<compile_context>
chip_gen: v7x
topology: tpu7x:2x2x1
jax: 0.10.0
libtpu: 0.0.40
codegen_flags: <defaults>
</compile_context>

<pallas_src>
import functools

import jax
import jax.numpy as jnp
from jax.experimental import pallas as pl
from jax.experimental.pallas import tpu as pltpu

LANE = 128


def _round_up(x, m):
    return (x + m - 1) // m * m


# ----------------------------------------------------------------------------
# Fused kernel: one batch element per grid step.
#   x_pad_ref : (H+2, W+2, Cp)  bf16  reflect-padded, channel-padded input
#   w1_ref    : (3, 3*Cp, Cp)   bf16  K-grouped spectral-normed weight of c1
#   w2_ref    : (3, 3*Cp, Cp)   bf16  K-grouped spectral-normed weight of c2
#   o_ref     : (H, W, Cp)      f32   c2(c1(x)) + x
# Scratch:
#   slab_ref  : (Hp*W, 3*Cp)    bf16  kw-unfolded im2col slab (shared by c1/c2)
#   ypad_ref  : (Hp, Wp, Cp)    bf16  reflect-padded intermediate y
#   acc_ref   : (H*W, Cp)       f32   matmul accumulator
# ----------------------------------------------------------------------------
def _fused_rres_kernel(x_pad_ref, w1_ref, w2_ref, o_ref,
                       slab_ref, ypad_ref, acc_ref, *, H, W, Cp):
    Hp = H + 2
    HW = H * W

    def build_slab(src_ref):
        # Row h*W + w of the slab holds src[h, w+kw, :] for kw = 0..2
        # concatenated along lanes (aligned 128-lane blocks).  The shifted
        # (sublane-misaligned) reads happen once per image here and are
        # reused by every kh tap below.
        for kw in range(3):
            sl = src_ref[:, pl.ds(kw, W), :]              # (Hp, W, Cp) bf16
            slab_ref[:, pl.ds(kw * Cp, Cp)] = sl.reshape(Hp * W, Cp)

    def conv_from_slab(w_ref):
        # 3 MXU matmuls with K = 3*Cp, f32 accumulation in VMEM scratch.
        # Tap kh uses slab rows [kh*W, kh*W + H*W)  (contiguous, aligned).
        acc_ref[...] = jnp.dot(slab_ref[pl.ds(0 * W, HW), :], w_ref[0],
                               preferred_element_type=jnp.float32)
        acc_ref[...] += jnp.dot(slab_ref[pl.ds(1 * W, HW), :], w_ref[1],
                                preferred_element_type=jnp.float32)
        acc_ref[...] += jnp.dot(slab_ref[pl.ds(2 * W, HW), :], w_ref[2],
                                preferred_element_type=jnp.float32)

    # --------------------------- c1 ---------------------------
    build_slab(x_pad_ref)
    conv_from_slab(w1_ref)

    # Reflect-pad the intermediate entirely in VMEM (no HBM round trip).
    # Width reflection is done on the value via concatenate; row reflection
    # via two cheap leading-dim ref copies.
    y = acc_ref[...].astype(jnp.bfloat16).reshape(H, W, Cp)
    y_wide = jnp.concatenate([y[:, 1:2, :], y, y[:, W - 2:W - 1, :]], axis=1)
    ypad_ref[pl.ds(1, H), :, :] = y_wide                  # rows 1..H, full width
    ypad_ref[0, :, :] = ypad_ref[2, :, :]                 # y_pad[0]   = y[1]
    ypad_ref[Hp - 1, :, :] = ypad_ref[Hp - 3, :, :]       # y_pad[H+1] = y[H-2]

    # ---------------------- c2 + residual ----------------------
    build_slab(ypad_ref)
    conv_from_slab(w2_ref)

    # Residual = interior of the padded bf16 input (== x); fused into the
    # epilogue, no extra HBM pass.
    res = x_pad_ref[pl.ds(1, H), pl.ds(1, W), :].astype(jnp.float32)
    o_ref[...] = (acc_ref[...].reshape(H, W, Cp) + res).astype(o_ref.dtype)


# ----------------------------------------------------------------------------
# pallas_call wrapper
# ----------------------------------------------------------------------------
def _vmem_capacity_bytes():
    try:
        cap = getattr(pltpu.get_tpu_info(), "vmem_capacity_bytes", None)
        if cap:
            return int(cap)
    except Exception:
        pass
    return 64 * 1024 * 1024   # conservative fallback (v7x per-TensorCore VMEM)


def rres_block_pallas(x_pad, w1, w2, *, H, W):
    """x_pad: (B, H+2, W+2, Cp) bf16.  w1/w2: (3, 3*Cp, Cp) bf16.
    Returns c2(c1(x)) + x of shape (B, H, W, Cp) in f32."""
    B, Hp, Wp, Cp = x_pad.shape
    Np = w1.shape[-1]
    assert Np == Cp, (Np, Cp)
    HW = H * W

    scratch = [
        pltpu.VMEM((Hp * W, 3 * Cp), jnp.bfloat16),   # kw-unfolded slab
        pltpu.VMEM((Hp, Wp, Cp), jnp.bfloat16),       # reflect-padded y
        pltpu.VMEM((HW, Cp), jnp.float32),            # f32 accumulator
    ]

    # VMEM requirement estimate (double-buffered streamed blocks + scratch),
    # used to size vmem_limit_bytes per generation instead of a hardcoded cap.
    block_bytes = (2 * Hp * Wp * Cp * 2            # bf16 padded image, 2 bufs
                   + 2 * 2 * 3 * 3 * Cp * Cp * 2   # two bf16 weights, 2 bufs
                   + 2 * HW * Cp * 4               # f32 output tile, 2 bufs
                   + Hp * W * 3 * Cp * 2           # slab scratch
                   + Hp * Wp * Cp * 2              # y_pad scratch
                   + HW * Cp * 4)                  # acc scratch
    vmem_limit = int(min(max(2 * block_bytes, 32 * 1024 * 1024),
                         (_vmem_capacity_bytes() * 3) // 4))

    flops = 2 * (2 * B * H * W * 9 * Cp * Cp)      # two 3x3 convs
    bytes_accessed = (x_pad.size * 2 + (w1.size + w2.size) * 2
                      + B * HW * Cp * 4)

    return pl.pallas_call(
        functools.partial(_fused_rres_kernel, H=H, W=W, Cp=Cp),
        grid=(B,),
        in_specs=[
            # whole bf16 padded image of one batch element
            pl.BlockSpec((pl.Squeezed(), Hp, Wp, Cp), lambda b: (b, 0, 0, 0)),
            # K-grouped bf16 weights (grid-invariant, tiny)
            pl.BlockSpec((3, 3 * Cp, Cp), lambda b: (0, 0, 0)),
            pl.BlockSpec((3, 3 * Cp, Cp), lambda b: (0, 0, 0)),
        ],
        out_specs=pl.BlockSpec((pl.Squeezed(), H, W, Cp),
                               lambda b: (b, 0, 0, 0)),
        out_shape=jax.ShapeDtypeStruct((B, H, W, Cp), jnp.float32),
        scratch_shapes=scratch,
        compiler_params=pltpu.CompilerParams(
            dimension_semantics=("parallel",),     # batch split across TCs
            vmem_limit_bytes=vmem_limit),
        cost_estimate=pl.CostEstimate(
            flops=flops, transcendentals=0, bytes_accessed=bytes_accessed),
    )(x_pad, w1, w2)


# ----------------------------------------------------------------------------
# Host-side glue: spectral norm, layout / channel padding
# ----------------------------------------------------------------------------
def spectral_normalize(w_oihw, n_iters=5):
    """Deterministic stand-in for torch.nn.utils.spectral_norm."""
    # TODO(synk): torch's spectral_norm keeps a stateful, randomly-initialized
    # `u`; here we use a fixed init + a few power iterations (same math,
    # different initial vector), so values won't bit-match torch.
    cout = w_oihw.shape[0]
    wm = w_oihw.reshape(cout, -1)
    u = jnp.ones((cout,), jnp.float32) / jnp.sqrt(float(cout))
    v = None
    for _ in range(n_iters):
        v = wm.T @ u
        v = v / (jnp.linalg.norm(v) + 1e-12)
        u = wm @ v
        u = u / (jnp.linalg.norm(u) + 1e-12)
    sigma = u @ (wm @ v)
    return w_oihw / sigma


def _prep_weight(w_oihw, c_pad):
    """(Cout, Cin, 3, 3) f32 -> spectral-normed, K-grouped (3, 3*Cp, Np) bf16."""
    cout, cin, kh, kw = w_oihw.shape
    w = spectral_normalize(w_oihw)
    w = jnp.transpose(w, (2, 3, 1, 0))                      # (kh, kw, cin, cout)
    w = jnp.pad(w, ((0, 0), (0, 0), (0, c_pad - cin), (0, c_pad - cout)))
    w = w.reshape(kh, kw * c_pad, c_pad)                    # merge (kw, cin) -> K
    return w.astype(jnp.bfloat16)


def rres_block_forward(params, x_nchw):
    """RResBlock.forward: out = c2(c1(x)) + x   (NCHW in, NCHW out)."""
    # TODO(synk): only the module's default norm_layer=None / nl_layer=None
    # (identity norm & activation) path is implemented.
    B, C, H, W = x_nchw.shape
    Cp = _round_up(C, LANE)

    # NCHW -> NHWC, bf16 activation residency, lane-dense channel padding,
    # reflect pad of the input done once on host (c1/c2/pad of y are in-kernel).
    x = jnp.transpose(x_nchw, (0, 2, 3, 1)).astype(jnp.bfloat16)
    x = jnp.pad(x, ((0, 0), (0, 0), (0, 0), (0, Cp - C)))
    x_pad = jnp.pad(x, ((0, 0), (1, 1), (1, 1), (0, 0)), mode="reflect")

    w1 = _prep_weight(params["w1"], Cp)
    w2 = _prep_weight(params["w2"], Cp)

    out = rres_block_pallas(x_pad, w1, w2, H=H, W=W)
    out = out[..., :C]
    return jnp.transpose(out, (0, 3, 1, 2)).astype(x_nchw.dtype)


# ----------------------------------------------------------------------------
# Pure-JAX references (same spectral-norm stand-in) for the sanity check
# ----------------------------------------------------------------------------
def _ref_forward(params, x_nchw, compute_dtype=jnp.float32):
    def cast(a):
        return a.astype(compute_dtype).astype(jnp.float32)

    def conv(h, w):
        wn = cast(spectral_normalize(w))
        hp = jnp.pad(cast(h), ((0, 0), (0, 0), (1, 1), (1, 1)), mode="reflect")
        return jax.lax.conv_general_dilated(
            hp, wn, window_strides=(1, 1), padding="VALID",
            dimension_numbers=("NCHW", "OIHW", "NCHW"),
            preferred_element_type=jnp.float32)

    y = conv(x_nchw, params["w1"])
    y = conv(y, params["w2"])
    return y + cast(x_nchw)


if __name__ == "__main__":
    # small RResBlock config: batch=2, h_dim=128 (lane-dense), 16x16 spatial
    B, C, H, W = 2, 128, 16, 16

    key = jax.random.PRNGKey(0)
    kx, k1, k2 = jax.random.split(key, 3)
    x = jax.random.normal(kx, (B, C, H, W), jnp.float32)
    params = dict(
        w1=0.05 * jax.random.normal(k1, (C, C, 3, 3), jnp.float32),
        w2=0.05 * jax.random.normal(k2, (C, C, 3, 3), jnp.float32),
    )

    fwd = jax.jit(rres_block_forward)
    out = jax.block_until_ready(fwd(params, x))

    assert out.shape == (B, C, H, W), out.shape
    assert bool(jnp.all(jnp.isfinite(out)))

    # Tight check against a reference with the same bf16 operand rounding as
    # the kernel's MXU path; loose check against a full-f32 reference.
    ref_bf16 = _ref_forward(params, x, compute_dtype=jnp.bfloat16)
    ref_f32 = _ref_forward(params, x, compute_dtype=jnp.float32)
    err_bf16 = float(jnp.max(jnp.abs(out - ref_bf16)))
    err_f32 = float(jnp.max(jnp.abs(out - ref_f32)))
    assert err_bf16 < 3e-2, f"bf16-matched reference mismatch: {err_bf16}"
    assert err_f32 < 1.5e-1, f"f32 reference mismatch: {err_f32}"

    print("KERNEL_OK")
</pallas_src>

<mosaic_0001>
module attributes {stable_mosaic.version = 11 : i64} {
  func.func @_fused_rres_kernel(%arg0: i32, %arg1: memref<1x18x18x128xbf16, #tpu.memory_space<vmem>>, %arg2: memref<3x384x128xbf16, #tpu.memory_space<vmem>>, %arg3: memref<3x384x128xbf16, #tpu.memory_space<vmem>>, %arg4: memref<1x16x16x128xf32, #tpu.memory_space<vmem>>, %arg5: memref<288x384xbf16, #tpu.memory_space<vmem>>, %arg6: memref<18x18x128xbf16, #tpu.memory_space<vmem>>, %arg7: memref<256x128xf32, #tpu.memory_space<vmem>>) attributes {dimension_semantics = [#tpu.dimension_semantics<parallel>], iteration_bounds = array<i64: 2>, scalar_prefetch = 0 : i64, scratch_operands = 3 : i64, tpu.core_type = #tpu.core_type<tc>, window_params = [{transform_indices = @transform_0, window_bounds = array<i64: 1, 18, 18, 128>}, {pipeline_mode = #tpu.pipeline_mode<synchronous>, transform_indices = @transform_1, window_bounds = array<i64: 3, 384, 128>}, {pipeline_mode = #tpu.pipeline_mode<synchronous>, transform_indices = @transform_2, window_bounds = array<i64: 3, 384, 128>}, {transform_indices = @transform_3, window_bounds = array<i64: 1, 16, 16, 128>}]} {
    %c0 = arith.constant 0 : index
    %c0_0 = arith.constant 0 : index
    %c0_1 = arith.constant 0 : index
    %c0_2 = arith.constant 0 : index
    %0 = vector.load %arg1[%c0, %c0_0, %c0_1, %c0_2] : memref<1x18x18x128xbf16, #tpu.memory_space<vmem>>, vector<1x18x16x128xbf16>
    %1 = vector.shape_cast %0 : vector<1x18x16x128xbf16> to vector<18x16x128xbf16>
    %2 = vector.shape_cast %1 : vector<18x16x128xbf16> to vector<288x128xbf16>
    %c0_3 = arith.constant 0 : index
    %c0_4 = arith.constant 0 : index
    %3 = vector.load %arg5[%c0_3, %c0_4] : memref<288x384xbf16, #tpu.memory_space<vmem>>, vector<288x128xbf16>
    tpu.vector_store %arg5[%c0_3, %c0_4], %2 {strides = array<i32>} : memref<288x384xbf16, #tpu.memory_space<vmem>>, vector<288x128xbf16>,
    %c0_5 = arith.constant 0 : index
    %c0_6 = arith.constant 0 : index
    %c1 = arith.constant 1 : index
    %c0_7 = arith.constant 0 : index
    %4 = vector.load %arg1[%c0_5, %c0_6, %c1, %c0_7] : memref<1x18x18x128xbf16, #tpu.memory_space<vmem>>, vector<1x18x16x128xbf16>
    %5 = vector.shape_cast %4 : vector<1x18x16x128xbf16> to vector<18x16x128xbf16>
    %6 = vector.shape_cast %5 : vector<18x16x128xbf16> to vector<288x128xbf16>
    %c0_8 = arith.constant 0 : index
    %c128 = arith.constant 128 : index
    %7 = vector.load %arg5[%c0_8, %c128] : memref<288x384xbf16, #tpu.memory_space<vmem>>, vector<288x128xbf16>
    tpu.vector_store %arg5[%c0_8, %c128], %6 {strides = array<i32>} : memref<288x384xbf16, #tpu.memory_space<vmem>>, vector<288x128xbf16>,
    %c0_9 = arith.constant 0 : index
    %c0_10 = arith.constant 0 : index
    %c2 = arith.constant 2 : index
    %c0_11 = arith.constant 0 : index
    %8 = vector.load %arg1[%c0_9, %c0_10, %c2, %c0_11] : memref<1x18x18x128xbf16, #tpu.memory_space<vmem>>, vector<1x18x16x128xbf16>
    %9 = vector.shape_cast %8 : vector<1x18x16x128xbf16> to vector<18x16x128xbf16>
    %10 = vector.shape_cast %9 : vector<18x16x128xbf16> to vector<288x128xbf16>
    %c0_12 = arith.constant 0 : index
    %c256 = arith.constant 256 : index
    %11 = vector.load %arg5[%c0_12, %c256] : memref<288x384xbf16, #tpu.memory_space<vmem>>, vector<288x128xbf16>
    tpu.vector_store %arg5[%c0_12, %c256], %10 {strides = array<i32>} : memref<288x384xbf16, #tpu.memory_space<vmem>>, vector<288x128xbf16>,
    %c0_13 = arith.constant 0 : index
    %c0_14 = arith.constant 0 : index
    %12 = vector.load %arg5[%c0_13, %c0_14] : memref<288x384xbf16, #tpu.memory_space<vmem>>, vector<256x384xbf16>
    %c0_15 = arith.constant 0 : index
    %c0_16 = arith.constant 0 : index
    %c0_17 = arith.constant 0 : index
    %13 = vector.load %arg2[%c0_15, %c0_16, %c0_17] : memref<3x384x128xbf16, #tpu.memory_space<vmem>>, vector<1x384x128xbf16>
    %14 = vector.shape_cast %13 : vector<1x384x128xbf16> to vector<384x128xbf16>
    %cst = arith.constant dense<0.000000e+00> : vector<256x128xf32>
    %15 = tpu.matmul %12, %14, %cst {dimension_numbers = #tpu.dot_dimension_numbers<[1], [0], [0], [1], [0, 0, 1, 1], [], []>} : vector<256x384xbf16>, vector<384x128xbf16>, vector<256x128xf32> -> vector<256x128xf32>
    %c0_18 = arith.constant 0 : index
    %c0_19 = arith.constant 0 : index
    %16 = vector.load %arg7[%c0_18, %c0_19] : memref<256x128xf32, #tpu.memory_space<vmem>>, vector<256x128xf32>
    tpu.vector_store %arg7[%c0_18, %c0_19], %15 {strides = array<i32>} : memref<256x128xf32, #tpu.memory_space<vmem>>, vector<256x128xf32>,
    %c0_20 = arith.constant 0 : index
    %c0_21 = arith.constant 0 : index
    %17 = vector.load %arg7[%c0_20, %c0_21] : memref<256x128xf32, #tpu.memory_space<vmem>>, vector<256x128xf32>
    %c16 = arith.constant 16 : index
    %c0_22 = arith.constant 0 : index
    %18 = vector.load %arg5[%c16, %c0_22] : memref<288x384xbf16, #tpu.memory_space<vmem>>, vector<256x384xbf16>
    %c1_23 = arith.constant 1 : index
    %c0_24 = arith.constant 0 : index
    %c0_25 = arith.constant 0 : index
    %19 = vector.load %arg2[%c1_23, %c0_24, %c0_25] : memref<3x384x128xbf16, #tpu.memory_space<vmem>>, vector<1x384x128xbf16>
    %20 = vector.shape_cast %19 : vector<1x384x128xbf16> to vector<384x128xbf16>
    %cst_26 = arith.constant dense<0.000000e+00> : vector<256x128xf32>
    %21 = tpu.matmul %18, %20, %cst_26 {dimension_numbers = #tpu.dot_dimension_numbers<[1], [0], [0], [1], [0, 0, 1, 1], [], []>} : vector<256x384xbf16>, vector<384x128xbf16>, vector<256x128xf32> -> vector<256x128xf32>
    %22 = arith.addf %17, %21 : vector<256x128xf32>
    %c0_27 = arith.constant 0 : index
    %c0_28 = arith.constant 0 : index
    %23 = vector.load %arg7[%c0_27, %c0_28] : memref<256x128xf32, #tpu.memory_space<vmem>>, vector<256x128xf32>
    tpu.vector_store %arg7[%c0_27, %c0_28], %22 {strides = array<i32>} : memref<256x128xf32, #tpu.memory_space<vmem>>, vector<256x128xf32>,
    %c0_29 = arith.constant 0 : index
    %c0_30 = arith.constant 0 : index
    %24 = vector.load %arg7[%c0_29, %c0_30] : memref<256x128xf32, #tpu.memory_space<vmem>>, vector<256x128xf32>
    %c32 = arith.constant 32 : index
    %c0_31 = arith.constant 0 : index
    %25 = vector.load %arg5[%c32, %c0_31] : memref<288x384xbf16, #tpu.memory_space<vmem>>, vector<256x384xbf16>
    %c2_32 = arith.constant 2 : index
    %c0_33 = arith.constant 0 : index
    %c0_34 = arith.constant 0 : index
    %26 = vector.load %arg2[%c2_32, %c0_33, %c0_34] : memref<3x384x128xbf16, #tpu.memory_space<vmem>>, vector<1x384x128xbf16>
    %27 = vector.shape_cast %26 : vector<1x384x128xbf16> to vector<384x128xbf16>
    %cst_35 = arith.constant dense<0.000000e+00> : vector<256x128xf32>
    %28 = tpu.matmul %25, %27, %cst_35 {dimension_numbers = #tpu.dot_dimension_numbers<[1], [0], [0], [1], [0, 0, 1, 1], [], []>} : vector<256x384xbf16>, vector<384x128xbf16>, vector<256x128xf32> -> vector<256x128xf32>
    %29 = arith.addf %24, %28 : vector<256x128xf32>
    %c0_36 = arith.constant 0 : index
    %c0_37 = arith.constant 0 : index
    %30 = vector.load %arg7[%c0_36, %c0_37] : memref<256x128xf32, #tpu.memory_space<vmem>>, vector<256x128xf32>
    tpu.vector_store %arg7[%c0_36, %c0_37], %29 {strides = array<i32>} : memref<256x128xf32, #tpu.memory_space<vmem>>, vector<256x128xf32>,
    %c0_38 = arith.constant 0 : index
    %c0_39 = arith.constant 0 : index
    %31 = vector.load %arg7[%c0_38, %c0_39] : memref<256x128xf32, #tpu.memory_space<vmem>>, vector<256x128xf32>
    %32 = arith.truncf %31 : vector<256x128xf32> to vector<256x128xbf16>
    %33 = vector.shape_cast %32 : vector<256x128xbf16> to vector<16x16x128xbf16>
    %34 = vector.extract_strided_slice %33 {offsets = [0, 1, 0], sizes = [16, 1, 128], strides = [1, 1, 1]} : vector<16x16x128xbf16> to vector<16x1x128xbf16>
    %35 = vector.extract_strided_slice %33 {offsets = [0, 14, 0], sizes = [16, 1, 128], strides = [1, 1, 1]} : vector<16x16x128xbf16> to vector<16x1x128xbf16>
    %36 = tpu.concatenate %34, %33, %35 in 1 : vector<16x1x128xbf16>, vector<16x16x128xbf16>, vector<16x1x128xbf16> -> vector<16x18x128xbf16>
    %c1_40 = arith.constant 1 : index
    %c0_41 = arith.constant 0 : index
    %c0_42 = arith.constant 0 : index
    %37 = vector.load %arg6[%c1_40, %c0_41, %c0_42] : memref<18x18x128xbf16, #tpu.memory_space<vmem>>, vector<16x18x128xbf16>
    tpu.vector_store %arg6[%c1_40, %c0_41, %c0_42], %36 {strides = array<i32>} : memref<18x18x128xbf16, #tpu.memory_space<vmem>>, vector<16x18x128xbf16>,
    %c2_43 = arith.constant 2 : index
    %c0_44 = arith.constant 0 : index
    %c0_45 = arith.constant 0 : index
    %38 = vector.load %arg6[%c2_43, %c0_44, %c0_45] : memref<18x18x128xbf16, #tpu.memory_space<vmem>>, vector<1x18x128xbf16>
    %39 = vector.shape_cast %38 : vector<1x18x128xbf16> to vector<18x128xbf16>
    %c0_46 = arith.constant 0 : index
    %c0_47 = arith.constant 0 : index
    %c0_48 = arith.constant 0 : index
    %40 = vector.load %arg6[%c0_46, %c0_47, %c0_48] : memref<18x18x128xbf16, #tpu.memory_space<vmem>>, vector<1x18x128xbf16>
    %41 = vector.shape_cast %40 : vector<1x18x128xbf16> to vector<18x128xbf16>
    %42 = vector.shape_cast %39 : vector<18x128xbf16> to vector<1x18x128xbf16>
    tpu.vector_store %arg6[%c0_46, %c0_47, %c0_48], %42 {strides = array<i32>} : memref<18x18x128xbf16, #tpu.memory_space<vmem>>, vector<1x18x128xbf16>,
    %c15 = arith.constant 15 : index
    %c0_49 = arith.constant 0 : index
    %c0_50 = arith.constant 0 : index
    %43 = vector.load %arg6[%c15, %c0_49, %c0_50] : memref<18x18x128xbf16, #tpu.memory_space<vmem>>, vector<1x18x128xbf16>
    %44 = vector.shape_cast %43 : vector<1x18x128xbf16> to vector<18x128xbf16>
    %c17 = arith.constant 17 : index
    %c0_51 = arith.constant 0 : index
    %c0_52 = arith.constant 0 : index
    %45 = vector.load %arg6[%c17, %c0_51, %c0_52] : memref<18x18x128xbf16, #tpu.memory_space<vmem>>, vector<1x18x128xbf16>
    %46 = vector.shape_cast %45 : vector<1x18x128xbf16> to vector<18x128xbf16>
    %47 = vector.shape_cast %44 : vector<18x128xbf16> to vector<1x18x128xbf16>
    tpu.vector_store %arg6[%c17, %c0_51, %c0_52], %47 {strides = array<i32>} : memref<18x18x128xbf16, #tpu.memory_space<vmem>>, vector<1x18x128xbf16>,
    %c0_53 = arith.constant 0 : index
    %c0_54 = arith.constant 0 : index
    %c0_55 = arith.constant 0 : index
    %48 = vector.load %arg6[%c0_53, %c0_54, %c0_55] : memref<18x18x128xbf16, #tpu.memory_space<vmem>>, vector<18x16x128xbf16>
    %49 = vector.shape_cast %48 : vector<18x16x128xbf16> to vector<288x128xbf16>
    %c0_56 = arith.constant 0 : index
    %c0_57 = arith.constant 0 : index
    %50 = vector.load %arg5[%c0_56, %c0_57] : memref<288x384xbf16, #tpu.memory_space<vmem>>, vector<288x128xbf16>
    tpu.vector_store %arg5[%c0_56, %c0_57], %49 {strides = array<i32>} : memref<288x384xbf16, #tpu.memory_space<vmem>>, vector<288x128xbf16>,
    %c0_58 = arith.constant 0 : index
    %c1_59 = arith.constant 1 : index
    %c0_60 = arith.constant 0 : index
    %51 = vector.load %arg6[%c0_58, %c1_59, %c0_60] : memref<18x18x128xbf16, #tpu.memory_space<vmem>>, vector<18x16x128xbf16>
    %52 = vector.shape_cast %51 : vector<18x16x128xbf16> to vector<288x128xbf16>
    %c0_61 = arith.constant 0 : index
    %c128_62 = arith.constant 128 : index
    %53 = vector.load %arg5[%c0_61, %c128_62] : memref<288x384xbf16, #tpu.memory_space<vmem>>, vector<288x128xbf16>
    tpu.vector_store %arg5[%c0_61, %c128_62], %52 {strides = array<i32>} : memref<288x384xbf16, #tpu.memory_space<vmem>>, vector<288x128xbf16>,
    %c0_63 = arith.constant 0 : index
    %c2_64 = arith.constant 2 : index
    %c0_65 = arith.constant 0 : index
    %54 = vector.load %arg6[%c0_63, %c2_64, %c0_65] : memref<18x18x128xbf16, #tpu.memory_space<vmem>>, vector<18x16x128xbf16>
    %55 = vector.shape_cast %54 : vector<18x16x128xbf16> to vector<288x128xbf16>
    %c0_66 = arith.constant 0 : index
    %c256_67 = arith.constant 256 : index
    %56 = vector.load %arg5[%c0_66, %c256_67] : memref<288x384xbf16, #tpu.memory_space<vmem>>, vector<288x128xbf16>
    tpu.vector_store %arg5[%c0_66, %c256_67], %55 {strides = array<i32>} : memref<288x384xbf16, #tpu.memory_space<vmem>>, vector<288x128xbf16>,
    %c0_68 = arith.constant 0 : index
    %c0_69 = arith.constant 0 : index
    %57 = vector.load %arg5[%c0_68, %c0_69] : memref<288x384xbf16, #tpu.memory_space<vmem>>, vector<256x384xbf16>
    %c0_70 = arith.constant 0 : index
    %c0_71 = arith.constant 0 : index
    %c0_72 = arith.constant 0 : index
    %58 = vector.load %arg3[%c0_70, %c0_71, %c0_72] : memref<3x384x128xbf16, #tpu.memory_space<vmem>>, vector<1x384x128xbf16>
    %59 = vector.shape_cast %58 : vector<1x384x128xbf16> to vector<384x128xbf16>
    %cst_73 = arith.constant dense<0.000000e+00> : vector<256x128xf32>
    %60 = tpu.matmul %57, %59, %cst_73 {dimension_numbers = #tpu.dot_dimension_numbers<[1], [0], [0], [1], [0, 0, 1, 1], [], []>} : vector<256x384xbf16>, vector<384x128xbf16>, vector<256x128xf32> -> vector<256x128xf32>
    %c0_74 = arith.constant 0 : index
    %c0_75 = arith.constant 0 : index
    %61 = vector.load %arg7[%c0_74, %c0_75] : memref<256x128xf32, #tpu.memory_space<vmem>>, vector<256x128xf32>
    tpu.vector_store %arg7[%c0_74, %c0_75], %60 {strides = array<i32>} : memref<256x128xf32, #tpu.memory_space<vmem>>, vector<256x128xf32>,
    %c0_76 = arith.constant 0 : index
    %c0_77 = arith.constant 0 : index
    %62 = vector.load %arg7[%c0_76, %c0_77] : memref<256x128xf32, #tpu.memory_space<vmem>>, vector<256x128xf32>
    %c16_78 = arith.constant 16 : index
    %c0_79 = arith.constant 0 : index
    %63 = vector.load %arg5[%c16_78, %c0_79] : memref<288x384xbf16, #tpu.memory_space<vmem>>, vector<256x384xbf16>
    %c1_80 = arith.constant 1 : index
    %c0_81 = arith.constant 0 : index
    %c0_82 = arith.constant 0 : index
    %64 = vector.load %arg3[%c1_80, %c0_81, %c0_82] : memref<3x384x128xbf16, #tpu.memory_space<vmem>>, vector<1x384x128xbf16>
    %65 = vector.shape_cast %64 : vector<1x384x128xbf16> to vector<384x128xbf16>
    %cst_83 = arith.constant dense<0.000000e+00> : vector<256x128xf32>
    %66 = tpu.matmul %63, %65, %cst_83 {dimension_numbers = #tpu.dot_dimension_numbers<[1], [0], [0], [1], [0, 0, 1, 1], [], []>} : vector<256x384xbf16>, vector<384x128xbf16>, vector<256x128xf32> -> vector<256x128xf32>
    %67 = arith.addf %62, %66 : vector<256x128xf32>
    %c0_84 = arith.constant 0 : index
    %c0_85 = arith.constant 0 : index
    %68 = vector.load %arg7[%c0_84, %c0_85] : memref<256x128xf32, #tpu.memory_space<vmem>>, vector<256x128xf32>
    tpu.vector_store %arg7[%c0_84, %c0_85], %67 {strides = array<i32>} : memref<256x128xf32, #tpu.memory_space<vmem>>, vector<256x128xf32>,
    %c0_86 = arith.constant 0 : index
    %c0_87 = arith.constant 0 : index
    %69 = vector.load %arg7[%c0_86, %c0_87] : memref<256x128xf32, #tpu.memory_space<vmem>>, vector<256x128xf32>
    %c32_88 = arith.constant 32 : index
    %c0_89 = arith.constant 0 : index
    %70 = vector.load %arg5[%c32_88, %c0_89] : memref<288x384xbf16, #tpu.memory_space<vmem>>, vector<256x384xbf16>
    %c2_90 = arith.constant 2 : index
    %c0_91 = arith.constant 0 : index
    %c0_92 = arith.constant 0 : index
    %71 = vector.load %arg3[%c2_90, %c0_91, %c0_92] : memref<3x384x128xbf16, #tpu.memory_space<vmem>>, vector<1x384x128xbf16>
    %72 = vector.shape_cast %71 : vector<1x384x128xbf16> to vector<384x128xbf16>
    %cst_93 = arith.constant dense<0.000000e+00> : vector<256x128xf32>
    %73 = tpu.matmul %70, %72, %cst_93 {dimension_numbers = #tpu.dot_dimension_numbers<[1], [0], [0], [1], [0, 0, 1, 1], [], []>} : vector<256x384xbf16>, vector<384x128xbf16>, vector<256x128xf32> -> vector<256x128xf32>
    %74 = arith.addf %69, %73 : vector<256x128xf32>
    %c0_94 = arith.constant 0 : index
    %c0_95 = arith.constant 0 : index
    %75 = vector.load %arg7[%c0_94, %c0_95] : memref<256x128xf32, #tpu.memory_space<vmem>>, vector<256x128xf32>
    tpu.vector_store %arg7[%c0_94, %c0_95], %74 {strides = array<i32>} : memref<256x128xf32, #tpu.memory_space<vmem>>, vector<256x128xf32>,
    %c0_96 = arith.constant 0 : index
    %c1_97 = arith.constant 1 : index
    %c1_98 = arith.constant 1 : index
    %c0_99 = arith.constant 0 : index
    %76 = vector.load %arg1[%c0_96, %c1_97, %c1_98, %c0_99] : memref<1x18x18x128xbf16, #tpu.memory_space<vmem>>, vector<1x16x16x128xbf16>
    %77 = vector.shape_cast %76 : vector<1x16x16x128xbf16> to vector<16x16x128xbf16>
    %78 = arith.extf %77 : vector<16x16x128xbf16> to vector<16x16x128xf32>
    %c0_100 = arith.constant 0 : index
    %c0_101 = arith.constant 0 : index
    %79 = vector.load %arg7[%c0_100, %c0_101] : memref<256x128xf32, #tpu.memory_space<vmem>>, vector<256x128xf32>
    %80 = vector.shape_cast %79 : vector<256x128xf32> to vector<16x16x128xf32>
    %81 = arith.addf %80, %78 : vector<16x16x128xf32>
    %c0_102 = arith.constant 0 : index
    %c0_103 = arith.constant 0 : index
    %c0_104 = arith.constant 0 : index
    %c0_105 = arith.constant 0 : index
    %82 = vector.load %arg4[%c0_102, %c0_103, %c0_104, %c0_105] : memref<1x16x16x128xf32, #tpu.memory_space<vmem>>, vector<1x16x16x128xf32>
    %83 = vector.shape_cast %82 : vector<1x16x16x128xf32> to vector<16x16x128xf32>
    %84 = vector.shape_cast %81 : vector<16x16x128xf32> to vector<1x16x16x128xf32>
    tpu.vector_store %arg4[%c0_102, %c0_103, %c0_104, %c0_105], %84 {strides = array<i32>} : memref<1x16x16x128xf32, #tpu.memory_space<vmem>>, vector<1x16x16x128xf32>,
    return
  }
  func.func @transform_0(%arg0: i32) -> (i32, i32, i32, i32) {
    %c0_i32 = arith.constant 0 : i32
    %c0_i32_0 = arith.constant 0 : i32
    %c0_i32_1 = arith.constant 0 : i32
    %c0_i32_2 = arith.constant 0 : i32
    return %arg0, %c0_i32, %c0_i32_0, %c0_i32_1 : i32, i32, i32, i32
  }
  func.func @transform_1(%arg0: i32) -> (i32, i32, i32) {
    %c0_i32 = arith.constant 0 : i32
    %c0_i32_0 = arith.constant 0 : i32
    %c0_i32_1 = arith.constant 0 : i32
    %c0_i32_2 = arith.constant 0 : i32
    return %c0_i32, %c0_i32_0, %c0_i32_1 : i32, i32, i32
  }
  func.func @transform_2(%arg0: i32) -> (i32, i32, i32) {
    %c0_i32 = arith.constant 0 : i32
    %c0_i32_0 = arith.constant 0 : i32
    %c0_i32_1 = arith.constant 0 : i32
    %c0_i32_2 = arith.constant 0 : i32
    return %c0_i32, %c0_i32_0, %c0_i32_1 : i32, i32, i32
  }
  func.func @transform_3(%arg0: i32) -> (i32, i32, i32, i32) {
    %c0_i32 = arith.constant 0 : i32
    %c0_i32_0 = arith.constant 0 : i32
    %c0_i32_1 = arith.constant 0 : i32
    %c0_i32_2 = arith.constant 0 : i32
    return %arg0, %c0_i32, %c0_i32_0, %c0_i32_1 : i32, i32, i32, i32
  }
}

</mosaic_0001>

<llo_original>
// kernel: rres_block_forward.1
$region0: #{rres_block_forward.1}
  #allocation0 [shape = 'u32[]', space=smem, size = 0x4, offset = 0x4, fixed_abs, tag = 'smem constant byte address 0x4 - core index']
  #allocation1 [shape = 'u32[144,128]{1,0:T(1,128)}', space=vmem, size = 0x12000, scoped, tag = 'internal scratch']
  #allocation2 [shape = 'bf16[288,384]{1,0:T(16,128)(2,1)}', space=vmem, size = 0x36000, scoped, tag = 'scratch operand']
  #allocation3 [shape = 'bf16[18,18,128]{2,1,0:T(8,128)(2,1)}', space=vmem, size = 0x1b000, scoped, tag = 'scratch operand']
  #allocation4 [shape = 'f32[256,128]{1,0:T(8,128)}', space=vmem, size = 0x20000, scoped, tag = 'scratch operand']
  %s0 = inlined_call_operand.vmem [shape: bf16[2,18,18,128], index: 0, kind: input, shape index: {}]
  %s1 = inlined_call_operand.vmem [shape: bf16[3,384,128], index: 1, kind: input, shape index: {}]
  %s2 = inlined_call_operand.vmem [shape: bf16[3,384,128], index: 2, kind: input, shape index: {}]
  %s3 = inlined_call_operand.hbm [shape: f32[2,16,16,128], index: 3, kind: output, shape index: {}]
  %s4 = sld [smem:[#allocation0]]
  $region45: #{rres_block_forward.1} parent=0
    _
  %s6 = ssub.s32 1, %s4
  %s7 = scalar_select 0, %s6, %s4
  $region1: #{rres_block_forward.1} parent=0
    #allocation5 [shape = 'u8[262144]{0}', space=vmem, size = 0x40000, scoped, tag = 'output window, operand 0']
    #allocation6 [shape = 's32[2]{0}', space=sflag, size = 0x8, scoped, tag = 'scoped memory for rres_block_forward.1']
    %8 = vsyncpa [#allocation6], 0
    %s9 = scalar_lea.sflag [#allocation6], 1
    %10 = vsyncpa %s9, 0
    loop: start=0, step=1, limit=4
    $region2: #{rres_block_forward.1} parent=1 // loop_pre_header
      _
    $region3: #{rres_block_forward.1} parent=1 // loop_header
      %s12 = sphi 0, %s16
      %p13 = scmp.ge.s32.totalorder %s12, 4
      %s22 = sphi 0, %s24
      %s25 = sphi 0, %s22
      %s26 = sphi 0, %s25
      %s42 = sphi 0, %s26
      %s46 = sphi 0, %s46
      %s48 = sphi 0, %s46
      %s49 = sphi 0, %s48
      %s63 = sphi 0, %s49
      %s67 = sphi 0, %s67
      %s69 = sphi 0, %s67
      %s70 = sphi 0, %s69
      %s84 = sphi 0, %s70
      %s90 = sphi 0, %s92
      %s93 = sphi 0, %s90
      %s94 = sphi 0, %s93
      %s110 = sphi 0, %s94
    $region4: #{rres_block_forward.1} parent=1 // loop_header_branch
      %15 = sbr.rel (%p13) target = $region8
    $region5: #{rres_block_forward.1} parent=1 // loop_body
      %s17 = ssub.s32 %s12, 1
      %s18 = ssub.s32 %s12, 2
      %s19 = sadd.s32 %s12, 1
      %s20 = ssub.s32 %s12, %s19
      %p21 = scmp.eq.s32.totalorder %s20, 0
      %s23 = sadd.s32 %s22, 1
      %s24 = scalar_select %p21, %s22, %s23
      %p27 = pneg %p21
      %p28 = scmp.eq.s32.totalorder %s12, 1
      %p29 = por %p27, %p28
      %p30 = scmp.ne.s32.totalorder %s22, %s25
      %p31 = scmp.eq.s32.totalorder %s12, 0
      %p32 = por %p30, %p31
      %p33 = scmp.ne.s32.totalorder %s22, %s25
      %p34 = scmp.eq.s32.totalorder %s17, 1
      %p35 = por %p33, %p34
      %p36 = scmp.ne.s32.totalorder %s25, %s26
      %p37 = scmp.eq.s32.totalorder %s17, 0
      %p38 = por %p36, %p37
      %p39 = scmp.ne.s32.totalorder %s25, %s26
      %p40 = scmp.eq.s32.totalorder %s18, 1
      %p41 = por %p39, %p40
      %p43 = scmp.ne.s32.totalorder %s26, %s42
      %p44 = scmp.eq.s32.totalorder %s18, 0
      %p45 = por %p43, %p44
      %s47 = sadd.s32 %s46, 1
      %p50 = scmp.eq.s32.totalorder %s12, 1
      %p51 = scmp.ne.s32.totalorder %s46, %s48
      %p52 = scmp.eq.s32.totalorder %s12, 0
      %p53 = por %p51, %p52
      %p54 = scmp.ne.s32.totalorder %s46, %s48
      %p55 = scmp.eq.s32.totalorder %s17, 1
      %p56 = por %p54, %p55
      %p57 = scmp.ne.s32.totalorder %s48, %s49
      %p58 = scmp.eq.s32.totalorder %s17, 0
      %p59 = por %p57, %p58
      %p60 = scmp.ne.s32.totalorder %s48, %s49
      %p61 = scmp.eq.s32.totalorder %s18, 1
      %p62 = por %p60, %p61
      %p64 = scmp.ne.s32.totalorder %s49, %s63
      %p65 = scmp.eq.s32.totalorder %s18, 0
      %p66 = por %p64, %p65
      %s68 = sadd.s32 %s67, 1
      %p71 = scmp.eq.s32.totalorder %s12, 1
      %p72 = scmp.ne.s32.totalorder %s67, %s69
      %p73 = scmp.eq.s32.totalorder %s12, 0
      %p74 = por %p72, %p73
      %p75 = scmp.ne.s32.totalorder %s67, %s69
      %p76 = scmp.eq.s32.totalorder %s17, 1
      %p77 = por %p75, %p76
      %p78 = scmp.ne.s32.totalorder %s69, %s70
      %p79 = scmp.eq.s32.totalorder %s17, 0
      %p80 = por %p78, %p79
      %p81 = scmp.ne.s32.totalorder %s69, %s70
      %p82 = scmp.eq.s32.totalorder %s18, 1
      %p83 = por %p81, %p82
      %p85 = scmp.ne.s32.totalorder %s70, %s84
      %p86 = scmp.eq.s32.totalorder %s18, 0
      %p87 = por %p85, %p86
      %s88 = ssub.s32 %s12, %s19
      %p89 = scmp.eq.s32.totalorder %s88, 0
      %s91 = sadd.s32 %s90, 1
      %s92 = scalar_select %p89, %s90, %s91
      %p95 = pneg %p89
      %p96 = scmp.eq.s32.totalorder %s12, 1
      %p97 = por %p95, %p96
      %p98 = scmp.ne.s32.totalorder %s90, %s93
      %p99 = scmp.eq.s32.totalorder %s12, 0
      %p100 = por %p98, %p99
      %p101 = scmp.ne.s32.totalorder %s90, %s93
      %p102 = scmp.eq.s32.totalorder %s17, 1
      %p103 = por %p101, %p102
      %p104 = scmp.ne.s32.totalorder %s93, %s94
      %p105 = scmp.eq.s32.totalorder %s17, 0
      %p106 = por %p104, %p105
      %p107 = scmp.ne.s32.totalorder %s93, %s94
      %p108 = scmp.eq.s32.totalorder %s18, 1
      %p109 = por %p107, %p108
      %p111 = scmp.ne.s32.totalorder %s94, %s110
      %p112 = scmp.eq.s32.totalorder %s18, 0
      %p113 = por %p111, %p112
      %p114 = scmp.le.s32.totalorder 1, %s12
      %p115 = scmp.lt.s32.totalorder %s12, 3
      %p116 = pnand %p114, %p115
      %p117 = pneg %p116
      // Predicated region
      $region9: #{rres_block_forward.1} parent=5 // pred_check
        _
      $region10: #{rres_block_forward.1} parent=5 // pred_check_branch
        %119 = sbr.rel (%p116) target = $region12
      $region11: #{rres_block_forward.1} parent=5 // pred_region
        %s120 = ssub.s32 %s12, 1
        // Predicated region
        $region13: #{rres_block_forward.1} parent=11 // pred_check
          %p121 = pneg %p59
        $region14: #{rres_block_forward.1} parent=11 // pred_check_branch
          %123 = sbr.rel (%p121) target = $region16
        $region15: #{rres_block_forward.1} parent=11 // pred_region
          _
        $region16: #{rres_block_forward.1} parent=11 // pred_fallthru
          _
        // Predicated region
        $region17: #{rres_block_forward.1} parent=11 // pred_check
          %p124 = pneg %p80
        $region18: #{rres_block_forward.1} parent=11 // pred_check_branch
          %126 = sbr.rel (%p124) target = $region20
        $region19: #{rres_block_forward.1} parent=11 // pred_region
          _
        $region20: #{rres_block_forward.1} parent=11 // pred_fallthru
          _
      $region12: #{rres_block_forward.1} parent=5 // pred_fallthru
        _
      %p127 = scmp.lt.s32.totalorder %s12, 2
      // Predicated region
      $region21: #{rres_block_forward.1} parent=5 // pred_check
        %p128 = pneg %p127
      $region22: #{rres_block_forward.1} parent=5 // pred_check_branch
        %130 = sbr.rel (%p128) target = $region24
      $region23: #{rres_block_forward.1} parent=5 // pred_region
        // Predicated region
        $region25: #{rres_block_forward.1} parent=23 // pred_check
          %p131 = pneg %p32
        $region26: #{rres_block_forward.1} parent=23 // pred_check_branch
          %133 = sbr.rel (%p131) target = $region28
        $region27: #{rres_block_forward.1} parent=23 // pred_region
          %p134 = scmp.lt.s32.totalorder %s12, 1
          %s135 = scalar_select %p134, %s12, 1
          %s136 = smul.addr %s135, 54
          %s137 = smul.addr %s136, 4
          %s138 = scalar_lea.vmem %s0, %s137
        $region28: #{rres_block_forward.1} parent=23 // pred_fallthru
          _
      $region24: #{rres_block_forward.1} parent=5 // pred_fallthru
        _
      %p139 = scmp.le.s32.totalorder 1, %s12
      %p140 = scmp.lt.s32.totalorder %s12, 3
      %p141 = pnand %p139, %p140
      %p142 = pneg %p141
      // Predicated region
      $region29: #{rres_block_forward.1} parent=5 // pred_check
        _
      $region30: #{rres_block_forward.1} parent=5 // pred_check_branch
        %144 = sbr.rel (%p141) target = $region32
      $region31: #{rres_block_forward.1} parent=5 // pred_region
        %s145 = ssub.s32 %s12, 1
        %p146 = scmp.lt.s32.totalorder %s17, 1
        %s147 = scalar_select %p146, %s17, 1
        %s148 = smul.addr %s147, 54
        %s149 = smul.addr %s148, 4
        %s150 = scalar_lea.vmem %s0, %s149
        %p151 = pneg %p38
        %p152 = pneg %p35
        %p153 = pneg %p59
        %p154 = pneg %p56
        %p155 = pneg %p80
        %p156 = pneg %p77
        %p157 = pneg %p106
        %p158 = pneg %p103
        %s159 = sand.u32 %s93, 1
        %s160 = scalar_lea.sflag [#allocation6], %s159
        %s161 = sand.u32 %s93, 1
        %s162 = smul.addr %s161, 256
        %s163 = scalar_lea.vmem [#allocation5], %s162
        %p164 = scmp.lt.s32.totalorder %s17, 1
        %s165 = scalar_select %p164, %s17, 1
        %s166 = smul.addr %s165, 54
        %s167 = smul.addr %s166, 4
        %s168 = scalar_lea.vmem %s0, %s167
        %v170 = vld [vmem:[%s168] sm:$0xf]
        %v171 = vld [vmem:[%s168 + $0x4] sm:$0xf]
        %v172 = vld [vmem:[%s168 + $0xc] sm:$0xf]
        %v173 = vld [vmem:[%s168 + $0x10] sm:$0xf]
        %v174 = vld [vmem:[%s168 + $0x18] sm:$0xf]
        %v175 = vld [vmem:[%s168 + $0x1c] sm:$0xf]
        %v176 = vld [vmem:[%s168 + $0x24] sm:$0xf]
        %v177 = vld [vmem:[%s168 + $0x28] sm:$0xf]
        %v178 = vld [vmem:[%s168 + $0x30] sm:$0xf]
        %v179 = vld [vmem:[%s168 + $0x34] sm:$0xf]
        %v180 = vld [vmem:[%s168 + $0x3c] sm:$0xf]
        %v181 = vld [vmem:[%s168 + $0x40] sm:$0xf]
        %v182 = vld [vmem:[%s168 + $0x48] sm:$0xf]
        %v183 = vld [vmem:[%s168 + $0x4c] sm:$0xf]
        %v184 = vld [vmem:[%s168 + $0x54] sm:$0xf]
        %v185 = vld [vmem:[%s168 + $0x58] sm:$0xf]
        %v186 = vld [vmem:[%s168 + $0x60] sm:$0xf]
        %v187 = vld [vmem:[%s168 + $0x64] sm:$0xf]
        %v188 = vld [vmem:[%s168 + $0x6c] sm:$0xf]
        %v189 = vld [vmem:[%s168 + $0x70] sm:$0xf]
        %v190 = vld [vmem:[%s168 + $0x78] sm:$0xf]
        %v191 = vld [vmem:[%s168 + $0x7c] sm:$0xf]
        %v192 = vld [vmem:[%s168 + $0x84] sm:$0xf]
        %v193 = vld [vmem:[%s168 + $0x88] sm:$0xf]
        %v194 = vld [vmem:[%s168 + $0x90] sm:$0xf]
        %v195 = vld [vmem:[%s168 + $0x94] sm:$0xf]
        %v196 = vld [vmem:[%s168 + $0x9c] sm:$0xf]
        %v197 = vld [vmem:[%s168 + $0xa0] sm:$0xf]
        %v198 = vld [vmem:[%s168 + $0xa8] sm:$0xf]
        %v199 = vld [vmem:[%s168 + $0xac] sm:$0xf]
        %v200 = vld [vmem:[%s168 + $0xb4] sm:$0xf]
        %v201 = vld [vmem:[%s168 + $0xb8] sm:$0xf]
        %v202 = vld [vmem:[%s168 + $0xc0] sm:$0xf]
        %v203 = vld [vmem:[%s168 + $0xc4] sm:$0xf]
        %v204 = vld [vmem:[%s168 + $0xcc] sm:$0xf]
        %v205 = vld [vmem:[%s168 + $0xd0] sm:$0xf]
        %v242 = vunpack.c.l.b16 %v170
        %v243 = vunpack.c.l.b16 %v171
        %v244 = vunpack.c.l.b16 %v172
        %v245 = vunpack.c.l.b16 %v173
        %v246 = vunpack.c.l.b16 %v174
        %v247 = vunpack.c.l.b16 %v175
        %v248 = vunpack.c.l.b16 %v176
        %v249 = vunpack.c.l.b16 %v177
        %v250 = vunpack.c.l.b16 %v178
        %v251 = vunpack.c.l.b16 %v179
        %v252 = vunpack.c.l.b16 %v180
        %v253 = vunpack.c.l.b16 %v181
        %v254 = vunpack.c.l.b16 %v182
        %v255 = vunpack.c.l.b16 %v183
        %v256 = vunpack.c.l.b16 %v184
        %v257 = vunpack.c.l.b16 %v185
        %v258 = vunpack.c.l.b16 %v186
        %v259 = vunpack.c.l.b16 %v187
        %v260 = vunpack.c.l.b16 %v188
        %v261 = vunpack.c.l.b16 %v189
        %v262 = vunpack.c.l.b16 %v190
        %v263 = vunpack.c.l.b16 %v191
        %v264 = vunpack.c.l.b16 %v192
        %v265 = vunpack.c.l.b16 %v193
        %v266 = vunpack.c.l.b16 %v194
        %v267 = vunpack.c.l.b16 %v195
        %v268 = vunpack.c.l.b16 %v196
        %v269 = vunpack.c.l.b16 %v197
        %v270 = vunpack.c.l.b16 %v198
        %v271 = vunpack.c.l.b16 %v199
        %v272 = vunpack.c.l.b16 %v200
        %v273 = vunpack.c.l.b16 %v201
        %v274 = vunpack.c.l.b16 %v202
        %v275 = vunpack.c.l.b16 %v203
        %v276 = vunpack.c.l.b16 %v204
        %v277 = vunpack.c.l.b16 %v205
        %v278 = vpack.c.b16 %v243, %v242
        %v279 = vpack.c.b16 %v245, %v244
        %v280 = vpack.c.b16 %v247, %v246
        %v281 = vpack.c.b16 %v249, %v248
        %v282 = vpack.c.b16 %v251, %v250
        %v283 = vpack.c.b16 %v253, %v252
        %v284 = vpack.c.b16 %v255, %v254
        %v285 = vpack.c.b16 %v257, %v256
        %v286 = vpack.c.b16 %v259, %v258
        %v287 = vpack.c.b16 %v261, %v260
        %v288 = vpack.c.b16 %v263, %v262
        %v289 = vpack.c.b16 %v265, %v264
        %v290 = vpack.c.b16 %v267, %v266
        %v291 = vpack.c.b16 %v269, %v268
        %v292 = vpack.c.b16 %v271, %v270
        %v293 = vpack.c.b16 %v273, %v272
        %v294 = vpack.c.b16 %v275, %v274
        %v295 = vpack.c.b16 %v277, %v276
        %314 = vst [vmem:[#allocation2] sm:$0xff] %v278
        %315 = vst [vmem:[#allocation2 + $0x18] sm:$0xff] %v279
        %316 = vst [vmem:[#allocation2 + $0x30] sm:$0xff] %v280
        %317 = vst [vmem:[#allocation2 + $0x48] sm:$0xff] %v281
        %318 = vst [vmem:[#allocation2 + $0x60] sm:$0xff] %v282
        %319 = vst [vmem:[#allocation2 + $0x78] sm:$0xff] %v283
        %320 = vst [vmem:[#allocation2 + $0x90] sm:$0xff] %v284
        %321 = vst [vmem:[#allocation2 + $0xa8] sm:$0xff] %v285
        %322 = vst [vmem:[#allocation2 + $0xc0] sm:$0xff] %v286
        %323 = vst [vmem:[#allocation2 + $0xd8] sm:$0xff] %v287
        %324 = vst [vmem:[#allocation2 + $0xf0] sm:$0xff] %v288
        %325 = vst [vmem:[#allocation2 + $0x108] sm:$0xff] %v289
        %326 = vst [vmem:[#allocation2 + $0x120] sm:$0xff] %v290
        %327 = vst [vmem:[#allocation2 + $0x138] sm:$0xff] %v291
        %328 = vst [vmem:[#allocation2 + $0x150] sm:$0xff] %v292
        %329 = vst [vmem:[#allocation2 + $0x168] sm:$0xff] %v293
        %330 = vst [vmem:[#allocation2 + $0x180] sm:$0xff] %v294
        %331 = vst [vmem:[#allocation2 + $0x198] sm:$0xff] %v295
        %v332 = vld [vmem:[%s168] sm:$0xf]
        %v333 = vld [vmem:[%s168 + $0x4] sm:$0xf]
        %v334 = vld [vmem:[%s168 + $0x8] sm:$0x1]
        %v335 = vld [vmem:[%s168 + $0xc] sm:$0xf]
        %v336 = vld [vmem:[%s168 + $0x10] sm:$0xf]
        %v337 = vld [vmem:[%s168 + $0x14] sm:$0x1]
        %v338 = vld [vmem:[%s168 + $0x18] sm:$0xf]
        %v339 = vld [vmem:[%s168 + $0x1c] sm:$0xf]
        %v340 = vld [vmem:[%s168 + $0x20] sm:$0x1]
        %v341 = vld [vmem:[%s168 + $0x24] sm:$0xf]
        %v342 = vld [vmem:[%s168 + $0x28] sm:$0xf]
        %v343 = vld [vmem:[%s168 + $0x2c] sm:$0x1]
        %v344 = vld [vmem:[%s168 + $0x30] sm:$0xf]
        %v345 = vld [vmem:[%s168 + $0x34] sm:$0xf]
        %v346 = vld [vmem:[%s168 + $0x38] sm:$0x1]
        %v347 = vld [vmem:[%s168 + $0x3c] sm:$0xf]
        %v348 = vld [vmem:[%s168 + $0x40] sm:$0xf]
        %v349 = vld [vmem:[%s168 + $0x44] sm:$0x1]
        %v350 = vld [vmem:[%s168 + $0x48] sm:$0xf]
        %v351 = vld [vmem:[%s168 + $0x4c] sm:$0xf]
        %v352 = vld [vmem:[%s168 + $0x50] sm:$0x1]
        %v353 = vld [vmem:[%s168 + $0x54] sm:$0xf]
        %v354 = vld [vmem:[%s168 + $0x58] sm:$0xf]
        %v355 = vld [vmem:[%s168 + $0x5c] sm:$0x1]
        %v356 = vld [vmem:[%s168 + $0x60] sm:$0xf]
        %v357 = vld [vmem:[%s168 + $0x64] sm:$0xf]
        %v358 = vld [vmem:[%s168 + $0x68] sm:$0x1]
        %v359 = vld [vmem:[%s168 + $0x6c] sm:$0xf]
        %v360 = vld [vmem:[%s168 + $0x70] sm:$0xf]
        %v361 = vld [vmem:[%s168 + $0x74] sm:$0x1]
        %v362 = vld [vmem:[%s168 + $0x78] sm:$0xf]
        %v363 = vld [vmem:[%s168 + $0x7c] sm:$0xf]
        %v364 = vld [vmem:[%s168 + $0x80] sm:$0x1]
        %v365 = vld [vmem:[%s168 + $0x84] sm:$0xf]
        %v366 = vld [vmem:[%s168 + $0x88] sm:$0xf]
        %v367 = vld [vmem:[%s168 + $0x8c] sm:$0x1]
        %v368 = vld [vmem:[%s168 + $0x90] sm:$0xf]
        %v369 = vld [vmem:[%s168 + $0x94] sm:$0xf]
        %v370 = vld [vmem:[%s168 + $0x98] sm:$0x1]
        %v371 = vld [vmem:[%s168 + $0x9c] sm:$0xf]
        %v372 = vld [vmem:[%s168 + $0xa0] sm:$0xf]
        %v373 = vld [vmem:[%s168 + $0xa4] sm:$0x1]
        %v374 = vld [vmem:[%s168 + $0xa8] sm:$0xf]
        %v375 = vld [vmem:[%s168 + $0xac] sm:$0xf]
        %v376 = vld [vmem:[%s168 + $0xb0] sm:$0x1]
        %v377 = vld [vmem:[%s168 + $0xb4] sm:$0xf]
        %v378 = vld [vmem:[%s168 + $0xb8] sm:$0xf]
        %v379 = vld [vmem:[%s168 + $0xbc] sm:$0x1]
        %v380 = vld [vmem:[%s168 + $0xc0] sm:$0xf]
        %v381 = vld [vmem:[%s168 + $0xc4] sm:$0xf]
        %v382 = vld [vmem:[%s168 + $0xc8] sm:$0x1]
        %v383 = vld [vmem:[%s168 + $0xcc] sm:$0xf]
        %v384 = vld [vmem:[%s168 + $0xd0] sm:$0xf]
        %v385 = vld [vmem:[%s168 + $0xd4] sm:$0x1]
        %vm386 = vsmask.f32 3328
        %vm387 = vsmask.f32 7440
        %vm388 = vmor %vm386, %vm387
        %v390 = vshrl.u32 %v332, 16
        %v392 = vrot.slane %v390, 4
        %v393 = vshll.u32 %v332, 16
        %v395 = vrot.slane %v393, 5
        %v396 = vor.u32 %v392, %v395
        %v397 = vrot.slane %v396, 4
        %v399 = vshll.u32 %v333, 16
        %v401 = vrot.slane %v399, 5
        %v402 = vsel %vm388, %v397, %v401
        %v403 = vshrl.u32 %v333, 16
        %v405 = vrot.slane %v403, 4
        %v406 = vor.u32 %v405, %v401
        %v407 = vrot.slane %v406, 4
        %v409 = vshll.u32 %v334, 16
        %v411 = vrot.slane %v409, 5
        %v412 = vsel %vm388, %v407, %v411
        %v414 = vshrl.u32 %v335, 16
        %v416 = vrot.slane %v414, 4
        %v417 = vshll.u32 %v335, 16
        %v419 = vrot.slane %v417, 5
        %v420 = vor.u32 %v416, %v419
        %v421 = vrot.slane %v420, 4
        %v423 = vshll.u32 %v336, 16
        %v425 = vrot.slane %v423, 5
        %v426 = vsel %vm388, %v421, %v425
        %v427 = vshrl.u32 %v336, 16
        %v429 = vrot.slane %v427, 4
        %v430 = vor.u32 %v429, %v425
        %v431 = vrot.slane %v430, 4
        %v433 = vshll.u32 %v337, 16
        %v435 = vrot.slane %v433, 5
        %v436 = vsel %vm388, %v431, %v435
        %v438 = vshrl.u32 %v338, 16
        %v440 = vrot.slane %v438, 4
        %v441 = vshll.u32 %v338, 16
        %v443 = vrot.slane %v441, 5
        %v444 = vor.u32 %v440, %v443
        %v445 = vrot.slane %v444, 4
        %v447 = vshll.u32 %v339, 16
        %v449 = vrot.slane %v447, 5
        %v450 = vsel %vm388, %v445, %v449
        %v451 = vshrl.u32 %v339, 16
        %v453 = vrot.slane %v451, 4
        %v454 = vor.u32 %v453, %v449
        %v455 = vrot.slane %v454, 4
        %v457 = vshll.u32 %v340, 16
        %v459 = vrot.slane %v457, 5
        %v460 = vsel %vm388, %v455, %v459
        %v462 = vshrl.u32 %v341, 16
        %v464 = vrot.slane %v462, 4
        %v465 = vshll.u32 %v341, 16
        %v467 = vrot.slane %v465, 5
        %v468 = vor.u32 %v464, %v467
        %v469 = vrot.slane %v468, 4
        %v471 = vshll.u32 %v342, 16
        %v473 = vrot.slane %v471, 5
        %v474 = vsel %vm388, %v469, %v473
        %v475 = vshrl.u32 %v342, 16
        %v477 = vrot.slane %v475, 4
        %v478 = vor.u32 %v477, %v473
        %v479 = vrot.slane %v478, 4
        %v481 = vshll.u32 %v343, 16
        %v483 = vrot.slane %v481, 5
        %v484 = vsel %vm388, %v479, %v483
        %v486 = vshrl.u32 %v344, 16
        %v488 = vrot.slane %v486, 4
        %v489 = vshll.u32 %v344, 16
        %v491 = vrot.slane %v489, 5
        %v492 = vor.u32 %v488, %v491
        %v493 = vrot.slane %v492, 4
        %v495 = vshll.u32 %v345, 16
        %v497 = vrot.slane %v495, 5
        %v498 = vsel %vm388, %v493, %v497
        %v499 = vshrl.u32 %v345, 16
        %v501 = vrot.slane %v499, 4
        %v502 = vor.u32 %v501, %v497
        %v503 = vrot.slane %v502, 4
        %v505 = vshll.u32 %v346, 16
        %v507 = vrot.slane %v505, 5
        %v508 = vsel %vm388, %v503, %v507
        %v510 = vshrl.u32 %v347, 16
        %v512 = vrot.slane %v510, 4
        %v513 = vshll.u32 %v347, 16
        %v515 = vrot.slane %v513, 5
        %v516 = vor.u32 %v512, %v515
        %v517 = vrot.slane %v516, 4
        %v519 = vshll.u32 %v348, 16
        %v521 = vrot.slane %v519, 5
        %v522 = vsel %vm388, %v517, %v521
        %v523 = vshrl.u32 %v348, 16
        %v525 = vrot.slane %v523, 4
        %v526 = vor.u32 %v525, %v521
        %v527 = vrot.slane %v526, 4
        %v529 = vshll.u32 %v349, 16
        %v531 = vrot.slane %v529, 5
        %v532 = vsel %vm388, %v527, %v531
        %v534 = vshrl.u32 %v350, 16
        %v536 = vrot.slane %v534, 4
        %v537 = vshll.u32 %v350, 16
        %v539 = vrot.slane %v537, 5
        %v540 = vor.u32 %v536, %v539
        %v541 = vrot.slane %v540, 4
        %v543 = vshll.u32 %v351, 16
        %v545 = vrot.slane %v543, 5
        %v546 = vsel %vm388, %v541, %v545
        %v547 = vshrl.u32 %v351, 16
        %v549 = vrot.slane %v547, 4
        %v550 = vor.u32 %v549, %v545
        %v551 = vrot.slane %v550, 4
        %v553 = vshll.u32 %v352, 16
        %v555 = vrot.slane %v553, 5
        %v556 = vsel %vm388, %v551, %v555
        %v558 = vshrl.u32 %v353, 16
        %v560 = vrot.slane %v558, 4
        %v561 = vshll.u32 %v353, 16
        %v563 = vrot.slane %v561, 5
        %v564 = vor.u32 %v560, %v563
        %v565 = vrot.slane %v564, 4
        %v567 = vshll.u32 %v354, 16
        %v569 = vrot.slane %v567, 5
        %v570 = vsel %vm388, %v565, %v569
        %v571 = vshrl.u32 %v354, 16
        %v573 = vrot.slane %v571, 4
        %v574 = vor.u32 %v573, %v569
        %v575 = vrot.slane %v574, 4
        %v577 = vshll.u32 %v355, 16
        %v579 = vrot.slane %v577, 5
        %v580 = vsel %vm388, %v575, %v579
        %v582 = vshrl.u32 %v356, 16
        %v584 = vrot.slane %v582, 4
        %v585 = vshll.u32 %v356, 16
        %v587 = vrot.slane %v585, 5
        %v588 = vor.u32 %v584, %v587
        %v589 = vrot.slane %v588, 4
        %v591 = vshll.u32 %v357, 16
        %v593 = vrot.slane %v591, 5
        %v594 = vsel %vm388, %v589, %v593
        %v595 = vshrl.u32 %v357, 16
        %v597 = vrot.slane %v595, 4
        %v598 = vor.u32 %v597, %v593
        %v599 = vrot.slane %v598, 4
        %v601 = vshll.u32 %v358, 16
        %v603 = vrot.slane %v601, 5
        %v604 = vsel %vm388, %v599, %v603
        %v606 = vshrl.u32 %v359, 16
        %v608 = vrot.slane %v606, 4
        %v609 = vshll.u32 %v359, 16
        %v611 = vrot.slane %v609, 5
        %v612 = vor.u32 %v608, %v611
        %v613 = vrot.slane %v612, 4
        %v615 = vshll.u32 %v360, 16
        %v617 = vrot.slane %v615, 5
        %v618 = vsel %vm388, %v613, %v617
        %v619 = vshrl.u32 %v360, 16
        %v621 = vrot.slane %v619, 4
        %v622 = vor.u32 %v621, %v617
        %v623 = vrot.slane %v622, 4
        %v625 = vshll.u32 %v361, 16
        %v627 = vrot.slane %v625, 5
        %v628 = vsel %vm388, %v623, %v627
        %v630 = vshrl.u32 %v362, 16
        %v632 = vrot.slane %v630, 4
        %v633 = vshll.u32 %v362, 16
        %v635 = vrot.slane %v633, 5
        %v636 = vor.u32 %v632, %v635
        %v637 = vrot.slane %v636, 4
        %v639 = vshll.u32 %v363, 16
        %v641 = vrot.slane %v639, 5
        %v642 = vsel %vm388, %v637, %v641
        %v643 = vshrl.u32 %v363, 16
        %v645 = vrot.slane %v643, 4
        %v646 = vor.u32 %v645, %v641
        %v647 = vrot.slane %v646, 4
        %v649 = vshll.u32 %v364, 16
        %v651 = vrot.slane %v649, 5
        %v652 = vsel %vm388, %v647, %v651
        %v654 = vshrl.u32 %v365, 16
        %v656 = vrot.slane %v654, 4
        %v657 = vshll.u32 %v365, 16
        %v659 = vrot.slane %v657, 5
        %v660 = vor.u32 %v656, %v659
        %v661 = vrot.slane %v660, 4
        %v663 = vshll.u32 %v366, 16
        %v665 = vrot.slane %v663, 5
        %v666 = vsel %vm388, %v661, %v665
        %v667 = vshrl.u32 %v366, 16
        %v669 = vrot.slane %v667, 4
        %v670 = vor.u32 %v669, %v665
        %v671 = vrot.slane %v670, 4
        %v673 = vshll.u32 %v367, 16
        %v675 = vrot.slane %v673, 5
        %v676 = vsel %vm388, %v671, %v675
        %v678 = vshrl.u32 %v368, 16
        %v680 = vrot.slane %v678, 4
        %v681 = vshll.u32 %v368, 16
        %v683 = vrot.slane %v681, 5
        %v684 = vor.u32 %v680, %v683
        %v685 = vrot.slane %v684, 4
        %v687 = vshll.u32 %v369, 16
        %v689 = vrot.slane %v687, 5
        %v690 = vsel %vm388, %v685, %v689
        %v691 = vshrl.u32 %v369, 16
        %v693 = vrot.slane %v691, 4
        %v694 = vor.u32 %v693, %v689
        %v695 = vrot.slane %v694, 4
        %v697 = vshll.u32 %v370, 16
        %v699 = vrot.slane %v697, 5
        %v700 = vsel %vm388, %v695, %v699
        %v702 = vshrl.u32 %v371, 16
        %v704 = vrot.slane %v702, 4
        %v705 = vshll.u32 %v371, 16
        %v707 = vrot.slane %v705, 5
        %v708 = vor.u32 %v704, %v707
        %v709 = vrot.slane %v708, 4
        %v711 = vshll.u32 %v372, 16
        %v713 = vrot.slane %v711, 5
        %v714 = vsel %vm388, %v709, %v713
        %v715 = vshrl.u32 %v372, 16
        %v717 = vrot.slane %v715, 4
        %v718 = vor.u32 %v717, %v713
        %v719 = vrot.slane %v718, 4
        %v721 = vshll.u32 %v373, 16
        %v723 = vrot.slane %v721, 5
        %v724 = vsel %vm388, %v719, %v723
        %v726 = vshrl.u32 %v374, 16
        %v728 = vrot.slane %v726, 4
        %v729 = vshll.u32 %v374, 16
        %v731 = vrot.slane %v729, 5
        %v732 = vor.u32 %v728, %v731
        %v733 = vrot.slane %v732, 4
        %v735 = vshll.u32 %v375, 16
        %v737 = vrot.slane %v735, 5
        %v738 = vsel %vm388, %v733, %v737
        %v739 = vshrl.u32 %v375, 16
        %v741 = vrot.slane %v739, 4
        %v742 = vor.u32 %v741, %v737
        %v743 = vrot.slane %v742, 4
        %v745 = vshll.u32 %v376, 16
        %v747 = vrot.slane %v745, 5
        %v748 = vsel %vm388, %v743, %v747
        %v750 = vshrl.u32 %v377, 16
        %v752 = vrot.slane %v750, 4
        %v753 = vshll.u32 %v377, 16
        %v755 = vrot.slane %v753, 5
        %v756 = vor.u32 %v752, %v755
        %v757 = vrot.slane %v756, 4
        %v759 = vshll.u32 %v378, 16
        %v761 = vrot.slane %v759, 5
        %v762 = vsel %vm388, %v757, %v761
        %v763 = vshrl.u32 %v378, 16
        %v765 = vrot.slane %v763, 4
        %v766 = vor.u32 %v765, %v761
        %v767 = vrot.slane %v766, 4
        %v769 = vshll.u32 %v379, 16
        %v771 = vrot.slane %v769, 5
        %v772 = vsel %vm388, %v767, %v771
        %v774 = vshrl.u32 %v380, 16
        %v776 = vrot.slane %v774, 4
        %v777 = vshll.u32 %v380, 16
        %v779 = vrot.slane %v777, 5
        %v780 = vor.u32 %v776, %v779
        %v781 = vrot.slane %v780, 4
        %v783 = vshll.u32 %v381, 16
        %v785 = vrot.slane %v783, 5
        %v786 = vsel %vm388, %v781, %v785
        %v787 = vshrl.u32 %v381, 16
        %v789 = vrot.slane %v787, 4
        %v790 = vor.u32 %v789, %v785
        %v791 = vrot.slane %v790, 4
        %v793 = vshll.u32 %v382, 16
        %v795 = vrot.slane %v793, 5
        %v796 = vsel %vm388, %v791, %v795
        %v798 = vshrl.u32 %v383, 16
        %v800 = vrot.slane %v798, 4
        %v801 = vshll.u32 %v383, 16
        %v803 = vrot.slane %v801, 5
        %v804 = vor.u32 %v800, %v803
        %v805 = vrot.slane %v804, 4
        %v807 = vshll.u32 %v384, 16
        %v809 = vrot.slane %v807, 5
        %v810 = vsel %vm388, %v805, %v809
        %v811 = vshrl.u32 %v384, 16
        %v813 = vrot.slane %v811, 4
        %v814 = vor.u32 %v813, %v809
        %v815 = vrot.slane %v814, 4
        %v817 = vshll.u32 %v385, 16
        %v819 = vrot.slane %v817, 5
        %v820 = vsel %vm388, %v815, %v819
        %v821 = vunpack.c.l.b16 %v402
        %v822 = vunpack.c.l.b16 %v412
        %v823 = vunpack.c.l.b16 %v426
        %v824 = vunpack.c.l.b16 %v436
        %v825 = vunpack.c.l.b16 %v450
        %v826 = vunpack.c.l.b16 %v460
        %v827 = vunpack.c.l.b16 %v474
        %v828 = vunpack.c.l.b16 %v484
        %v829 = vunpack.c.l.b16 %v498
        %v830 = vunpack.c.l.b16 %v508
        %v831 = vunpack.c.l.b16 %v522
        %v832 = vunpack.c.l.b16 %v532
        %v833 = vunpack.c.l.b16 %v546
        %v834 = vunpack.c.l.b16 %v556
        %v835 = vunpack.c.l.b16 %v570
        %v836 = vunpack.c.l.b16 %v580
        %v837 = vunpack.c.l.b16 %v594
        %v838 = vunpack.c.l.b16 %v604
        %v839 = vunpack.c.l.b16 %v618
        %v840 = vunpack.c.l.b16 %v628
        %v841 = vunpack.c.l.b16 %v642
        %v842 = vunpack.c.l.b16 %v652
        %v843 = vunpack.c.l.b16 %v666
        %v844 = vunpack.c.l.b16 %v676
        %v845 = vunpack.c.l.b16 %v690
        %v846 = vunpack.c.l.b16 %v700
        %v847 = vunpack.c.l.b16 %v714
        %v848 = vunpack.c.l.b16 %v724
        %v849 = vunpack.c.l.b16 %v738
        %v850 = vunpack.c.l.b16 %v748
        %v851 = vunpack.c.l.b16 %v762
        %v852 = vunpack.c.l.b16 %v772
        %v853 = vunpack.c.l.b16 %v786
        %v854 = vunpack.c.l.b16 %v796
        %v855 = vunpack.c.l.b16 %v810
        %v856 = vunpack.c.l.b16 %v820
        %v857 = vpack.c.b16 %v822, %v821
        %v858 = vpack.c.b16 %v824, %v823
        %v859 = vpack.c.b16 %v826, %v825
        %v860 = vpack.c.b16 %v828, %v827
        %v861 = vpack.c.b16 %v830, %v829
        %v862 = vpack.c.b16 %v832, %v831
        %v863 = vpack.c.b16 %v834, %v833
        %v864 = vpack.c.b16 %v836, %v835
        %v865 = vpack.c.b16 %v838, %v837
        %v866 = vpack.c.b16 %v840, %v839
        %v867 = vpack.c.b16 %v842, %v841
        %v868 = vpack.c.b16 %v844, %v843
        %v869 = vpack.c.b16 %v846, %v845
        %v870 = vpack.c.b16 %v848, %v847
        %v871 = vpack.c.b16 %v850, %v849
        %v872 = vpack.c.b16 %v852, %v851
        %v873 = vpack.c.b16 %v854, %v853
        %v874 = vpack.c.b16 %v856, %v855
        %893 = vst [vmem:[#allocation2 + $0x8] sm:$0xff] %v857
        %894 = vst [vmem:[#allocation2 + $0x20] sm:$0xff] %v858
        %895 = vst [vmem:[#allocation2 + $0x38] sm:$0xff] %v859
        %896 = vst [vmem:[#allocation2 + $0x50] sm:$0xff] %v860
        %897 = vst [vmem:[#allocation2 + $0x68] sm:$0xff] %v861
        %898 = vst [vmem:[#allocation2 + $0x80] sm:$0xff] %v862
        %899 = vst [vmem:[#allocation2 + $0x98] sm:$0xff] %v863
        %900 = vst [vmem:[#allocation2 + $0xb0] sm:$0xff] %v864
        %901 = vst [vmem:[#allocation2 + $0xc8] sm:$0xff] %v865
        %902 = vst [vmem:[#allocation2 + $0xe0] sm:$0xff] %v866
        %903 = vst [vmem:[#allocation2 + $0xf8] sm:$0xff] %v867
        %904 = vst [vmem:[#allocation2 + $0x110] sm:$0xff] %v868
        %905 = vst [vmem:[#allocation2 + $0x128] sm:$0xff] %v869
        %906 = vst [vmem:[#allocation2 + $0x140] sm:$0xff] %v870
        %907 = vst [vmem:[#allocation2 + $0x158] sm:$0xff] %v871
        %908 = vst [vmem:[#allocation2 + $0x170] sm:$0xff] %v872
        %909 = vst [vmem:[#allocation2 + $0x188] sm:$0xff] %v873
        %910 = vst [vmem:[#allocation2 + $0x1a0] sm:$0xff] %v874
        %v911 = vld [vmem:[%s168] sm:$0xe]
        %v912 = vld [vmem:[%s168 + $0x4] sm:$0xf]
        %v913 = vld [vmem:[%s168 + $0x8] sm:$0x1]
        %v914 = vld [vmem:[%s168 + $0xc] sm:$0xe]
        %v915 = vld [vmem:[%s168 + $0x10] sm:$0xf]
        %v916 = vld [vmem:[%s168 + $0x14] sm:$0x1]
        %v917 = vld [vmem:[%s168 + $0x18] sm:$0xe]
        %v918 = vld [vmem:[%s168 + $0x1c] sm:$0xf]
        %v919 = vld [vmem:[%s168 + $0x20] sm:$0x1]
        %v920 = vld [vmem:[%s168 + $0x24] sm:$0xe]
        %v921 = vld [vmem:[%s168 + $0x28] sm:$0xf]
        %v922 = vld [vmem:[%s168 + $0x2c] sm:$0x1]
        %v923 = vld [vmem:[%s168 + $0x30] sm:$0xe]
        %v924 = vld [vmem:[%s168 + $0x34] sm:$0xf]
        %v925 = vld [vmem:[%s168 + $0x38] sm:$0x1]
        %v926 = vld [vmem:[%s168 + $0x3c] sm:$0xe]
        %v927 = vld [vmem:[%s168 + $0x40] sm:$0xf]
        %v928 = vld [vmem:[%s168 + $0x44] sm:$0x1]
        %v929 = vld [vmem:[%s168 + $0x48] sm:$0xe]
        %v930 = vld [vmem:[%s168 + $0x4c] sm:$0xf]
        %v931 = vld [vmem:[%s168 + $0x50] sm:$0x1]
        %v932 = vld [vmem:[%s168 + $0x54] sm:$0xe]
        %v933 = vld [vmem:[%s168 + $0x58] sm:$0xf]
        %v934 = vld [vmem:[%s168 + $0x5c] sm:$0x1]
        %v935 = vld [vmem:[%s168 + $0x60] sm:$0xe]
        %v936 = vld [vmem:[%s168 + $0x64] sm:$0xf]
        %v937 = vld [vmem:[%s168 + $0x68] sm:$0x1]
        %v938 = vld [vmem:[%s168 + $0x6c] sm:$0xe]
        %v939 = vld [vmem:[%s168 + $0x70] sm:$0xf]
        %v940 = vld [vmem:[%s168 + $0x74] sm:$0x1]
        %v941 = vld [vmem:[%s168 + $0x78] sm:$0xe]
        %v942 = vld [vmem:[%s168 + $0x7c] sm:$0xf]
        %v943 = vld [vmem:[%s168 + $0x80] sm:$0x1]
        %v944 = vld [vmem:[%s168 + $0x84] sm:$0xe]
        %v945 = vld [vmem:[%s168 + $0x88] sm:$0xf]
        %v946 = vld [vmem:[%s168 + $0x8c] sm:$0x1]
        %v947 = vld [vmem:[%s168 + $0x90] sm:$0xe]
        %v948 = vld [vmem:[%s168 + $0x94] sm:$0xf]
        %v949 = vld [vmem:[%s168 + $0x98] sm:$0x1]
        %v950 = vld [vmem:[%s168 + $0x9c] sm:$0xe]
        %v951 = vld [vmem:[%s168 + $0xa0] sm:$0xf]
        %v952 = vld [vmem:[%s168 + $0xa4] sm:$0x1]
        %v953 = vld [vmem:[%s168 + $0xa8] sm:$0xe]
        %v954 = vld [vmem:[%s168 + $0xac] sm:$0xf]
        %v955 = vld [vmem:[%s168 + $0xb0] sm:$0x1]
        %v956 = vld [vmem:[%s168 + $0xb4] sm:$0xe]
        %v957 = vld [vmem:[%s168 + $0xb8] sm:$0xf]
        %v958 = vld [vmem:[%s168 + $0xbc] sm:$0x1]
        %v959 = vld [vmem:[%s168 + $0xc0] sm:$0xe]
        %v960 = vld [vmem:[%s168 + $0xc4] sm:$0xf]
        %v961 = vld [vmem:[%s168 + $0xc8] sm:$0x1]
        %v962 = vld [vmem:[%s168 + $0xcc] sm:$0xe]
        %v963 = vld [vmem:[%s168 + $0xd0] sm:$0xf]
        %v964 = vld [vmem:[%s168 + $0xd4] sm:$0x1]
        %vm1019 = vcmask 1042432
        %vm1020 = vcmask 1046532
        %vm1021 = vmor %vm1019, %vm1020
        %v1022 = vrot.slane %v911, 5
        %v1023 = vrot.slane %v1022, 4
        %v1024 = vrot.slane %v912, 5
        %v1025 = vsel %vm1021, %v1023, %v1024
        %v1026 = vrot.slane %v1024, 4
        %v1027 = vrot.slane %v913, 5
        %v1028 = vsel %vm1021, %v1026, %v1027
        %v1029 = vrot.slane %v914, 5
        %v1030 = vrot.slane %v1029, 4
        %v1031 = vrot.slane %v915, 5
        %v1032 = vsel %vm1021, %v1030, %v1031
        %v1033 = vrot.slane %v1031, 4
        %v1034 = vrot.slane %v916, 5
        %v1035 = vsel %vm1021, %v1033, %v1034
        %v1036 = vrot.slane %v917, 5
        %v1037 = vrot.slane %v1036, 4
        %v1038 = vrot.slane %v918, 5
        %v1039 = vsel %vm1021, %v1037, %v1038
        %v1040 = vrot.slane %v1038, 4
        %v1041 = vrot.slane %v919, 5
        %v1042 = vsel %vm1021, %v1040, %v1041
        %v1043 = vrot.slane %v920, 5
        %v1044 = vrot.slane %v1043, 4
        %v1045 = vrot.slane %v921, 5
        %v1046 = vsel %vm1021, %v1044, %v1045
        %v1047 = vrot.slane %v1045, 4
        %v1048 = vrot.slane %v922, 5
        %v1049 = vsel %vm1021, %v1047, %v1048
        %v1050 = vrot.slane %v923, 5
        %v1051 = vrot.slane %v1050, 4
        %v1052 = vrot.slane %v924, 5
        %v1053 = vsel %vm1021, %v1051, %v1052
        %v1054 = vrot.slane %v1052, 4
        %v1055 = vrot.slane %v925, 5
        %v1056 = vsel %vm1021, %v1054, %v1055
        %v1057 = vrot.slane %v926, 5
        %v1058 = vrot.slane %v1057, 4
        %v1059 = vrot.slane %v927, 5
        %v1060 = vsel %vm1021, %v1058, %v1059
        %v1061 = vrot.slane %v1059, 4
        %v1062 = vrot.slane %v928, 5
        %v1063 = vsel %vm1021, %v1061, %v1062
        %v1064 = vrot.slane %v929, 5
        %v1065 = vrot.slane %v1064, 4
        %v1066 = vrot.slane %v930, 5
        %v1067 = vsel %vm1021, %v1065, %v1066
        %v1068 = vrot.slane %v1066, 4
        %v1069 = vrot.slane %v931, 5
        %v1070 = vsel %vm1021, %v1068, %v1069
        %v1071 = vrot.slane %v932, 5
        %v1072 = vrot.slane %v1071, 4
        %v1073 = vrot.slane %v933, 5
        %v1074 = vsel %vm1021, %v1072, %v1073
        %v1075 = vrot.slane %v1073, 4
        %v1076 = vrot.slane %v934, 5
        %v1077 = vsel %vm1021, %v1075, %v1076
        %v1078 = vrot.slane %v935, 5
        %v1079 = vrot.slane %v1078, 4
        %v1080 = vrot.slane %v936, 5
        %v1081 = vsel %vm1021, %v1079, %v1080
        %v1082 = vrot.slane %v1080, 4
        %v1083 = vrot.slane %v937, 5
        %v1084 = vsel %vm1021, %v1082, %v1083
        %v1085 = vrot.slane %v938, 5
        %v1086 = vrot.slane %v1085, 4
        %v1087 = vrot.slane %v939, 5
        %v1088 = vsel %vm1021, %v1086, %v1087
        %v1089 = vrot.slane %v1087, 4
        %v1090 = vrot.slane %v940, 5
        %v1091 = vsel %vm1021, %v1089, %v1090
        %v1092 = vrot.slane %v941, 5
        %v1093 = vrot.slane %v1092, 4
        %v1094 = vrot.slane %v942, 5
        %v1095 = vsel %vm1021, %v1093, %v1094
        %v1096 = vrot.slane %v1094, 4
        %v1097 = vrot.slane %v943, 5
        %v1098 = vsel %vm1021, %v1096, %v1097
        %v1099 = vrot.slane %v944, 5
        %v1100 = vrot.slane %v1099, 4
        %v1101 = vrot.slane %v945, 5
        %v1102 = vsel %vm1021, %v1100, %v1101
        %v1103 = vrot.slane %v1101, 4
        %v1104 = vrot.slane %v946, 5
        %v1105 = vsel %vm1021, %v1103, %v1104
        %v1106 = vrot.slane %v947, 5
        %v1107 = vrot.slane %v1106, 4
        %v1108 = vrot.slane %v948, 5
        %v1109 = vsel %vm1021, %v1107, %v1108
        %v1110 = vrot.slane %v1108, 4
        %v1111 = vrot.slane %v949, 5
        %v1112 = vsel %vm1021, %v1110, %v1111
        %v1113 = vrot.slane %v950, 5
        %v1114 = vrot.slane %v1113, 4
        %v1115 = vrot.slane %v951, 5
        %v1116 = vsel %vm1021, %v1114, %v1115
        %v1117 = vrot.slane %v1115, 4
        %v1118 = vrot.slane %v952, 5
        %v1119 = vsel %vm1021, %v1117, %v1118
        %v1120 = vrot.slane %v953, 5
        %v1121 = vrot.slane %v1120, 4
        %v1122 = vrot.slane %v954, 5
        %v1123 = vsel %vm1021, %v1121, %v1122
        %v1124 = vrot.slane %v1122, 4
        %v1125 = vrot.slane %v955, 5
        %v1126 = vsel %vm1021, %v1124, %v1125
        %v1127 = vrot.slane %v956, 5
        %v1128 = vrot.slane %v1127, 4
        %v1129 = vrot.slane %v957, 5
        %v1130 = vsel %vm1021, %v1128, %v1129
        %v1131 = vrot.slane %v1129, 4
        %v1132 = vrot.slane %v958, 5
        %v1133 = vsel %vm1021, %v1131, %v1132
        %v1134 = vrot.slane %v959, 5
        %v1135 = vrot.slane %v1134, 4
        %v1136 = vrot.slane %v960, 5
        %v1137 = vsel %vm1021, %v1135, %v1136
        %v1138 = vrot.slane %v1136, 4
        %v1139 = vrot.slane %v961, 5
        %v1140 = vsel %vm1021, %v1138, %v1139
        %v1141 = vrot.slane %v962, 5
        %v1142 = vrot.slane %v1141, 4
        %v1143 = vrot.slane %v963, 5
        %v1144 = vsel %vm1021, %v1142, %v1143
        %v1145 = vrot.slane %v1143, 4
        %v1146 = vrot.slane %v964, 5
        %v1147 = vsel %vm1021, %v1145, %v1146
        %v1148 = vunpack.c.l.b16 %v1025
        %v1149 = vunpack.c.l.b16 %v1028
        %v1150 = vunpack.c.l.b16 %v1032
        %v1151 = vunpack.c.l.b16 %v1035
        %v1152 = vunpack.c.l.b16 %v1039
        %v1153 = vunpack.c.l.b16 %v1042
        %v1154 = vunpack.c.l.b16 %v1046
        %v1155 = vunpack.c.l.b16 %v1049
        %v1156 = vunpack.c.l.b16 %v1053
        %v1157 = vunpack.c.l.b16 %v1056
        %v1158 = vunpack.c.l.b16 %v1060
        %v1159 = vunpack.c.l.b16 %v1063
        %v1160 = vunpack.c.l.b16 %v1067
        %v1161 = vunpack.c.l.b16 %v1070
        %v1162 = vunpack.c.l.b16 %v1074
        %v1163 = vunpack.c.l.b16 %v1077
        %v1164 = vunpack.c.l.b16 %v1081
        %v1165 = vunpack.c.l.b16 %v1084
        %v1166 = vunpack.c.l.b16 %v1088
        %v1167 = vunpack.c.l.b16 %v1091
        %v1168 = vunpack.c.l.b16 %v1095
        %v1169 = vunpack.c.l.b16 %v1098
        %v1170 = vunpack.c.l.b16 %v1102
        %v1171 = vunpack.c.l.b16 %v1105
        %v1172 = vunpack.c.l.b16 %v1109
        %v1173 = vunpack.c.l.b16 %v1112
        %v1174 = vunpack.c.l.b16 %v1116
        %v1175 = vunpack.c.l.b16 %v1119
        %v1176 = vunpack.c.l.b16 %v1123
        %v1177 = vunpack.c.l.b16 %v1126
        %v1178 = vunpack.c.l.b16 %v1130
        %v1179 = vunpack.c.l.b16 %v1133
        %v1180 = vunpack.c.l.b16 %v1137
        %v1181 = vunpack.c.l.b16 %v1140
        %v1182 = vunpack.c.l.b16 %v1144
        %v1183 = vunpack.c.l.b16 %v1147
        %v1184 = vpack.c.b16 %v1149, %v1148
        %v1185 = vpack.c.b16 %v1151, %v1150
        %v1186 = vpack.c.b16 %v1153, %v1152
        %v1187 = vpack.c.b16 %v1155, %v1154
        %v1188 = vpack.c.b16 %v1157, %v1156
        %v1189 = vpack.c.b16 %v1159, %v1158
        %v1190 = vpack.c.b16 %v1161, %v1160
        %v1191 = vpack.c.b16 %v1163, %v1162
        %v1192 = vpack.c.b16 %v1165, %v1164
        %v1193 = vpack.c.b16 %v1167, %v1166
        %v1194 = vpack.c.b16 %v1169, %v1168
        %v1195 = vpack.c.b16 %v1171, %v1170
        %v1196 = vpack.c.b16 %v1173, %v1172
        %v1197 = vpack.c.b16 %v1175, %v1174
        %v1198 = vpack.c.b16 %v1177, %v1176
        %v1199 = vpack.c.b16 %v1179, %v1178
        %v1200 = vpack.c.b16 %v1181, %v1180
        %v1201 = vpack.c.b16 %v1183, %v1182
        %1220 = vst [vmem:[#allocation2 + $0x10] sm:$0xff] %v1184
        %1221 = vst [vmem:[#allocation2 + $0x28] sm:$0xff] %v1185
        %1222 = vst [vmem:[#allocation2 + $0x40] sm:$0xff] %v1186
        %1223 = vst [vmem:[#allocation2 + $0x58] sm:$0xff] %v1187
        %1224 = vst [vmem:[#allocation2 + $0x70] sm:$0xff] %v1188
        %1225 = vst [vmem:[#allocation2 + $0x88] sm:$0xff] %v1189
        %1226 = vst [vmem:[#allocation2 + $0xa0] sm:$0xff] %v1190
        %1227 = vst [vmem:[#allocation2 + $0xb8] sm:$0xff] %v1191
        %1228 = vst [vmem:[#allocation2 + $0xd0] sm:$0xff] %v1192
        %1229 = vst [vmem:[#allocation2 + $0xe8] sm:$0xff] %v1193
        %1230 = vst [vmem:[#allocation2 + $0x100] sm:$0xff] %v1194
        %1231 = vst [vmem:[#allocation2 + $0x118] sm:$0xff] %v1195
        %1232 = vst [vmem:[#allocation2 + $0x130] sm:$0xff] %v1196
        %1233 = vst [vmem:[#allocation2 + $0x148] sm:$0xff] %v1197
        %1234 = vst [vmem:[#allocation2 + $0x160] sm:$0xff] %v1198
        %1235 = vst [vmem:[#allocation2 + $0x178] sm:$0xff] %v1199
        %1236 = vst [vmem:[#allocation2 + $0x190] sm:$0xff] %v1200
        %1237 = vst [vmem:[#allocation2 + $0x1a8] sm:$0xff] %v1201
        %v1238 = vld [vmem:[#allocation2] sm:$0xff]
        %v1239 = vld [vmem:[#allocation2 + $0x8] sm:$0xff]
        %v1240 = vld [vmem:[#allocation2 + $0x10] sm:$0xff]
        %v1241 = vld [vmem:[#allocation2 + $0x18] sm:$0xff]
        %v1242 = vld [vmem:[#allocation2 + $0x20] sm:$0xff]
        %v1243 = vld [vmem:[#allocation2 + $0x28] sm:$0xff]
        %v1244 = vld [vmem:[#allocation2 + $0x30] sm:$0xff]
        %v1245 = vld [vmem:[#allocation2 + $0x38] sm:$0xff]
        %v1246 = vld [vmem:[#allocation2 + $0x40] sm:$0xff]
        %v1247 = vld [vmem:[#allocation2 + $0x48] sm:$0xff]
        %v1248 = vld [vmem:[#allocation2 + $0x50] sm:$0xff]
        %v1249 = vld [vmem:[#allocation2 + $0x58] sm:$0xff]
        %v1250 = vld [vmem:[#allocation2 + $0x60] sm:$0xff]
        %v1251 = vld [vmem:[#allocation2 + $0x68] sm:$0xff]
        %v1252 = vld [vmem:[#allocation2 + $0x70] sm:$0xff]
        %v1253 = vld [vmem:[#allocation2 + $0x78] sm:$0xff]
        %v1254 = vld [vmem:[#allocation2 + $0x80] sm:$0xff]
        %v1255 = vld [vmem:[#allocation2 + $0x88] sm:$0xff]
        %v1256 = vld [vmem:[#allocation2 + $0x90] sm:$0xff]
        %v1257 = vld [vmem:[#allocation2 + $0x98] sm:$0xff]
        %v1258 = vld [vmem:[#allocation2 + $0xa0] sm:$0xff]
        %v1259 = vld [vmem:[#allocation2 + $0xa8] sm:$0xff]
        %v1260 = vld [vmem:[#allocation2 + $0xb0] sm:$0xff]
        %v1261 = vld [vmem:[#allocation2 + $0xb8] sm:$0xff]
        %v1262 = vld [vmem:[#allocation2 + $0xc0] sm:$0xff]
        %v1263 = vld [vmem:[#allocation2 + $0xc8] sm:$0xff]
        %v1264 = vld [vmem:[#allocation2 + $0xd0] sm:$0xff]
        %v1265 = vld [vmem:[#allocation2 + $0xd8] sm:$0xff]
        %v1266 = vld [vmem:[#allocation2 + $0xe0] sm:$0xff]
        %v1267 = vld [vmem:[#allocation2 + $0xe8] sm:$0xff]
        %v1268 = vld [vmem:[#allocation2 + $0xf0] sm:$0xff]
        %v1269 = vld [vmem:[#allocation2 + $0xf8] sm:$0xff]
        %v1270 = vld [vmem:[#allocation2 + $0x100] sm:$0xff]
        %v1271 = vld [vmem:[#allocation2 + $0x108] sm:$0xff]
        %v1272 = vld [vmem:[#allocation2 + $0x110] sm:$0xff]
        %v1273 = vld [vmem:[#allocation2 + $0x118] sm:$0xff]
        %v1274 = vld [vmem:[#allocation2 + $0x120] sm:$0xff]
        %v1275 = vld [vmem:[#allocation2 + $0x128] sm:$0xff]
        %v1276 = vld [vmem:[#allocation2 + $0x130] sm:$0xff]
        %v1277 = vld [vmem:[#allocation2 + $0x138] sm:$0xff]
        %v1278 = vld [vmem:[#allocation2 + $0x140] sm:$0xff]
        %v1279 = vld [vmem:[#allocation2 + $0x148] sm:$0xff]
        %v1280 = vld [vmem:[#allocation2 + $0x150] sm:$0xff]
        %v1281 = vld [vmem:[#allocation2 + $0x158] sm:$0xff]
        %v1282 = vld [vmem:[#allocation2 + $0x160] sm:$0xff]
        %v1283 = vld [vmem:[#allocation2 + $0x168] sm:$0xff]
        %v1284 = vld [vmem:[#allocation2 + $0x170] sm:$0xff]
        %v1285 = vld [vmem:[#allocation2 + $0x178] sm:$0xff]
        %v1286 = vld [vmem:[%s1] sm:$0xf]
        %v1287 = vld [vmem:[%s1 + $0x4] sm:$0xf]
        %v1288 = vld [vmem:[%s1 + $0x8] sm:$0xf]
        %v1289 = vld [vmem:[%s1 + $0xc] sm:$0xf]
        %v1290 = vld [vmem:[%s1 + $0x10] sm:$0xf]
        %v1291 = vld [vmem:[%s1 + $0x14] sm:$0xf]
        %v1292 = vld [vmem:[%s1 + $0x18] sm:$0xf]
        %v1293 = vld [vmem:[%s1 + $0x1c] sm:$0xf]
        %v1294 = vld [vmem:[%s1 + $0x20] sm:$0xf]
        %v1295 = vld [vmem:[%s1 + $0x24] sm:$0xf]
        %v1296 = vld [vmem:[%s1 + $0x28] sm:$0xf]
        %v1297 = vld [vmem:[%s1 + $0x2c] sm:$0xf]
        %v1298 = vld [vmem:[%s1 + $0x30] sm:$0xf]
        %v1299 = vld [vmem:[%s1 + $0x34] sm:$0xf]
        %v1300 = vld [vmem:[%s1 + $0x38] sm:$0xf]
        %v1301 = vld [vmem:[%s1 + $0x3c] sm:$0xf]
        %v1302 = vld [vmem:[%s1 + $0x40] sm:$0xf]
        %v1303 = vld [vmem:[%s1 + $0x44] sm:$0xf]
        %v1304 = vld [vmem:[%s1 + $0x48] sm:$0xf]
        %v1305 = vld [vmem:[%s1 + $0x4c] sm:$0xf]
        %v1306 = vld [vmem:[%s1 + $0x50] sm:$0xf]
        %v1307 = vld [vmem:[%s1 + $0x54] sm:$0xf]
        %v1308 = vld [vmem:[%s1 + $0x58] sm:$0xf]
        %v1309 = vld [vmem:[%s1 + $0x5c] sm:$0xf]
        %v1310 = vld [vmem:[%s1 + $0x60] sm:$0xf]
        %v1311 = vld [vmem:[%s1 + $0x64] sm:$0xf]
        %v1312 = vld [vmem:[%s1 + $0x68] sm:$0xf]
        %v1313 = vld [vmem:[%s1 + $0x6c] sm:$0xf]
        %v1314 = vld [vmem:[%s1 + $0x70] sm:$0xf]
        %v1315 = vld [vmem:[%s1 + $0x74] sm:$0xf]
        %v1316 = vld [vmem:[%s1 + $0x78] sm:$0xf]
        %v1317 = vld [vmem:[%s1 + $0x7c] sm:$0xf]
        %v1318 = vld [vmem:[%s1 + $0x80] sm:$0xf]
        %v1319 = vld [vmem:[%s1 + $0x84] sm:$0xf]
        %v1320 = vld [vmem:[%s1 + $0x88] sm:$0xf]
        %v1321 = vld [vmem:[%s1 + $0x8c] sm:$0xf]
        %v1322 = vld [vmem:[%s1 + $0x90] sm:$0xf]
        %v1323 = vld [vmem:[%s1 + $0x94] sm:$0xf]
        %v1324 = vld [vmem:[%s1 + $0x98] sm:$0xf]
        %v1325 = vld [vmem:[%s1 + $0x9c] sm:$0xf]
        %v1326 = vld [vmem:[%s1 + $0xa0] sm:$0xf]
        %v1327 = vld [vmem:[%s1 + $0xa4] sm:$0xf]
        %v1328 = vld [vmem:[%s1 + $0xa8] sm:$0xf]
        %v1329 = vld [vmem:[%s1 + $0xac] sm:$0xf]
        %v1330 = vld [vmem:[%s1 + $0xb0] sm:$0xf]
        %v1331 = vld [vmem:[%s1 + $0xb4] sm:$0xf]
        %v1332 = vld [vmem:[%s1 + $0xb8] sm:$0xf]
        %v1333 = vld [vmem:[%s1 + $0xbc] sm:$0xf]
        %v1382 = vunpack.c.l.b16 %v1286
        %v1383 = vunpack.c.l.b16 %v1287
        %v1384 = vunpack.c.l.b16 %v1288
        %v1385 = vunpack.c.l.b16 %v1289
        %v1386 = vunpack.c.l.b16 %v1290
        %v1387 = vunpack.c.l.b16 %v1291
        %v1388 = vunpack.c.l.b16 %v1292
        %v1389 = vunpack.c.l.b16 %v1293
        %v1390 = vunpack.c.l.b16 %v1294
        %v1391 = vunpack.c.l.b16 %v1295
        %v1392 = vunpack.c.l.b16 %v1296
        %v1393 = vunpack.c.l.b16 %v1297
        %v1394 = vunpack.c.l.b16 %v1298
        %v1395 = vunpack.c.l.b16 %v1299
        %v1396 = vunpack.c.l.b16 %v1300
        %v1397 = vunpack.c.l.b16 %v1301
        %v1398 = vunpack.c.l.b16 %v1302
        %v1399 = vunpack.c.l.b16 %v1303
        %v1400 = vunpack.c.l.b16 %v1304
        %v1401 = vunpack.c.l.b16 %v1305
        %v1402 = vunpack.c.l.b16 %v1306
        %v1403 = vunpack.c.l.b16 %v1307
        %v1404 = vunpack.c.l.b16 %v1308
        %v1405 = vunpack.c.l.b16 %v1309
        %v1406 = vunpack.c.l.b16 %v1310
        %v1407 = vunpack.c.l.b16 %v1311
        %v1408 = vunpack.c.l.b16 %v1312
        %v1409 = vunpack.c.l.b16 %v1313
        %v1410 = vunpack.c.l.b16 %v1314
        %v1411 = vunpack.c.l.b16 %v1315
        %v1412 = vunpack.c.l.b16 %v1316
        %v1413 = vunpack.c.l.b16 %v1317
        %v1414 = vunpack.c.l.b16 %v1318
        %v1415 = vunpack.c.l.b16 %v1319
        %v1416 = vunpack.c.l.b16 %v1320
        %v1417 = vunpack.c.l.b16 %v1321
        %v1418 = vunpack.c.l.b16 %v1322
        %v1419 = vunpack.c.l.b16 %v1323
        %v1420 = vunpack.c.l.b16 %v1324
        %v1421 = vunpack.c.l.b16 %v1325
        %v1422 = vunpack.c.l.b16 %v1326
        %v1423 = vunpack.c.l.b16 %v1327
        %v1424 = vunpack.c.l.b16 %v1328
        %v1425 = vunpack.c.l.b16 %v1329
        %v1426 = vunpack.c.l.b16 %v1330
        %v1427 = vunpack.c.l.b16 %v1331
        %v1428 = vunpack.c.l.b16 %v1332
        %v1429 = vunpack.c.l.b16 %v1333
        %v1430 = vpack.c.b16 %v1383, %v1382
        %v1431 = vpack.c.b16 %v1385, %v1384
        %v1432 = vpack.c.b16 %v1387, %v1386
        %v1433 = vpack.c.b16 %v1389, %v1388
        %v1434 = vpack.c.b16 %v1391, %v1390
        %v1435 = vpack.c.b16 %v1393, %v1392
        %v1436 = vpack.c.b16 %v1395, %v1394
        %v1437 = vpack.c.b16 %v1397, %v1396
        %v1438 = vpack.c.b16 %v1399, %v1398
        %v1439 = vpack.c.b16 %v1401, %v1400
        %v1440 = vpack.c.b16 %v1403, %v1402
        %v1441 = vpack.c.b16 %v1405, %v1404
        %v1442 = vpack.c.b16 %v1407, %v1406
        %v1443 = vpack.c.b16 %v1409, %v1408
        %v1444 = vpack.c.b16 %v1411, %v1410
        %v1445 = vpack.c.b16 %v1413, %v1412
        %v1446 = vpack.c.b16 %v1415, %v1414
        %v1447 = vpack.c.b16 %v1417, %v1416
        %v1448 = vpack.c.b16 %v1419, %v1418
        %v1449 = vpack.c.b16 %v1421, %v1420
        %v1450 = vpack.c.b16 %v1423, %v1422
        %v1451 = vpack.c.b16 %v1425, %v1424
        %v1452 = vpack.c.b16 %v1427, %v1426
        %v1453 = vpack.c.b16 %v1429, %v1428
        %1478 = vmatprep.subr.bf16.mxu0 0
        %1479 = vmatpush1.bf16.msra.mxu0 %v1430
        %1480 = vmatprep.subr.bf16.mxu0 0
        %1481 = vmatpush1.bf16.msra.mxu0 %v1431
        %1482 = vmatprep.subr.bf16.mxu0 0
        %1483 = vmatpush1.bf16.msra.mxu0 %v1432
        %1484 = vmatprep.subr.bf16.mxu0 0
        %1485 = vmatpush1.bf16.msra.mxu0 %v1433
        %1486 = vmatprep.subr.bf16.mxu0 0
        %1487 = vmatpush1.bf16.msra.mxu0 %v1434
        %1488 = vmatprep.subr.bf16.mxu0 0
        %1489 = vmatpush1.bf16.msra.mxu0 %v1435
        %1490 = vmatprep.subr.bf16.mxu0 0
        %1491 = vmatpush1.bf16.msra.mxu0 %v1436
        %1492 = vmatprep.subr.bf16.mxu0 0
        %1493 = vmatpush1.bf16.msra.mxu0 %v1437
        %1494 = vmatprep.subr.bf16.mxu0 0
        %1495 = vmatpush1.bf16.msra.mxu0 %v1438
        %1496 = vmatprep.subr.bf16.mxu0 0
        %1497 = vmatpush1.bf16.msra.mxu0 %v1439
        %1498 = vmatprep.subr.bf16.mxu0 0
        %1499 = vmatpush1.bf16.msra.mxu0 %v1440
        %1500 = vmatprep.subr.bf16.mxu0 0
        %1501 = vmatpush1.bf16.msra.mxu0 %v1441
        %1502 = vmatprep.subr.bf16.mxu0 0
        %1503 = vmatpush1.bf16.msra.mxu0 %v1442
        %1504 = vmatprep.subr.bf16.mxu0 0
        %1505 = vmatpush1.bf16.msra.mxu0 %v1443
        %1506 = vmatprep.subr.bf16.mxu0 0
        %1507 = vmatpush1.bf16.msra.mxu0 %v1444
        %1508 = vmatprep.subr.bf16.mxu0 0
        %1509 = vmatpush1.bf16.msra.mxu0 %v1445
        %1510 = vmatprep.mubr.bf16.mxu0 %v1239
        %1511 = vmatmul.mubr.bf16.gmra.mrb[0].mxu0 %v1238
        %v1512 = vpop.f32.mrb[0].mxu0
        %v1513 = vadd.f32 0.0, %v1512
        %v1514 = vpop.f32.mrb[0].mxu0
        %v1515 = vpop.f32.mrb[0].mxu0
        %v1516 = vadd.f32 0.0, %v1515
        %v1517 = vpop.f32.mrb[0].mxu0
        %1518 = vmatprep.mubr.bf16.mxu0 %v1242
        %1519 = vmatmul.mubr.bf16.gmra.mrb[0].mxu0 %v1241
        %v1520 = vpop.f32.mrb[0].mxu0
        %v1521 = vadd.f32 0.0, %v1520
        %v1522 = vpop.f32.mrb[0].mxu0
        %v1523 = vpop.f32.mrb[0].mxu0
        %v1524 = vadd.f32 0.0, %v1523
        %v1525 = vpop.f32.mrb[0].mxu0
        %1526 = vmatprep.mubr.bf16.mxu0 %v1245
        %1527 = vmatmul.mubr.bf16.gmra.mrb[0].mxu0 %v1244
        %v1528 = vpop.f32.mrb[0].mxu0
        %v1529 = vadd.f32 0.0, %v1528
        %v1530 = vpop.f32.mrb[0].mxu0
        %v1531 = vpop.f32.mrb[0].mxu0
        %v1532 = vadd.f32 0.0, %v1531
        %v1533 = vpop.f32.mrb[0].mxu0
        %1534 = vmatprep.mubr.bf16.mxu0 %v1248
        %1535 = vmatmul.mubr.bf16.gmra.mrb[0].mxu0 %v1247
        %v1536 = vpop.f32.mrb[0].mxu0
        %v1537 = vadd.f32 0.0, %v1536
        %v1538 = vpop.f32.mrb[0].mxu0
        %v1539 = vpop.f32.mrb[0].mxu0
        %v1540 = vadd.f32 0.0, %v1539
        %v1541 = vpop.f32.mrb[0].mxu0
        %1542 = vmatprep.mubr.bf16.mxu0 %v1251
        %1543 = vmatmul.mubr.bf16.gmra.mrb[0].mxu0 %v1250
        %v1544 = vpop.f32.mrb[0].mxu0
        %v1545 = vadd.f32 0.0, %v1544
        %v1546 = vpop.f32.mrb[0].mxu0
        %v1547 = vpop.f32.mrb[0].mxu0
        %v1548 = vadd.f32 0.0, %v1547
        %v1549 = vpop.f32.mrb[0].mxu0
        %1550 = vmatprep.mubr.bf16.mxu0 %v1254
        %1551 = vmatmul.mubr.bf16.gmra.mrb[0].mxu0 %v1253
        %v1552 = vpop.f32.mrb[0].mxu0
        %v1553 = vadd.f32 0.0, %v1552
        %v1554 = vpop.f32.mrb[0].mxu0
        %v1555 = vpop.f32.mrb[0].mxu0
        %v1556 = vadd.f32 0.0, %v1555
        %v1557 = vpop.f32.mrb[0].mxu0
        %1558 = vmatprep.mubr.bf16.mxu0 %v1257
        %1559 = vmatmul.mubr.bf16.gmra.mrb[0].mxu0 %v1256
        %v1560 = vpop.f32.mrb[0].mxu0
        %v1561 = vadd.f32 0.0, %v1560
        %v1562 = vpop.f32.mrb[0].mxu0
        %v1563 = vpop.f32.mrb[0].mxu0
        %v1564 = vadd.f32 0.0, %v1563
        %v1565 = vpop.f32.mrb[0].mxu0
        %1566 = vmatprep.mubr.bf16.mxu0 %v1260
        %1567 = vmatmul.mubr.bf16.gmra.mrb[0].mxu0 %v1259
        %v1568 = vpop.f32.mrb[0].mxu0
        %v1569 = vadd.f32 0.0, %v1568
        %v1570 = vpop.f32.mrb[0].mxu0
        %v1571 = vpop.f32.mrb[0].mxu0
        %v1572 = vadd.f32 0.0, %v1571
        %v1573 = vpop.f32.mrb[0].mxu0
        %1574 = vmatprep.mubr.bf16.mxu0 %v1263
        %1575 = vmatmul.mubr.bf16.gmra.mrb[0].mxu0 %v1262
        %v1576 = vpop.f32.mrb[0].mxu0
        %v1577 = vadd.f32 0.0, %v1576
        %v1578 = vpop.f32.mrb[0].mxu0
        %v1579 = vpop.f32.mrb[0].mxu0
        %v1580 = vadd.f32 0.0, %v1579
        %v1581 = vpop.f32.mrb[0].mxu0
        %1582 = vmatprep.mubr.bf16.mxu0 %v1266
        %1583 = vmatmul.mubr.bf16.gmra.mrb[0].mxu0 %v1265
        %v1584 = vpop.f32.mrb[0].mxu0
        %v1585 = vadd.f32 0.0, %v1584
        %v1586 = vpop.f32.mrb[0].mxu0
        %v1587 = vpop.f32.mrb[0].mxu0
        %v1588 = vadd.f32 0.0, %v1587
        %v1589 = vpop.f32.mrb[0].mxu0
        %1590 = vmatprep.mubr.bf16.mxu0 %v1269
        %1591 = vmatmul.mubr.bf16.gmra.mrb[0].mxu0 %v1268
        %v1592 = vpop.f32.mrb[0].mxu0
        %v1593 = vadd.f32 0.0, %v1592
        %v1594 = vpop.f32.mrb[0].mxu0
        %v1595 = vpop.f32.mrb[0].mxu0
        %v1596 = vadd.f32 0.0, %v1595
        %v1597 = vpop.f32.mrb[0].mxu0
        %1598 = vmatprep.mubr.bf16.mxu0 %v1272
        %1599 = vmatmul.mubr.bf16.gmra.mrb[0].mxu0 %v1271
        %v1600 = vpop.f32.mrb[0].mxu0
        %v1601 = vadd.f32 0.0, %v1600
        %v1602 = vpop.f32.mrb[0].mxu0
        %v1603 = vpop.f32.mrb[0].mxu0
        %v1604 = vadd.f32 0.0, %v1603
        %v1605 = vpop.f32.mrb[0].mxu0
        %1606 = vmatprep.mubr.bf16.mxu0 %v1275
        %1607 = vmatmul.mubr.bf16.gmra.mrb[0].mxu0 %v1274
        %v1608 = vpop.f32.mrb[0].mxu0
        %v1609 = vadd.f32 0.0, %v1608
        %v1610 = vpop.f32.mrb[0].mxu0
        %v1611 = vpop.f32.mrb[0].mxu0
        %v1612 = vadd.f32 0.0, %v1611
        %v1613 = vpop.f32.mrb[0].mxu0
        %1614 = vmatprep.mubr.bf16.mxu0 %v1278
        %1615 = vmatmul.mubr.bf16.gmra.mrb[0].mxu0 %v1277
        %v1616 = vpop.f32.mrb[0].mxu0
        %v1617 = vadd.f32 0.0, %v1616
        %v1618 = vpop.f32.mrb[0].mxu0
        %v1619 = vpop.f32.mrb[0].mxu0
        %v1620 = vadd.f32 0.0, %v1619
        %v1621 = vpop.f32.mrb[0].mxu0
        %1622 = vmatprep.mubr.bf16.mxu0 %v1281
        %1623 = vmatmul.mubr.bf16.gmra.mrb[0].mxu0 %v1280
        %v1624 = vpop.f32.mrb[0].mxu0
        %v1625 = vadd.f32 0.0, %v1624
        %v1626 = vpop.f32.mrb[0].mxu0
        %v1627 = vpop.f32.mrb[0].mxu0
        %v1628 = vadd.f32 0.0, %v1627
        %v1629 = vpop.f32.mrb[0].mxu0
        %1630 = vmatprep.mubr.bf16.mxu0 %v1284
        %1631 = vmatmul.mubr.bf16.gmra.mrb[0].mxu0 %v1283
        %v1632 = vpop.f32.mrb[0].mxu0
        %v1633 = vadd.f32 0.0, %v1632
        %v1634 = vpop.f32.mrb[0].mxu0
        %v1635 = vpop.f32.mrb[0].mxu0
        %v1636 = vadd.f32 0.0, %v1635
        %v1637 = vpop.f32.mrb[0].mxu0
        %1638 = vdwg.mxu0
        %1639 = vmatprep.subr.bf16.mxu0 0
        %1640 = vmatpush1.bf16.msra.mxu0 %v1446
        %1641 = vmatprep.subr.bf16.mxu0 0
        %1642 = vmatpush1.bf16.msra.mxu0 %v1447
        %1643 = vmatprep.subr.bf16.mxu0 0
        %1644 = vmatpush1.bf16.msra.mxu0 %v1448
        %1645 = vmatprep.subr.bf16.mxu0 0
        %1646 = vmatpush1.bf16.msra.mxu0 %v1449
        %1647 = vmatprep.subr.bf16.mxu0 0
        %1648 = vmatpush1.bf16.msra.mxu0 %v1450
        %1649 = vmatprep.subr.bf16.mxu0 0
        %1650 = vmatpush1.bf16.msra.mxu0 %v1451
        %1651 = vmatprep.subr.bf16.mxu0 0
        %1652 = vmatpush1.bf16.msra.mxu0 %v1452
        %1653 = vmatprep.subr.bf16.mxu0 0
        %1654 = vmatpush1.bf16.msra.mxu0 %v1453
        %1655 = vmatprep.subr.bf16.mxu0 0
        %1656 = vmatpush1.bf16.msra.mxu0 0
        %1657 = vmatprep.subr.bf16.mxu0 0
        %1658 = vmatpush1.bf16.msra.mxu0 0
        %1659 = vmatprep.subr.bf16.mxu0 0
        %1660 = vmatpush1.bf16.msra.mxu0 0
        %1661 = vmatprep.subr.bf16.mxu0 0
        %1662 = vmatpush1.bf16.msra.mxu0 0
        %1663 = vmatprep.subr.bf16.mxu0 0
        %1664 = vmatpush1.bf16.msra.mxu0 0
        %1665 = vmatprep.subr.bf16.mxu0 0
        %1666 = vmatpush1.bf16.msra.mxu0 0
        %1667 = vmatprep.subr.bf16.mxu0 0
        %1668 = vmatpush1.bf16.msra.mxu0 0
        %1669 = vmatprep.subr.bf16.mxu0 0
        %1670 = vmatpush1.bf16.msra.mxu0 0
        %1671 = vmatprep.mubr.bf16.mxu0 0
        %1672 = vmatmul.mubr.bf16.gmra.mrb[0].mxu0 %v1240
        %v1673 = vpop.f32.mrb[0].mxu0
        %v1674 = vadd.f32 %v1513, %v1673
        %v1675 = vpop.f32.mrb[0].mxu0
        %v1676 = vpop.f32.mrb[0].mxu0
        %v1677 = vadd.f32 %v1516, %v1676
        %v1678 = vpop.f32.mrb[0].mxu0
        %1679 = vmatprep.mubr.bf16.mxu0 0
        %1680 = vmatmul.mubr.bf16.gmra.mrb[0].mxu0 %v1243
        %v1681 = vpop.f32.mrb[0].mxu0
        %v1682 = vadd.f32 %v1521, %v1681
        %v1683 = vpop.f32.mrb[0].mxu0
        %v1684 = vpop.f32.mrb[0].mxu0
        %v1685 = vadd.f32 %v1524, %v1684
        %v1686 = vpop.f32.mrb[0].mxu0
        %1687 = vmatprep.mubr.bf16.mxu0 0
        %1688 = vmatmul.mubr.bf16.gmra.mrb[0].mxu0 %v1246
        %v1689 = vpop.f32.mrb[0].mxu0
        %v1690 = vadd.f32 %v1529, %v1689
        %v1691 = vpop.f32.mrb[0].mxu0
        %v1692 = vpop.f32.mrb[0].mxu0
        %v1693 = vadd.f32 %v1532, %v1692
        %v1694 = vpop.f32.mrb[0].mxu0
        %1695 = vmatprep.mubr.bf16.mxu0 0
        %1696 = vmatmul.mubr.bf16.gmra.mrb[0].mxu0 %v1249
        %v1697 = vpop.f32.mrb[0].mxu0
        %v1698 = vadd.f32 %v1537, %v1697
        %v1699 = vpop.f32.mrb[0].mxu0
        %v1700 = vpop.f32.mrb[0].mxu0
        %v1701 = vadd.f32 %v1540, %v1700
        %v1702 = vpop.f32.mrb[0].mxu0
        %1703 = vmatprep.mubr.bf16.mxu0 0
        %1704 = vmatmul.mubr.bf16.gmra.mrb[0].mxu0 %v1252
        %v1705 = vpop.f32.mrb[0].mxu0
        %v1706 = vadd.f32 %v1545, %v1705
        %v1707 = vpop.f32.mrb[0].mxu0
        %v1708 = vpop.f32.mrb[0].mxu0
        %v1709 = vadd.f32 %v1548, %v1708
        %v1710 = vpop.f32.mrb[0].mxu0
        %1711 = vmatprep.mubr.bf16.mxu0 0
        %1712 = vmatmul.mubr.bf16.gmra.mrb[0].mxu0 %v1255
        %v1713 = vpop.f32.mrb[0].mxu0
        %v1714 = vadd.f32 %v1553, %v1713
        %v1715 = vpop.f32.mrb[0].mxu0
        %v1716 = vpop.f32.mrb[0].mxu0
        %v1717 = vadd.f32 %v1556, %v1716
        %v1718 = vpop.f32.mrb[0].mxu0
        %1719 = vmatprep.mubr.bf16.mxu0 0
        %1720 = vmatmul.mubr.bf16.gmra.mrb[0].mxu0 %v1258
        %v1721 = vpop.f32.mrb[0].mxu0
        %v1722 = vadd.f32 %v1561, %v1721
        %v1723 = vpop.f32.mrb[0].mxu0
        %v1724 = vpop.f32.mrb[0].mxu0
        %v1725 = vadd.f32 %v1564, %v1724
        %v1726 = vpop.f32.mrb[0].mxu0
        %1727 = vmatprep.mubr.bf16.mxu0 0
        %1728 = vmatmul.mubr.bf16.gmra.mrb[0].mxu0 %v1261
        %v1729 = vpop.f32.mrb[0].mxu0
        %v1730 = vadd.f32 %v1569, %v1729
        %v1731 = vpop.f32.mrb[0].mxu0
        %v1732 = vpop.f32.mrb[0].mxu0
        %v1733 = vadd.f32 %v1572, %v1732
        %v1734 = vpop.f32.mrb[0].mxu0
        %1735 = vmatprep.mubr.bf16.mxu0 0
        %1736 = vmatmul.mubr.bf16.gmra.mrb[0].mxu0 %v1264
        %v1737 = vpop.f32.mrb[0].mxu0
        %v1738 = vadd.f32 %v1577, %v1737
        %v1739 = vpop.f32.mrb[0].mxu0
        %v1740 = vpop.f32.mrb[0].mxu0
        %v1741 = vadd.f32 %v1580, %v1740
        %v1742 = vpop.f32.mrb[0].mxu0
        %1743 = vmatprep.mubr.bf16.mxu0 0
        %1744 = vmatmul.mubr.bf16.gmra.mrb[0].mxu0 %v1267
        %v1745 = vpop.f32.mrb[0].mxu0
        %v1746 = vadd.f32 %v1585, %v1745
        %v1747 = vpop.f32.mrb[0].mxu0
        %v1748 = vpop.f32.mrb[0].mxu0
        %v1749 = vadd.f32 %v1588, %v1748
        %v1750 = vpop.f32.mrb[0].mxu0
        %1751 = vmatprep.mubr.bf16.mxu0 0
        %1752 = vmatmul.mubr.bf16.gmra.mrb[0].mxu0 %v1270
        %v1753 = vpop.f32.mrb[0].mxu0
        %v1754 = vadd.f32 %v1593, %v1753
        %v1755 = vpop.f32.mrb[0].mxu0
        %v1756 = vpop.f32.mrb[0].mxu0
        %v1757 = vadd.f32 %v1596, %v1756
        %v1758 = vpop.f32.mrb[0].mxu0
        %1759 = vmatprep.mubr.bf16.mxu0 0
        %1760 = vmatmul.mubr.bf16.gmra.mrb[0].mxu0 %v1273
        %v1761 = vpop.f32.mrb[0].mxu0
        %v1762 = vadd.f32 %v1601, %v1761
        %v1763 = vpop.f32.mrb[0].mxu0
        %v1764 = vpop.f32.mrb[0].mxu0
        %v1765 = vadd.f32 %v1604, %v1764
        %v1766 = vpop.f32.mrb[0].mxu0
        %1767 = vmatprep.mubr.bf16.mxu0 0
        %1768 = vmatmul.mubr.bf16.gmra.mrb[0].mxu0 %v1276
        %v1769 = vpop.f32.mrb[0].mxu0
        %v1770 = vadd.f32 %v1609, %v1769
        %v1771 = vpop.f32.mrb[0].mxu0
        %v1772 = vpop.f32.mrb[0].mxu0
        %v1773 = vadd.f32 %v1612, %v1772
        %v1774 = vpop.f32.mrb[0].mxu0
        %1775 = vmatprep.mubr.bf16.mxu0 0
        %1776 = vmatmul.mubr.bf16.gmra.mrb[0].mxu0 %v1279
        %v1777 = vpop.f32.mrb[0].mxu0
        %v1778 = vadd.f32 %v1617, %v1777
        %v1779 = vpop.f32.mrb[0].mxu0
        %v1780 = vpop.f32.mrb[0].mxu0
        %v1781 = vadd.f32 %v1620, %v1780
        %v1782 = vpop.f32.mrb[0].mxu0
        %1783 = vmatprep.mubr.bf16.mxu0 0
        %1784 = vmatmul.mubr.bf16.gmra.mrb[0].mxu0 %v1282
        %v1785 = vpop.f32.mrb[0].mxu0
        %v1786 = vadd.f32 %v1625, %v1785
        %v1787 = vpop.f32.mrb[0].mxu0
        %v1788 = vpop.f32.mrb[0].mxu0
        %v1789 = vadd.f32 %v1628, %v1788
        %v1790 = vpop.f32.mrb[0].mxu0
        %1791 = vmatprep.mubr.bf16.mxu0 0
        %1792 = vmatmul.mubr.bf16.gmra.mrb[0].mxu0 %v1285
        %v1793 = vpop.f32.mrb[0].mxu0
        %v1794 = vadd.f32 %v1633, %v1793
        %v1795 = vpop.f32.mrb[0].mxu0
        %v1796 = vpop.f32.mrb[0].mxu0
        %v1797 = vadd.f32 %v1636, %v1796
        %v1798 = vpop.f32.mrb[0].mxu0
        %1799 = vdwg.mxu0
        %1800 = vst [vmem:[#allocation4] sm:$0xff] %v1674
        %1801 = vst [vmem:[#allocation4 + $0x8] sm:$0xff] %v1677
        %1802 = vst [vmem:[#allocation4 + $0x10] sm:$0xff] %v1682
        %1803 = vst [vmem:[#allocation4 + $0x18] sm:$0xff] %v1685
        %1804 = vst [vmem:[#allocation4 + $0x20] sm:$0xff] %v1690
        %1805 = vst [vmem:[#allocation4 + $0x28] sm:$0xff] %v1693
        %1806 = vst [vmem:[#allocation4 + $0x30] sm:$0xff] %v1698
        %1807 = vst [vmem:[#allocation4 + $0x38] sm:$0xff] %v1701
        %1808 = vst [vmem:[#allocation4 + $0x40] sm:$0xff] %v1706
        %1809 = vst [vmem:[#allocation4 + $0x48] sm:$0xff] %v1709
        %1810 = vst [vmem:[#allocation4 + $0x50] sm:$0xff] %v1714
        %1811 = vst [vmem:[#allocation4 + $0x58] sm:$0xff] %v1717
        %1812 = vst [vmem:[#allocation4 + $0x60] sm:$0xff] %v1722
        %1813 = vst [vmem:[#allocation4 + $0x68] sm:$0xff] %v1725
        %1814 = vst [vmem:[#allocation4 + $0x70] sm:$0xff] %v1730
        %1815 = vst [vmem:[#allocation4 + $0x78] sm:$0xff] %v1733
        %1816 = vst [vmem:[#allocation4 + $0x80] sm:$0xff] %v1738
        %1817 = vst [vmem:[#allocation4 + $0x88] sm:$0xff] %v1741
        %1818 = vst [vmem:[#allocation4 + $0x90] sm:$0xff] %v1746
        %1819 = vst [vmem:[#allocation4 + $0x98] sm:$0xff] %v1749
        %1820 = vst [vmem:[#allocation4 + $0xa0] sm:$0xff] %v1754
        %1821 = vst [vmem:[#allocation4 + $0xa8] sm:$0xff] %v1757
        %1822 = vst [vmem:[#allocation4 + $0xb0] sm:$0xff] %v1762
        %1823 = vst [vmem:[#allocation4 + $0xb8] sm:$0xff] %v1765
        %1824 = vst [vmem:[#allocation4 + $0xc0] sm:$0xff] %v1770
        %1825 = vst [vmem:[#allocation4 + $0xc8] sm:$0xff] %v1773
        %1826 = vst [vmem:[#allocation4 + $0xd0] sm:$0xff] %v1778
        %1827 = vst [vmem:[#allocation4 + $0xd8] sm:$0xff] %v1781
        %1828 = vst [vmem:[#allocation4 + $0xe0] sm:$0xff] %v1786
        %1829 = vst [vmem:[#allocation4 + $0xe8] sm:$0xff] %v1789
        %1830 = vst [vmem:[#allocation4 + $0xf0] sm:$0xff] %v1794
        %1831 = vst [vmem:[#allocation4 + $0xf8] sm:$0xff] %v1797
        %v1832 = vld [vmem:[#allocation4] sm:$0xff]
        %v1833 = vld [vmem:[#allocation4 + $0x8] sm:$0xff]
        %v1834 = vld [vmem:[#allocation4 + $0x10] sm:$0xff]
        %v1835 = vld [vmem:[#allocation4 + $0x18] sm:$0xff]
        %v1836 = vld [vmem:[#allocation4 + $0x20] sm:$0xff]
        %v1837 = vld [vmem:[#allocation4 + $0x28] sm:$0xff]
        %v1838 = vld [vmem:[#allocation4 + $0x30] sm:$0xff]
        %v1839 = vld [vmem:[#allocation4 + $0x38] sm:$0xff]
        %v1840 = vld [vmem:[#allocation4 + $0x40] sm:$0xff]
        %v1841 = vld [vmem:[#allocation4 + $0x48] sm:$0xff]
        %v1842 = vld [vmem:[#allocation4 + $0x50] sm:$0xff]
        %v1843 = vld [vmem:[#allocation4 + $0x58] sm:$0xff]
        %v1844 = vld [vmem:[#allocation4 + $0x60] sm:$0xff]
        %v1845 = vld [vmem:[#allocation4 + $0x68] sm:$0xff]
        %v1846 = vld [vmem:[#allocation4 + $0x70] sm:$0xff]
        %v1847 = vld [vmem:[#allocation4 + $0x78] sm:$0xff]
        %v1848 = vld [vmem:[#allocation4 + $0x80] sm:$0xff]
        %v1849 = vld [vmem:[#allocation4 + $0x88] sm:$0xff]
        %v1850 = vld [vmem:[#allocation4 + $0x90] sm:$0xff]
        %v1851 = vld [vmem:[#allocation4 + $0x98] sm:$0xff]
        %v1852 = vld [vmem:[#allocation4 + $0xa0] sm:$0xff]
        %v1853 = vld [vmem:[#allocation4 + $0xa8] sm:$0xff]
        %v1854 = vld [vmem:[#allocation4 + $0xb0] sm:$0xff]
        %v1855 = vld [vmem:[#allocation4 + $0xb8] sm:$0xff]
        %v1856 = vld [vmem:[#allocation4 + $0xc0] sm:$0xff]
        %v1857 = vld [vmem:[#allocation4 + $0xc8] sm:$0xff]
        %v1858 = vld [vmem:[#allocation4 + $0xd0] sm:$0xff]
        %v1859 = vld [vmem:[#allocation4 + $0xd8] sm:$0xff]
        %v1860 = vld [vmem:[#allocation4 + $0xe0] sm:$0xff]
        %v1861 = vld [vmem:[#allocation4 + $0xe8] sm:$0xff]
        %v1862 = vld [vmem:[#allocation4 + $0xf0] sm:$0xff]
        %v1863 = vld [vmem:[#allocation4 + $0xf8] sm:$0xff]
        %v1864 = vld [vmem:[#allocation2 + $0x18] sm:$0xff]
        %v1865 = vld [vmem:[#allocation2 + $0x20] sm:$0xff]
        %v1866 = vld [vmem:[#allocation2 + $0x28] sm:$0xff]
        %v1867 = vld [vmem:[#allocation2 + $0x30] sm:$0xff]
        %v1868 = vld [vmem:[#allocation2 + $0x38] sm:$0xff]
        %v1869 = vld [vmem:[#allocation2 + $0x40] sm:$0xff]
        %v1870 = vld [vmem:[#allocation2 + $0x48] sm:$0xff]
        %v1871 = vld [vmem:[#allocation2 + $0x50] sm:$0xff]
        %v1872 = vld [vmem:[#allocation2 + $0x58] sm:$0xff]
        %v1873 = vld [vmem:[#allocation2 + $0x60] sm:$0xff]
        %v1874 = vld [vmem:[#allocation2 + $0x68] sm:$0xff]
        %v1875 = vld [vmem:[#allocation2 + $0x70] sm:$0xff]
        %v1876 = vld [vmem:[#allocation2 + $0x78] sm:$0xff]
        %v1877 = vld [vmem:[#allocation2 + $0x80] sm:$0xff]
        %v1878 = vld [vmem:[#allocation2 + $0x88] sm:$0xff]
        %v1879 = vld [vmem:[#allocation2 + $0x90] sm:$0xff]
        %v1880 = vld [vmem:[#allocation2 + $0x98] sm:$0xff]
        %v1881 = vld [vmem:[#allocation2 + $0xa0] sm:$0xff]
        %v1882 = vld [vmem:[#allocation2 + $0xa8] sm:$0xff]
        %v1883 = vld [vmem:[#allocation2 + $0xb0] sm:$0xff]
        %v1884 = vld [vmem:[#allocation2 + $0xb8] sm:$0xff]
        %v1885 = vld [vmem:[#allocation2 + $0xc0] sm:$0xff]
        %v1886 = vld [vmem:[#allocation2 + $0xc8] sm:$0xff]
        %v1887 = vld [vmem:[#allocation2 + $0xd0] sm:$0xff]
        %v1888 = vld [vmem:[#allocation2 + $0xd8] sm:$0xff]
        %v1889 = vld [vmem:[#allocation2 + $0xe0] sm:$0xff]
        %v1890 = vld [vmem:[#allocation2 + $0xe8] sm:$0xff]
        %v1891 = vld [vmem:[#allocation2 + $0xf0] sm:$0xff]
        %v1892 = vld [vmem:[#allocation2 + $0xf8] sm:$0xff]
        %v1893 = vld [vmem:[#allocation2 + $0x100] sm:$0xff]
        %v1894 = vld [vmem:[#allocation2 + $0x108] sm:$0xff]
        %v1895 = vld [vmem:[#allocation2 + $0x110] sm:$0xff]
        %v1896 = vld [vmem:[#allocation2 + $0x118] sm:$0xff]
        %v1897 = vld [vmem:[#allocation2 + $0x120] sm:$0xff]
        %v1898 = vld [vmem:[#allocation2 + $0x128] sm:$0xff]
        %v1899 = vld [vmem:[#allocation2 + $0x130] sm:$0xff]
        %v1900 = vld [vmem:[#allocation2 + $0x138] sm:$0xff]
        %v1901 = vld [vmem:[#allocation2 + $0x140] sm:$0xff]
        %v1902 = vld [vmem:[#allocation2 + $0x148] sm:$0xff]
        %v1903 = vld [vmem:[#allocation2 + $0x150] sm:$0xff]
        %v1904 = vld [vmem:[#allocation2 + $0x158] sm:$0xff]
        %v1905 = vld [vmem:[#allocation2 + $0x160] sm:$0xff]
        %v1906 = vld [vmem:[#allocation2 + $0x168] sm:$0xff]
        %v1907 = vld [vmem:[#allocation2 + $0x170] sm:$0xff]
        %v1908 = vld [vmem:[#allocation2 + $0x178] sm:$0xff]
        %v1909 = vld [vmem:[#allocation2 + $0x180] sm:$0xff]
        %v1910 = vld [vmem:[#allocation2 + $0x188] sm:$0xff]
        %v1911 = vld [vmem:[#allocation2 + $0x190] sm:$0xff]
        %s1912 = scalar_lea.vmem %s1, 192
        %v1913 = vld [vmem:[%s1912] sm:$0xf]
        %v1914 = vld [vmem:[%s1912 + $0x4] sm:$0xf]
        %v1915 = vld [vmem:[%s1912 + $0x8] sm:$0xf]
        %v1916 = vld [vmem:[%s1912 + $0xc] sm:$0xf]
        %v1917 = vld [vmem:[%s1912 + $0x10] sm:$0xf]
        %v1918 = vld [vmem:[%s1912 + $0x14] sm:$0xf]
        %v1919 = vld [vmem:[%s1912 + $0x18] sm:$0xf]
        %v1920 = vld [vmem:[%s1912 + $0x1c] sm:$0xf]
        %v1921 = vld [vmem:[%s1912 + $0x20] sm:$0xf]
        %v1922 = vld [vmem:[%s1912 + $0x24] sm:$0xf]
        %v1923 = vld [vmem:[%s1912 + $0x28] sm:$0xf]
        %v1924 = vld [vmem:[%s1912 + $0x2c] sm:$0xf]
        %v1925 = vld [vmem:[%s1912 + $0x30] sm:$0xf]
        %v1926 = vld [vmem:[%s1912 + $0x34] sm:$0xf]
        %v1927 = vld [vmem:[%s1912 + $0x38] sm:$0xf]
        %v1928 = vld [vmem:[%s1912 + $0x3c] sm:$0xf]
        %v1929 = vld [vmem:[%s1912 + $0x40] sm:$0xf]
        %v1930 = vld [vmem:[%s1912 + $0x44] sm:$0xf]
        %v1931 = vld [vmem:[%s1912 + $0x48] sm:$0xf]
        %v1932 = vld [vmem:[%s1912 + $0x4c] sm:$0xf]
        %v1933 = vld [vmem:[%s1912 + $0x50] sm:$0xf]
        %v1934 = vld [vmem:[%s1912 + $0x54] sm:$0xf]
        %v1935 = vld [vmem:[%s1912 + $0x58] sm:$0xf]
        %v1936 = vld [vmem:[%s1912 + $0x5c] sm:$0xf]
        %v1937 = vld [vmem:[%s1912 + $0x60] sm:$0xf]
        %v1938 = vld [vmem:[%s1912 + $0x64] sm:$0xf]
        %v1939 = vld [vmem:[%s1912 + $0x68] sm:$0xf]
        %v1940 = vld [vmem:[%s1912 + $0x6c] sm:$0xf]
        %v1941 = vld [vmem:[%s1912 + $0x70] sm:$0xf]
        %v1942 = vld [vmem:[%s1912 + $0x74] sm:$0xf]
        %v1943 = vld [vmem:[%s1912 + $0x78] sm:$0xf]
        %v1944 = vld [vmem:[%s1912 + $0x7c] sm:$0xf]
        %v1945 = vld [vmem:[%s1912 + $0x80] sm:$0xf]
        %v1946 = vld [vmem:[%s1912 + $0x84] sm:$0xf]
        %v1947 = vld [vmem:[%s1912 + $0x88] sm:$0xf]
        %v1948 = vld [vmem:[%s1912 + $0x8c] sm:$0xf]
        %v1949 = vld [vmem:[%s1912 + $0x90] sm:$0xf]
        %v1950 = vld [vmem:[%s1912 + $0x94] sm:$0xf]
        %v1951 = vld [vmem:[%s1912 + $0x98] sm:$0xf]
        %v1952 = vld [vmem:[%s1912 + $0x9c] sm:$0xf]
        %v1953 = vld [vmem:[%s1912 + $0xa0] sm:$0xf]
        %v1954 = vld [vmem:[%s1912 + $0xa4] sm:$0xf]
        %v1955 = vld [vmem:[%s1912 + $0xa8] sm:$0xf]
        %v1956 = vld [vmem:[%s1912 + $0xac] sm:$0xf]
        %v1957 = vld [vmem:[%s1912 + $0xb0] sm:$0xf]
        %v1958 = vld [vmem:[%s1912 + $0xb4] sm:$0xf]
        %v1959 = vld [vmem:[%s1912 + $0xb8] sm:$0xf]
        %v1960 = vld [vmem:[%s1912 + $0xbc] sm:$0xf]
        %v2009 = vunpack.c.l.b16 %v1913
        %v2010 = vunpack.c.l.b16 %v1914
        %v2011 = vunpack.c.l.b16 %v1915
        %v2012 = vunpack.c.l.b16 %v1916
        %v2013 = vunpack.c.l.b16 %v1917
        %v2014 = vunpack.c.l.b16 %v1918
        %v2015 = vunpack.c.l.b16 %v1919
        %v2016 = vunpack.c.l.b16 %v1920
        %v2017 = vunpack.c.l.b16 %v1921
        %v2018 = vunpack.c.l.b16 %v1922
        %v2019 = vunpack.c.l.b16 %v1923
        %v2020 = vunpack.c.l.b16 %v1924
        %v2021 = vunpack.c.l.b16 %v1925
        %v2022 = vunpack.c.l.b16 %v1926
        %v2023 = vunpack.c.l.b16 %v1927
        %v2024 = vunpack.c.l.b16 %v1928
        %v2025 = vunpack.c.l.b16 %v1929
        %v2026 = vunpack.c.l.b16 %v1930
        %v2027 = vunpack.c.l.b16 %v1931
        %v2028 = vunpack.c.l.b16 %v1932
        %v2029 = vunpack.c.l.b16 %v1933
        %v2030 = vunpack.c.l.b16 %v1934
        %v2031 = vunpack.c.l.b16 %v1935
        %v2032 = vunpack.c.l.b16 %v1936
        %v2033 = vunpack.c.l.b16 %v1937
        %v2034 = vunpack.c.l.b16 %v1938
        %v2035 = vunpack.c.l.b16 %v1939
        %v2036 = vunpack.c.l.b16 %v1940
        %v2037 = vunpack.c.l.b16 %v1941
        %v2038 = vunpack.c.l.b16 %v1942
        %v2039 = vunpack.c.l.b16 %v1943
        %v2040 = vunpack.c.l.b16 %v1944
        %v2041 = vunpack.c.l.b16 %v1945
        %v2042 = vunpack.c.l.b16 %v1946
        %v2043 = vunpack.c.l.b16 %v1947
        %v2044 = vunpack.c.l.b16 %v1948
        %v2045 = vunpack.c.l.b16 %v1949
        %v2046 = vunpack.c.l.b16 %v1950
        %v2047 = vunpack.c.l.b16 %v1951
        %v2048 = vunpack.c.l.b16 %v1952
        %v2049 = vunpack.c.l.b16 %v1953
        %v2050 = vunpack.c.l.b16 %v1954
        %v2051 = vunpack.c.l.b16 %v1955
        %v2052 = vunpack.c.l.b16 %v1956
        %v2053 = vunpack.c.l.b16 %v1957
        %v2054 = vunpack.c.l.b16 %v1958
        %v2055 = vunpack.c.l.b16 %v1959
        %v2056 = vunpack.c.l.b16 %v1960
        %v2057 = vpack.c.b16 %v2010, %v2009
        %v2058 = vpack.c.b16 %v2012, %v2011
        %v2059 = vpack.c.b16 %v2014, %v2013
        %v2060 = vpack.c.b16 %v2016, %v2015
        %v2061 = vpack.c.b16 %v2018, %v2017
        %v2062 = vpack.c.b16 %v2020, %v2019
        %v2063 = vpack.c.b16 %v2022, %v2021
        %v2064 = vpack.c.b16 %v2024, %v2023
        %v2065 = vpack.c.b16 %v2026, %v2025
        %v2066 = vpack.c.b16 %v2028, %v2027
        %v2067 = vpack.c.b16 %v2030, %v2029
        %v2068 = vpack.c.b16 %v2032, %v2031
        %v2069 = vpack.c.b16 %v2034, %v2033
        %v2070 = vpack.c.b16 %v2036, %v2035
        %v2071 = vpack.c.b16 %v2038, %v2037
        %v2072 = vpack.c.b16 %v2040, %v2039
        %v2073 = vpack.c.b16 %v2042, %v2041
        %v2074 = vpack.c.b16 %v2044, %v2043
        %v2075 = vpack.c.b16 %v2046, %v2045
        %v2076 = vpack.c.b16 %v2048, %v2047
        %v2077 = vpack.c.b16 %v2050, %v2049
        %v2078 = vpack.c.b16 %v2052, %v2051
        %v2079 = vpack.c.b16 %v2054, %v2053
        %v2080 = vpack.c.b16 %v2056, %v2055
        %2105 = vmatprep.subr.bf16.mxu0 0
        %2106 = vmatpush1.bf16.msra.mxu0 %v2057
        %2107 = vmatprep.subr.bf16.mxu0 0
        %2108 = vmatpush1.bf16.msra.mxu0 %v2058
        %2109 = vmatprep.subr.bf16.mxu0 0
        %2110 = vmatpush1.bf16.msra.mxu0 %v2059
        %2111 = vmatprep.subr.bf16.mxu0 0
        %2112 = vmatpush1.bf16.msra.mxu0 %v2060
        %2113 = vmatprep.subr.bf16.mxu0 0
        %2114 = vmatpush1.bf16.msra.mxu0 %v2061
        %2115 = vmatprep.subr.bf16.mxu0 0
        %2116 = vmatpush1.bf16.msra.mxu0 %v2062
        %2117 = vmatprep.subr.bf16.mxu0 0
        %2118 = vmatpush1.bf16.msra.mxu0 %v2063
        %2119 = vmatprep.subr.bf16.mxu0 0
        %2120 = vmatpush1.bf16.msra.mxu0 %v2064
        %2121 = vmatprep.subr.bf16.mxu0 0
        %2122 = vmatpush1.bf16.msra.mxu0 %v2065
        %2123 = vmatprep.subr.bf16.mxu0 0
        %2124 = vmatpush1.bf16.msra.mxu0 %v2066
        %2125 = vmatprep.subr.bf16.mxu0 0
        %2126 = vmatpush1.bf16.msra.mxu0 %v2067
        %2127 = vmatprep.subr.bf16.mxu0 0
        %2128 = vmatpush1.bf16.msra.mxu0 %v2068
        %2129 = vmatprep.subr.bf16.mxu0 0
        %2130 = vmatpush1.bf16.msra.mxu0 %v2069
        %2131 = vmatprep.subr.bf16.mxu0 0
        %2132 = vmatpush1.bf16.msra.mxu0 %v2070
        %2133 = vmatprep.subr.bf16.mxu0 0
        %2134 = vmatpush1.bf16.msra.mxu0 %v2071
        %2135 = vmatprep.subr.bf16.mxu0 0
        %2136 = vmatpush1.bf16.msra.mxu0 %v2072
        %2137 = vmatprep.mubr.bf16.mxu0 %v1865
        %2138 = vmatmul.mubr.bf16.gmra.mrb[0].mxu0 %v1864
        %v2139 = vpop.f32.mrb[0].mxu0
        %v2140 = vadd.f32 0.0, %v2139
        %v2141 = vpop.f32.mrb[0].mxu0
        %v2142 = vpop.f32.mrb[0].mxu0
        %v2143 = vadd.f32 0.0, %v2142
        %v2144 = vpop.f32.mrb[0].mxu0
        %2145 = vmatprep.mubr.bf16.mxu0 %v1868
        %2146 = vmatmul.mubr.bf16.gmra.mrb[0].mxu0 %v1867
        %v2147 = vpop.f32.mrb[0].mxu0
        %v2148 = vadd.f32 0.0, %v2147
        %v2149 = vpop.f32.mrb[0].mxu0
        %v2150 = vpop.f32.mrb[0].mxu0
        %v2151 = vadd.f32 0.0, %v2150
        %v2152 = vpop.f32.mrb[0].mxu0
        %2153 = vmatprep.mubr.bf16.mxu0 %v1871
        %2154 = vmatmul.mubr.bf16.gmra.mrb[0].mxu0 %v1870
        %v2155 = vpop.f32.mrb[0].mxu0
        %v2156 = vadd.f32 0.0, %v2155
        %v2157 = vpop.f32.mrb[0].mxu0
        %v2158 = vpop.f32.mrb[0].mxu0
        %v2159 = vadd.f32 0.0, %v2158
        %v2160 = vpop.f32.mrb[0].mxu0
        %2161 = vmatprep.mubr.bf16.mxu0 %v1874
        %2162 = vmatmul.mubr.bf16.gmra.mrb[0].mxu0 %v1873
        %v2163 = vpop.f32.mrb[0].mxu0
        %v2164 = vadd.f32 0.0, %v2163
        %v2165 = vpop.f32.mrb[0].mxu0
        %v2166 = vpop.f32.mrb[0].mxu0
        %v2167 = vadd.f32 0.0, %v2166
        %v2168 = vpop.f32.mrb[0].mxu0
        %2169 = vmatprep.mubr.bf16.mxu0 %v1877
        %2170 = vmatmul.mubr.bf16.gmra.mrb[0].mxu0 %v1876
        %v2171 = vpop.f32.mrb[0].mxu0
        %v2172 = vadd.f32 0.0, %v2171
        %v2173 = vpop.f32.mrb[0].mxu0
        %v2174 = vpop.f32.mrb[0].mxu0
        %v2175 = vadd.f32 0.0, %v2174
        %v2176 = vpop.f32.mrb[0].mxu0
        %2177 = vmatprep.mubr.bf16.mxu0 %v1880
        %2178 = vmatmul.mubr.bf16.gmra.mrb[0].mxu0 %v1879
        %v2179 = vpop.f32.mrb[0].mxu0
        %v2180 = vadd.f32 0.0, %v2179
        %v2181 = vpop.f32.mrb[0].mxu0
        %v2182 = vpop.f32.mrb[0].mxu0
        %v2183 = vadd.f32 0.0, %v2182
        %v2184 = vpop.f32.mrb[0].mxu0
        %2185 = vmatprep.mubr.bf16.mxu0 %v1883
        %2186 = vmatmul.mubr.bf16.gmra.mrb[0].mxu0 %v1882
        %v2187 = vpop.f32.mrb[0].mxu0
        %v2188 = vadd.f32 0.0, %v2187
        %v2189 = vpop.f32.mrb[0].mxu0
        %v2190 = vpop.f32.mrb[0].mxu0
        %v2191 = vadd.f32 0.0, %v2190
        %v2192 = vpop.f32.mrb[0].mxu0
        %2193 = vmatprep.mubr.bf16.mxu0 %v1886
        %2194 = vmatmul.mubr.bf16.gmra.mrb[0].mxu0 %v1885
        %v2195 = vpop.f32.mrb[0].mxu0
        %v2196 = vadd.f32 0.0, %v2195
        %v2197 = vpop.f32.mrb[0].mxu0
        %v2198 = vpop.f32.mrb[0].mxu0
        %v2199 = vadd.f32 0.0, %v2198
        %v2200 = vpop.f32.mrb[0].mxu0
        %2201 = vmatprep.mubr.bf16.mxu0 %v1889
        %2202 = vmatmul.mubr.bf16.gmra.mrb[0].mxu0 %v1888
        %v2203 = vpop.f32.mrb[0].mxu0
        %v2204 = vadd.f32 0.0, %v2203
        %v2205 = vpop.f32.mrb[0].mxu0
        %v2206 = vpop.f32.mrb[0].mxu0
        %v2207 = vadd.f32 0.0, %v2206
        %v2208 = vpop.f32.mrb[0].mxu0
        %2209 = vmatprep.mubr.bf16.mxu0 %v1892
        %2210 = vmatmul.mubr.bf16.gmra.mrb[0].mxu0 %v1891
        %v2211 = vpop.f32.mrb[0].mxu0
        %v2212 = vadd.f32 0.0, %v2211
        %v2213 = vpop.f32.mrb[0].mxu0
        %v2214 = vpop.f32.mrb[0].mxu0
        %v2215 = vadd.f32 0.0, %v2214
        %v2216 = vpop.f32.mrb[0].mxu0
        %2217 = vmatprep.mubr.bf16.mxu0 %v1895
        %2218 = vmatmul.mubr.bf16.gmra.mrb[0].mxu0 %v1894
        %v2219 = vpop.f32.mrb[0].mxu0
        %v2220 = vadd.f32 0.0, %v2219
        %v2221 = vpop.f32.mrb[0].mxu0
        %v2222 = vpop.f32.mrb[0].mxu0
        %v2223 = vadd.f32 0.0, %v2222
        %v2224 = vpop.f32.mrb[0].mxu0
        %2225 = vmatprep.mubr.bf16.mxu0 %v1898
        %2226 = vmatmul.mubr.bf16.gmra.mrb[0].mxu0 %v1897
        %v2227 = vpop.f32.mrb[0].mxu0
        %v2228 = vadd.f32 0.0, %v2227
        %v2229 = vpop.f32.mrb[0].mxu0
        %v2230 = vpop.f32.mrb[0].mxu0
        %v2231 = vadd.f32 0.0, %v2230
        %v2232 = vpop.f32.mrb[0].mxu0
        %2233 = vmatprep.mubr.bf16.mxu0 %v1901
        %2234 = vmatmul.mubr.bf16.gmra.mrb[0].mxu0 %v1900
        %v2235 = vpop.f32.mrb[0].mxu0
        %v2236 = vadd.f32 0.0, %v2235
        %v2237 = vpop.f32.mrb[0].mxu0
        %v2238 = vpop.f32.mrb[0].mxu0
        %v2239 = vadd.f32 0.0, %v2238
        %v2240 = vpop.f32.mrb[0].mxu0
        %2241 = vmatprep.mubr.bf16.mxu0 %v1904
        %2242 = vmatmul.mubr.bf16.gmra.mrb[0].mxu0 %v1903
        %v2243 = vpop.f32.mrb[0].mxu0
        %v2244 = vadd.f32 0.0, %v2243
        %v2245 = vpop.f32.mrb[0].mxu0
        %v2246 = vpop.f32.mrb[0].mxu0
        %v2247 = vadd.f32 0.0, %v2246
        %v2248 = vpop.f32.mrb[0].mxu0
        %2249 = vmatprep.mubr.bf16.mxu0 %v1907
        %2250 = vmatmul.mubr.bf16.gmra.mrb[0].mxu0 %v1906
        %v2251 = vpop.f32.mrb[0].mxu0
        %v2252 = vadd.f32 0.0, %v2251
        %v2253 = vpop.f32.mrb[0].mxu0
        %v2254 = vpop.f32.mrb[0].mxu0
        %v2255 = vadd.f32 0.0, %v2254
        %v2256 = vpop.f32.mrb[0].mxu0
        %2257 = vmatprep.mubr.bf16.mxu0 %v1910
        %2258 = vmatmul.mubr.bf16.gmra.mrb[0].mxu0 %v1909
        %v2259 = vpop.f32.mrb[0].mxu0
        %v2260 = vadd.f32 0.0, %v2259
        %v2261 = vpop.f32.mrb[0].mxu0
        %v2262 = vpop.f32.mrb[0].mxu0
        %v2263 = vadd.f32 0.0, %v2262
        %v2264 = vpop.f32.mrb[0].mxu0
        %2265 = vdwg.mxu0
        %2266 = vmatprep.subr.bf16.mxu0 0
        %2267 = vmatpush1.bf16.msra.mxu0 %v2073
        %2268 = vmatprep.subr.bf16.mxu0 0
        %2269 = vmatpush1.bf16.msra.mxu0 %v2074
        %2270 = vmatprep.subr.bf16.mxu0 0
        %2271 = vmatpush1.bf16.msra.mxu0 %v2075
        %2272 = vmatprep.subr.bf16.mxu0 0
        %2273 = vmatpush1.bf16.msra.mxu0 %v2076
        %2274 = vmatprep.subr.bf16.mxu0 0
        %2275 = vmatpush1.bf16.msra.mxu0 %v2077
        %2276 = vmatprep.subr.bf16.mxu0 0
        %2277 = vmatpush1.bf16.msra.mxu0 %v2078
        %2278 = vmatprep.subr.bf16.mxu0 0
        %2279 = vmatpush1.bf16.msra.mxu0 %v2079
        %2280 = vmatprep.subr.bf16.mxu0 0
        %2281 = vmatpush1.bf16.msra.mxu0 %v2080
        %2282 = vmatprep.subr.bf16.mxu0 0
        %2283 = vmatpush1.bf16.msra.mxu0 0
        %2284 = vmatprep.subr.bf16.mxu0 0
        %2285 = vmatpush1.bf16.msra.mxu0 0
        %2286 = vmatprep.subr.bf16.mxu0 0
        %2287 = vmatpush1.bf16.msra.mxu0 0
        %2288 = vmatprep.subr.bf16.mxu0 0
        %2289 = vmatpush1.bf16.msra.mxu0 0
        %2290 = vmatprep.subr.bf16.mxu0 0
        %2291 = vmatpush1.bf16.msra.mxu0 0
        %2292 = vmatprep.subr.bf16.mxu0 0
        %2293 = vmatpush1.bf16.msra.mxu0 0
        %2294 = vmatprep.subr.bf16.mxu0 0
        %2295 = vmatpush1.bf16.msra.mxu0 0
        %2296 = vmatprep.subr.bf16.mxu0 0
        %2297 = vmatpush1.bf16.msra.mxu0 0
        %2298 = vmatprep.mubr.bf16.mxu0 0
        %2299 = vmatmul.mubr.bf16.gmra.mrb[0].mxu0 %v1866
        %v2300 = vpop.f32.mrb[0].mxu0
        %v2301 = vadd.f32 %v2140, %v2300
        %v2302 = vpop.f32.mrb[0].mxu0
        %v2303 = vpop.f32.mrb[0].mxu0
        %v2304 = vadd.f32 %v2143, %v2303
        %v2305 = vpop.f32.mrb[0].mxu0
        %2306 = vmatprep.mubr.bf16.mxu0 0
        %2307 = vmatmul.mubr.bf16.gmra.mrb[0].mxu0 %v1869
        %v2308 = vpop.f32.mrb[0].mxu0
        %v2309 = vadd.f32 %v2148, %v2308
        %v2310 = vpop.f32.mrb[0].mxu0
        %v2311 = vpop.f32.mrb[0].mxu0
        %v2312 = vadd.f32 %v2151, %v2311
        %v2313 = vpop.f32.mrb[0].mxu0
        %2314 = vmatprep.mubr.bf16.mxu0 0
        %2315 = vmatmul.mubr.bf16.gmra.mrb[0].mxu0 %v1872
        %v2316 = vpop.f32.mrb[0].mxu0
        %v2317 = vadd.f32 %v2156, %v2316
        %v2318 = vpop.f32.mrb[0].mxu0
        %v2319 = vpop.f32.mrb[0].mxu0
        %v2320 = vadd.f32 %v2159, %v2319
        %v2321 = vpop.f32.mrb[0].mxu0
        %2322 = vmatprep.mubr.bf16.mxu0 0
        %2323 = vmatmul.mubr.bf16.gmra.mrb[0].mxu0 %v1875
        %v2324 = vpop.f32.mrb[0].mxu0
        %v2325 = vadd.f32 %v2164, %v2324
        %v2326 = vpop.f32.mrb[0].mxu0
        %v2327 = vpop.f32.mrb[0].mxu0
        %v2328 = vadd.f32 %v2167, %v2327
        %v2329 = vpop.f32.mrb[0].mxu0
        %2330 = vmatprep.mubr.bf16.mxu0 0
        %2331 = vmatmul.mubr.bf16.gmra.mrb[0].mxu0 %v1878
        %v2332 = vpop.f32.mrb[0].mxu0
        %v2333 = vadd.f32 %v2172, %v2332
        %v2334 = vpop.f32.mrb[0].mxu0
        %v2335 = vpop.f32.mrb[0].mxu0
        %v2336 = vadd.f32 %v2175, %v2335
        %v2337 = vpop.f32.mrb[0].mxu0
        %2338 = vmatprep.mubr.bf16.mxu0 0
        %2339 = vmatmul.mubr.bf16.gmra.mrb[0].mxu0 %v1881
        %v2340 = vpop.f32.mrb[0].mxu0
        %v2341 = vadd.f32 %v2180, %v2340
        %v2342 = vpop.f32.mrb[0].mxu0
        %v2343 = vpop.f32.mrb[0].mxu0
        %v2344 = vadd.f32 %v2183, %v2343
        %v2345 = vpop.f32.mrb[0].mxu0
        %2346 = vmatprep.mubr.bf16.mxu0 0
        %2347 = vmatmul.mubr.bf16.gmra.mrb[0].mxu0 %v1884
        %v2348 = vpop.f32.mrb[0].mxu0
        %v2349 = vadd.f32 %v2188, %v2348
        %v2350 = vpop.f32.mrb[0].mxu0
        %v2351 = vpop.f32.mrb[0].mxu0
        %v2352 = vadd.f32 %v2191, %v2351
        %v2353 = vpop.f32.mrb[0].mxu0
        %2354 = vmatprep.mubr.bf16.mxu0 0
        %2355 = vmatmul.mubr.bf16.gmra.mrb[0].mxu0 %v1887
        %v2356 = vpop.f32.mrb[0].mxu0
        %v2357 = vadd.f32 %v2196, %v2356
        %v2358 = vpop.f32.mrb[0].mxu0
        %v2359 = vpop.f32.mrb[0].mxu0
        %v2360 = vadd.f32 %v2199, %v2359
        %v2361 = vpop.f32.mrb[0].mxu0
        %2362 = vmatprep.mubr.bf16.mxu0 0
        %2363 = vmatmul.mubr.bf16.gmra.mrb[0].mxu0 %v1890
        %v2364 = vpop.f32.mrb[0].mxu0
        %v2365 = vadd.f32 %v2204, %v2364
        %v2366 = vpop.f32.mrb[0].mxu0
        %v2367 = vpop.f32.mrb[0].mxu0
        %v2368 = vadd.f32 %v2207, %v2367
        %v2369 = vpop.f32.mrb[0].mxu0
        %2370 = vmatprep.mubr.bf16.mxu0 0
        %2371 = vmatmul.mubr.bf16.gmra.mrb[0].mxu0 %v1893
        %v2372 = vpop.f32.mrb[0].mxu0
        %v2373 = vadd.f32 %v2212, %v2372
        %v2374 = vpop.f32.mrb[0].mxu0
        %v2375 = vpop.f32.mrb[0].mxu0
        %v2376 = vadd.f32 %v2215, %v2375
        %v2377 = vpop.f32.mrb[0].mxu0
        %2378 = vmatprep.mubr.bf16.mxu0 0
        %2379 = vmatmul.mubr.bf16.gmra.mrb[0].mxu0 %v1896
        %v2380 = vpop.f32.mrb[0].mxu0
        %v2381 = vadd.f32 %v2220, %v2380
        %v2382 = vpop.f32.mrb[0].mxu0
        %v2383 = vpop.f32.mrb[0].mxu0
        %v2384 = vadd.f32 %v2223, %v2383
        %v2385 = vpop.f32.mrb[0].mxu0
        %2386 = vmatprep.mubr.bf16.mxu0 0
        %2387 = vmatmul.mubr.bf16.gmra.mrb[0].mxu0 %v1899
        %v2388 = vpop.f32.mrb[0].mxu0
        %v2389 = vadd.f32 %v2228, %v2388
        %v2390 = vpop.f32.mrb[0].mxu0
        %v2391 = vpop.f32.mrb[0].mxu0
        %v2392 = vadd.f32 %v2231, %v2391
        %v2393 = vpop.f32.mrb[0].mxu0
        %2394 = vmatprep.mubr.bf16.mxu0 0
        %2395 = vmatmul.mubr.bf16.gmra.mrb[0].mxu0 %v1902
        %v2396 = vpop.f32.mrb[0].mxu0
        %v2397 = vadd.f32 %v2236, %v2396
        %v2398 = vpop.f32.mrb[0].mxu0
        %v2399 = vpop.f32.mrb[0].mxu0
        %v2400 = vadd.f32 %v2239, %v2399
        %v2401 = vpop.f32.mrb[0].mxu0
        %2402 = vmatprep.mubr.bf16.mxu0 0
        %2403 = vmatmul.mubr.bf16.gmra.mrb[0].mxu0 %v1905
        %v2404 = vpop.f32.mrb[0].mxu0
        %v2405 = vadd.f32 %v2244, %v2404
        %v2406 = vpop.f32.mrb[0].mxu0
        %v2407 = vpop.f32.mrb[0].mxu0
        %v2408 = vadd.f32 %v2247, %v2407
        %v2409 = vpop.f32.mrb[0].mxu0
        %2410 = vmatprep.mubr.bf16.mxu0 0
        %2411 = vmatmul.mubr.bf16.gmra.mrb[0].mxu0 %v1908
        %v2412 = vpop.f32.mrb[0].mxu0
        %v2413 = vadd.f32 %v2252, %v2412
        %v2414 = vpop.f32.mrb[0].mxu0
        %v2415 = vpop.f32.mrb[0].mxu0
        %v2416 = vadd.f32 %v2255, %v2415
        %v2417 = vpop.f32.mrb[0].mxu0
        %2418 = vmatprep.mubr.bf16.mxu0 0
        %2419 = vmatmul.mubr.bf16.gmra.mrb[0].mxu0 %v1911
        %v2420 = vpop.f32.mrb[0].mxu0
        %v2421 = vadd.f32 %v2260, %v2420
        %v2422 = vpop.f32.mrb[0].mxu0
        %v2423 = vpop.f32.mrb[0].mxu0
        %v2424 = vadd.f32 %v2263, %v2423
        %v2425 = vpop.f32.mrb[0].mxu0
        %2426 = vdwg.mxu0
        %v2427 = vadd.f32 %v1832, %v2301
        %v2428 = vadd.f32 %v1833, %v2304
        %v2429 = vadd.f32 %v1834, %v2309
        %v2430 = vadd.f32 %v1835, %v2312
        %v2431 = vadd.f32 %v1836, %v2317
        %v2432 = vadd.f32 %v1837, %v2320
        %v2433 = vadd.f32 %v1838, %v2325
        %v2434 = vadd.f32 %v1839, %v2328
        %v2435 = vadd.f32 %v1840, %v2333
        %v2436 = vadd.f32 %v1841, %v2336
        %v2437 = vadd.f32 %v1842, %v2341
        %v2438 = vadd.f32 %v1843, %v2344
        %v2439 = vadd.f32 %v1844, %v2349
        %v2440 = vadd.f32 %v1845, %v2352
        %v2441 = vadd.f32 %v1846, %v2357
        %v2442 = vadd.f32 %v1847, %v2360
        %v2443 = vadd.f32 %v1848, %v2365
        %v2444 = vadd.f32 %v1849, %v2368
        %v2445 = vadd.f32 %v1850, %v2373
        %v2446 = vadd.f32 %v1851, %v2376
        %v2447 = vadd.f32 %v1852, %v2381
        %v2448 = vadd.f32 %v1853, %v2384
        %v2449 = vadd.f32 %v1854, %v2389
        %v2450 = vadd.f32 %v1855, %v2392
        %v2451 = vadd.f32 %v1856, %v2397
        %v2452 = vadd.f32 %v1857, %v2400
        %v2453 = vadd.f32 %v1858, %v2405
        %v2454 = vadd.f32 %v1859, %v2408
        %v2455 = vadd.f32 %v1860, %v2413
        %v2456 = vadd.f32 %v1861, %v2416
        %v2457 = vadd.f32 %v1862, %v2421
        %v2458 = vadd.f32 %v1863, %v2424
        %2459 = vst [vmem:[#allocation4] sm:$0xff] %v2427
        %2460 = vst [vmem:[#allocation4 + $0x8] sm:$0xff] %v2428
        %2461 = vst [vmem:[#allocation4 + $0x10] sm:$0xff] %v2429
        %2462 = vst [vmem:[#allocation4 + $0x18] sm:$0xff] %v2430
        %2463 = vst [vmem:[#allocation4 + $0x20] sm:$0xff] %v2431
        %2464 = vst [vmem:[#allocation4 + $0x28] sm:$0xff] %v2432
        %2465 = vst [vmem:[#allocation4 + $0x30] sm:$0xff] %v2433
        %2466 = vst [vmem:[#allocation4 + $0x38] sm:$0xff] %v2434
        %2467 = vst [vmem:[#allocation4 + $0x40] sm:$0xff] %v2435
        %2468 = vst [vmem:[#allocation4 + $0x48] sm:$0xff] %v2436
        %2469 = vst [vmem:[#allocation4 + $0x50] sm:$0xff] %v2437
        %2470 = vst [vmem:[#allocation4 + $0x58] sm:$0xff] %v2438
        %2471 = vst [vmem:[#allocation4 + $0x60] sm:$0xff] %v2439
        %2472 = vst [vmem:[#allocation4 + $0x68] sm:$0xff] %v2440
        %2473 = vst [vmem:[#allocation4 + $0x70] sm:$0xff] %v2441
        %2474 = vst [vmem:[#allocation4 + $0x78] sm:$0xff] %v2442
        %2475 = vst [vmem:[#allocation4 + $0x80] sm:$0xff] %v2443
        %2476 = vst [vmem:[#allocation4 + $0x88] sm:$0xff] %v2444
        %2477 = vst [vmem:[#allocation4 + $0x90] sm:$0xff] %v2445
        %2478 = vst [vmem:[#allocation4 + $0x98] sm:$0xff] %v2446
        %2479 = vst [vmem:[#allocation4 + $0xa0] sm:$0xff] %v2447
        %2480 = vst [vmem:[#allocation4 + $0xa8] sm:$0xff] %v2448
        %2481 = vst [vmem:[#allocation4 + $0xb0] sm:$0xff] %v2449
        %2482 = vst [vmem:[#allocation4 + $0xb8] sm:$0xff] %v2450
        %2483 = vst [vmem:[#allocation4 + $0xc0] sm:$0xff] %v2451
        %2484 = vst [vmem:[#allocation4 + $0xc8] sm:$0xff] %v2452
        %2485 = vst [vmem:[#allocation4 + $0xd0] sm:$0xff] %v2453
        %2486 = vst [vmem:[#allocation4 + $0xd8] sm:$0xff] %v2454
        %2487 = vst [vmem:[#allocation4 + $0xe0] sm:$0xff] %v2455
        %2488 = vst [vmem:[#allocation4 + $0xe8] sm:$0xff] %v2456
        %2489 = vst [vmem:[#allocation4 + $0xf0] sm:$0xff] %v2457
        %2490 = vst [vmem:[#allocation4 + $0xf8] sm:$0xff] %v2458
        %v2491 = vld [vmem:[#allocation4] sm:$0xff]
        %v2492 = vld [vmem:[#allocation4 + $0x8] sm:$0xff]
        %v2493 = vld [vmem:[#allocation4 + $0x10] sm:$0xff]
        %v2494 = vld [vmem:[#allocation4 + $0x18] sm:$0xff]
        %v2495 = vld [vmem:[#allocation4 + $0x20] sm:$0xff]
        %v2496 = vld [vmem:[#allocation4 + $0x28] sm:$0xff]
        %v2497 = vld [vmem:[#allocation4 + $0x30] sm:$0xff]
        %v2498 = vld [vmem:[#allocation4 + $0x38] sm:$0xff]
        %v2499 = vld [vmem:[#allocation4 + $0x40] sm:$0xff]
        %v2500 = vld [vmem:[#allocation4 + $0x48] sm:$0xff]
        %v2501 = vld [vmem:[#allocation4 + $0x50] sm:$0xff]
        %v2502 = vld [vmem:[#allocation4 + $0x58] sm:$0xff]
        %v2503 = vld [vmem:[#allocation4 + $0x60] sm:$0xff]
        %v2504 = vld [vmem:[#allocation4 + $0x68] sm:$0xff]
        %v2505 = vld [vmem:[#allocation4 + $0x70] sm:$0xff]
        %v2506 = vld [vmem:[#allocation4 + $0x78] sm:$0xff]
        %v2507 = vld [vmem:[#allocation4 + $0x80] sm:$0xff]
        %v2508 = vld [vmem:[#allocation4 + $0x88] sm:$0xff]
        %v2509 = vld [vmem:[#allocation4 + $0x90] sm:$0xff]
        %v2510 = vld [vmem:[#allocation4 + $0x98] sm:$0xff]
        %v2511 = vld [vmem:[#allocation4 + $0xa0] sm:$0xff]
        %v2512 = vld [vmem:[#allocation4 + $0xa8] sm:$0xff]
        %v2513 = vld [vmem:[#allocation4 + $0xb0] sm:$0xff]
        %v2514 = vld [vmem:[#allocation4 + $0xb8] sm:$0xff]
        %v2515 = vld [vmem:[#allocation4 + $0xc0] sm:$0xff]
        %v2516 = vld [vmem:[#allocation4 + $0xc8] sm:$0xff]
        %v2517 = vld [vmem:[#allocation4 + $0xd0] sm:$0xff]
        %v2518 = vld [vmem:[#allocation4 + $0xd8] sm:$0xff]
        %v2519 = vld [vmem:[#allocation4 + $0xe0] sm:$0xff]
        %v2520 = vld [vmem:[#allocation4 + $0xe8] sm:$0xff]
        %v2521 = vld [vmem:[#allocation4 + $0xf0] sm:$0xff]
        %v2522 = vld [vmem:[#allocation4 + $0xf8] sm:$0xff]
        %v2523 = vld [vmem:[#allocation2 + $0x30] sm:$0xff]
        %v2524 = vld [vmem:[#allocation2 + $0x38] sm:$0xff]
        %v2525 = vld [vmem:[#allocation2 + $0x40] sm:$0xff]
        %v2526 = vld [vmem:[#allocation2 + $0x48] sm:$0xff]
        %v2527 = vld [vmem:[#allocation2 + $0x50] sm:$0xff]
        %v2528 = vld [vmem:[#allocation2 + $0x58] sm:$0xff]
        %v2529 = vld [vmem:[#allocation2 + $0x60] sm:$0xff]
        %v2530 = vld [vmem:[#allocation2 + $0x68] sm:$0xff]
        %v2531 = vld [vmem:[#allocation2 + $0x70] sm:$0xff]
        %v2532 = vld [vmem:[#allocation2 + $0x78] sm:$0xff]
        %v2533 = vld [vmem:[#allocation2 + $0x80] sm:$0xff]
        %v2534 = vld [vmem:[#allocation2 + $0x88] sm:$0xff]
        %v2535 = vld [vmem:[#allocation2 + $0x90] sm:$0xff]
        %v2536 = vld [vmem:[#allocation2 + $0x98] sm:$0xff]
        %v2537 = vld [vmem:[#allocation2 + $0xa0] sm:$0xff]
        %v2538 = vld [vmem:[#allocation2 + $0xa8] sm:$0xff]
        %v2539 = vld [vmem:[#allocation2 + $0xb0] sm:$0xff]
        %v2540 = vld [vmem:[#allocation2 + $0xb8] sm:$0xff]
        %v2541 = vld [vmem:[#allocation2 + $0xc0] sm:$0xff]
        %v2542 = vld [vmem:[#allocation2 + $0xc8] sm:$0xff]
        %v2543 = vld [vmem:[#allocation2 + $0xd0] sm:$0xff]
        %v2544 = vld [vmem:[#allocation2 + $0xd8] sm:$0xff]
        %v2545 = vld [vmem:[#allocation2 + $0xe0] sm:$0xff]
        %v2546 = vld [vmem:[#allocation2 + $0xe8] sm:$0xff]
        %v2547 = vld [vmem:[#allocation2 + $0xf0] sm:$0xff]
        %v2548 = vld [vmem:[#allocation2 + $0xf8] sm:$0xff]
        %v2549 = vld [vmem:[#allocation2 + $0x100] sm:$0xff]
        %v2550 = vld [vmem:[#allocation2 + $0x108] sm:$0xff]
        %v2551 = vld [vmem:[#allocation2 + $0x110] sm:$0xff]
        %v2552 = vld [vmem:[#allocation2 + $0x118] sm:$0xff]
        %v2553 = vld [vmem:[#allocation2 + $0x120] sm:$0xff]
        %v2554 = vld [vmem:[#allocation2 + $0x128] sm:$0xff]
        %v2555 = vld [vmem:[#allocation2 + $0x130] sm:$0xff]
        %v2556 = vld [vmem:[#allocation2 + $0x138] sm:$0xff]
        %v2557 = vld [vmem:[#allocation2 + $0x140] sm:$0xff]
        %v2558 = vld [vmem:[#allocation2 + $0x148] sm:$0xff]
        %v2559 = vld [vmem:[#allocation2 + $0x150] sm:$0xff]
        %v2560 = vld [vmem:[#allocation2 + $0x158] sm:$0xff]
        %v2561 = vld [vmem:[#allocation2 + $0x160] sm:$0xff]
        %v2562 = vld [vmem:[#allocation2 + $0x168] sm:$0xff]
        %v2563 = vld [vmem:[#allocation2 + $0x170] sm:$0xff]
        %v2564 = vld [vmem:[#allocation2 + $0x178] sm:$0xff]
        %v2565 = vld [vmem:[#allocation2 + $0x180] sm:$0xff]
        %v2566 = vld [vmem:[#allocation2 + $0x188] sm:$0xff]
        %v2567 = vld [vmem:[#allocation2 + $0x190] sm:$0xff]
        %v2568 = vld [vmem:[#allocation2 + $0x198] sm:$0xff]
        %v2569 = vld [vmem:[#allocation2 + $0x1a0] sm:$0xff]
        %v2570 = vld [vmem:[#allocation2 + $0x1a8] sm:$0xff]
        %s2571 = scalar_lea.vmem %s1, 384
        %v2572 = vld [vmem:[%s2571] sm:$0xf]
        %v2573 = vld [vmem:[%s2571 + $0x4] sm:$0xf]
        %v2574 = vld [vmem:[%s2571 + $0x8] sm:$0xf]
        %v2575 = vld [vmem:[%s2571 + $0xc] sm:$0xf]
        %v2576 = vld [vmem:[%s2571 + $0x10] sm:$0xf]
        %v2577 = vld [vmem:[%s2571 + $0x14] sm:$0xf]
        %v2578 = vld [vmem:[%s2571 + $0x18] sm:$0xf]
        %v2579 = vld [vmem:[%s2571 + $0x1c] sm:$0xf]
        %v2580 = vld [vmem:[%s2571 + $0x20] sm:$0xf]
        %v2581 = vld [vmem:[%s2571 + $0x24] sm:$0xf]
        %v2582 = vld [vmem:[%s2571 + $0x28] sm:$0xf]
        %v2583 = vld [vmem:[%s2571 + $0x2c] sm:$0xf]
        %v2584 = vld [vmem:[%s2571 + $0x30] sm:$0xf]
        %v2585 = vld [vmem:[%s2571 + $0x34] sm:$0xf]
        %v2586 = vld [vmem:[%s2571 + $0x38] sm:$0xf]
        %v2587 = vld [vmem:[%s2571 + $0x3c] sm:$0xf]
        %v2588 = vld [vmem:[%s2571 + $0x40] sm:$0xf]
        %v2589 = vld [vmem:[%s2571 + $0x44] sm:$0xf]
        %v2590 = vld [vmem:[%s2571 + $0x48] sm:$0xf]
        %v2591 = vld [vmem:[%s2571 + $0x4c] sm:$0xf]
        %v2592 = vld [vmem:[%s2571 + $0x50] sm:$0xf]
        %v2593 = vld [vmem:[%s2571 + $0x54] sm:$0xf]
        %v2594 = vld [vmem:[%s2571 + $0x58] sm:$0xf]
        %v2595 = vld [vmem:[%s2571 + $0x5c] sm:$0xf]
        %v2596 = vld [vmem:[%s2571 + $0x60] sm:$0xf]
        %v2597 = vld [vmem:[%s2571 + $0x64] sm:$0xf]
        %v2598 = vld [vmem:[%s2571 + $0x68] sm:$0xf]
        %v2599 = vld [vmem:[%s2571 + $0x6c] sm:$0xf]
        %v2600 = vld [vmem:[%s2571 + $0x70] sm:$0xf]
        %v2601 = vld [vmem:[%s2571 + $0x74] sm:$0xf]
        %v2602 = vld [vmem:[%s2571 + $0x78] sm:$0xf]
        %v2603 = vld [vmem:[%s2571 + $0x7c] sm:$0xf]
        %v2604 = vld [vmem:[%s2571 + $0x80] sm:$0xf]
        %v2605 = vld [vmem:[%s2571 + $0x84] sm:$0xf]
        %v2606 = vld [vmem:[%s2571 + $0x88] sm:$0xf]
        %v2607 = vld [vmem:[%s2571 + $0x8c] sm:$0xf]
        %v2608 = vld [vmem:[%s2571 + $0x90] sm:$0xf]
        %v2609 = vld [vmem:[%s2571 + $0x94] sm:$0xf]
        %v2610 = vld [vmem:[%s2571 + $0x98] sm:$0xf]
        %v2611 = vld [vmem:[%s2571 + $0x9c] sm:$0xf]
        %v2612 = vld [vmem:[%s2571 + $0xa0] sm:$0xf]
        %v2613 = vld [vmem:[%s2571 + $0xa4] sm:$0xf]
        %v2614 = vld [vmem:[%s2571 + $0xa8] sm:$0xf]
        %v2615 = vld [vmem:[%s2571 + $0xac] sm:$0xf]
        %v2616 = vld [vmem:[%s2571 + $0xb0] sm:$0xf]
        %v2617 = vld [vmem:[%s2571 + $0xb4] sm:$0xf]
        %v2618 = vld [vmem:[%s2571 + $0xb8] sm:$0xf]
        %v2619 = vld [vmem:[%s2571 + $0xbc] sm:$0xf]
        %v2668 = vunpack.c.l.b16 %v2572
        %v2669 = vunpack.c.l.b16 %v2573
        %v2670 = vunpack.c.l.b16 %v2574
        %v2671 = vunpack.c.l.b16 %v2575
        %v2672 = vunpack.c.l.b16 %v2576
        %v2673 = vunpack.c.l.b16 %v2577
        %v2674 = vunpack.c.l.b16 %v2578
        %v2675 = vunpack.c.l.b16 %v2579
        %v2676 = vunpack.c.l.b16 %v2580
        %v2677 = vunpack.c.l.b16 %v2581
        %v2678 = vunpack.c.l.b16 %v2582
        %v2679 = vunpack.c.l.b16 %v2583
        %v2680 = vunpack.c.l.b16 %v2584
        %v2681 = vunpack.c.l.b16 %v2585
        %v2682 = vunpack.c.l.b16 %v2586
        %v2683 = vunpack.c.l.b16 %v2587
        %v2684 = vunpack.c.l.b16 %v2588
        %v2685 = vunpack.c.l.b16 %v2589
        %v2686 = vunpack.c.l.b16 %v2590
        %v2687 = vunpack.c.l.b16 %v2591
        %v2688 = vunpack.c.l.b16 %v2592
        %v2689 = vunpack.c.l.b16 %v2593
        %v2690 = vunpack.c.l.b16 %v2594
        %v2691 = vunpack.c.l.b16 %v2595
        %v2692 = vunpack.c.l.b16 %v2596
        %v2693 = vunpack.c.l.b16 %v2597
        %v2694 = vunpack.c.l.b16 %v2598
        %v2695 = vunpack.c.l.b16 %v2599
        %v2696 = vunpack.c.l.b16 %v2600
        %v2697 = vunpack.c.l.b16 %v2601
        %v2698 = vunpack.c.l.b16 %v2602
        %v2699 = vunpack.c.l.b16 %v2603
        %v2700 = vunpack.c.l.b16 %v2604
        %v2701 = vunpack.c.l.b16 %v2605
        %v2702 = vunpack.c.l.b16 %v2606
        %v2703 = vunpack.c.l.b16 %v2607
        %v2704 = vunpack.c.l.b16 %v2608
        %v2705 = vunpack.c.l.b16 %v2609
        %v2706 = vunpack.c.l.b16 %v2610
        %v2707 = vunpack.c.l.b16 %v2611
        %v2708 = vunpack.c.l.b16 %v2612
        %v2709 = vunpack.c.l.b16 %v2613
        %v2710 = vunpack.c.l.b16 %v2614
        %v2711 = vunpack.c.l.b16 %v2615
        %v2712 = vunpack.c.l.b16 %v2616
        %v2713 = vunpack.c.l.b16 %v2617
        %v2714 = vunpack.c.l.b16 %v2618
        %v2715 = vunpack.c.l.b16 %v2619
        %v2716 = vpack.c.b16 %v2669, %v2668
        %v2717 = vpack.c.b16 %v2671, %v2670
        %v2718 = vpack.c.b16 %v2673, %v2672
        %v2719 = vpack.c.b16 %v2675, %v2674
        %v2720 = vpack.c.b16 %v2677, %v2676
        %v2721 = vpack.c.b16 %v2679, %v2678
        %v2722 = vpack.c.b16 %v2681, %v2680
        %v2723 = vpack.c.b16 %v2683, %v2682
        %v2724 = vpack.c.b16 %v2685, %v2684
        %v2725 = vpack.c.b16 %v2687, %v2686
        %v2726 = vpack.c.b16 %v2689, %v2688
        %v2727 = vpack.c.b16 %v2691, %v2690
        %v2728 = vpack.c.b16 %v2693, %v2692
        %v2729 = vpack.c.b16 %v2695, %v2694
        %v2730 = vpack.c.b16 %v2697, %v2696
        %v2731 = vpack.c.b16 %v2699, %v2698
        %v2732 = vpack.c.b16 %v2701, %v2700
        %v2733 = vpack.c.b16 %v2703, %v2702
        %v2734 = vpack.c.b16 %v2705, %v2704
        %v2735 = vpack.c.b16 %v2707, %v2706
        %v2736 = vpack.c.b16 %v2709, %v2708
        %v2737 = vpack.c.b16 %v2711, %v2710
        %v2738 = vpack.c.b16 %v2713, %v2712
        %v2739 = vpack.c.b16 %v2715, %v2714
        %2764 = vmatprep.subr.bf16.mxu0 0
        %2765 = vmatpush1.bf16.msra.mxu0 %v2716
        %2766 = vmatprep.subr.bf16.mxu0 0
        %2767 = vmatpush1.bf16.msra.mxu0 %v2717
        %2768 = vmatprep.subr.bf16.mxu0 0
        %2769 = vmatpush1.bf16.msra.mxu0 %v2718
        %2770 = vmatprep.subr.bf16.mxu0 0
        %2771 = vmatpush1.bf16.msra.mxu0 %v2719
        %2772 = vmatprep.subr.bf16.mxu0 0
        %2773 = vmatpush1.bf16.msra.mxu0 %v2720
        %2774 = vmatprep.subr.bf16.mxu0 0
        %2775 = vmatpush1.bf16.msra.mxu0 %v2721
        %2776 = vmatprep.subr.bf16.mxu0 0
        %2777 = vmatpush1.bf16.msra.mxu0 %v2722
        %2778 = vmatprep.subr.bf16.mxu0 0
        %2779 = vmatpush1.bf16.msra.mxu0 %v2723
        %2780 = vmatprep.subr.bf16.mxu0 0
        %2781 = vmatpush1.bf16.msra.mxu0 %v2724
        %2782 = vmatprep.subr.bf16.mxu0 0
        %2783 = vmatpush1.bf16.msra.mxu0 %v2725
        %2784 = vmatprep.subr.bf16.mxu0 0
        %2785 = vmatpush1.bf16.msra.mxu0 %v2726
        %2786 = vmatprep.subr.bf16.mxu0 0
        %2787 = vmatpush1.bf16.msra.mxu0 %v2727
        %2788 = vmatprep.subr.bf16.mxu0 0
        %2789 = vmatpush1.bf16.msra.mxu0 %v2728
        %2790 = vmatprep.subr.bf16.mxu0 0
        %2791 = vmatpush1.bf16.msra.mxu0 %v2729
        %2792 = vmatprep.subr.bf16.mxu0 0
        %2793 = vmatpush1.bf16.msra.mxu0 %v2730
        %2794 = vmatprep.subr.bf16.mxu0 0
        %2795 = vmatpush1.bf16.msra.mxu0 %v2731
        %2796 = vmatprep.mubr.bf16.mxu0 %v2524
        %2797 = vmatmul.mubr.bf16.gmra.mrb[0].mxu0 %v2523
        %v2798 = vpop.f32.mrb[0].mxu0
        %v2799 = vadd.f32 0.0, %v2798
        %v2800 = vpop.f32.mrb[0].mxu0
        %v2801 = vpop.f32.mrb[0].mxu0
        %v2802 = vadd.f32 0.0, %v2801
        %v2803 = vpop.f32.mrb[0].mxu0
        %2804 = vmatprep.mubr.bf16.mxu0 %v2527
        %2805 = vmatmul.mubr.bf16.gmra.mrb[0].mxu0 %v2526
        %v2806 = vpop.f32.mrb[0].mxu0
        %v2807 = vadd.f32 0.0, %v2806
        %v2808 = vpop.f32.mrb[0].mxu0
        %v2809 = vpop.f32.mrb[0].mxu0
        %v2810 = vadd.f32 0.0, %v2809
        %v2811 = vpop.f32.mrb[0].mxu0
        %2812 = vmatprep.mubr.bf16.mxu0 %v2530
        %2813 = vmatmul.mubr.bf16.gmra.mrb[0].mxu0 %v2529
        %v2814 = vpop.f32.mrb[0].mxu0
        %v2815 = vadd.f32 0.0, %v2814
        %v2816 = vpop.f32.mrb[0].mxu0
        %v2817 = vpop.f32.mrb[0].mxu0
        %v2818 = vadd.f32 0.0, %v2817
        %v2819 = vpop.f32.mrb[0].mxu0
        %2820 = vmatprep.mubr.bf16.mxu0 %v2533
        %2821 = vmatmul.mubr.bf16.gmra.mrb[0].mxu0 %v2532
        %v2822 = vpop.f32.mrb[0].mxu0
        %v2823 = vadd.f32 0.0, %v2822
        %v2824 = vpop.f32.mrb[0].mxu0
        %v2825 = vpop.f32.mrb[0].mxu0
        %v2826 = vadd.f32 0.0, %v2825
        %v2827 = vpop.f32.mrb[0].mxu0
        %2828 = vmatprep.mubr.bf16.mxu0 %v2536
        %2829 = vmatmul.mubr.bf16.gmra.mrb[0].mxu0 %v2535
        %v2830 = vpop.f32.mrb[0].mxu0
        %v2831 = vadd.f32 0.0, %v2830
        %v2832 = vpop.f32.mrb[0].mxu0
        %v2833 = vpop.f32.mrb[0].mxu0
        %v2834 = vadd.f32 0.0, %v2833
        %v2835 = vpop.f32.mrb[0].mxu0
        %2836 = vmatprep.mubr.bf16.mxu0 %v2539
        %2837 = vmatmul.mubr.bf16.gmra.mrb[0].mxu0 %v2538
        %v2838 = vpop.f32.mrb[0].mxu0
        %v2839 = vadd.f32 0.0, %v2838
        %v2840 = vpop.f32.mrb[0].mxu0
        %v2841 = vpop.f32.mrb[0].mxu0
        %v2842 = vadd.f32 0.0, %v2841
        %v2843 = vpop.f32.mrb[0].mxu0
        %2844 = vmatprep.mubr.bf16.mxu0 %v2542
        %2845 = vmatmul.mubr.bf16.gmra.mrb[0].mxu0 %v2541
        %v2846 = vpop.f32.mrb[0].mxu0
        %v2847 = vadd.f32 0.0, %v2846
        %v2848 = vpop.f32.mrb[0].mxu0
        %v2849 = vpop.f32.mrb[0].mxu0
        %v2850 = vadd.f32 0.0, %v2849
        %v2851 = vpop.f32.mrb[0].mxu0
        %2852 = vmatprep.mubr.bf16.mxu0 %v2545
        %2853 = vmatmul.mubr.bf16.gmra.mrb[0].mxu0 %v2544
        %v2854 = vpop.f32.mrb[0].mxu0
        %v2855 = vadd.f32 0.0, %v2854
        %v2856 = vpop.f32.mrb[0].mxu0
        %v2857 = vpop.f32.mrb[0].mxu0
        %v2858 = vadd.f32 0.0, %v2857
        %v2859 = vpop.f32.mrb[0].mxu0
        %2860 = vmatprep.mubr.bf16.mxu0 %v2548
        %2861 = vmatmul.mubr.bf16.gmra.mrb[0].mxu0 %v2547
        %v2862 = vpop.f32.mrb[0].mxu0
        %v2863 = vadd.f32 0.0, %v2862
        %v2864 = vpop.f32.mrb[0].mxu0
        %v2865 = vpop.f32.mrb[0].mxu0
        %v2866 = vadd.f32 0.0, %v2865
        %v2867 = vpop.f32.mrb[0].mxu0
        %2868 = vmatprep.mubr.bf16.mxu0 %v2551
        %2869 = vmatmul.mubr.bf16.gmra.mrb[0].mxu0 %v2550
        %v2870 = vpop.f32.mrb[0].mxu0
        %v2871 = vadd.f32 0.0, %v2870
        %v2872 = vpop.f32.mrb[0].mxu0
        %v2873 = vpop.f32.mrb[0].mxu0
        %v2874 = vadd.f32 0.0, %v2873
        %v2875 = vpop.f32.mrb[0].mxu0
        %2876 = vmatprep.mubr.bf16.mxu0 %v2554
        %2877 = vmatmul.mubr.bf16.gmra.mrb[0].mxu0 %v2553
        %v2878 = vpop.f32.mrb[0].mxu0
        %v2879 = vadd.f32 0.0, %v2878
        %v2880 = vpop.f32.mrb[0].mxu0
        %v2881 = vpop.f32.mrb[0].mxu0
        %v2882 = vadd.f32 0.0, %v2881
        %v2883 = vpop.f32.mrb[0].mxu0
        %2884 = vmatprep.mubr.bf16.mxu0 %v2557
        %2885 = vmatmul.mubr.bf16.gmra.mrb[0].mxu0 %v2556
        %v2886 = vpop.f32.mrb[0].mxu0
        %v2887 = vadd.f32 0.0, %v2886
        %v2888 = vpop.f32.mrb[0].mxu0
        %v2889 = vpop.f32.mrb[0].mxu0
        %v2890 = vadd.f32 0.0, %v2889
        %v2891 = vpop.f32.mrb[0].mxu0
        %2892 = vmatprep.mubr.bf16.mxu0 %v2560
        %2893 = vmatmul.mubr.bf16.gmra.mrb[0].mxu0 %v2559
        %v2894 = vpop.f32.mrb[0].mxu0
        %v2895 = vadd.f32 0.0, %v2894
        %v2896 = vpop.f32.mrb[0].mxu0
        %v2897 = vpop.f32.mrb[0].mxu0
        %v2898 = vadd.f32 0.0, %v2897
        %v2899 = vpop.f32.mrb[0].mxu0
        %2900 = vmatprep.mubr.bf16.mxu0 %v2563
        %2901 = vmatmul.mubr.bf16.gmra.mrb[0].mxu0 %v2562
        %v2902 = vpop.f32.mrb[0].mxu0
        %v2903 = vadd.f32 0.0, %v2902
        %v2904 = vpop.f32.mrb[0].mxu0
        %v2905 = vpop.f32.mrb[0].mxu0
        %v2906 = vadd.f32 0.0, %v2905
        %v2907 = vpop.f32.mrb[0].mxu0
        %2908 = vmatprep.mubr.bf16.mxu0 %v2566
        %2909 = vmatmul.mubr.bf16.gmra.mrb[0].mxu0 %v2565
        %v2910 = vpop.f32.mrb[0].mxu0
        %v2911 = vadd.f32 0.0, %v2910
        %v2912 = vpop.f32.mrb[0].mxu0
        %v2913 = vpop.f32.mrb[0].mxu0
        %v2914 = vadd.f32 0.0, %v2913
        %v2915 = vpop.f32.mrb[0].mxu0
        %2916 = vmatprep.mubr.bf16.mxu0 %v2569
        %2917 = vmatmul.mubr.bf16.gmra.mrb[0].mxu0 %v2568
        %v2918 = vpop.f32.mrb[0].mxu0
        %v2919 = vadd.f32 0.0, %v2918
        %v2920 = vpop.f32.mrb[0].mxu0
        %v2921 = vpop.f32.mrb[0].mxu0
        %v2922 = vadd.f32 0.0, %v2921
        %v2923 = vpop.f32.mrb[0].mxu0
        %2924 = vdwg.mxu0
        %2925 = vmatprep.subr.bf16.mxu0 0
        %2926 = vmatpush1.bf16.msra.mxu0 %v2732
        %2927 = vmatprep.subr.bf16.mxu0 0
        %2928 = vmatpush1.bf16.msra.mxu0 %v2733
        %2929 = vmatprep.subr.bf16.mxu0 0
        %2930 = vmatpush1.bf16.msra.mxu0 %v2734
        %2931 = vmatprep.subr.bf16.mxu0 0
        %2932 = vmatpush1.bf16.msra.mxu0 %v2735
        %2933 = vmatprep.subr.bf16.mxu0 0
        %2934 = vmatpush1.bf16.msra.mxu0 %v2736
        %2935 = vmatprep.subr.bf16.mxu0 0
        %2936 = vmatpush1.bf16.msra.mxu0 %v2737
        %2937 = vmatprep.subr.bf16.mxu0 0
        %2938 = vmatpush1.bf16.msra.mxu0 %v2738
        %2939 = vmatprep.subr.bf16.mxu0 0
        %2940 = vmatpush1.bf16.msra.mxu0 %v2739
        %2941 = vmatprep.subr.bf16.mxu0 0
        %2942 = vmatpush1.bf16.msra.mxu0 0
        %2943 = vmatprep.subr.bf16.mxu0 0
        %2944 = vmatpush1.bf16.msra.mxu0 0
        %2945 = vmatprep.subr.bf16.mxu0 0
        %2946 = vmatpush1.bf16.msra.mxu0 0
        %2947 = vmatprep.subr.bf16.mxu0 0
        %2948 = vmatpush1.bf16.msra.mxu0 0
        %2949 = vmatprep.subr.bf16.mxu0 0
        %2950 = vmatpush1.bf16.msra.mxu0 0
        %2951 = vmatprep.subr.bf16.mxu0 0
        %2952 = vmatpush1.bf16.msra.mxu0 0
        %2953 = vmatprep.subr.bf16.mxu0 0
        %2954 = vmatpush1.bf16.msra.mxu0 0
        %2955 = vmatprep.subr.bf16.mxu0 0
        %2956 = vmatpush1.bf16.msra.mxu0 0
        %2957 = vmatprep.mubr.bf16.mxu0 0
        %2958 = vmatmul.mubr.bf16.gmra.mrb[0].mxu0 %v2525
        %v2959 = vpop.f32.mrb[0].mxu0
        %v2960 = vadd.f32 %v2799, %v2959
        %v2961 = vpop.f32.mrb[0].mxu0
        %v2962 = vpop.f32.mrb[0].mxu0
        %v2963 = vadd.f32 %v2802, %v2962
        %v2964 = vpop.f32.mrb[0].mxu0
        %2965 = vmatprep.mubr.bf16.mxu0 0
        %2966 = vmatmul.mubr.bf16.gmra.mrb[0].mxu0 %v2528
        %v2967 = vpop.f32.mrb[0].mxu0
        %v2968 = vadd.f32 %v2807, %v2967
        %v2969 = vpop.f32.mrb[0].mxu0
        %v2970 = vpop.f32.mrb[0].mxu0
        %v2971 = vadd.f32 %v2810, %v2970
        %v2972 = vpop.f32.mrb[0].mxu0
        %2973 = vmatprep.mubr.bf16.mxu0 0
        %2974 = vmatmul.mubr.bf16.gmra.mrb[0].mxu0 %v2531
        %v2975 = vpop.f32.mrb[0].mxu0
        %v2976 = vadd.f32 %v2815, %v2975
        %v2977 = vpop.f32.mrb[0].mxu0
        %v2978 = vpop.f32.mrb[0].mxu0
        %v2979 = vadd.f32 %v2818, %v2978
        %v2980 = vpop.f32.mrb[0].mxu0
        %2981 = vmatprep.mubr.bf16.mxu0 0
        %2982 = vmatmul.mubr.bf16.gmra.mrb[0].mxu0 %v2534
        %v2983 = vpop.f32.mrb[0].mxu0
        %v2984 = vadd.f32 %v2823, %v2983
        %v2985 = vpop.f32.mrb[0].mxu0
        %v2986 = vpop.f32.mrb[0].mxu0
        %v2987 = vadd.f32 %v2826, %v2986
        %v2988 = vpop.f32.mrb[0].mxu0
        %2989 = vmatprep.mubr.bf16.mxu0 0
        %2990 = vmatmul.mubr.bf16.gmra.mrb[0].mxu0 %v2537
        %v2991 = vpop.f32.mrb[0].mxu0
        %v2992 = vadd.f32 %v2831, %v2991
        %v2993 = vpop.f32.mrb[0].mxu0
        %v2994 = vpop.f32.mrb[0].mxu0
        %v2995 = vadd.f32 %v2834, %v2994
        %v2996 = vpop.f32.mrb[0].mxu0
        %2997 = vmatprep.mubr.bf16.mxu0 0
        %2998 = vmatmul.mubr.bf16.gmra.mrb[0].mxu0 %v2540
        %v2999 = vpop.f32.mrb[0].mxu0
        %v3000 = vadd.f32 %v2839, %v2999
        %v3001 = vpop.f32.mrb[0].mxu0
        %v3002 = vpop.f32.mrb[0].mxu0
        %v3003 = vadd.f32 %v2842, %v3002
        %v3004 = vpop.f32.mrb[0].mxu0
        %3005 = vmatprep.mubr.bf16.mxu0 0
        %3006 = vmatmul.mubr.bf16.gmra.mrb[0].mxu0 %v2543
        %v3007 = vpop.f32.mrb[0].mxu0
        %v3008 = vadd.f32 %v2847, %v3007
        %v3009 = vpop.f32.mrb[0].mxu0
        %v3010 = vpop.f32.mrb[0].mxu0
        %v3011 = vadd.f32 %v2850, %v3010
        %v3012 = vpop.f32.mrb[0].mxu0
        %3013 = vmatprep.mubr.bf16.mxu0 0
        %3014 = vmatmul.mubr.bf16.gmra.mrb[0].mxu0 %v2546
        %v3015 = vpop.f32.mrb[0].mxu0
        %v3016 = vadd.f32 %v2855, %v3015
        %v3017 = vpop.f32.mrb[0].mxu0
        %v3018 = vpop.f32.mrb[0].mxu0
        %v3019 = vadd.f32 %v2858, %v3018
        %v3020 = vpop.f32.mrb[0].mxu0
        %3021 = vmatprep.mubr.bf16.mxu0 0
        %3022 = vmatmul.mubr.bf16.gmra.mrb[0].mxu0 %v2549
        %v3023 = vpop.f32.mrb[0].mxu0
        %v3024 = vadd.f32 %v2863, %v3023
        %v3025 = vpop.f32.mrb[0].mxu0
        %v3026 = vpop.f32.mrb[0].mxu0
        %v3027 = vadd.f32 %v2866, %v3026
        %v3028 = vpop.f32.mrb[0].mxu0
        %3029 = vmatprep.mubr.bf16.mxu0 0
        %3030 = vmatmul.mubr.bf16.gmra.mrb[0].mxu0 %v2552
        %v3031 = vpop.f32.mrb[0].mxu0
        %v3032 = vadd.f32 %v2871, %v3031
        %v3033 = vpop.f32.mrb[0].mxu0
        %v3034 = vpop.f32.mrb[0].mxu0
        %v3035 = vadd.f32 %v2874, %v3034
        %v3036 = vpop.f32.mrb[0].mxu0
        %3037 = vmatprep.mubr.bf16.mxu0 0
        %3038 = vmatmul.mubr.bf16.gmra.mrb[0].mxu0 %v2555
        %v3039 = vpop.f32.mrb[0].mxu0
        %v3040 = vadd.f32 %v2879, %v3039
        %v3041 = vpop.f32.mrb[0].mxu0
        %v3042 = vpop.f32.mrb[0].mxu0
        %v3043 = vadd.f32 %v2882, %v3042
        %v3044 = vpop.f32.mrb[0].mxu0
        %3045 = vmatprep.mubr.bf16.mxu0 0
        %3046 = vmatmul.mubr.bf16.gmra.mrb[0].mxu0 %v2558
        %v3047 = vpop.f32.mrb[0].mxu0
        %v3048 = vadd.f32 %v2887, %v3047
        %v3049 = vpop.f32.mrb[0].mxu0
        %v3050 = vpop.f32.mrb[0].mxu0
        %v3051 = vadd.f32 %v2890, %v3050
        %v3052 = vpop.f32.mrb[0].mxu0
        %3053 = vmatprep.mubr.bf16.mxu0 0
        %3054 = vmatmul.mubr.bf16.gmra.mrb[0].mxu0 %v2561
        %v3055 = vpop.f32.mrb[0].mxu0
        %v3056 = vadd.f32 %v2895, %v3055
        %v3057 = vpop.f32.mrb[0].mxu0
        %v3058 = vpop.f32.mrb[0].mxu0
        %v3059 = vadd.f32 %v2898, %v3058
        %v3060 = vpop.f32.mrb[0].mxu0
        %3061 = vmatprep.mubr.bf16.mxu0 0
        %3062 = vmatmul.mubr.bf16.gmra.mrb[0].mxu0 %v2564
        %v3063 = vpop.f32.mrb[0].mxu0
        %v3064 = vadd.f32 %v2903, %v3063
        %v3065 = vpop.f32.mrb[0].mxu0
        %v3066 = vpop.f32.mrb[0].mxu0
        %v3067 = vadd.f32 %v2906, %v3066
        %v3068 = vpop.f32.mrb[0].mxu0
        %3069 = vmatprep.mubr.bf16.mxu0 0
        %3070 = vmatmul.mubr.bf16.gmra.mrb[0].mxu0 %v2567
        %v3071 = vpop.f32.mrb[0].mxu0
        %v3072 = vadd.f32 %v2911, %v3071
        %v3073 = vpop.f32.mrb[0].mxu0
        %v3074 = vpop.f32.mrb[0].mxu0
        %v3075 = vadd.f32 %v2914, %v3074
        %v3076 = vpop.f32.mrb[0].mxu0
        %3077 = vmatprep.mubr.bf16.mxu0 0
        %3078 = vmatmul.mubr.bf16.gmra.mrb[0].mxu0 %v2570
        %v3079 = vpop.f32.mrb[0].mxu0
        %v3080 = vadd.f32 %v2919, %v3079
        %v3081 = vpop.f32.mrb[0].mxu0
        %v3082 = vpop.f32.mrb[0].mxu0
        %v3083 = vadd.f32 %v2922, %v3082
        %v3084 = vpop.f32.mrb[0].mxu0
        %3085 = vdwg.mxu0
        %v3086 = vadd.f32 %v2491, %v2960
        %v3087 = vadd.f32 %v2492, %v2963
        %v3088 = vadd.f32 %v2493, %v2968
        %v3089 = vadd.f32 %v2494, %v2971
        %v3090 = vadd.f32 %v2495, %v2976
        %v3091 = vadd.f32 %v2496, %v2979
        %v3092 = vadd.f32 %v2497, %v2984
        %v3093 = vadd.f32 %v2498, %v2987
        %v3094 = vadd.f32 %v2499, %v2992
        %v3095 = vadd.f32 %v2500, %v2995
        %v3096 = vadd.f32 %v2501, %v3000
        %v3097 = vadd.f32 %v2502, %v3003
        %v3098 = vadd.f32 %v2503, %v3008
        %v3099 = vadd.f32 %v2504, %v3011
        %v3100 = vadd.f32 %v2505, %v3016
        %v3101 = vadd.f32 %v2506, %v3019
        %v3102 = vadd.f32 %v2507, %v3024
        %v3103 = vadd.f32 %v2508, %v3027
        %v3104 = vadd.f32 %v2509, %v3032
        %v3105 = vadd.f32 %v2510, %v3035
        %v3106 = vadd.f32 %v2511, %v3040
        %v3107 = vadd.f32 %v2512, %v3043
        %v3108 = vadd.f32 %v2513, %v3048
        %v3109 = vadd.f32 %v2514, %v3051
        %v3110 = vadd.f32 %v2515, %v3056
        %v3111 = vadd.f32 %v2516, %v3059
        %v3112 = vadd.f32 %v2517, %v3064
        %v3113 = vadd.f32 %v2518, %v3067
        %v3114 = vadd.f32 %v2519, %v3072
        %v3115 = vadd.f32 %v2520, %v3075
        %v3116 = vadd.f32 %v2521, %v3080
        %v3117 = vadd.f32 %v2522, %v3083
        %3118 = vst [vmem:[#allocation4] sm:$0xff] %v3086
        %3119 = vst [vmem:[#allocation4 + $0x8] sm:$0xff] %v3087
        %3120 = vst [vmem:[#allocation4 + $0x10] sm:$0xff] %v3088
        %3121 = vst [vmem:[#allocation4 + $0x18] sm:$0xff] %v3089
        %3122 = vst [vmem:[#allocation4 + $0x20] sm:$0xff] %v3090
        %3123 = vst [vmem:[#allocation4 + $0x28] sm:$0xff] %v3091
        %3124 = vst [vmem:[#allocation4 + $0x30] sm:$0xff] %v3092
        %3125 = vst [vmem:[#allocation4 + $0x38] sm:$0xff] %v3093
        %3126 = vst [vmem:[#allocation4 + $0x40] sm:$0xff] %v3094
        %3127 = vst [vmem:[#allocation4 + $0x48] sm:$0xff] %v3095
        %3128 = vst [vmem:[#allocation4 + $0x50] sm:$0xff] %v3096
        %3129 = vst [vmem:[#allocation4 + $0x58] sm:$0xff] %v3097
        %3130 = vst [vmem:[#allocation4 + $0x60] sm:$0xff] %v3098
        %3131 = vst [vmem:[#allocation4 + $0x68] sm:$0xff] %v3099
        %3132 = vst [vmem:[#allocation4 + $0x70] sm:$0xff] %v3100
        %3133 = vst [vmem:[#allocation4 + $0x78] sm:$0xff] %v3101
        %3134 = vst [vmem:[#allocation4 + $0x80] sm:$0xff] %v3102
        %3135 = vst [vmem:[#allocation4 + $0x88] sm:$0xff] %v3103
        %3136 = vst [vmem:[#allocation4 + $0x90] sm:$0xff] %v3104
        %3137 = vst [vmem:[#allocation4 + $0x98] sm:$0xff] %v3105
        %3138 = vst [vmem:[#allocation4 + $0xa0] sm:$0xff] %v3106
        %3139 = vst [vmem:[#allocation4 + $0xa8] sm:$0xff] %v3107
        %3140 = vst [vmem:[#allocation4 + $0xb0] sm:$0xff] %v3108
        %3141 = vst [vmem:[#allocation4 + $0xb8] sm:$0xff] %v3109
        %3142 = vst [vmem:[#allocation4 + $0xc0] sm:$0xff] %v3110
        %3143 = vst [vmem:[#allocation4 + $0xc8] sm:$0xff] %v3111
        %3144 = vst [vmem:[#allocation4 + $0xd0] sm:$0xff] %v3112
        %3145 = vst [vmem:[#allocation4 + $0xd8] sm:$0xff] %v3113
        %3146 = vst [vmem:[#allocation4 + $0xe0] sm:$0xff] %v3114
        %3147 = vst [vmem:[#allocation4 + $0xe8] sm:$0xff] %v3115
        %3148 = vst [vmem:[#allocation4 + $0xf0] sm:$0xff] %v3116
        %3149 = vst [vmem:[#allocation4 + $0xf8] sm:$0xff] %v3117
        %v3150 = vld [vmem:[#allocation4] sm:$0xff]
        %v3151 = vld [vmem:[#allocation4 + $0x8] sm:$0xff]
        %v3152 = vld [vmem:[#allocation4 + $0x10] sm:$0xff]
        %v3153 = vld [vmem:[#allocation4 + $0x18] sm:$0xff]
        %v3154 = vld [vmem:[#allocation4 + $0x20] sm:$0xff]
        %v3155 = vld [vmem:[#allocation4 + $0x28] sm:$0xff]
        %v3156 = vld [vmem:[#allocation4 + $0x30] sm:$0xff]
        %v3157 = vld [vmem:[#allocation4 + $0x38] sm:$0xff]
        %v3158 = vld [vmem:[#allocation4 + $0x40] sm:$0xff]
        %v3159 = vld [vmem:[#allocation4 + $0x48] sm:$0xff]
        %v3160 = vld [vmem:[#allocation4 + $0x50] sm:$0xff]
        %v3161 = vld [vmem:[#allocation4 + $0x58] sm:$0xff]
        %v3162 = vld [vmem:[#allocation4 + $0x60] sm:$0xff]
        %v3163 = vld [vmem:[#allocation4 + $0x68] sm:$0xff]
        %v3164 = vld [vmem:[#allocation4 + $0x70] sm:$0xff]
        %v3165 = vld [vmem:[#allocation4 + $0x78] sm:$0xff]
        %v3166 = vld [vmem:[#allocation4 + $0x80] sm:$0xff]
        %v3167 = vld [vmem:[#allocation4 + $0x88] sm:$0xff]
        %v3168 = vld [vmem:[#allocation4 + $0x90] sm:$0xff]
        %v3169 = vld [vmem:[#allocation4 + $0x98] sm:$0xff]
        %v3170 = vld [vmem:[#allocation4 + $0xa0] sm:$0xff]
        %v3171 = vld [vmem:[#allocation4 + $0xa8] sm:$0xff]
        %v3172 = vld [vmem:[#allocation4 + $0xb0] sm:$0xff]
        %v3173 = vld [vmem:[#allocation4 + $0xb8] sm:$0xff]
        %v3174 = vld [vmem:[#allocation4 + $0xc0] sm:$0xff]
        %v3175 = vld [vmem:[#allocation4 + $0xc8] sm:$0xff]
        %v3176 = vld [vmem:[#allocation4 + $0xd0] sm:$0xff]
        %v3177 = vld [vmem:[#allocation4 + $0xd8] sm:$0xff]
        %v3178 = vld [vmem:[#allocation4 + $0xe0] sm:$0xff]
        %v3179 = vld [vmem:[#allocation4 + $0xe8] sm:$0xff]
        %v3180 = vld [vmem:[#allocation4 + $0xf0] sm:$0xff]
        %v3181 = vld [vmem:[#allocation4 + $0xf8] sm:$0xff]
        %v3182 = vpack.c.bf16 %v3151, %v3150
        %v3183 = vpack.c.bf16 %v3153, %v3152
        %v3184 = vpack.c.bf16 %v3155, %v3154
        %v3185 = vpack.c.bf16 %v3157, %v3156
        %v3186 = vpack.c.bf16 %v3159, %v3158
        %v3187 = vpack.c.bf16 %v3161, %v3160
        %v3188 = vpack.c.bf16 %v3163, %v3162
        %v3189 = vpack.c.bf16 %v3165, %v3164
        %v3190 = vpack.c.bf16 %v3167, %v3166
        %v3191 = vpack.c.bf16 %v3169, %v3168
        %v3192 = vpack.c.bf16 %v3171, %v3170
        %v3193 = vpack.c.bf16 %v3173, %v3172
        %v3194 = vpack.c.bf16 %v3175, %v3174
        %v3195 = vpack.c.bf16 %v3177, %v3176
        %v3196 = vpack.c.bf16 %v3179, %v3178
        %v3197 = vpack.c.bf16 %v3181, %v3180
        %v3199 = vshrl.u32 %v3182, 16
        %v3202 = vshrl.u32 %v3183, 16
        %v3205 = vshrl.u32 %v3184, 16
        %v3208 = vshrl.u32 %v3185, 16
        %v3211 = vshrl.u32 %v3186, 16
        %v3214 = vshrl.u32 %v3187, 16
        %v3217 = vshrl.u32 %v3188, 16
        %v3220 = vshrl.u32 %v3189, 16
        %v3223 = vshrl.u32 %v3190, 16
        %v3226 = vshrl.u32 %v3191, 16
        %v3229 = vshrl.u32 %v3192, 16
        %v3232 = vshrl.u32 %v3193, 16
        %v3235 = vshrl.u32 %v3194, 16
        %v3238 = vshrl.u32 %v3195, 16
        %v3241 = vshrl.u32 %v3196, 16
        %v3244 = vshrl.u32 %v3197, 16
        %v3262 = vrot.slane %v3199, 7
        %v3263 = vshll.u32 %v3182, 16
        %v3265 = vor.u32 %v3262, %v3263
        %v3266 = vrot.slane %v3202, 7
        %v3267 = vshll.u32 %v3183, 16
        %v3269 = vor.u32 %v3266, %v3267
        %v3270 = vrot.slane %v3205, 7
        %v3271 = vshll.u32 %v3184, 16
        %v3273 = vor.u32 %v3270, %v3271
        %v3274 = vrot.slane %v3208, 7
        %v3275 = vshll.u32 %v3185, 16
        %v3277 = vor.u32 %v3274, %v3275
        %v3278 = vrot.slane %v3211, 7
        %v3279 = vshll.u32 %v3186, 16
        %v3281 = vor.u32 %v3278, %v3279
        %v3282 = vrot.slane %v3214, 7
        %v3283 = vshll.u32 %v3187, 16
        %v3285 = vor.u32 %v3282, %v3283
        %v3286 = vrot.slane %v3217, 7
        %v3287 = vshll.u32 %v3188, 16
        %v3289 = vor.u32 %v3286, %v3287
        %v3290 = vrot.slane %v3220, 7
        %v3291 = vshll.u32 %v3189, 16
        %v3293 = vor.u32 %v3290, %v3291
        %v3294 = vrot.slane %v3223, 7
        %v3295 = vshll.u32 %v3190, 16
        %v3297 = vor.u32 %v3294, %v3295
        %v3298 = vrot.slane %v3226, 7
        %v3299 = vshll.u32 %v3191, 16
        %v3301 = vor.u32 %v3298, %v3299
        %v3302 = vrot.slane %v3229, 7
        %v3303 = vshll.u32 %v3192, 16
        %v3305 = vor.u32 %v3302, %v3303
        %v3306 = vrot.slane %v3232, 7
        %v3307 = vshll.u32 %v3193, 16
        %v3309 = vor.u32 %v3306, %v3307
        %v3310 = vrot.slane %v3235, 7
        %v3311 = vshll.u32 %v3194, 16
        %v3313 = vor.u32 %v3310, %v3311
        %v3314 = vrot.slane %v3238, 7
        %v3315 = vshll.u32 %v3195, 16
        %v3317 = vor.u32 %v3314, %v3315
        %v3318 = vrot.slane %v3241, 7
        %v3319 = vshll.u32 %v3196, 16
        %v3321 = vor.u32 %v3318, %v3319
        %v3322 = vrot.slane %v3244, 7
        %v3323 = vshll.u32 %v3197, 16
        %v3325 = vor.u32 %v3322, %v3323
        %v3358 = vrot.slane %v3263, 7
        %v3359 = vrot.slane %v3267, 7
        %v3360 = vrot.slane %v3271, 7
        %v3361 = vrot.slane %v3275, 7
        %v3362 = vrot.slane %v3279, 7
        %v3363 = vrot.slane %v3283, 7
        %v3364 = vrot.slane %v3287, 7
        %v3365 = vrot.slane %v3291, 7
        %v3366 = vrot.slane %v3295, 7
        %v3367 = vrot.slane %v3299, 7
        %v3368 = vrot.slane %v3303, 7
        %v3369 = vrot.slane %v3307, 7
        %v3370 = vrot.slane %v3311, 7
        %v3371 = vrot.slane %v3315, 7
        %v3372 = vrot.slane %v3319, 7
        %v3373 = vrot.slane %v3323, 7
        %vm3390 = vcmask 1040384
        %vm3391 = vsmask.f32 256
        %vm3392 = vmand %vm3390, %vm3391
        %v3393 = vsel %vm3392, %v3199, %v3265
        %v3394 = vsel %vm3392, %v3202, %v3269
        %v3395 = vsel %vm3392, %v3205, %v3273
        %v3396 = vsel %vm3392, %v3208, %v3277
        %v3397 = vsel %vm3392, %v3211, %v3281
        %v3398 = vsel %vm3392, %v3214, %v3285
        %v3399 = vsel %vm3392, %v3217, %v3289
        %v3400 = vsel %vm3392, %v3220, %v3293
        %v3401 = vsel %vm3392, %v3223, %v3297
        %v3402 = vsel %vm3392, %v3226, %v3301
        %v3403 = vsel %vm3392, %v3229, %v3305
        %v3404 = vsel %vm3392, %v3232, %v3309
        %v3405 = vsel %vm3392, %v3235, %v3313
        %v3406 = vsel %vm3392, %v3238, %v3317
        %v3407 = vsel %vm3392, %v3241, %v3321
        %v3408 = vsel %vm3392, %v3244, %v3325
        %v3409 = vsel %vm3392, %v3262, %v3358
        %v3410 = vsel %vm3392, %v3266, %v3359
        %v3411 = vsel %vm3392, %v3270, %v3360
        %v3412 = vsel %vm3392, %v3274, %v3361
        %v3413 = vsel %vm3392, %v3278, %v3362
        %v3414 = vsel %vm3392, %v3282, %v3363
        %v3415 = vsel %vm3392, %v3286, %v3364
        %v3416 = vsel %vm3392, %v3290, %v3365
        %v3417 = vsel %vm3392, %v3294, %v3366
        %v3418 = vsel %vm3392, %v3298, %v3367
        %v3419 = vsel %vm3392, %v3302, %v3368
        %v3420 = vsel %vm3392, %v3306, %v3369
        %v3421 = vsel %vm3392, %v3310, %v3370
        %v3422 = vsel %vm3392, %v3314, %v3371
        %v3423 = vsel %vm3392, %v3318, %v3372
        %v3424 = vsel %vm3392, %v3322, %v3373
        %v3457 = vunpack.c.l.b16 %v3393
        %v3458 = vunpack.c.h.b16 %v3393
        %v3459 = vunpack.c.l.b16 %v3409
        %v3460 = vunpack.c.l.b16 %v3394
        %v3461 = vunpack.c.h.b16 %v3394
        %v3462 = vunpack.c.l.b16 %v3410
        %v3463 = vunpack.c.l.b16 %v3395
        %v3464 = vunpack.c.h.b16 %v3395
        %v3465 = vunpack.c.l.b16 %v3411
        %v3466 = vunpack.c.l.b16 %v3396
        %v3467 = vunpack.c.h.b16 %v3396
        %v3468 = vunpack.c.l.b16 %v3412
        %v3469 = vunpack.c.l.b16 %v3397
        %v3470 = vunpack.c.h.b16 %v3397
        %v3471 = vunpack.c.l.b16 %v3413
        %v3472 = vunpack.c.l.b16 %v3398
        %v3473 = vunpack.c.h.b16 %v3398
        %v3474 = vunpack.c.l.b16 %v3414
        %v3475 = vunpack.c.l.b16 %v3399
        %v3476 = vunpack.c.h.b16 %v3399
        %v3477 = vunpack.c.l.b16 %v3415
        %v3478 = vunpack.c.l.b16 %v3400
        %v3479 = vunpack.c.h.b16 %v3400
        %v3480 = vunpack.c.l.b16 %v3416
        %v3481 = vunpack.c.l.b16 %v3401
        %v3482 = vunpack.c.h.b16 %v3401
        %v3483 = vunpack.c.l.b16 %v3417
        %v3484 = vunpack.c.l.b16 %v3402
        %v3485 = vunpack.c.h.b16 %v3402
        %v3486 = vunpack.c.l.b16 %v3418
        %v3487 = vunpack.c.l.b16 %v3403
        %v3488 = vunpack.c.h.b16 %v3403
        %v3489 = vunpack.c.l.b16 %v3419
        %v3490 = vunpack.c.l.b16 %v3404
        %v3491 = vunpack.c.h.b16 %v3404
        %v3492 = vunpack.c.l.b16 %v3420
        %v3493 = vunpack.c.l.b16 %v3405
        %v3494 = vunpack.c.h.b16 %v3405
        %v3495 = vunpack.c.l.b16 %v3421
        %v3496 = vunpack.c.l.b16 %v3406
        %v3497 = vunpack.c.h.b16 %v3406
        %v3498 = vunpack.c.l.b16 %v3422
        %v3499 = vunpack.c.l.b16 %v3407
        %v3500 = vunpack.c.h.b16 %v3407
        %v3501 = vunpack.c.l.b16 %v3423
        %v3502 = vunpack.c.l.b16 %v3408
        %v3503 = vunpack.c.h.b16 %v3408
        %v3504 = vunpack.c.l.b16 %v3424
        %v3505 = vpack.c.b16 %v3457, %v3457
        %v3506 = vpack.c.b16 %v3458, %v3458
        %v3507 = vpack.c.b16 %v3459, %v3459
        %v3508 = vpack.c.b16 %v3460, %v3460
        %v3509 = vpack.c.b16 %v3461, %v3461
        %v3510 = vpack.c.b16 %v3462, %v3462
        %v3511 = vpack.c.b16 %v3463, %v3463
        %v3512 = vpack.c.b16 %v3464, %v3464
        %v3513 = vpack.c.b16 %v3465, %v3465
        %v3514 = vpack.c.b16 %v3466, %v3466
        %v3515 = vpack.c.b16 %v3467, %v3467
        %v3516 = vpack.c.b16 %v3468, %v3468
        %v3517 = vpack.c.b16 %v3469, %v3469
        %v3518 = vpack.c.b16 %v3470, %v3470
        %v3519 = vpack.c.b16 %v3471, %v3471
        %v3520 = vpack.c.b16 %v3472, %v3472
        %v3521 = vpack.c.b16 %v3473, %v3473
        %v3522 = vpack.c.b16 %v3474, %v3474
        %v3523 = vpack.c.b16 %v3475, %v3475
        %v3524 = vpack.c.b16 %v3476, %v3476
        %v3525 = vpack.c.b16 %v3477, %v3477
        %v3526 = vpack.c.b16 %v3478, %v3478
        %v3527 = vpack.c.b16 %v3479, %v3479
        %v3528 = vpack.c.b16 %v3480, %v3480
        %v3529 = vpack.c.b16 %v3481, %v3481
        %v3530 = vpack.c.b16 %v3482, %v3482
        %v3531 = vpack.c.b16 %v3483, %v3483
        %v3532 = vpack.c.b16 %v3484, %v3484
        %v3533 = vpack.c.b16 %v3485, %v3485
        %v3534 = vpack.c.b16 %v3486, %v3486
        %v3535 = vpack.c.b16 %v3487, %v3487
        %v3536 = vpack.c.b16 %v3488, %v3488
        %v3537 = vpack.c.b16 %v3489, %v3489
        %v3538 = vpack.c.b16 %v3490, %v3490
        %v3539 = vpack.c.b16 %v3491, %v3491
        %v3540 = vpack.c.b16 %v3492, %v3492
        %v3541 = vpack.c.b16 %v3493, %v3493
        %v3542 = vpack.c.b16 %v3494, %v3494
        %v3543 = vpack.c.b16 %v3495, %v3495
        %v3544 = vpack.c.b16 %v3496, %v3496
        %v3545 = vpack.c.b16 %v3497, %v3497
        %v3546 = vpack.c.b16 %v3498, %v3498
        %v3547 = vpack.c.b16 %v3499, %v3499
        %v3548 = vpack.c.b16 %v3500, %v3500
        %v3549 = vpack.c.b16 %v3501, %v3501
        %v3550 = vpack.c.b16 %v3502, %v3502
        %v3551 = vpack.c.b16 %v3503, %v3503
        %v3552 = vpack.c.b16 %v3504, %v3504
        %s3601 = scalar_lea.vmem [#allocation3], 12
        %3602 = vst [vmem:[%s3601] sm:$0xf] %v3505
        %3603 = vst [vmem:[%s3601 + $0x4] sm:$0xf] %v3506
        %3604 = vst [vmem:[%s3601 + $0x8] sm:$0x1] %v3507
        %3605 = vst [vmem:[%s3601 + $0xc] sm:$0xf] %v3508
        %3606 = vst [vmem:[%s3601 + $0x10] sm:$0xf] %v3509
        %3607 = vst [vmem:[%s3601 + $0x14] sm:$0x1] %v3510
        %3608 = vst [vmem:[%s3601 + $0x18] sm:$0xf] %v3511
        %3609 = vst [vmem:[%s3601 + $0x1c] sm:$0xf] %v3512
        %3610 = vst [vmem:[%s3601 + $0x20] sm:$0x1] %v3513
        %3611 = vst [vmem:[%s3601 + $0x24] sm:$0xf] %v3514
        %3612 = vst [vmem:[%s3601 + $0x28] sm:$0xf] %v3515
        %3613 = vst [vmem:[%s3601 + $0x2c] sm:$0x1] %v3516
        %3614 = vst [vmem:[%s3601 + $0x30] sm:$0xf] %v3517
        %3615 = vst [vmem:[%s3601 + $0x34] sm:$0xf] %v3518
        %3616 = vst [vmem:[%s3601 + $0x38] sm:$0x1] %v3519
        %3617 = vst [vmem:[%s3601 + $0x3c] sm:$0xf] %v3520
        %3618 = vst [vmem:[%s3601 + $0x40] sm:$0xf] %v3521
        %3619 = vst [vmem:[%s3601 + $0x44] sm:$0x1] %v3522
        %3620 = vst [vmem:[%s3601 + $0x48] sm:$0xf] %v3523
        %3621 = vst [vmem:[%s3601 + $0x4c] sm:$0xf] %v3524
        %3622 = vst [vmem:[%s3601 + $0x50] sm:$0x1] %v3525
        %3623 = vst [vmem:[%s3601 + $0x54] sm:$0xf] %v3526
        %3624 = vst [vmem:[%s3601 + $0x58] sm:$0xf] %v3527
        %3625 = vst [vmem:[%s3601 + $0x5c] sm:$0x1] %v3528
        %3626 = vst [vmem:[%s3601 + $0x60] sm:$0xf] %v3529
        %3627 = vst [vmem:[%s3601 + $0x64] sm:$0xf] %v3530
        %3628 = vst [vmem:[%s3601 + $0x68] sm:$0x1] %v3531
        %3629 = vst [vmem:[%s3601 + $0x6c] sm:$0xf] %v3532
        %3630 = vst [vmem:[%s3601 + $0x70] sm:$0xf] %v3533
        %3631 = vst [vmem:[%s3601 + $0x74] sm:$0x1] %v3534
        %3632 = vst [vmem:[%s3601 + $0x78] sm:$0xf] %v3535
        %3633 = vst [vmem:[%s3601 + $0x7c] sm:$0xf] %v3536
        %3634 = vst [vmem:[%s3601 + $0x80] sm:$0x1] %v3537
        %3635 = vst [vmem:[%s3601 + $0x84] sm:$0xf] %v3538
        %3636 = vst [vmem:[%s3601 + $0x88] sm:$0xf] %v3539
        %3637 = vst [vmem:[%s3601 + $0x8c] sm:$0x1] %v3540
        %3638 = vst [vmem:[%s3601 + $0x90] sm:$0xf] %v3541
        %3639 = vst [vmem:[%s3601 + $0x94] sm:$0xf] %v3542
        %3640 = vst [vmem:[%s3601 + $0x98] sm:$0x1] %v3543
        %3641 = vst [vmem:[%s3601 + $0x9c] sm:$0xf] %v3544
        %3642 = vst [vmem:[%s3601 + $0xa0] sm:$0xf] %v3545
        %3643 = vst [vmem:[%s3601 + $0xa4] sm:$0x1] %v3546
        %3644 = vst [vmem:[%s3601 + $0xa8] sm:$0xf] %v3547
        %3645 = vst [vmem:[%s3601 + $0xac] sm:$0xf] %v3548
        %3646 = vst [vmem:[%s3601 + $0xb0] sm:$0x1] %v3549
        %3647 = vst [vmem:[%s3601 + $0xb4] sm:$0xf] %v3550
        %3648 = vst [vmem:[%s3601 + $0xb8] sm:$0xf] %v3551
        %3649 = vst [vmem:[%s3601 + $0xbc] sm:$0x1] %v3552
        %s3650 = scalar_lea.vmem [#allocation3], 24
        %v3651 = vld [vmem:[%s3650] sm:$0xf]
        %v3652 = vld [vmem:[%s3650 + $0x4] sm:$0xf]
        %v3653 = vld [vmem:[%s3650 + $0x8] sm:$0x1]
        %3654 = vst [vmem:[#allocation3] sm:$0xf] %v3651
        %3655 = vst [vmem:[#allocation3 + $0x4] sm:$0xf] %v3652
        %3656 = vst [vmem:[#allocation3 + $0x8] sm:$0x1] %v3653
        %s3657 = scalar_lea.vmem [#allocation3], 180
        %v3658 = vld [vmem:[%s3657] sm:$0xf]
        %v3659 = vld [vmem:[%s3657 + $0x4] sm:$0xf]
        %v3660 = vld [vmem:[%s3657 + $0x8] sm:$0x1]
        %s3661 = scalar_lea.vmem [#allocation3], 204
        %3662 = vst [vmem:[%s3661] sm:$0xf] %v3658
        %3663 = vst [vmem:[%s3661 + $0x4] sm:$0xf] %v3659
        %3664 = vst [vmem:[%s3661 + $0x8] sm:$0x1] %v3660
        %v3665 = vld [vmem:[#allocation3] sm:$0xf]
        %v3666 = vld [vmem:[#allocation3 + $0x4] sm:$0xf]
        %v3667 = vld [vmem:[#allocation3 + $0xc] sm:$0xf]
        %v3668 = vld [vmem:[#allocation3 + $0x10] sm:$0xf]
        %v3669 = vld [vmem:[#allocation3 + $0x18] sm:$0xf]
        %v3670 = vld [vmem:[#allocation3 + $0x1c] sm:$0xf]
        %v3671 = vld [vmem:[#allocation3 + $0x24] sm:$0xf]
        %v3672 = vld [vmem:[#allocation3 + $0x28] sm:$0xf]
        %v3673 = vld [vmem:[#allocation3 + $0x30] sm:$0xf]
        %v3674 = vld [vmem:[#allocation3 + $0x34] sm:$0xf]
        %v3675 = vld [vmem:[#allocation3 + $0x3c] sm:$0xf]
        %v3676 = vld [vmem:[#allocation3 + $0x40] sm:$0xf]
        %v3677 = vld [vmem:[#allocation3 + $0x48] sm:$0xf]
        %v3678 = vld [vmem:[#allocation3 + $0x4c] sm:$0xf]
        %v3679 = vld [vmem:[#allocation3 + $0x54] sm:$0xf]
        %v3680 = vld [vmem:[#allocation3 + $0x58] sm:$0xf]
        %v3681 = vld [vmem:[#allocation3 + $0x60] sm:$0xf]
        %v3682 = vld [vmem:[#allocation3 + $0x64] sm:$0xf]
        %v3683 = vld [vmem:[#allocation3 + $0x6c] sm:$0xf]
        %v3684 = vld [vmem:[#allocation3 + $0x70] sm:$0xf]
        %v3685 = vld [vmem:[#allocation3 + $0x78] sm:$0xf]
        %v3686 = vld [vmem:[#allocation3 + $0x7c] sm:$0xf]
        %v3687 = vld [vmem:[#allocation3 + $0x84] sm:$0xf]
        %v3688 = vld [vmem:[#allocation3 + $0x88] sm:$0xf]
        %v3689 = vld [vmem:[#allocation3 + $0x90] sm:$0xf]
        %v3690 = vld [vmem:[#allocation3 + $0x94] sm:$0xf]
        %v3691 = vld [vmem:[#allocation3 + $0x9c] sm:$0xf]
        %v3692 = vld [vmem:[#allocation3 + $0xa0] sm:$0xf]
        %v3693 = vld [vmem:[#allocation3 + $0xa8] sm:$0xf]
        %v3694 = vld [vmem:[#allocation3 + $0xac] sm:$0xf]
        %v3695 = vld [vmem:[#allocation3 + $0xb4] sm:$0xf]
        %v3696 = vld [vmem:[#allocation3 + $0xb8] sm:$0xf]
        %v3697 = vld [vmem:[#allocation3 + $0xc0] sm:$0xf]
        %v3698 = vld [vmem:[#allocation3 + $0xc4] sm:$0xf]
        %v3699 = vld [vmem:[#allocation3 + $0xcc] sm:$0xf]
        %v3700 = vld [vmem:[#allocation3 + $0xd0] sm:$0xf]
        %v3737 = vunpack.c.l.b16 %v3665
        %v3738 = vunpack.c.l.b16 %v3666
        %v3739 = vunpack.c.l.b16 %v3667
        %v3740 = vunpack.c.l.b16 %v3668
        %v3741 = vunpack.c.l.b16 %v3669
        %v3742 = vunpack.c.l.b16 %v3670
        %v3743 = vunpack.c.l.b16 %v3671
        %v3744 = vunpack.c.l.b16 %v3672
        %v3745 = vunpack.c.l.b16 %v3673
        %v3746 = vunpack.c.l.b16 %v3674
        %v3747 = vunpack.c.l.b16 %v3675
        %v3748 = vunpack.c.l.b16 %v3676
        %v3749 = vunpack.c.l.b16 %v3677
        %v3750 = vunpack.c.l.b16 %v3678
        %v3751 = vunpack.c.l.b16 %v3679
        %v3752 = vunpack.c.l.b16 %v3680
        %v3753 = vunpack.c.l.b16 %v3681
        %v3754 = vunpack.c.l.b16 %v3682
        %v3755 = vunpack.c.l.b16 %v3683
        %v3756 = vunpack.c.l.b16 %v3684
        %v3757 = vunpack.c.l.b16 %v3685
        %v3758 = vunpack.c.l.b16 %v3686
        %v3759 = vunpack.c.l.b16 %v3687
        %v3760 = vunpack.c.l.b16 %v3688
        %v3761 = vunpack.c.l.b16 %v3689
        %v3762 = vunpack.c.l.b16 %v3690
        %v3763 = vunpack.c.l.b16 %v3691
        %v3764 = vunpack.c.l.b16 %v3692
        %v3765 = vunpack.c.l.b16 %v3693
        %v3766 = vunpack.c.l.b16 %v3694
        %v3767 = vunpack.c.l.b16 %v3695
        %v3768 = vunpack.c.l.b16 %v3696
        %v3769 = vunpack.c.l.b16 %v3697
        %v3770 = vunpack.c.l.b16 %v3698
        %v3771 = vunpack.c.l.b16 %v3699
        %v3772 = vunpack.c.l.b16 %v3700
        %v3773 = vpack.c.b16 %v3738, %v3737
        %v3774 = vpack.c.b16 %v3740, %v3739
        %v3775 = vpack.c.b16 %v3742, %v3741
        %v3776 = vpack.c.b16 %v3744, %v3743
        %v3777 = vpack.c.b16 %v3746, %v3745
        %v3778 = vpack.c.b16 %v3748, %v3747
        %v3779 = vpack.c.b16 %v3750, %v3749
        %v3780 = vpack.c.b16 %v3752, %v3751
        %v3781 = vpack.c.b16 %v3754, %v3753
        %v3782 = vpack.c.b16 %v3756, %v3755
        %v3783 = vpack.c.b16 %v3758, %v3757
        %v3784 = vpack.c.b16 %v3760, %v3759
        %v3785 = vpack.c.b16 %v3762, %v3761
        %v3786 = vpack.c.b16 %v3764, %v3763
        %v3787 = vpack.c.b16 %v3766, %v3765
        %v3788 = vpack.c.b16 %v3768, %v3767
        %v3789 = vpack.c.b16 %v3770, %v3769
        %v3790 = vpack.c.b16 %v3772, %v3771
        %3809 = vst [vmem:[#allocation2] sm:$0xff] %v3773
        %3810 = vst [vmem:[#allocation2 + $0x18] sm:$0xff] %v3774
        %3811 = vst [vmem:[#allocation2 + $0x30] sm:$0xff] %v3775
        %3812 = vst [vmem:[#allocation2 + $0x48] sm:$0xff] %v3776
        %3813 = vst [vmem:[#allocation2 + $0x60] sm:$0xff] %v3777
        %3814 = vst [vmem:[#allocation2 + $0x78] sm:$0xff] %v3778
        %3815 = vst [vmem:[#allocation2 + $0x90] sm:$0xff] %v3779
        %3816 = vst [vmem:[#allocation2 + $0xa8] sm:$0xff] %v3780
        %3817 = vst [vmem:[#allocation2 + $0xc0] sm:$0xff] %v3781
        %3818 = vst [vmem:[#allocation2 + $0xd8] sm:$0xff] %v3782
        %3819 = vst [vmem:[#allocation2 + $0xf0] sm:$0xff] %v3783
        %3820 = vst [vmem:[#allocation2 + $0x108] sm:$0xff] %v3784
        %3821 = vst [vmem:[#allocation2 + $0x120] sm:$0xff] %v3785
        %3822 = vst [vmem:[#allocation2 + $0x138] sm:$0xff] %v3786
        %3823 = vst [vmem:[#allocation2 + $0x150] sm:$0xff] %v3787
        %3824 = vst [vmem:[#allocation2 + $0x168] sm:$0xff] %v3788
        %3825 = vst [vmem:[#allocation2 + $0x180] sm:$0xff] %v3789
        %3826 = vst [vmem:[#allocation2 + $0x198] sm:$0xff] %v3790
        %v3827 = vld [vmem:[#allocation3] sm:$0xf]
        %v3828 = vld [vmem:[#allocation3 + $0x4] sm:$0xf]
        %v3829 = vld [vmem:[#allocation3 + $0x8] sm:$0x1]
        %v3830 = vld [vmem:[#allocation3 + $0xc] sm:$0xf]
        %v3831 = vld [vmem:[#allocation3 + $0x10] sm:$0xf]
        %v3832 = vld [vmem:[#allocation3 + $0x14] sm:$0x1]
        %v3833 = vld [vmem:[#allocation3 + $0x18] sm:$0xf]
        %v3834 = vld [vmem:[#allocation3 + $0x1c] sm:$0xf]
        %v3835 = vld [vmem:[#allocation3 + $0x20] sm:$0x1]
        %v3836 = vld [vmem:[#allocation3 + $0x24] sm:$0xf]
        %v3837 = vld [vmem:[#allocation3 + $0x28] sm:$0xf]
        %v3838 = vld [vmem:[#allocation3 + $0x2c] sm:$0x1]
        %v3839 = vld [vmem:[#allocation3 + $0x30] sm:$0xf]
        %v3840 = vld [vmem:[#allocation3 + $0x34] sm:$0xf]
        %v3841 = vld [vmem:[#allocation3 + $0x38] sm:$0x1]
        %v3842 = vld [vmem:[#allocation3 + $0x3c] sm:$0xf]
        %v3843 = vld [vmem:[#allocation3 + $0x40] sm:$0xf]
        %v3844 = vld [vmem:[#allocation3 + $0x44] sm:$0x1]
        %v3845 = vld [vmem:[#allocation3 + $0x48] sm:$0xf]
        %v3846 = vld [vmem:[#allocation3 + $0x4c] sm:$0xf]
        %v3847 = vld [vmem:[#allocation3 + $0x50] sm:$0x1]
        %v3848 = vld [vmem:[#allocation3 + $0x54] sm:$0xf]
        %v3849 = vld [vmem:[#allocation3 + $0x58] sm:$0xf]
        %v3850 = vld [vmem:[#allocation3 + $0x5c] sm:$0x1]
        %v3851 = vld [vmem:[#allocation3 + $0x60] sm:$0xf]
        %v3852 = vld [vmem:[#allocation3 + $0x64] sm:$0xf]
        %v3853 = vld [vmem:[#allocation3 + $0x68] sm:$0x1]
        %v3854 = vld [vmem:[#allocation3 + $0x6c] sm:$0xf]
        %v3855 = vld [vmem:[#allocation3 + $0x70] sm:$0xf]
        %v3856 = vld [vmem:[#allocation3 + $0x74] sm:$0x1]
        %v3857 = vld [vmem:[#allocation3 + $0x78] sm:$0xf]
        %v3858 = vld [vmem:[#allocation3 + $0x7c] sm:$0xf]
        %v3859 = vld [vmem:[#allocation3 + $0x80] sm:$0x1]
        %v3860 = vld [vmem:[#allocation3 + $0x84] sm:$0xf]
        %v3861 = vld [vmem:[#allocation3 + $0x88] sm:$0xf]
        %v3862 = vld [vmem:[#allocation3 + $0x8c] sm:$0x1]
        %v3863 = vld [vmem:[#allocation3 + $0x90] sm:$0xf]
        %v3864 = vld [vmem:[#allocation3 + $0x94] sm:$0xf]
        %v3865 = vld [vmem:[#allocation3 + $0x98] sm:$0x1]
        %v3866 = vld [vmem:[#allocation3 + $0x9c] sm:$0xf]
        %v3867 = vld [vmem:[#allocation3 + $0xa0] sm:$0xf]
        %v3868 = vld [vmem:[#allocation3 + $0xa4] sm:$0x1]
        %v3869 = vld [vmem:[#allocation3 + $0xa8] sm:$0xf]
        %v3870 = vld [vmem:[#allocation3 + $0xac] sm:$0xf]
        %v3871 = vld [vmem:[#allocation3 + $0xb0] sm:$0x1]
        %v3872 = vld [vmem:[#allocation3 + $0xb4] sm:$0xf]
        %v3873 = vld [vmem:[#allocation3 + $0xb8] sm:$0xf]
        %v3874 = vld [vmem:[#allocation3 + $0xbc] sm:$0x1]
        %v3875 = vld [vmem:[#allocation3 + $0xc0] sm:$0xf]
        %v3876 = vld [vmem:[#allocation3 + $0xc4] sm:$0xf]
        %v3877 = vld [vmem:[#allocation3 + $0xc8] sm:$0x1]
        %v3878 = vld [vmem:[#allocation3 + $0xcc] sm:$0xf]
        %v3879 = vld [vmem:[#allocation3 + $0xd0] sm:$0xf]
        %v3880 = vld [vmem:[#allocation3 + $0xd4] sm:$0x1]
        %v3882 = vshrl.u32 %v3827, 16
        %v3884 = vrot.slane %v3882, 4
        %v3885 = vshll.u32 %v3827, 16
        %v3887 = vrot.slane %v3885, 5
        %v3888 = vor.u32 %v3884, %v3887
        %v3889 = vrot.slane %v3888, 4
        %v3891 = vshll.u32 %v3828, 16
        %v3893 = vrot.slane %v3891, 5
        %v3894 = vsel %vm388, %v3889, %v3893
        %v3895 = vshrl.u32 %v3828, 16
        %v3897 = vrot.slane %v3895, 4
        %v3898 = vor.u32 %v3897, %v3893
        %v3899 = vrot.slane %v3898, 4
        %v3901 = vshll.u32 %v3829, 16
        %v3903 = vrot.slane %v3901, 5
        %v3904 = vsel %vm388, %v3899, %v3903
        %v3906 = vshrl.u32 %v3830, 16
        %v3908 = vrot.slane %v3906, 4
        %v3909 = vshll.u32 %v3830, 16
        %v3911 = vrot.slane %v3909, 5
        %v3912 = vor.u32 %v3908, %v3911
        %v3913 = vrot.slane %v3912, 4
        %v3915 = vshll.u32 %v3831, 16
        %v3917 = vrot.slane %v3915, 5
        %v3918 = vsel %vm388, %v3913, %v3917
        %v3919 = vshrl.u32 %v3831, 16
        %v3921 = vrot.slane %v3919, 4
        %v3922 = vor.u32 %v3921, %v3917
        %v3923 = vrot.slane %v3922, 4
        %v3925 = vshll.u32 %v3832, 16
        %v3927 = vrot.slane %v3925, 5
        %v3928 = vsel %vm388, %v3923, %v3927
        %v3930 = vshrl.u32 %v3833, 16
        %v3932 = vrot.slane %v3930, 4
        %v3933 = vshll.u32 %v3833, 16
        %v3935 = vrot.slane %v3933, 5
        %v3936 = vor.u32 %v3932, %v3935
        %v3937 = vrot.slane %v3936, 4
        %v3939 = vshll.u32 %v3834, 16
        %v3941 = vrot.slane %v3939, 5
        %v3942 = vsel %vm388, %v3937, %v3941
        %v3943 = vshrl.u32 %v3834, 16
        %v3945 = vrot.slane %v3943, 4
        %v3946 = vor.u32 %v3945, %v3941
        %v3947 = vrot.slane %v3946, 4
        %v3949 = vshll.u32 %v3835, 16
        %v3951 = vrot.slane %v3949, 5
        %v3952 = vsel %vm388, %v3947, %v3951
        %v3954 = vshrl.u32 %v3836, 16
        %v3956 = vrot.slane %v3954, 4
        %v3957 = vshll.u32 %v3836, 16
        %v3959 = vrot.slane %v3957, 5
        %v3960 = vor.u32 %v3956, %v3959
        %v3961 = vrot.slane %v3960, 4
        %v3963 = vshll.u32 %v3837, 16
        %v3965 = vrot.slane %v3963, 5
        %v3966 = vsel %vm388, %v3961, %v3965
        %v3967 = vshrl.u32 %v3837, 16
        %v3969 = vrot.slane %v3967, 4
        %v3970 = vor.u32 %v3969, %v3965
        %v3971 = vrot.slane %v3970, 4
        %v3973 = vshll.u32 %v3838, 16
        %v3975 = vrot.slane %v3973, 5
        %v3976 = vsel %vm388, %v3971, %v3975
        %v3978 = vshrl.u32 %v3839, 16
        %v3980 = vrot.slane %v3978, 4
        %v3981 = vshll.u32 %v3839, 16
        %v3983 = vrot.slane %v3981, 5
        %v3984 = vor.u32 %v3980, %v3983
        %v3985 = vrot.slane %v3984, 4
        %v3987 = vshll.u32 %v3840, 16
        %v3989 = vrot.slane %v3987, 5
        %v3990 = vsel %vm388, %v3985, %v3989
        %v3991 = vshrl.u32 %v3840, 16
        %v3993 = vrot.slane %v3991, 4
        %v3994 = vor.u32 %v3993, %v3989
        %v3995 = vrot.slane %v3994, 4
        %v3997 = vshll.u32 %v3841, 16
        %v3999 = vrot.slane %v3997, 5
        %v4000 = vsel %vm388, %v3995, %v3999
        %v4002 = vshrl.u32 %v3842, 16
        %v4004 = vrot.slane %v4002, 4
        %v4005 = vshll.u32 %v3842, 16
        %v4007 = vrot.slane %v4005, 5
        %v4008 = vor.u32 %v4004, %v4007
        %v4009 = vrot.slane %v4008, 4
        %v4011 = vshll.u32 %v3843, 16
        %v4013 = vrot.slane %v4011, 5
        %v4014 = vsel %vm388, %v4009, %v4013
        %v4015 = vshrl.u32 %v3843, 16
        %v4017 = vrot.slane %v4015, 4
        %v4018 = vor.u32 %v4017, %v4013
        %v4019 = vrot.slane %v4018, 4
        %v4021 = vshll.u32 %v3844, 16
        %v4023 = vrot.slane %v4021, 5
        %v4024 = vsel %vm388, %v4019, %v4023
        %v4026 = vshrl.u32 %v3845, 16
        %v4028 = vrot.slane %v4026, 4
        %v4029 = vshll.u32 %v3845, 16
        %v4031 = vrot.slane %v4029, 5
        %v4032 = vor.u32 %v4028, %v4031
        %v4033 = vrot.slane %v4032, 4
        %v4035 = vshll.u32 %v3846, 16
        %v4037 = vrot.slane %v4035, 5
        %v4038 = vsel %vm388, %v4033, %v4037
        %v4039 = vshrl.u32 %v3846, 16
        %v4041 = vrot.slane %v4039, 4
        %v4042 = vor.u32 %v4041, %v4037
        %v4043 = vrot.slane %v4042, 4
        %v4045 = vshll.u32 %v3847, 16
        %v4047 = vrot.slane %v4045, 5
        %v4048 = vsel %vm388, %v4043, %v4047
        %v4050 = vshrl.u32 %v3848, 16
        %v4052 = vrot.slane %v4050, 4
        %v4053 = vshll.u32 %v3848, 16
        %v4055 = vrot.slane %v4053, 5
        %v4056 = vor.u32 %v4052, %v4055
        %v4057 = vrot.slane %v4056, 4
        %v4059 = vshll.u32 %v3849, 16
        %v4061 = vrot.slane %v4059, 5
        %v4062 = vsel %vm388, %v4057, %v4061
        %v4063 = vshrl.u32 %v3849, 16
        %v4065 = vrot.slane %v4063, 4
        %v4066 = vor.u32 %v4065, %v4061
        %v4067 = vrot.slane %v4066, 4
        %v4069 = vshll.u32 %v3850, 16
        %v4071 = vrot.slane %v4069, 5
        %v4072 = vsel %vm388, %v4067, %v4071
        %v4074 = vshrl.u32 %v3851, 16
        %v4076 = vrot.slane %v4074, 4
        %v4077 = vshll.u32 %v3851, 16
        %v4079 = vrot.slane %v4077, 5
        %v4080 = vor.u32 %v4076, %v4079
        %v4081 = vrot.slane %v4080, 4
        %v4083 = vshll.u32 %v3852, 16
        %v4085 = vrot.slane %v4083, 5
        %v4086 = vsel %vm388, %v4081, %v4085
        %v4087 = vshrl.u32 %v3852, 16
        %v4089 = vrot.slane %v4087, 4
        %v4090 = vor.u32 %v4089, %v4085
        %v4091 = vrot.slane %v4090, 4
        %v4093 = vshll.u32 %v3853, 16
        %v4095 = vrot.slane %v4093, 5
        %v4096 = vsel %vm388, %v4091, %v4095
        %v4098 = vshrl.u32 %v3854, 16
        %v4100 = vrot.slane %v4098, 4
        %v4101 = vshll.u32 %v3854, 16
        %v4103 = vrot.slane %v4101, 5
        %v4104 = vor.u32 %v4100, %v4103
        %v4105 = vrot.slane %v4104, 4
        %v4107 = vshll.u32 %v3855, 16
        %v4109 = vrot.slane %v4107, 5
        %v4110 = vsel %vm388, %v4105, %v4109
        %v4111 = vshrl.u32 %v3855, 16
        %v4113 = vrot.slane %v4111, 4
        %v4114 = vor.u32 %v4113, %v4109
        %v4115 = vrot.slane %v4114, 4
        %v4117 = vshll.u32 %v3856, 16
        %v4119 = vrot.slane %v4117, 5
        %v4120 = vsel %vm388, %v4115, %v4119
        %v4122 = vshrl.u32 %v3857, 16
        %v4124 = vrot.slane %v4122, 4
        %v4125 = vshll.u32 %v3857, 16
        %v4127 = vrot.slane %v4125, 5
        %v4128 = vor.u32 %v4124, %v4127
        %v4129 = vrot.slane %v4128, 4
        %v4131 = vshll.u32 %v3858, 16
        %v4133 = vrot.slane %v4131, 5
        %v4134 = vsel %vm388, %v4129, %v4133
        %v4135 = vshrl.u32 %v3858, 16
        %v4137 = vrot.slane %v4135, 4
        %v4138 = vor.u32 %v4137, %v4133
        %v4139 = vrot.slane %v4138, 4
        %v4141 = vshll.u32 %v3859, 16
        %v4143 = vrot.slane %v4141, 5
        %v4144 = vsel %vm388, %v4139, %v4143
        %v4146 = vshrl.u32 %v3860, 16
        %v4148 = vrot.slane %v4146, 4
        %v4149 = vshll.u32 %v3860, 16
        %v4151 = vrot.slane %v4149, 5
        %v4152 = vor.u32 %v4148, %v4151
        %v4153 = vrot.slane %v4152, 4
        %v4155 = vshll.u32 %v3861, 16
        %v4157 = vrot.slane %v4155, 5
        %v4158 = vsel %vm388, %v4153, %v4157
        %v4159 = vshrl.u32 %v3861, 16
        %v4161 = vrot.slane %v4159, 4
        %v4162 = vor.u32 %v4161, %v4157
        %v4163 = vrot.slane %v4162, 4
        %v4165 = vshll.u32 %v3862, 16
        %v4167 = vrot.slane %v4165, 5
        %v4168 = vsel %vm388, %v4163, %v4167
        %v4170 = vshrl.u32 %v3863, 16
        %v4172 = vrot.slane %v4170, 4
        %v4173 = vshll.u32 %v3863, 16
        %v4175 = vrot.slane %v4173, 5
        %v4176 = vor.u32 %v4172, %v4175
        %v4177 = vrot.slane %v4176, 4
        %v4179 = vshll.u32 %v3864, 16
        %v4181 = vrot.slane %v4179, 5
        %v4182 = vsel %vm388, %v4177, %v4181
        %v4183 = vshrl.u32 %v3864, 16
        %v4185 = vrot.slane %v4183, 4
        %v4186 = vor.u32 %v4185, %v4181
        %v4187 = vrot.slane %v4186, 4
        %v4189 = vshll.u32 %v3865, 16
        %v4191 = vrot.slane %v4189, 5
        %v4192 = vsel %vm388, %v4187, %v4191
        %v4194 = vshrl.u32 %v3866, 16
        %v4196 = vrot.slane %v4194, 4
        %v4197 = vshll.u32 %v3866, 16
        %v4199 = vrot.slane %v4197, 5
        %v4200 = vor.u32 %v4196, %v4199
        %v4201 = vrot.slane %v4200, 4
        %v4203 = vshll.u32 %v3867, 16
        %v4205 = vrot.slane %v4203, 5
        %v4206 = vsel %vm388, %v4201, %v4205
        %v4207 = vshrl.u32 %v3867, 16
        %v4209 = vrot.slane %v4207, 4
        %v4210 = vor.u32 %v4209, %v4205
        %v4211 = vrot.slane %v4210, 4
        %v4213 = vshll.u32 %v3868, 16
        %v4215 = vrot.slane %v4213, 5
        %v4216 = vsel %vm388, %v4211, %v4215
        %v4218 = vshrl.u32 %v3869, 16
        %v4220 = vrot.slane %v4218, 4
        %v4221 = vshll.u32 %v3869, 16
        %v4223 = vrot.slane %v4221, 5
        %v4224 = vor.u32 %v4220, %v4223
        %v4225 = vrot.slane %v4224, 4
        %v4227 = vshll.u32 %v3870, 16
        %v4229 = vrot.slane %v4227, 5
        %v4230 = vsel %vm388, %v4225, %v4229
        %v4231 = vshrl.u32 %v3870, 16
        %v4233 = vrot.slane %v4231, 4
        %v4234 = vor.u32 %v4233, %v4229
        %v4235 = vrot.slane %v4234, 4
        %v4237 = vshll.u32 %v3871, 16
        %v4239 = vrot.slane %v4237, 5
        %v4240 = vsel %vm388, %v4235, %v4239
        %v4242 = vshrl.u32 %v3872, 16
        %v4244 = vrot.slane %v4242, 4
        %v4245 = vshll.u32 %v3872, 16
        %v4247 = vrot.slane %v4245, 5
        %v4248 = vor.u32 %v4244, %v4247
        %v4249 = vrot.slane %v4248, 4
        %v4251 = vshll.u32 %v3873, 16
        %v4253 = vrot.slane %v4251, 5
        %v4254 = vsel %vm388, %v4249, %v4253
        %v4255 = vshrl.u32 %v3873, 16
        %v4257 = vrot.slane %v4255, 4
        %v4258 = vor.u32 %v4257, %v4253
        %v4259 = vrot.slane %v4258, 4
        %v4261 = vshll.u32 %v3874, 16
        %v4263 = vrot.slane %v4261, 5
        %v4264 = vsel %vm388, %v4259, %v4263
        %v4266 = vshrl.u32 %v3875, 16
        %v4268 = vrot.slane %v4266, 4
        %v4269 = vshll.u32 %v3875, 16
        %v4271 = vrot.slane %v4269, 5
        %v4272 = vor.u32 %v4268, %v4271
        %v4273 = vrot.slane %v4272, 4
        %v4275 = vshll.u32 %v3876, 16
        %v4277 = vrot.slane %v4275, 5
        %v4278 = vsel %vm388, %v4273, %v4277
        %v4279 = vshrl.u32 %v3876, 16
        %v4281 = vrot.slane %v4279, 4
        %v4282 = vor.u32 %v4281, %v4277
        %v4283 = vrot.slane %v4282, 4
        %v4285 = vshll.u32 %v3877, 16
        %v4287 = vrot.slane %v4285, 5
        %v4288 = vsel %vm388, %v4283, %v4287
        %v4290 = vshrl.u32 %v3878, 16
        %v4292 = vrot.slane %v4290, 4
        %v4293 = vshll.u32 %v3878, 16
        %v4295 = vrot.slane %v4293, 5
        %v4296 = vor.u32 %v4292, %v4295
        %v4297 = vrot.slane %v4296, 4
        %v4299 = vshll.u32 %v3879, 16
        %v4301 = vrot.slane %v4299, 5
        %v4302 = vsel %vm388, %v4297, %v4301
        %v4303 = vshrl.u32 %v3879, 16
        %v4305 = vrot.slane %v4303, 4
        %v4306 = vor.u32 %v4305, %v4301
        %v4307 = vrot.slane %v4306, 4
        %v4309 = vshll.u32 %v3880, 16
        %v4311 = vrot.slane %v4309, 5
        %v4312 = vsel %vm388, %v4307, %v4311
        %v4313 = vunpack.c.l.b16 %v3894
        %v4314 = vunpack.c.l.b16 %v3904
        %v4315 = vunpack.c.l.b16 %v3918
        %v4316 = vunpack.c.l.b16 %v3928
        %v4317 = vunpack.c.l.b16 %v3942
        %v4318 = vunpack.c.l.b16 %v3952
        %v4319 = vunpack.c.l.b16 %v3966
        %v4320 = vunpack.c.l.b16 %v3976
        %v4321 = vunpack.c.l.b16 %v3990
        %v4322 = vunpack.c.l.b16 %v4000
        %v4323 = vunpack.c.l.b16 %v4014
        %v4324 = vunpack.c.l.b16 %v4024
        %v4325 = vunpack.c.l.b16 %v4038
        %v4326 = vunpack.c.l.b16 %v4048
        %v4327 = vunpack.c.l.b16 %v4062
        %v4328 = vunpack.c.l.b16 %v4072
        %v4329 = vunpack.c.l.b16 %v4086
        %v4330 = vunpack.c.l.b16 %v4096
        %v4331 = vunpack.c.l.b16 %v4110
        %v4332 = vunpack.c.l.b16 %v4120
        %v4333 = vunpack.c.l.b16 %v4134
        %v4334 = vunpack.c.l.b16 %v4144
        %v4335 = vunpack.c.l.b16 %v4158
        %v4336 = vunpack.c.l.b16 %v4168
        %v4337 = vunpack.c.l.b16 %v4182
        %v4338 = vunpack.c.l.b16 %v4192
        %v4339 = vunpack.c.l.b16 %v4206
        %v4340 = vunpack.c.l.b16 %v4216
        %v4341 = vunpack.c.l.b16 %v4230
        %v4342 = vunpack.c.l.b16 %v4240
        %v4343 = vunpack.c.l.b16 %v4254
        %v4344 = vunpack.c.l.b16 %v4264
        %v4345 = vunpack.c.l.b16 %v4278
        %v4346 = vunpack.c.l.b16 %v4288
        %v4347 = vunpack.c.l.b16 %v4302
        %v4348 = vunpack.c.l.b16 %v4312
        %v4349 = vpack.c.b16 %v4314, %v4313
        %v4350 = vpack.c.b16 %v4316, %v4315
        %v4351 = vpack.c.b16 %v4318, %v4317
        %v4352 = vpack.c.b16 %v4320, %v4319
        %v4353 = vpack.c.b16 %v4322, %v4321
        %v4354 = vpack.c.b16 %v4324, %v4323
        %v4355 = vpack.c.b16 %v4326, %v4325
        %v4356 = vpack.c.b16 %v4328, %v4327
        %v4357 = vpack.c.b16 %v4330, %v4329
        %v4358 = vpack.c.b16 %v4332, %v4331
        %v4359 = vpack.c.b16 %v4334, %v4333
        %v4360 = vpack.c.b16 %v4336, %v4335
        %v4361 = vpack.c.b16 %v4338, %v4337
        %v4362 = vpack.c.b16 %v4340, %v4339
        %v4363 = vpack.c.b16 %v4342, %v4341
        %v4364 = vpack.c.b16 %v4344, %v4343
        %v4365 = vpack.c.b16 %v4346, %v4345
        %v4366 = vpack.c.b16 %v4348, %v4347
        %4385 = vst [vmem:[#allocation2 + $0x8] sm:$0xff] %v4349
        %4386 = vst [vmem:[#allocation2 + $0x20] sm:$0xff] %v4350
        %4387 = vst [vmem:[#allocation2 + $0x38] sm:$0xff] %v4351
        %4388 = vst [vmem:[#allocation2 + $0x50] sm:$0xff] %v4352
        %4389 = vst [vmem:[#allocation2 + $0x68] sm:$0xff] %v4353
        %4390 = vst [vmem:[#allocation2 + $0x80] sm:$0xff] %v4354
        %4391 = vst [vmem:[#allocation2 + $0x98] sm:$0xff] %v4355
        %4392 = vst [vmem:[#allocation2 + $0xb0] sm:$0xff] %v4356
        %4393 = vst [vmem:[#allocation2 + $0xc8] sm:$0xff] %v4357
        %4394 = vst [vmem:[#allocation2 + $0xe0] sm:$0xff] %v4358
        %4395 = vst [vmem:[#allocation2 + $0xf8] sm:$0xff] %v4359
        %4396 = vst [vmem:[#allocation2 + $0x110] sm:$0xff] %v4360
        %4397 = vst [vmem:[#allocation2 + $0x128] sm:$0xff] %v4361
        %4398 = vst [vmem:[#allocation2 + $0x140] sm:$0xff] %v4362
        %4399 = vst [vmem:[#allocation2 + $0x158] sm:$0xff] %v4363
        %4400 = vst [vmem:[#allocation2 + $0x170] sm:$0xff] %v4364
        %4401 = vst [vmem:[#allocation2 + $0x188] sm:$0xff] %v4365
        %4402 = vst [vmem:[#allocation2 + $0x1a0] sm:$0xff] %v4366
        %v4403 = vld [vmem:[#allocation3] sm:$0xe]
        %v4404 = vld [vmem:[#allocation3 + $0x4] sm:$0xf]
        %v4405 = vld [vmem:[#allocation3 + $0x8] sm:$0x1]
        %v4406 = vld [vmem:[#allocation3 + $0xc] sm:$0xe]
        %v4407 = vld [vmem:[#allocation3 + $0x10] sm:$0xf]
        %v4408 = vld [vmem:[#allocation3 + $0x14] sm:$0x1]
        %v4409 = vld [vmem:[#allocation3 + $0x18] sm:$0xe]
        %v4410 = vld [vmem:[#allocation3 + $0x1c] sm:$0xf]
        %v4411 = vld [vmem:[#allocation3 + $0x20] sm:$0x1]
        %v4412 = vld [vmem:[#allocation3 + $0x24] sm:$0xe]
        %v4413 = vld [vmem:[#allocation3 + $0x28] sm:$0xf]
        %v4414 = vld [vmem:[#allocation3 + $0x2c] sm:$0x1]
        %v4415 = vld [vmem:[#allocation3 + $0x30] sm:$0xe]
        %v4416 = vld [vmem:[#allocation3 + $0x34] sm:$0xf]
        %v4417 = vld [vmem:[#allocation3 + $0x38] sm:$0x1]
        %v4418 = vld [vmem:[#allocation3 + $0x3c] sm:$0xe]
        %v4419 = vld [vmem:[#allocation3 + $0x40] sm:$0xf]
        %v4420 = vld [vmem:[#allocation3 + $0x44] sm:$0x1]
        %v4421 = vld [vmem:[#allocation3 + $0x48] sm:$0xe]
        %v4422 = vld [vmem:[#allocation3 + $0x4c] sm:$0xf]
        %v4423 = vld [vmem:[#allocation3 + $0x50] sm:$0x1]
        %v4424 = vld [vmem:[#allocation3 + $0x54] sm:$0xe]
        %v4425 = vld [vmem:[#allocation3 + $0x58] sm:$0xf]
        %v4426 = vld [vmem:[#allocation3 + $0x5c] sm:$0x1]
        %v4427 = vld [vmem:[#allocation3 + $0x60] sm:$0xe]
        %v4428 = vld [vmem:[#allocation3 + $0x64] sm:$0xf]
        %v4429 = vld [vmem:[#allocation3 + $0x68] sm:$0x1]
        %v4430 = vld [vmem:[#allocation3 + $0x6c] sm:$0xe]
        %v4431 = vld [vmem:[#allocation3 + $0x70] sm:$0xf]
        %v4432 = vld [vmem:[#allocation3 + $0x74] sm:$0x1]
        %v4433 = vld [vmem:[#allocation3 + $0x78] sm:$0xe]
        %v4434 = vld [vmem:[#allocation3 + $0x7c] sm:$0xf]
        %v4435 = vld [vmem:[#allocation3 + $0x80] sm:$0x1]
        %v4436 = vld [vmem:[#allocation3 + $0x84] sm:$0xe]
        %v4437 = vld [vmem:[#allocation3 + $0x88] sm:$0xf]
        %v4438 = vld [vmem:[#allocation3 + $0x8c] sm:$0x1]
        %v4439 = vld [vmem:[#allocation3 + $0x90] sm:$0xe]
        %v4440 = vld [vmem:[#allocation3 + $0x94] sm:$0xf]
        %v4441 = vld [vmem:[#allocation3 + $0x98] sm:$0x1]
        %v4442 = vld [vmem:[#allocation3 + $0x9c] sm:$0xe]
        %v4443 = vld [vmem:[#allocation3 + $0xa0] sm:$0xf]
        %v4444 = vld [vmem:[#allocation3 + $0xa4] sm:$0x1]
        %v4445 = vld [vmem:[#allocation3 + $0xa8] sm:$0xe]
        %v4446 = vld [vmem:[#allocation3 + $0xac] sm:$0xf]
        %v4447 = vld [vmem:[#allocation3 + $0xb0] sm:$0x1]
        %v4448 = vld [vmem:[#allocation3 + $0xb4] sm:$0xe]
        %v4449 = vld [vmem:[#allocation3 + $0xb8] sm:$0xf]
        %v4450 = vld [vmem:[#allocation3 + $0xbc] sm:$0x1]
        %v4451 = vld [vmem:[#allocation3 + $0xc0] sm:$0xe]
        %v4452 = vld [vmem:[#allocation3 + $0xc4] sm:$0xf]
        %v4453 = vld [vmem:[#allocation3 + $0xc8] sm:$0x1]
        %v4454 = vld [vmem:[#allocation3 + $0xcc] sm:$0xe]
        %v4455 = vld [vmem:[#allocation3 + $0xd0] sm:$0xf]
        %v4456 = vld [vmem:[#allocation3 + $0xd4] sm:$0x1]
        %v4511 = vrot.slane %v4403, 5
        %v4512 = vrot.slane %v4511, 4
        %v4513 = vrot.slane %v4404, 5
        %v4514 = vsel %vm1021, %v4512, %v4513
        %v4515 = vrot.slane %v4513, 4
        %v4516 = vrot.slane %v4405, 5
        %v4517 = vsel %vm1021, %v4515, %v4516
        %v4518 = vrot.slane %v4406, 5
        %v4519 = vrot.slane %v4518, 4
        %v4520 = vrot.slane %v4407, 5
        %v4521 = vsel %vm1021, %v4519, %v4520
        %v4522 = vrot.slane %v4520, 4
        %v4523 = vrot.slane %v4408, 5
        %v4524 = vsel %vm1021, %v4522, %v4523
        %v4525 = vrot.slane %v4409, 5
        %v4526 = vrot.slane %v4525, 4
        %v4527 = vrot.slane %v4410, 5
        %v4528 = vsel %vm1021, %v4526, %v4527
        %v4529 = vrot.slane %v4527, 4
        %v4530 = vrot.slane %v4411, 5
        %v4531 = vsel %vm1021, %v4529, %v4530
        %v4532 = vrot.slane %v4412, 5
        %v4533 = vrot.slane %v4532, 4
        %v4534 = vrot.slane %v4413, 5
        %v4535 = vsel %vm1021, %v4533, %v4534
        %v4536 = vrot.slane %v4534, 4
        %v4537 = vrot.slane %v4414, 5
        %v4538 = vsel %vm1021, %v4536, %v4537
        %v4539 = vrot.slane %v4415, 5
        %v4540 = vrot.slane %v4539, 4
        %v4541 = vrot.slane %v4416, 5
        %v4542 = vsel %vm1021, %v4540, %v4541
        %v4543 = vrot.slane %v4541, 4
        %v4544 = vrot.slane %v4417, 5
        %v4545 = vsel %vm1021, %v4543, %v4544
        %v4546 = vrot.slane %v4418, 5
        %v4547 = vrot.slane %v4546, 4
        %v4548 = vrot.slane %v4419, 5
        %v4549 = vsel %vm1021, %v4547, %v4548
        %v4550 = vrot.slane %v4548, 4
        %v4551 = vrot.slane %v4420, 5
        %v4552 = vsel %vm1021, %v4550, %v4551
        %v4553 = vrot.slane %v4421, 5
        %v4554 = vrot.slane %v4553, 4
        %v4555 = vrot.slane %v4422, 5
        %v4556 = vsel %vm1021, %v4554, %v4555
        %v4557 = vrot.slane %v4555, 4
        %v4558 = vrot.slane %v4423, 5
        %v4559 = vsel %vm1021, %v4557, %v4558
        %v4560 = vrot.slane %v4424, 5
        %v4561 = vrot.slane %v4560, 4
        %v4562 = vrot.slane %v4425, 5
        %v4563 = vsel %vm1021, %v4561, %v4562
        %v4564 = vrot.slane %v4562, 4
        %v4565 = vrot.slane %v4426, 5
        %v4566 = vsel %vm1021, %v4564, %v4565
        %v4567 = vrot.slane %v4427, 5
        %v4568 = vrot.slane %v4567, 4
        %v4569 = vrot.slane %v4428, 5
        %v4570 = vsel %vm1021, %v4568, %v4569
        %v4571 = vrot.slane %v4569, 4
        %v4572 = vrot.slane %v4429, 5
        %v4573 = vsel %vm1021, %v4571, %v4572
        %v4574 = vrot.slane %v4430, 5
        %v4575 = vrot.slane %v4574, 4
        %v4576 = vrot.slane %v4431, 5
        %v4577 = vsel %vm1021, %v4575, %v4576
        %v4578 = vrot.slane %v4576, 4
        %v4579 = vrot.slane %v4432, 5
        %v4580 = vsel %vm1021, %v4578, %v4579
        %v4581 = vrot.slane %v4433, 5
        %v4582 = vrot.slane %v4581, 4
        %v4583 = vrot.slane %v4434, 5
        %v4584 = vsel %vm1021, %v4582, %v4583
        %v4585 = vrot.slane %v4583, 4
        %v4586 = vrot.slane %v4435, 5
        %v4587 = vsel %vm1021, %v4585, %v4586
        %v4588 = vrot.slane %v4436, 5
        %v4589 = vrot.slane %v4588, 4
        %v4590 = vrot.slane %v4437, 5
        %v4591 = vsel %vm1021, %v4589, %v4590
        %v4592 = vrot.slane %v4590, 4
        %v4593 = vrot.slane %v4438, 5
        %v4594 = vsel %vm1021, %v4592, %v4593
        %v4595 = vrot.slane %v4439, 5
        %v4596 = vrot.slane %v4595, 4
        %v4597 = vrot.slane %v4440, 5
        %v4598 = vsel %vm1021, %v4596, %v4597
        %v4599 = vrot.slane %v4597, 4
        %v4600 = vrot.slane %v4441, 5
        %v4601 = vsel %vm1021, %v4599, %v4600
        %v4602 = vrot.slane %v4442, 5
        %v4603 = vrot.slane %v4602, 4
        %v4604 = vrot.slane %v4443, 5
        %v4605 = vsel %vm1021, %v4603, %v4604
        %v4606 = vrot.slane %v4604, 4
        %v4607 = vrot.slane %v4444, 5
        %v4608 = vsel %vm1021, %v4606, %v4607
        %v4609 = vrot.slane %v4445, 5
        %v4610 = vrot.slane %v4609, 4
        %v4611 = vrot.slane %v4446, 5
        %v4612 = vsel %vm1021, %v4610, %v4611
        %v4613 = vrot.slane %v4611, 4
        %v4614 = vrot.slane %v4447, 5
        %v4615 = vsel %vm1021, %v4613, %v4614
        %v4616 = vrot.slane %v4448, 5
        %v4617 = vrot.slane %v4616, 4
        %v4618 = vrot.slane %v4449, 5
        %v4619 = vsel %vm1021, %v4617, %v4618
        %v4620 = vrot.slane %v4618, 4
        %v4621 = vrot.slane %v4450, 5
        %v4622 = vsel %vm1021, %v4620, %v4621
        %v4623 = vrot.slane %v4451, 5
        %v4624 = vrot.slane %v4623, 4
        %v4625 = vrot.slane %v4452, 5
        %v4626 = vsel %vm1021, %v4624, %v4625
        %v4627 = vrot.slane %v4625, 4
        %v4628 = vrot.slane %v4453, 5
        %v4629 = vsel %vm1021, %v4627, %v4628
        %v4630 = vrot.slane %v4454, 5
        %v4631 = vrot.slane %v4630, 4
        %v4632 = vrot.slane %v4455, 5
        %v4633 = vsel %vm1021, %v4631, %v4632
        %v4634 = vrot.slane %v4632, 4
        %v4635 = vrot.slane %v4456, 5
        %v4636 = vsel %vm1021, %v4634, %v4635
        %v4637 = vunpack.c.l.b16 %v4514
        %v4638 = vunpack.c.l.b16 %v4517
        %v4639 = vunpack.c.l.b16 %v4521
        %v4640 = vunpack.c.l.b16 %v4524
        %v4641 = vunpack.c.l.b16 %v4528
        %v4642 = vunpack.c.l.b16 %v4531
        %v4643 = vunpack.c.l.b16 %v4535
        %v4644 = vunpack.c.l.b16 %v4538
        %v4645 = vunpack.c.l.b16 %v4542
        %v4646 = vunpack.c.l.b16 %v4545
        %v4647 = vunpack.c.l.b16 %v4549
        %v4648 = vunpack.c.l.b16 %v4552
        %v4649 = vunpack.c.l.b16 %v4556
        %v4650 = vunpack.c.l.b16 %v4559
        %v4651 = vunpack.c.l.b16 %v4563
        %v4652 = vunpack.c.l.b16 %v4566
        %v4653 = vunpack.c.l.b16 %v4570
        %v4654 = vunpack.c.l.b16 %v4573
        %v4655 = vunpack.c.l.b16 %v4577
        %v4656 = vunpack.c.l.b16 %v4580
        %v4657 = vunpack.c.l.b16 %v4584
        %v4658 = vunpack.c.l.b16 %v4587
        %v4659 = vunpack.c.l.b16 %v4591
        %v4660 = vunpack.c.l.b16 %v4594
        %v4661 = vunpack.c.l.b16 %v4598
        %v4662 = vunpack.c.l.b16 %v4601
        %v4663 = vunpack.c.l.b16 %v4605
        %v4664 = vunpack.c.l.b16 %v4608
        %v4665 = vunpack.c.l.b16 %v4612
        %v4666 = vunpack.c.l.b16 %v4615
        %v4667 = vunpack.c.l.b16 %v4619
        %v4668 = vunpack.c.l.b16 %v4622
        %v4669 = vunpack.c.l.b16 %v4626
        %v4670 = vunpack.c.l.b16 %v4629
        %v4671 = vunpack.c.l.b16 %v4633
        %v4672 = vunpack.c.l.b16 %v4636
        %v4673 = vpack.c.b16 %v4638, %v4637
        %v4674 = vpack.c.b16 %v4640, %v4639
        %v4675 = vpack.c.b16 %v4642, %v4641
        %v4676 = vpack.c.b16 %v4644, %v4643
        %v4677 = vpack.c.b16 %v4646, %v4645
        %v4678 = vpack.c.b16 %v4648, %v4647
        %v4679 = vpack.c.b16 %v4650, %v4649
        %v4680 = vpack.c.b16 %v4652, %v4651
        %v4681 = vpack.c.b16 %v4654, %v4653
        %v4682 = vpack.c.b16 %v4656, %v4655
        %v4683 = vpack.c.b16 %v4658, %v4657
        %v4684 = vpack.c.b16 %v4660, %v4659
        %v4685 = vpack.c.b16 %v4662, %v4661
        %v4686 = vpack.c.b16 %v4664, %v4663
        %v4687 = vpack.c.b16 %v4666, %v4665
        %v4688 = vpack.c.b16 %v4668, %v4667
        %v4689 = vpack.c.b16 %v4670, %v4669
        %v4690 = vpack.c.b16 %v4672, %v4671
        %4709 = vst [vmem:[#allocation2 + $0x10] sm:$0xff] %v4673
        %4710 = vst [vmem:[#allocation2 + $0x28] sm:$0xff] %v4674
        %4711 = vst [vmem:[#allocation2 + $0x40] sm:$0xff] %v4675
        %4712 = vst [vmem:[#allocation2 + $0x58] sm:$0xff] %v4676
        %4713 = vst [vmem:[#allocation2 + $0x70] sm:$0xff] %v4677
        %4714 = vst [vmem:[#allocation2 + $0x88] sm:$0xff] %v4678
        %4715 = vst [vmem:[#allocation2 + $0xa0] sm:$0xff] %v4679
        %4716 = vst [vmem:[#allocation2 + $0xb8] sm:$0xff] %v4680
        %4717 = vst [vmem:[#allocation2 + $0xd0] sm:$0xff] %v4681
        %4718 = vst [vmem:[#allocation2 + $0xe8] sm:$0xff] %v4682
        %4719 = vst [vmem:[#allocation2 + $0x100] sm:$0xff] %v4683
        %4720 = vst [vmem:[#allocation2 + $0x118] sm:$0xff] %v4684
        %4721 = vst [vmem:[#allocation2 + $0x130] sm:$0xff] %v4685
        %4722 = vst [vmem:[#allocation2 + $0x148] sm:$0xff] %v4686
        %4723 = vst [vmem:[#allocation2 + $0x160] sm:$0xff] %v4687
        %4724 = vst [vmem:[#allocation2 + $0x178] sm:$0xff] %v4688
        %4725 = vst [vmem:[#allocation2 + $0x190] sm:$0xff] %v4689
        %4726 = vst [vmem:[#allocation2 + $0x1a8] sm:$0xff] %v4690
        %v4727 = vld [vmem:[#allocation2] sm:$0xff]
        %v4728 = vld [vmem:[#allocation2 + $0x8] sm:$0xff]
        %v4729 = vld [vmem:[#allocation2 + $0x10] sm:$0xff]
        %v4730 = vld [vmem:[#allocation2 + $0x18] sm:$0xff]
        %v4731 = vld [vmem:[#allocation2 + $0x20] sm:$0xff]
        %v4732 = vld [vmem:[#allocation2 + $0x28] sm:$0xff]
        %v4733 = vld [vmem:[#allocation2 + $0x30] sm:$0xff]
        %v4734 = vld [vmem:[#allocation2 + $0x38] sm:$0xff]
        %v4735 = vld [vmem:[#allocation2 + $0x40] sm:$0xff]
        %v4736 = vld [vmem:[#allocation2 + $0x48] sm:$0xff]
        %v4737 = vld [vmem:[#allocation2 + $0x50] sm:$0xff]
        %v4738 = vld [vmem:[#allocation2 + $0x58] sm:$0xff]
        %v4739 = vld [vmem:[#allocation2 + $0x60] sm:$0xff]
        %v4740 = vld [vmem:[#allocation2 + $0x68] sm:$0xff]
        %v4741 = vld [vmem:[#allocation2 + $0x70] sm:$0xff]
        %v4742 = vld [vmem:[#allocation2 + $0x78] sm:$0xff]
        %v4743 = vld [vmem:[#allocation2 + $0x80] sm:$0xff]
        %v4744 = vld [vmem:[#allocation2 + $0x88] sm:$0xff]
        %v4745 = vld [vmem:[#allocation2 + $0x90] sm:$0xff]
        %v4746 = vld [vmem:[#allocation2 + $0x98] sm:$0xff]
        %v4747 = vld [vmem:[#allocation2 + $0xa0] sm:$0xff]
        %v4748 = vld [vmem:[#allocation2 + $0xa8] sm:$0xff]
        %v4749 = vld [vmem:[#allocation2 + $0xb0] sm:$0xff]
        %v4750 = vld [vmem:[#allocation2 + $0xb8] sm:$0xff]
        %v4751 = vld [vmem:[#allocation2 + $0xc0] sm:$0xff]
        %v4752 = vld [vmem:[#allocation2 + $0xc8] sm:$0xff]
        %v4753 = vld [vmem:[#allocation2 + $0xd0] sm:$0xff]
        %v4754 = vld [vmem:[#allocation2 + $0xd8] sm:$0xff]
        %v4755 = vld [vmem:[#allocation2 + $0xe0] sm:$0xff]
        %v4756 = vld [vmem:[#allocation2 + $0xe8] sm:$0xff]
        %v4757 = vld [vmem:[#allocation2 + $0xf0] sm:$0xff]
        %v4758 = vld [vmem:[#allocation2 + $0xf8] sm:$0xff]
        %v4759 = vld [vmem:[#allocation2 + $0x100] sm:$0xff]
        %v4760 = vld [vmem:[#allocation2 + $0x108] sm:$0xff]
        %v4761 = vld [vmem:[#allocation2 + $0x110] sm:$0xff]
        %v4762 = vld [vmem:[#allocation2 + $0x118] sm:$0xff]
        %v4763 = vld [vmem:[#allocation2 + $0x120] sm:$0xff]
        %v4764 = vld [vmem:[#allocation2 + $0x128] sm:$0xff]
        %v4765 = vld [vmem:[#allocation2 + $0x130] sm:$0xff]
        %v4766 = vld [vmem:[#allocation2 + $0x138] sm:$0xff]
        %v4767 = vld [vmem:[#allocation2 + $0x140] sm:$0xff]
        %v4768 = vld [vmem:[#allocation2 + $0x148] sm:$0xff]
        %v4769 = vld [vmem:[#allocation2 + $0x150] sm:$0xff]
        %v4770 = vld [vmem:[#allocation2 + $0x158] sm:$0xff]
        %v4771 = vld [vmem:[#allocation2 + $0x160] sm:$0xff]
        %v4772 = vld [vmem:[#allocation2 + $0x168] sm:$0xff]
        %v4773 = vld [vmem:[#allocation2 + $0x170] sm:$0xff]
        %v4774 = vld [vmem:[#allocation2 + $0x178] sm:$0xff]
        %v4775 = vld [vmem:[%s2] sm:$0xf]
        %v4776 = vld [vmem:[%s2 + $0x4] sm:$0xf]
        %v4777 = vld [vmem:[%s2 + $0x8] sm:$0xf]
        %v4778 = vld [vmem:[%s2 + $0xc] sm:$0xf]
        %v4779 = vld [vmem:[%s2 + $0x10] sm:$0xf]
        %v4780 = vld [vmem:[%s2 + $0x14] sm:$0xf]
        %v4781 = vld [vmem:[%s2 + $0x18] sm:$0xf]
        %v4782 = vld [vmem:[%s2 + $0x1c] sm:$0xf]
        %v4783 = vld [vmem:[%s2 + $0x20] sm:$0xf]
        %v4784 = vld [vmem:[%s2 + $0x24] sm:$0xf]
        %v4785 = vld [vmem:[%s2 + $0x28] sm:$0xf]
        %v4786 = vld [vmem:[%s2 + $0x2c] sm:$0xf]
        %v4787 = vld [vmem:[%s2 + $0x30] sm:$0xf]
        %v4788 = vld [vmem:[%s2 + $0x34] sm:$0xf]
        %v4789 = vld [vmem:[%s2 + $0x38] sm:$0xf]
        %v4790 = vld [vmem:[%s2 + $0x3c] sm:$0xf]
        %v4791 = vld [vmem:[%s2 + $0x40] sm:$0xf]
        %v4792 = vld [vmem:[%s2 + $0x44] sm:$0xf]
        %v4793 = vld [vmem:[%s2 + $0x48] sm:$0xf]
        %v4794 = vld [vmem:[%s2 + $0x4c] sm:$0xf]
        %v4795 = vld [vmem:[%s2 + $0x50] sm:$0xf]
        %v4796 = vld [vmem:[%s2 + $0x54] sm:$0xf]
        %v4797 = vld [vmem:[%s2 + $0x58] sm:$0xf]
        %v4798 = vld [vmem:[%s2 + $0x5c] sm:$0xf]
        %v4799 = vld [vmem:[%s2 + $0x60] sm:$0xf]
        %v4800 = vld [vmem:[%s2 + $0x64] sm:$0xf]
        %v4801 = vld [vmem:[%s2 + $0x68] sm:$0xf]
        %v4802 = vld [vmem:[%s2 + $0x6c] sm:$0xf]
        %v4803 = vld [vmem:[%s2 + $0x70] sm:$0xf]
        %v4804 = vld [vmem:[%s2 + $0x74] sm:$0xf]
        %v4805 = vld [vmem:[%s2 + $0x78] sm:$0xf]
        %v4806 = vld [vmem:[%s2 + $0x7c] sm:$0xf]
        %v4807 = vld [vmem:[%s2 + $0x80] sm:$0xf]
        %v4808 = vld [vmem:[%s2 + $0x84] sm:$0xf]
        %v4809 = vld [vmem:[%s2 + $0x88] sm:$0xf]
        %v4810 = vld [vmem:[%s2 + $0x8c] sm:$0xf]
        %v4811 = vld [vmem:[%s2 + $0x90] sm:$0xf]
        %v4812 = vld [vmem:[%s2 + $0x94] sm:$0xf]
        %v4813 = vld [vmem:[%s2 + $0x98] sm:$0xf]
        %v4814 = vld [vmem:[%s2 + $0x9c] sm:$0xf]
        %v4815 = vld [vmem:[%s2 + $0xa0] sm:$0xf]
        %v4816 = vld [vmem:[%s2 + $0xa4] sm:$0xf]
        %v4817 = vld [vmem:[%s2 + $0xa8] sm:$0xf]
        %v4818 = vld [vmem:[%s2 + $0xac] sm:$0xf]
        %v4819 = vld [vmem:[%s2 + $0xb0] sm:$0xf]
        %v4820 = vld [vmem:[%s2 + $0xb4] sm:$0xf]
        %v4821 = vld [vmem:[%s2 + $0xb8] sm:$0xf]
        %v4822 = vld [vmem:[%s2 + $0xbc] sm:$0xf]
        %v4871 = vunpack.c.l.b16 %v4775
        %v4872 = vunpack.c.l.b16 %v4776
        %v4873 = vunpack.c.l.b16 %v4777
        %v4874 = vunpack.c.l.b16 %v4778
        %v4875 = vunpack.c.l.b16 %v4779
        %v4876 = vunpack.c.l.b16 %v4780
        %v4877 = vunpack.c.l.b16 %v4781
        %v4878 = vunpack.c.l.b16 %v4782
        %v4879 = vunpack.c.l.b16 %v4783
        %v4880 = vunpack.c.l.b16 %v4784
        %v4881 = vunpack.c.l.b16 %v4785
        %v4882 = vunpack.c.l.b16 %v4786
        %v4883 = vunpack.c.l.b16 %v4787
        %v4884 = vunpack.c.l.b16 %v4788
        %v4885 = vunpack.c.l.b16 %v4789
        %v4886 = vunpack.c.l.b16 %v4790
        %v4887 = vunpack.c.l.b16 %v4791
        %v4888 = vunpack.c.l.b16 %v4792
        %v4889 = vunpack.c.l.b16 %v4793
        %v4890 = vunpack.c.l.b16 %v4794
        %v4891 = vunpack.c.l.b16 %v4795
        %v4892 = vunpack.c.l.b16 %v4796
        %v4893 = vunpack.c.l.b16 %v4797
        %v4894 = vunpack.c.l.b16 %v4798
        %v4895 = vunpack.c.l.b16 %v4799
        %v4896 = vunpack.c.l.b16 %v4800
        %v4897 = vunpack.c.l.b16 %v4801
        %v4898 = vunpack.c.l.b16 %v4802
        %v4899 = vunpack.c.l.b16 %v4803
        %v4900 = vunpack.c.l.b16 %v4804
        %v4901 = vunpack.c.l.b16 %v4805
        %v4902 = vunpack.c.l.b16 %v4806
        %v4903 = vunpack.c.l.b16 %v4807
        %v4904 = vunpack.c.l.b16 %v4808
        %v4905 = vunpack.c.l.b16 %v4809
        %v4906 = vunpack.c.l.b16 %v4810
        %v4907 = vunpack.c.l.b16 %v4811
        %v4908 = vunpack.c.l.b16 %v4812
        %v4909 = vunpack.c.l.b16 %v4813
        %v4910 = vunpack.c.l.b16 %v4814
        %v4911 = vunpack.c.l.b16 %v4815
        %v4912 = vunpack.c.l.b16 %v4816
        %v4913 = vunpack.c.l.b16 %v4817
        %v4914 = vunpack.c.l.b16 %v4818
        %v4915 = vunpack.c.l.b16 %v4819
        %v4916 = vunpack.c.l.b16 %v4820
        %v4917 = vunpack.c.l.b16 %v4821
        %v4918 = vunpack.c.l.b16 %v4822
        %v4919 = vpack.c.b16 %v4872, %v4871
        %v4920 = vpack.c.b16 %v4874, %v4873
        %v4921 = vpack.c.b16 %v4876, %v4875
        %v4922 = vpack.c.b16 %v4878, %v4877
        %v4923 = vpack.c.b16 %v4880, %v4879
        %v4924 = vpack.c.b16 %v4882, %v4881
        %v4925 = vpack.c.b16 %v4884, %v4883
        %v4926 = vpack.c.b16 %v4886, %v4885
        %v4927 = vpack.c.b16 %v4888, %v4887
        %v4928 = vpack.c.b16 %v4890, %v4889
        %v4929 = vpack.c.b16 %v4892, %v4891
        %v4930 = vpack.c.b16 %v4894, %v4893
        %v4931 = vpack.c.b16 %v4896, %v4895
        %v4932 = vpack.c.b16 %v4898, %v4897
        %v4933 = vpack.c.b16 %v4900, %v4899
        %v4934 = vpack.c.b16 %v4902, %v4901
        %v4935 = vpack.c.b16 %v4904, %v4903
        %v4936 = vpack.c.b16 %v4906, %v4905
        %v4937 = vpack.c.b16 %v4908, %v4907
        %v4938 = vpack.c.b16 %v4910, %v4909
        %v4939 = vpack.c.b16 %v4912, %v4911
        %v4940 = vpack.c.b16 %v4914, %v4913
        %v4941 = vpack.c.b16 %v4916, %v4915
        %v4942 = vpack.c.b16 %v4918, %v4917
        %4967 = vmatprep.subr.bf16.mxu0 0
        %4968 = vmatpush1.bf16.msra.mxu0 %v4919
        %4969 = vmatprep.subr.bf16.mxu0 0
        %4970 = vmatpush1.bf16.msra.mxu0 %v4920
        %4971 = vmatprep.subr.bf16.mxu0 0
        %4972 = vmatpush1.bf16.msra.mxu0 %v4921
        %4973 = vmatprep.subr.bf16.mxu0 0
        %4974 = vmatpush1.bf16.msra.mxu0 %v4922
        %4975 = vmatprep.subr.bf16.mxu0 0
        %4976 = vmatpush1.bf16.msra.mxu0 %v4923
        %4977 = vmatprep.subr.bf16.mxu0 0
        %4978 = vmatpush1.bf16.msra.mxu0 %v4924
        %4979 = vmatprep.subr.bf16.mxu0 0
        %4980 = vmatpush1.bf16.msra.mxu0 %v4925
        %4981 = vmatprep.subr.bf16.mxu0 0
        %4982 = vmatpush1.bf16.msra.mxu0 %v4926
        %4983 = vmatprep.subr.bf16.mxu0 0
        %4984 = vmatpush1.bf16.msra.mxu0 %v4927
        %4985 = vmatprep.subr.bf16.mxu0 0
        %4986 = vmatpush1.bf16.msra.mxu0 %v4928
        %4987 = vmatprep.subr.bf16.mxu0 0
        %4988 = vmatpush1.bf16.msra.mxu0 %v4929
        %4989 = vmatprep.subr.bf16.mxu0 0
        %4990 = vmatpush1.bf16.msra.mxu0 %v4930
        %4991 = vmatprep.subr.bf16.mxu0 0
        %4992 = vmatpush1.bf16.msra.mxu0 %v4931
        %4993 = vmatprep.subr.bf16.mxu0 0
        %4994 = vmatpush1.bf16.msra.mxu0 %v4932
        %4995 = vmatprep.subr.bf16.mxu0 0
        %4996 = vmatpush1.bf16.msra.mxu0 %v4933
        %4997 = vmatprep.subr.bf16.mxu0 0
        %4998 = vmatpush1.bf16.msra.mxu0 %v4934
        %4999 = vmatprep.mubr.bf16.mxu0 %v4728
        %5000 = vmatmul.mubr.bf16.gmra.mrb[0].mxu0 %v4727
        %v5001 = vpop.f32.mrb[0].mxu0
        %v5002 = vadd.f32 0.0, %v5001
        %v5003 = vpop.f32.mrb[0].mxu0
        %v5004 = vpop.f32.mrb[0].mxu0
        %v5005 = vadd.f32 0.0, %v5004
        %v5006 = vpop.f32.mrb[0].mxu0
        %5007 = vmatprep.mubr.bf16.mxu0 %v4731
        %5008 = vmatmul.mubr.bf16.gmra.mrb[0].mxu0 %v4730
        %v5009 = vpop.f32.mrb[0].mxu0
        %v5010 = vadd.f32 0.0, %v5009
        %v5011 = vpop.f32.mrb[0].mxu0
        %v5012 = vpop.f32.mrb[0].mxu0
        %v5013 = vadd.f32 0.0, %v5012
        %v5014 = vpop.f32.mrb[0].mxu0
        %5015 = vmatprep.mubr.bf16.mxu0 %v4734
        %5016 = vmatmul.mubr.bf16.gmra.mrb[0].mxu0 %v4733
        %v5017 = vpop.f32.mrb[0].mxu0
        %v5018 = vadd.f32 0.0, %v5017
        %v5019 = vpop.f32.mrb[0].mxu0
        %v5020 = vpop.f32.mrb[0].mxu0
        %v5021 = vadd.f32 0.0, %v5020
        %v5022 = vpop.f32.mrb[0].mxu0
        %5023 = vmatprep.mubr.bf16.mxu0 %v4737
        %5024 = vmatmul.mubr.bf16.gmra.mrb[0].mxu0 %v4736
        %v5025 = vpop.f32.mrb[0].mxu0
        %v5026 = vadd.f32 0.0, %v5025
        %v5027 = vpop.f32.mrb[0].mxu0
        %v5028 = vpop.f32.mrb[0].mxu0
        %v5029 = vadd.f32 0.0, %v5028
        %v5030 = vpop.f32.mrb[0].mxu0
        %5031 = vmatprep.mubr.bf16.mxu0 %v4740
        %5032 = vmatmul.mubr.bf16.gmra.mrb[0].mxu0 %v4739
        %v5033 = vpop.f32.mrb[0].mxu0
        %v5034 = vadd.f32 0.0, %v5033
        %v5035 = vpop.f32.mrb[0].mxu0
        %v5036 = vpop.f32.mrb[0].mxu0
        %v5037 = vadd.f32 0.0, %v5036
        %v5038 = vpop.f32.mrb[0].mxu0
        %5039 = vmatprep.mubr.bf16.mxu0 %v4743
        %5040 = vmatmul.mubr.bf16.gmra.mrb[0].mxu0 %v4742
        %v5041 = vpop.f32.mrb[0].mxu0
        %v5042 = vadd.f32 0.0, %v5041
        %v5043 = vpop.f32.mrb[0].mxu0
        %v5044 = vpop.f32.mrb[0].mxu0
        %v5045 = vadd.f32 0.0, %v5044
        %v5046 = vpop.f32.mrb[0].mxu0
        %5047 = vmatprep.mubr.bf16.mxu0 %v4746
        %5048 = vmatmul.mubr.bf16.gmra.mrb[0].mxu0 %v4745
        %v5049 = vpop.f32.mrb[0].mxu0
        %v5050 = vadd.f32 0.0, %v5049
        %v5051 = vpop.f32.mrb[0].mxu0
        %v5052 = vpop.f32.mrb[0].mxu0
        %v5053 = vadd.f32 0.0, %v5052
        %v5054 = vpop.f32.mrb[0].mxu0
        %5055 = vmatprep.mubr.bf16.mxu0 %v4749
        %5056 = vmatmul.mubr.bf16.gmra.mrb[0].mxu0 %v4748
        %v5057 = vpop.f32.mrb[0].mxu0
        %v5058 = vadd.f32 0.0, %v5057
        %v5059 = vpop.f32.mrb[0].mxu0
        %v5060 = vpop.f32.mrb[0].mxu0
        %v5061 = vadd.f32 0.0, %v5060
        %v5062 = vpop.f32.mrb[0].mxu0
        %5063 = vmatprep.mubr.bf16.mxu0 %v4752
        %5064 = vmatmul.mubr.bf16.gmra.mrb[0].mxu0 %v4751
        %v5065 = vpop.f32.mrb[0].mxu0
        %v5066 = vadd.f32 0.0, %v5065
        %v5067 = vpop.f32.mrb[0].mxu0
        %v5068 = vpop.f32.mrb[0].mxu0
        %v5069 = vadd.f32 0.0, %v5068
        %v5070 = vpop.f32.mrb[0].mxu0
        %5071 = vmatprep.mubr.bf16.mxu0 %v4755
        %5072 = vmatmul.mubr.bf16.gmra.mrb[0].mxu0 %v4754
        %v5073 = vpop.f32.mrb[0].mxu0
        %v5074 = vadd.f32 0.0, %v5073
        %v5075 = vpop.f32.mrb[0].mxu0
        %v5076 = vpop.f32.mrb[0].mxu0
        %v5077 = vadd.f32 0.0, %v5076
        %v5078 = vpop.f32.mrb[0].mxu0
        %5079 = vmatprep.mubr.bf16.mxu0 %v4758
        %5080 = vmatmul.mubr.bf16.gmra.mrb[0].mxu0 %v4757
        %v5081 = vpop.f32.mrb[0].mxu0
        %v5082 = vadd.f32 0.0, %v5081
        %v5083 = vpop.f32.mrb[0].mxu0
        %v5084 = vpop.f32.mrb[0].mxu0
        %v5085 = vadd.f32 0.0, %v5084
        %v5086 = vpop.f32.mrb[0].mxu0
        %5087 = vmatprep.mubr.bf16.mxu0 %v4761
        %5088 = vmatmul.mubr.bf16.gmra.mrb[0].mxu0 %v4760
        %v5089 = vpop.f32.mrb[0].mxu0
        %v5090 = vadd.f32 0.0, %v5089
        %v5091 = vpop.f32.mrb[0].mxu0
        %v5092 = vpop.f32.mrb[0].mxu0
        %v5093 = vadd.f32 0.0, %v5092
        %v5094 = vpop.f32.mrb[0].mxu0
        %5095 = vmatprep.mubr.bf16.mxu0 %v4764
        %5096 = vmatmul.mubr.bf16.gmra.mrb[0].mxu0 %v4763
        %v5097 = vpop.f32.mrb[0].mxu0
        %v5098 = vadd.f32 0.0, %v5097
        %v5099 = vpop.f32.mrb[0].mxu0
        %v5100 = vpop.f32.mrb[0].mxu0
        %v5101 = vadd.f32 0.0, %v5100
        %v5102 = vpop.f32.mrb[0].mxu0
        %5103 = vmatprep.mubr.bf16.mxu0 %v4767
        %5104 = vmatmul.mubr.bf16.gmra.mrb[0].mxu0 %v4766
        %v5105 = vpop.f32.mrb[0].mxu0
        %v5106 = vadd.f32 0.0, %v5105
        %v5107 = vpop.f32.mrb[0].mxu0
        %v5108 = vpop.f32.mrb[0].mxu0
        %v5109 = vadd.f32 0.0, %v5108
        %v5110 = vpop.f32.mrb[0].mxu0
        %5111 = vmatprep.mubr.bf16.mxu0 %v4770
        %5112 = vmatmul.mubr.bf16.gmra.mrb[0].mxu0 %v4769
        %v5113 = vpop.f32.mrb[0].mxu0
        %v5114 = vadd.f32 0.0, %v5113
        %v5115 = vpop.f32.mrb[0].mxu0
        %v5116 = vpop.f32.mrb[0].mxu0
        %v5117 = vadd.f32 0.0, %v5116
        %v5118 = vpop.f32.mrb[0].mxu0
        %5119 = vmatprep.mubr.bf16.mxu0 %v4773
        %5120 = vmatmul.mubr.bf16.gmra.mrb[0].mxu0 %v4772
        %v5121 = vpop.f32.mrb[0].mxu0
        %v5122 = vadd.f32 0.0, %v5121
        %v5123 = vpop.f32.mrb[0].mxu0
        %v5124 = vpop.f32.mrb[0].mxu0
        %v5125 = vadd.f32 0.0, %v5124
        %v5126 = vpop.f32.mrb[0].mxu0
        %5127 = vdwg.mxu0
        %5128 = vmatprep.subr.bf16.mxu0 0
        %5129 = vmatpush1.bf16.msra.mxu0 %v4935
        %5130 = vmatprep.subr.bf16.mxu0 0
        %5131 = vmatpush1.bf16.msra.mxu0 %v4936
        %5132 = vmatprep.subr.bf16.mxu0 0
        %5133 = vmatpush1.bf16.msra.mxu0 %v4937
        %5134 = vmatprep.subr.bf16.mxu0 0
        %5135 = vmatpush1.bf16.msra.mxu0 %v4938
        %5136 = vmatprep.subr.bf16.mxu0 0
        %5137 = vmatpush1.bf16.msra.mxu0 %v4939
        %5138 = vmatprep.subr.bf16.mxu0 0
        %5139 = vmatpush1.bf16.msra.mxu0 %v4940
        %5140 = vmatprep.subr.bf16.mxu0 0
        %5141 = vmatpush1.bf16.msra.mxu0 %v4941
        %5142 = vmatprep.subr.bf16.mxu0 0
        %5143 = vmatpush1.bf16.msra.mxu0 %v4942
        %5144 = vmatprep.subr.bf16.mxu0 0
        %5145 = vmatpush1.bf16.msra.mxu0 0
        %5146 = vmatprep.subr.bf16.mxu0 0
        %5147 = vmatpush1.bf16.msra.mxu0 0
        %5148 = vmatprep.subr.bf16.mxu0 0
        %5149 = vmatpush1.bf16.msra.mxu0 0
        %5150 = vmatprep.subr.bf16.mxu0 0
        %5151 = vmatpush1.bf16.msra.mxu0 0
        %5152 = vmatprep.subr.bf16.mxu0 0
        %5153 = vmatpush1.bf16.msra.mxu0 0
        %5154 = vmatprep.subr.bf16.mxu0 0
        %5155 = vmatpush1.bf16.msra.mxu0 0
        %5156 = vmatprep.subr.bf16.mxu0 0
        %5157 = vmatpush1.bf16.msra.mxu0 0
        %5158 = vmatprep.subr.bf16.mxu0 0
        %5159 = vmatpush1.bf16.msra.mxu0 0
        %5160 = vmatprep.mubr.bf16.mxu0 0
        %5161 = vmatmul.mubr.bf16.gmra.mrb[0].mxu0 %v4729
        %v5162 = vpop.f32.mrb[0].mxu0
        %v5163 = vadd.f32 %v5002, %v5162
        %v5164 = vpop.f32.mrb[0].mxu0
        %v5165 = vpop.f32.mrb[0].mxu0
        %v5166 = vadd.f32 %v5005, %v5165
        %v5167 = vpop.f32.mrb[0].mxu0
        %5168 = vmatprep.mubr.bf16.mxu0 0
        %5169 = vmatmul.mubr.bf16.gmra.mrb[0].mxu0 %v4732
        %v5170 = vpop.f32.mrb[0].mxu0
        %v5171 = vadd.f32 %v5010, %v5170
        %v5172 = vpop.f32.mrb[0].mxu0
        %v5173 = vpop.f32.mrb[0].mxu0
        %v5174 = vadd.f32 %v5013, %v5173
        %v5175 = vpop.f32.mrb[0].mxu0
        %5176 = vmatprep.mubr.bf16.mxu0 0
        %5177 = vmatmul.mubr.bf16.gmra.mrb[0].mxu0 %v4735
        %v5178 = vpop.f32.mrb[0].mxu0
        %v5179 = vadd.f32 %v5018, %v5178
        %v5180 = vpop.f32.mrb[0].mxu0
        %v5181 = vpop.f32.mrb[0].mxu0
        %v5182 = vadd.f32 %v5021, %v5181
        %v5183 = vpop.f32.mrb[0].mxu0
        %5184 = vmatprep.mubr.bf16.mxu0 0
        %5185 = vmatmul.mubr.bf16.gmra.mrb[0].mxu0 %v4738
        %v5186 = vpop.f32.mrb[0].mxu0
        %v5187 = vadd.f32 %v5026, %v5186
        %v5188 = vpop.f32.mrb[0].mxu0
        %v5189 = vpop.f32.mrb[0].mxu0
        %v5190 = vadd.f32 %v5029, %v5189
        %v5191 = vpop.f32.mrb[0].mxu0
        %5192 = vmatprep.mubr.bf16.mxu0 0
        %5193 = vmatmul.mubr.bf16.gmra.mrb[0].mxu0 %v4741
        %v5194 = vpop.f32.mrb[0].mxu0
        %v5195 = vadd.f32 %v5034, %v5194
        %v5196 = vpop.f32.mrb[0].mxu0
        %v5197 = vpop.f32.mrb[0].mxu0
        %v5198 = vadd.f32 %v5037, %v5197
        %v5199 = vpop.f32.mrb[0].mxu0
        %5200 = vmatprep.mubr.bf16.mxu0 0
        %5201 = vmatmul.mubr.bf16.gmra.mrb[0].mxu0 %v4744
        %v5202 = vpop.f32.mrb[0].mxu0
        %v5203 = vadd.f32 %v5042, %v5202
        %v5204 = vpop.f32.mrb[0].mxu0
        %v5205 = vpop.f32.mrb[0].mxu0
        %v5206 = vadd.f32 %v5045, %v5205
        %v5207 = vpop.f32.mrb[0].mxu0
        %5208 = vmatprep.mubr.bf16.mxu0 0
        %5209 = vmatmul.mubr.bf16.gmra.mrb[0].mxu0 %v4747
        %v5210 = vpop.f32.mrb[0].mxu0
        %v5211 = vadd.f32 %v5050, %v5210
        %v5212 = vpop.f32.mrb[0].mxu0
        %v5213 = vpop.f32.mrb[0].mxu0
        %v5214 = vadd.f32 %v5053, %v5213
        %v5215 = vpop.f32.mrb[0].mxu0
        %5216 = vmatprep.mubr.bf16.mxu0 0
        %5217 = vmatmul.mubr.bf16.gmra.mrb[0].mxu0 %v4750
        %v5218 = vpop.f32.mrb[0].mxu0
        %v5219 = vadd.f32 %v5058, %v5218
        %v5220 = vpop.f32.mrb[0].mxu0
        %v5221 = vpop.f32.mrb[0].mxu0
        %v5222 = vadd.f32 %v5061, %v5221
        %v5223 = vpop.f32.mrb[0].mxu0
        %5224 = vmatprep.mubr.bf16.mxu0 0
        %5225 = vmatmul.mubr.bf16.gmra.mrb[0].mxu0 %v4753
        %v5226 = vpop.f32.mrb[0].mxu0
        %v5227 = vadd.f32 %v5066, %v5226
        %v5228 = vpop.f32.mrb[0].mxu0
        %v5229 = vpop.f32.mrb[0].mxu0
        %v5230 = vadd.f32 %v5069, %v5229
        %v5231 = vpop.f32.mrb[0].mxu0
        %5232 = vmatprep.mubr.bf16.mxu0 0
        %5233 = vmatmul.mubr.bf16.gmra.mrb[0].mxu0 %v4756
        %v5234 = vpop.f32.mrb[0].mxu0
        %v5235 = vadd.f32 %v5074, %v5234
        %v5236 = vpop.f32.mrb[0].mxu0
        %v5237 = vpop.f32.mrb[0].mxu0
        %v5238 = vadd.f32 %v5077, %v5237
        %v5239 = vpop.f32.mrb[0].mxu0
        %5240 = vmatprep.mubr.bf16.mxu0 0
        %5241 = vmatmul.mubr.bf16.gmra.mrb[0].mxu0 %v4759
        %v5242 = vpop.f32.mrb[0].mxu0
        %v5243 = vadd.f32 %v5082, %v5242
        %v5244 = vpop.f32.mrb[0].mxu0
        %v5245 = vpop.f32.mrb[0].mxu0
        %v5246 = vadd.f32 %v5085, %v5245
        %v5247 = vpop.f32.mrb[0].mxu0
        %5248 = vmatprep.mubr.bf16.mxu0 0
        %5249 = vmatmul.mubr.bf16.gmra.mrb[0].mxu0 %v4762
        %v5250 = vpop.f32.mrb[0].mxu0
        %v5251 = vadd.f32 %v5090, %v5250
        %v5252 = vpop.f32.mrb[0].mxu0
        %v5253 = vpop.f32.mrb[0].mxu0
        %v5254 = vadd.f32 %v5093, %v5253
        %v5255 = vpop.f32.mrb[0].mxu0
        %5256 = vmatprep.mubr.bf16.mxu0 0
        %5257 = vmatmul.mubr.bf16.gmra.mrb[0].mxu0 %v4765
        %v5258 = vpop.f32.mrb[0].mxu0
        %v5259 = vadd.f32 %v5098, %v5258
        %v5260 = vpop.f32.mrb[0].mxu0
        %v5261 = vpop.f32.mrb[0].mxu0
        %v5262 = vadd.f32 %v5101, %v5261
        %v5263 = vpop.f32.mrb[0].mxu0
        %5264 = vmatprep.mubr.bf16.mxu0 0
        %5265 = vmatmul.mubr.bf16.gmra.mrb[0].mxu0 %v4768
        %v5266 = vpop.f32.mrb[0].mxu0
        %v5267 = vadd.f32 %v5106, %v5266
        %v5268 = vpop.f32.mrb[0].mxu0
        %v5269 = vpop.f32.mrb[0].mxu0
        %v5270 = vadd.f32 %v5109, %v5269
        %v5271 = vpop.f32.mrb[0].mxu0
        %5272 = vmatprep.mubr.bf16.mxu0 0
        %5273 = vmatmul.mubr.bf16.gmra.mrb[0].mxu0 %v4771
        %v5274 = vpop.f32.mrb[0].mxu0
        %v5275 = vadd.f32 %v5114, %v5274
        %v5276 = vpop.f32.mrb[0].mxu0
        %v5277 = vpop.f32.mrb[0].mxu0
        %v5278 = vadd.f32 %v5117, %v5277
        %v5279 = vpop.f32.mrb[0].mxu0
        %5280 = vmatprep.mubr.bf16.mxu0 0
        %5281 = vmatmul.mubr.bf16.gmra.mrb[0].mxu0 %v4774
        %v5282 = vpop.f32.mrb[0].mxu0
        %v5283 = vadd.f32 %v5122, %v5282
        %v5284 = vpop.f32.mrb[0].mxu0
        %v5285 = vpop.f32.mrb[0].mxu0
        %v5286 = vadd.f32 %v5125, %v5285
        %v5287 = vpop.f32.mrb[0].mxu0
        %5288 = vdwg.mxu0
        %5289 = vst [vmem:[#allocation4] sm:$0xff] %v5163
        %5290 = vst [vmem:[#allocation4 + $0x8] sm:$0xff] %v5166
        %5291 = vst [vmem:[#allocation4 + $0x10] sm:$0xff] %v5171
        %5292 = vst [vmem:[#allocation4 + $0x18] sm:$0xff] %v5174
        %5293 = vst [vmem:[#allocation4 + $0x20] sm:$0xff] %v5179
        %5294 = vst [vmem:[#allocation4 + $0x28] sm:$0xff] %v5182
        %5295 = vst [vmem:[#allocation4 + $0x30] sm:$0xff] %v5187
        %5296 = vst [vmem:[#allocation4 + $0x38] sm:$0xff] %v5190
        %5297 = vst [vmem:[#allocation4 + $0x40] sm:$0xff] %v5195
        %5298 = vst [vmem:[#allocation4 + $0x48] sm:$0xff] %v5198
        %5299 = vst [vmem:[#allocation4 + $0x50] sm:$0xff] %v5203
        %5300 = vst [vmem:[#allocation4 + $0x58] sm:$0xff] %v5206
        %5301 = vst [vmem:[#allocation4 + $0x60] sm:$0xff] %v5211
        %5302 = vst [vmem:[#allocation4 + $0x68] sm:$0xff] %v5214
        %5303 = vst [vmem:[#allocation4 + $0x70] sm:$0xff] %v5219
        %5304 = vst [vmem:[#allocation4 + $0x78] sm:$0xff] %v5222
        %5305 = vst [vmem:[#allocation4 + $0x80] sm:$0xff] %v5227
        %5306 = vst [vmem:[#allocation4 + $0x88] sm:$0xff] %v5230
        %5307 = vst [vmem:[#allocation4 + $0x90] sm:$0xff] %v5235
        %5308 = vst [vmem:[#allocation4 + $0x98] sm:$0xff] %v5238
        %5309 = vst [vmem:[#allocation4 + $0xa0] sm:$0xff] %v5243
        %5310 = vst [vmem:[#allocation4 + $0xa8] sm:$0xff] %v5246
        %5311 = vst [vmem:[#allocation4 + $0xb0] sm:$0xff] %v5251
        %5312 = vst [vmem:[#allocation4 + $0xb8] sm:$0xff] %v5254
        %5313 = vst [vmem:[#allocation4 + $0xc0] sm:$0xff] %v5259
        %5314 = vst [vmem:[#allocation4 + $0xc8] sm:$0xff] %v5262
        %5315 = vst [vmem:[#allocation4 + $0xd0] sm:$0xff] %v5267
        %5316 = vst [vmem:[#allocation4 + $0xd8] sm:$0xff] %v5270
        %5317 = vst [vmem:[#allocation4 + $0xe0] sm:$0xff] %v5275
        %5318 = vst [vmem:[#allocation4 + $0xe8] sm:$0xff] %v5278
        %5319 = vst [vmem:[#allocation4 + $0xf0] sm:$0xff] %v5283
        %5320 = vst [vmem:[#allocation4 + $0xf8] sm:$0xff] %v5286
        %v5321 = vld [vmem:[#allocation4] sm:$0xff]
        %v5322 = vld [vmem:[#allocation4 + $0x8] sm:$0xff]
        %v5323 = vld [vmem:[#allocation4 + $0x10] sm:$0xff]
        %v5324 = vld [vmem:[#allocation4 + $0x18] sm:$0xff]
        %v5325 = vld [vmem:[#allocation4 + $0x20] sm:$0xff]
        %v5326 = vld [vmem:[#allocation4 + $0x28] sm:$0xff]
        %v5327 = vld [vmem:[#allocation4 + $0x30] sm:$0xff]
        %v5328 = vld [vmem:[#allocation4 + $0x38] sm:$0xff]
        %v5329 = vld [vmem:[#allocation4 + $0x40] sm:$0xff]
        %v5330 = vld [vmem:[#allocation4 + $0x48] sm:$0xff]
        %v5331 = vld [vmem:[#allocation4 + $0x50] sm:$0xff]
        %v5332 = vld [vmem:[#allocation4 + $0x58] sm:$0xff]
        %v5333 = vld [vmem:[#allocation4 + $0x60] sm:$0xff]
        %v5334 = vld [vmem:[#allocation4 + $0x68] sm:$0xff]
        %v5335 = vld [vmem:[#allocation4 + $0x70] sm:$0xff]
        %v5336 = vld [vmem:[#allocation4 + $0x78] sm:$0xff]
        %v5337 = vld [vmem:[#allocation4 + $0x80] sm:$0xff]
        %v5338 = vld [vmem:[#allocation4 + $0x88] sm:$0xff]
        %v5339 = vld [vmem:[#allocation4 + $0x90] sm:$0xff]
        %v5340 = vld [vmem:[#allocation4 + $0x98] sm:$0xff]
        %v5341 = vld [vmem:[#allocation4 + $0xa0] sm:$0xff]
        %v5342 = vld [vmem:[#allocation4 + $0xa8] sm:$0xff]
        %v5343 = vld [vmem:[#allocation4 + $0xb0] sm:$0xff]
        %v5344 = vld [vmem:[#allocation4 + $0xb8] sm:$0xff]
        %v5345 = vld [vmem:[#allocation4 + $0xc0] sm:$0xff]
        %v5346 = vld [vmem:[#allocation4 + $0xc8] sm:$0xff]
        %v5347 = vld [vmem:[#allocation4 + $0xd0] sm:$0xff]
        %v5348 = vld [vmem:[#allocation4 + $0xd8] sm:$0xff]
        %v5349 = vld [vmem:[#allocation4 + $0xe0] sm:$0xff]
        %v5350 = vld [vmem:[#allocation4 + $0xe8] sm:$0xff]
        %v5351 = vld [vmem:[#allocation4 + $0xf0] sm:$0xff]
        %v5352 = vld [vmem:[#allocation4 + $0xf8] sm:$0xff]
        %v5353 = vld [vmem:[#allocation2 + $0x18] sm:$0xff]
        %v5354 = vld [vmem:[#allocation2 + $0x20] sm:$0xff]
        %v5355 = vld [vmem:[#allocation2 + $0x28] sm:$0xff]
        %v5356 = vld [vmem:[#allocation2 + $0x30] sm:$0xff]
        %v5357 = vld [vmem:[#allocation2 + $0x38] sm:$0xff]
        %v5358 = vld [vmem:[#allocation2 + $0x40] sm:$0xff]
        %v5359 = vld [vmem:[#allocation2 + $0x48] sm:$0xff]
        %v5360 = vld [vmem:[#allocation2 + $0x50] sm:$0xff]
        %v5361 = vld [vmem:[#allocation2 + $0x58] sm:$0xff]
        %v5362 = vld [vmem:[#allocation2 + $0x60] sm:$0xff]
        %v5363 = vld [vmem:[#allocation2 + $0x68] sm:$0xff]
        %v5364 = vld [vmem:[#allocation2 + $0x70] sm:$0xff]
        %v5365 = vld [vmem:[#allocation2 + $0x78] sm:$0xff]
        %v5366 = vld [vmem:[#allocation2 + $0x80] sm:$0xff]
        %v5367 = vld [vmem:[#allocation2 + $0x88] sm:$0xff]
        %v5368 = vld [vmem:[#allocation2 + $0x90] sm:$0xff]
        %v5369 = vld [vmem:[#allocation2 + $0x98] sm:$0xff]
        %v5370 = vld [vmem:[#allocation2 + $0xa0] sm:$0xff]
        %v5371 = vld [vmem:[#allocation2 + $0xa8] sm:$0xff]
        %v5372 = vld [vmem:[#allocation2 + $0xb0] sm:$0xff]
        %v5373 = vld [vmem:[#allocation2 + $0xb8] sm:$0xff]
        %v5374 = vld [vmem:[#allocation2 + $0xc0] sm:$0xff]
        %v5375 = vld [vmem:[#allocation2 + $0xc8] sm:$0xff]
        %v5376 = vld [vmem:[#allocation2 + $0xd0] sm:$0xff]
        %v5377 = vld [vmem:[#allocation2 + $0xd8] sm:$0xff]
        %v5378 = vld [vmem:[#allocation2 + $0xe0] sm:$0xff]
        %v5379 = vld [vmem:[#allocation2 + $0xe8] sm:$0xff]
        %v5380 = vld [vmem:[#allocation2 + $0xf0] sm:$0xff]
        %v5381 = vld [vmem:[#allocation2 + $0xf8] sm:$0xff]
        %v5382 = vld [vmem:[#allocation2 + $0x100] sm:$0xff]
        %v5383 = vld [vmem:[#allocation2 + $0x108] sm:$0xff]
        %v5384 = vld [vmem:[#allocation2 + $0x110] sm:$0xff]
        %v5385 = vld [vmem:[#allocation2 + $0x118] sm:$0xff]
        %v5386 = vld [vmem:[#allocation2 + $0x120] sm:$0xff]
        %v5387 = vld [vmem:[#allocation2 + $0x128] sm:$0xff]
        %v5388 = vld [vmem:[#allocation2 + $0x130] sm:$0xff]
        %v5389 = vld [vmem:[#allocation2 + $0x138] sm:$0xff]
        %v5390 = vld [vmem:[#allocation2 + $0x140] sm:$0xff]
        %v5391 = vld [vmem:[#allocation2 + $0x148] sm:$0xff]
        %v5392 = vld [vmem:[#allocation2 + $0x150] sm:$0xff]
        %v5393 = vld [vmem:[#allocation2 + $0x158] sm:$0xff]
        %v5394 = vld [vmem:[#allocation2 + $0x160] sm:$0xff]
        %v5395 = vld [vmem:[#allocation2 + $0x168] sm:$0xff]
        %v5396 = vld [vmem:[#allocation2 + $0x170] sm:$0xff]
        %v5397 = vld [vmem:[#allocation2 + $0x178] sm:$0xff]
        %v5398 = vld [vmem:[#allocation2 + $0x180] sm:$0xff]
        %v5399 = vld [vmem:[#allocation2 + $0x188] sm:$0xff]
        %v5400 = vld [vmem:[#allocation2 + $0x190] sm:$0xff]
        %s5401 = scalar_lea.vmem %s2, 192
        %v5402 = vld [vmem:[%s5401] sm:$0xf]
        %v5403 = vld [vmem:[%s5401 + $0x4] sm:$0xf]
        %v5404 = vld [vmem:[%s5401 + $0x8] sm:$0xf]
        %v5405 = vld [vmem:[%s5401 + $0xc] sm:$0xf]
        %v5406 = vld [vmem:[%s5401 + $0x10] sm:$0xf]
        %v5407 = vld [vmem:[%s5401 + $0x14] sm:$0xf]
        %v5408 = vld [vmem:[%s5401 + $0x18] sm:$0xf]
        %v5409 = vld [vmem:[%s5401 + $0x1c] sm:$0xf]
        %v5410 = vld [vmem:[%s5401 + $0x20] sm:$0xf]
        %v5411 = vld [vmem:[%s5401 + $0x24] sm:$0xf]
        %v5412 = vld [vmem:[%s5401 + $0x28] sm:$0xf]
        %v5413 = vld [vmem:[%s5401 + $0x2c] sm:$0xf]
        %v5414 = vld [vmem:[%s5401 + $0x30] sm:$0xf]
        %v5415 = vld [vmem:[%s5401 + $0x34] sm:$0xf]
        %v5416 = vld [vmem:[%s5401 + $0x38] sm:$0xf]
        %v5417 = vld [vmem:[%s5401 + $0x3c] sm:$0xf]
        %v5418 = vld [vmem:[%s5401 + $0x40] sm:$0xf]
        %v5419 = vld [vmem:[%s5401 + $0x44] sm:$0xf]
        %v5420 = vld [vmem:[%s5401 + $0x48] sm:$0xf]
        %v5421 = vld [vmem:[%s5401 + $0x4c] sm:$0xf]
        %v5422 = vld [vmem:[%s5401 + $0x50] sm:$0xf]
        %v5423 = vld [vmem:[%s5401 + $0x54] sm:$0xf]
        %v5424 = vld [vmem:[%s5401 + $0x58] sm:$0xf]
        %v5425 = vld [vmem:[%s5401 + $0x5c] sm:$0xf]
        %v5426 = vld [vmem:[%s5401 + $0x60] sm:$0xf]
        %v5427 = vld [vmem:[%s5401 + $0x64] sm:$0xf]
        %v5428 = vld [vmem:[%s5401 + $0x68] sm:$0xf]
        %v5429 = vld [vmem:[%s5401 + $0x6c] sm:$0xf]
        %v5430 = vld [vmem:[%s5401 + $0x70] sm:$0xf]
        %v5431 = vld [vmem:[%s5401 + $0x74] sm:$0xf]
        %v5432 = vld [vmem:[%s5401 + $0x78] sm:$0xf]
        %v5433 = vld [vmem:[%s5401 + $0x7c] sm:$0xf]
        %v5434 = vld [vmem:[%s5401 + $0x80] sm:$0xf]
        %v5435 = vld [vmem:[%s5401 + $0x84] sm:$0xf]
        %v5436 = vld [vmem:[%s5401 + $0x88] sm:$0xf]
        %v5437 = vld [vmem:[%s5401 + $0x8c] sm:$0xf]
        %v5438 = vld [vmem:[%s5401 + $0x90] sm:$0xf]
        %v5439 = vld [vmem:[%s5401 + $0x94] sm:$0xf]
        %v5440 = vld [vmem:[%s5401 + $0x98] sm:$0xf]
        %v5441 = vld [vmem:[%s5401 + $0x9c] sm:$0xf]
        %v5442 = vld [vmem:[%s5401 + $0xa0] sm:$0xf]
        %v5443 = vld [vmem:[%s5401 + $0xa4] sm:$0xf]
        %v5444 = vld [vmem:[%s5401 + $0xa8] sm:$0xf]
        %v5445 = vld [vmem:[%s5401 + $0xac] sm:$0xf]
        %v5446 = vld [vmem:[%s5401 + $0xb0] sm:$0xf]
        %v5447 = vld [vmem:[%s5401 + $0xb4] sm:$0xf]
        %v5448 = vld [vmem:[%s5401 + $0xb8] sm:$0xf]
        %v5449 = vld [vmem:[%s5401 + $0xbc] sm:$0xf]
        %v5498 = vunpack.c.l.b16 %v5402
        %v5499 = vunpack.c.l.b16 %v5403
        %v5500 = vunpack.c.l.b16 %v5404
        %v5501 = vunpack.c.l.b16 %v5405
        %v5502 = vunpack.c.l.b16 %v5406
        %v5503 = vunpack.c.l.b16 %v5407
        %v5504 = vunpack.c.l.b16 %v5408
        %v5505 = vunpack.c.l.b16 %v5409
        %v5506 = vunpack.c.l.b16 %v5410
        %v5507 = vunpack.c.l.b16 %v5411
        %v5508 = vunpack.c.l.b16 %v5412
        %v5509 = vunpack.c.l.b16 %v5413
        %v5510 = vunpack.c.l.b16 %v5414
        %v5511 = vunpack.c.l.b16 %v5415
        %v5512 = vunpack.c.l.b16 %v5416
        %v5513 = vunpack.c.l.b16 %v5417
        %v5514 = vunpack.c.l.b16 %v5418
        %v5515 = vunpack.c.l.b16 %v5419
        %v5516 = vunpack.c.l.b16 %v5420
        %v5517 = vunpack.c.l.b16 %v5421
        %v5518 = vunpack.c.l.b16 %v5422
        %v5519 = vunpack.c.l.b16 %v5423
        %v5520 = vunpack.c.l.b16 %v5424
        %v5521 = vunpack.c.l.b16 %v5425
        %v5522 = vunpack.c.l.b16 %v5426
        %v5523 = vunpack.c.l.b16 %v5427
        %v5524 = vunpack.c.l.b16 %v5428
        %v5525 = vunpack.c.l.b16 %v5429
        %v5526 = vunpack.c.l.b16 %v5430
        %v5527 = vunpack.c.l.b16 %v5431
        %v5528 = vunpack.c.l.b16 %v5432
        %v5529 = vunpack.c.l.b16 %v5433
        %v5530 = vunpack.c.l.b16 %v5434
        %v5531 = vunpack.c.l.b16 %v5435
        %v5532 = vunpack.c.l.b16 %v5436
        %v5533 = vunpack.c.l.b16 %v5437
        %v5534 = vunpack.c.l.b16 %v5438
        %v5535 = vunpack.c.l.b16 %v5439
        %v5536 = vunpack.c.l.b16 %v5440
        %v5537 = vunpack.c.l.b16 %v5441
        %v5538 = vunpack.c.l.b16 %v5442
        %v5539 = vunpack.c.l.b16 %v5443
        %v5540 = vunpack.c.l.b16 %v5444
        %v5541 = vunpack.c.l.b16 %v5445
        %v5542 = vunpack.c.l.b16 %v5446
        %v5543 = vunpack.c.l.b16 %v5447
        %v5544 = vunpack.c.l.b16 %v5448
        %v5545 = vunpack.c.l.b16 %v5449
        %v5546 = vpack.c.b16 %v5499, %v5498
        %v5547 = vpack.c.b16 %v5501, %v5500
        %v5548 = vpack.c.b16 %v5503, %v5502
        %v5549 = vpack.c.b16 %v5505, %v5504
        %v5550 = vpack.c.b16 %v5507, %v5506
        %v5551 = vpack.c.b16 %v5509, %v5508
        %v5552 = vpack.c.b16 %v5511, %v5510
        %v5553 = vpack.c.b16 %v5513, %v5512
        %v5554 = vpack.c.b16 %v5515, %v5514
        %v5555 = vpack.c.b16 %v5517, %v5516
        %v5556 = vpack.c.b16 %v5519, %v5518
        %v5557 = vpack.c.b16 %v5521, %v5520
        %v5558 = vpack.c.b16 %v5523, %v5522
        %v5559 = vpack.c.b16 %v5525, %v5524
        %v5560 = vpack.c.b16 %v5527, %v5526
        %v5561 = vpack.c.b16 %v5529, %v5528
        %v5562 = vpack.c.b16 %v5531, %v5530
        %v5563 = vpack.c.b16 %v5533, %v5532
        %v5564 = vpack.c.b16 %v5535, %v5534
        %v5565 = vpack.c.b16 %v5537, %v5536
        %v5566 = vpack.c.b16 %v5539, %v5538
        %v5567 = vpack.c.b16 %v5541, %v5540
        %v5568 = vpack.c.b16 %v5543, %v5542
        %v5569 = vpack.c.b16 %v5545, %v5544
        %5594 = vmatprep.subr.bf16.mxu0 0
        %5595 = vmatpush1.bf16.msra.mxu0 %v5546
        %5596 = vmatprep.subr.bf16.mxu0 0
        %5597 = vmatpush1.bf16.msra.mxu0 %v5547
        %5598 = vmatprep.subr.bf16.mxu0 0
        %5599 = vmatpush1.bf16.msra.mxu0 %v5548
        %5600 = vmatprep.subr.bf16.mxu0 0
        %5601 = vmatpush1.bf16.msra.mxu0 %v5549
        %5602 = vmatprep.subr.bf16.mxu0 0
        %5603 = vmatpush1.bf16.msra.mxu0 %v5550
        %5604 = vmatprep.subr.bf16.mxu0 0
        %5605 = vmatpush1.bf16.msra.mxu0 %v5551
        %5606 = vmatprep.subr.bf16.mxu0 0
        %5607 = vmatpush1.bf16.msra.mxu0 %v5552
        %5608 = vmatprep.subr.bf16.mxu0 0
        %5609 = vmatpush1.bf16.msra.mxu0 %v5553
        %5610 = vmatprep.subr.bf16.mxu0 0
        %5611 = vmatpush1.bf16.msra.mxu0 %v5554
        %5612 = vmatprep.subr.bf16.mxu0 0
        %5613 = vmatpush1.bf16.msra.mxu0 %v5555
        %5614 = vmatprep.subr.bf16.mxu0 0
        %5615 = vmatpush1.bf16.msra.mxu0 %v5556
        %5616 = vmatprep.subr.bf16.mxu0 0
        %5617 = vmatpush1.bf16.msra.mxu0 %v5557
        %5618 = vmatprep.subr.bf16.mxu0 0
        %5619 = vmatpush1.bf16.msra.mxu0 %v5558
        %5620 = vmatprep.subr.bf16.mxu0 0
        %5621 = vmatpush1.bf16.msra.mxu0 %v5559
        %5622 = vmatprep.subr.bf16.mxu0 0
        %5623 = vmatpush1.bf16.msra.mxu0 %v5560
        %5624 = vmatprep.subr.bf16.mxu0 0
        %5625 = vmatpush1.bf16.msra.mxu0 %v5561
        %5626 = vmatprep.mubr.bf16.mxu0 %v5354
        %5627 = vmatmul.mubr.bf16.gmra.mrb[0].mxu0 %v5353
        %v5628 = vpop.f32.mrb[0].mxu0
        %v5629 = vadd.f32 0.0, %v5628
        %v5630 = vpop.f32.mrb[0].mxu0
        %v5631 = vpop.f32.mrb[0].mxu0
        %v5632 = vadd.f32 0.0, %v5631
        %v5633 = vpop.f32.mrb[0].mxu0
        %5634 = vmatprep.mubr.bf16.mxu0 %v5357
        %5635 = vmatmul.mubr.bf16.gmra.mrb[0].mxu0 %v5356
        %v5636 = vpop.f32.mrb[0].mxu0
        %v5637 = vadd.f32 0.0, %v5636
        %v5638 = vpop.f32.mrb[0].mxu0
        %v5639 = vpop.f32.mrb[0].mxu0
        %v5640 = vadd.f32 0.0, %v5639
        %v5641 = vpop.f32.mrb[0].mxu0
        %5642 = vmatprep.mubr.bf16.mxu0 %v5360
        %5643 = vmatmul.mubr.bf16.gmra.mrb[0].mxu0 %v5359
        %v5644 = vpop.f32.mrb[0].mxu0
        %v5645 = vadd.f32 0.0, %v5644
        %v5646 = vpop.f32.mrb[0].mxu0
        %v5647 = vpop.f32.mrb[0].mxu0
        %v5648 = vadd.f32 0.0, %v5647
        %v5649 = vpop.f32.mrb[0].mxu0
        %5650 = vmatprep.mubr.bf16.mxu0 %v5363
        %5651 = vmatmul.mubr.bf16.gmra.mrb[0].mxu0 %v5362
        %v5652 = vpop.f32.mrb[0].mxu0
        %v5653 = vadd.f32 0.0, %v5652
        %v5654 = vpop.f32.mrb[0].mxu0
        %v5655 = vpop.f32.mrb[0].mxu0
        %v5656 = vadd.f32 0.0, %v5655
        %v5657 = vpop.f32.mrb[0].mxu0
        %5658 = vmatprep.mubr.bf16.mxu0 %v5366
        %5659 = vmatmul.mubr.bf16.gmra.mrb[0].mxu0 %v5365
        %v5660 = vpop.f32.mrb[0].mxu0
        %v5661 = vadd.f32 0.0, %v5660
        %v5662 = vpop.f32.mrb[0].mxu0
        %v5663 = vpop.f32.mrb[0].mxu0
        %v5664 = vadd.f32 0.0, %v5663
        %v5665 = vpop.f32.mrb[0].mxu0
        %5666 = vmatprep.mubr.bf16.mxu0 %v5369
        %5667 = vmatmul.mubr.bf16.gmra.mrb[0].mxu0 %v5368
        %v5668 = vpop.f32.mrb[0].mxu0
        %v5669 = vadd.f32 0.0, %v5668
        %v5670 = vpop.f32.mrb[0].mxu0
        %v5671 = vpop.f32.mrb[0].mxu0
        %v5672 = vadd.f32 0.0, %v5671
        %v5673 = vpop.f32.mrb[0].mxu0
        %5674 = vmatprep.mubr.bf16.mxu0 %v5372
        %5675 = vmatmul.mubr.bf16.gmra.mrb[0].mxu0 %v5371
        %v5676 = vpop.f32.mrb[0].mxu0
        %v5677 = vadd.f32 0.0, %v5676
        %v5678 = vpop.f32.mrb[0].mxu0
        %v5679 = vpop.f32.mrb[0].mxu0
        %v5680 = vadd.f32 0.0, %v5679
        %v5681 = vpop.f32.mrb[0].mxu0
        %5682 = vmatprep.mubr.bf16.mxu0 %v5375
        %5683 = vmatmul.mubr.bf16.gmra.mrb[0].mxu0 %v5374
        %v5684 = vpop.f32.mrb[0].mxu0
        %v5685 = vadd.f32 0.0, %v5684
        %v5686 = vpop.f32.mrb[0].mxu0
        %v5687 = vpop.f32.mrb[0].mxu0
        %v5688 = vadd.f32 0.0, %v5687
        %v5689 = vpop.f32.mrb[0].mxu0
        %5690 = vmatprep.mubr.bf16.mxu0 %v5378
        %5691 = vmatmul.mubr.bf16.gmra.mrb[0].mxu0 %v5377
        %v5692 = vpop.f32.mrb[0].mxu0
        %v5693 = vadd.f32 0.0, %v5692
        %v5694 = vpop.f32.mrb[0].mxu0
        %v5695 = vpop.f32.mrb[0].mxu0
        %v5696 = vadd.f32 0.0, %v5695
        %v5697 = vpop.f32.mrb[0].mxu0
        %5698 = vmatprep.mubr.bf16.mxu0 %v5381
        %5699 = vmatmul.mubr.bf16.gmra.mrb[0].mxu0 %v5380
        %v5700 = vpop.f32.mrb[0].mxu0
        %v5701 = vadd.f32 0.0, %v5700
        %v5702 = vpop.f32.mrb[0].mxu0
        %v5703 = vpop.f32.mrb[0].mxu0
        %v5704 = vadd.f32 0.0, %v5703
        %v5705 = vpop.f32.mrb[0].mxu0
        %5706 = vmatprep.mubr.bf16.mxu0 %v5384
        %5707 = vmatmul.mubr.bf16.gmra.mrb[0].mxu0 %v5383
        %v5708 = vpop.f32.mrb[0].mxu0
        %v5709 = vadd.f32 0.0, %v5708
        %v5710 = vpop.f32.mrb[0].mxu0
        %v5711 = vpop.f32.mrb[0].mxu0
        %v5712 = vadd.f32 0.0, %v5711
        %v5713 = vpop.f32.mrb[0].mxu0
        %5714 = vmatprep.mubr.bf16.mxu0 %v5387
        %5715 = vmatmul.mubr.bf16.gmra.mrb[0].mxu0 %v5386
        %v5716 = vpop.f32.mrb[0].mxu0
        %v5717 = vadd.f32 0.0, %v5716
        %v5718 = vpop.f32.mrb[0].mxu0
        %v5719 = vpop.f32.mrb[0].mxu0
        %v5720 = vadd.f32 0.0, %v5719
        %v5721 = vpop.f32.mrb[0].mxu0
        %5722 = vmatprep.mubr.bf16.mxu0 %v5390
        %5723 = vmatmul.mubr.bf16.gmra.mrb[0].mxu0 %v5389
        %v5724 = vpop.f32.mrb[0].mxu0
        %v5725 = vadd.f32 0.0, %v5724
        %v5726 = vpop.f32.mrb[0].mxu0
        %v5727 = vpop.f32.mrb[0].mxu0
        %v5728 = vadd.f32 0.0, %v5727
        %v5729 = vpop.f32.mrb[0].mxu0
        %5730 = vmatprep.mubr.bf16.mxu0 %v5393
        %5731 = vmatmul.mubr.bf16.gmra.mrb[0].mxu0 %v5392
        %v5732 = vpop.f32.mrb[0].mxu0
        %v5733 = vadd.f32 0.0, %v5732
        %v5734 = vpop.f32.mrb[0].mxu0
        %v5735 = vpop.f32.mrb[0].mxu0
        %v5736 = vadd.f32 0.0, %v5735
        %v5737 = vpop.f32.mrb[0].mxu0
        %5738 = vmatprep.mubr.bf16.mxu0 %v5396
        %5739 = vmatmul.mubr.bf16.gmra.mrb[0].mxu0 %v5395
        %v5740 = vpop.f32.mrb[0].mxu0
        %v5741 = vadd.f32 0.0, %v5740
        %v5742 = vpop.f32.mrb[0].mxu0
        %v5743 = vpop.f32.mrb[0].mxu0
        %v5744 = vadd.f32 0.0, %v5743
        %v5745 = vpop.f32.mrb[0].mxu0
        %5746 = vmatprep.mubr.bf16.mxu0 %v5399
        %5747 = vmatmul.mubr.bf16.gmra.mrb[0].mxu0 %v5398
        %v5748 = vpop.f32.mrb[0].mxu0
        %v5749 = vadd.f32 0.0, %v5748
        %v5750 = vpop.f32.mrb[0].mxu0
        %v5751 = vpop.f32.mrb[0].mxu0
        %v5752 = vadd.f32 0.0, %v5751
        %v5753 = vpop.f32.mrb[0].mxu0
        %5754 = vdwg.mxu0
        %5755 = vmatprep.subr.bf16.mxu0 0
        %5756 = vmatpush1.bf16.msra.mxu0 %v5562
        %5757 = vmatprep.subr.bf16.mxu0 0
        %5758 = vmatpush1.bf16.msra.mxu0 %v5563
        %5759 = vmatprep.subr.bf16.mxu0 0
        %5760 = vmatpush1.bf16.msra.mxu0 %v5564
        %5761 = vmatprep.subr.bf16.mxu0 0
        %5762 = vmatpush1.bf16.msra.mxu0 %v5565
        %5763 = vmatprep.subr.bf16.mxu0 0
        %5764 = vmatpush1.bf16.msra.mxu0 %v5566
        %5765 = vmatprep.subr.bf16.mxu0 0
        %5766 = vmatpush1.bf16.msra.mxu0 %v5567
        %5767 = vmatprep.subr.bf16.mxu0 0
        %5768 = vmatpush1.bf16.msra.mxu0 %v5568
        %5769 = vmatprep.subr.bf16.mxu0 0
        %5770 = vmatpush1.bf16.msra.mxu0 %v5569
        %5771 = vmatprep.subr.bf16.mxu0 0
        %5772 = vmatpush1.bf16.msra.mxu0 0
        %5773 = vmatprep.subr.bf16.mxu0 0
        %5774 = vmatpush1.bf16.msra.mxu0 0
        %5775 = vmatprep.subr.bf16.mxu0 0
        %5776 = vmatpush1.bf16.msra.mxu0 0
        %5777 = vmatprep.subr.bf16.mxu0 0
        %5778 = vmatpush1.bf16.msra.mxu0 0
        %5779 = vmatprep.subr.bf16.mxu0 0
        %5780 = vmatpush1.bf16.msra.mxu0 0
        %5781 = vmatprep.subr.bf16.mxu0 0
        %5782 = vmatpush1.bf16.msra.mxu0 0
        %5783 = vmatprep.subr.bf16.mxu0 0
        %5784 = vmatpush1.bf16.msra.mxu0 0
        %5785 = vmatprep.subr.bf16.mxu0 0
        %5786 = vmatpush1.bf16.msra.mxu0 0
        %5787 = vmatprep.mubr.bf16.mxu0 0
        %5788 = vmatmul.mubr.bf16.gmra.mrb[0].mxu0 %v5355
        %v5789 = vpop.f32.mrb[0].mxu0
        %v5790 = vadd.f32 %v5629, %v5789
        %v5791 = vpop.f32.mrb[0].mxu0
        %v5792 = vpop.f32.mrb[0].mxu0
        %v5793 = vadd.f32 %v5632, %v5792
        %v5794 = vpop.f32.mrb[0].mxu0
        %5795 = vmatprep.mubr.bf16.mxu0 0
        %5796 = vmatmul.mubr.bf16.gmra.mrb[0].mxu0 %v5358
        %v5797 = vpop.f32.mrb[0].mxu0
        %v5798 = vadd.f32 %v5637, %v5797
        %v5799 = vpop.f32.mrb[0].mxu0
        %v5800 = vpop.f32.mrb[0].mxu0
        %v5801 = vadd.f32 %v5640, %v5800
        %v5802 = vpop.f32.mrb[0].mxu0
        %5803 = vmatprep.mubr.bf16.mxu0 0
        %5804 = vmatmul.mubr.bf16.gmra.mrb[0].mxu0 %v5361
        %v5805 = vpop.f32.mrb[0].mxu0
        %v5806 = vadd.f32 %v5645, %v5805
        %v5807 = vpop.f32.mrb[0].mxu0
        %v5808 = vpop.f32.mrb[0].mxu0
        %v5809 = vadd.f32 %v5648, %v5808
        %v5810 = vpop.f32.mrb[0].mxu0
        %5811 = vmatprep.mubr.bf16.mxu0 0
        %5812 = vmatmul.mubr.bf16.gmra.mrb[0].mxu0 %v5364
        %v5813 = vpop.f32.mrb[0].mxu0
        %v5814 = vadd.f32 %v5653, %v5813
        %v5815 = vpop.f32.mrb[0].mxu0
        %v5816 = vpop.f32.mrb[0].mxu0
        %v5817 = vadd.f32 %v5656, %v5816
        %v5818 = vpop.f32.mrb[0].mxu0
        %5819 = vmatprep.mubr.bf16.mxu0 0
        %5820 = vmatmul.mubr.bf16.gmra.mrb[0].mxu0 %v5367
        %v5821 = vpop.f32.mrb[0].mxu0
        %v5822 = vadd.f32 %v5661, %v5821
        %v5823 = vpop.f32.mrb[0].mxu0
        %v5824 = vpop.f32.mrb[0].mxu0
        %v5825 = vadd.f32 %v5664, %v5824
        %v5826 = vpop.f32.mrb[0].mxu0
        %5827 = vmatprep.mubr.bf16.mxu0 0
        %5828 = vmatmul.mubr.bf16.gmra.mrb[0].mxu0 %v5370
        %v5829 = vpop.f32.mrb[0].mxu0
        %v5830 = vadd.f32 %v5669, %v5829
        %v5831 = vpop.f32.mrb[0].mxu0
        %v5832 = vpop.f32.mrb[0].mxu0
        %v5833 = vadd.f32 %v5672, %v5832
        %v5834 = vpop.f32.mrb[0].mxu0
        %5835 = vmatprep.mubr.bf16.mxu0 0
        %5836 = vmatmul.mubr.bf16.gmra.mrb[0].mxu0 %v5373
        %v5837 = vpop.f32.mrb[0].mxu0
        %v5838 = vadd.f32 %v5677, %v5837
        %v5839 = vpop.f32.mrb[0].mxu0
        %v5840 = vpop.f32.mrb[0].mxu0
        %v5841 = vadd.f32 %v5680, %v5840
        %v5842 = vpop.f32.mrb[0].mxu0
        %5843 = vmatprep.mubr.bf16.mxu0 0
        %5844 = vmatmul.mubr.bf16.gmra.mrb[0].mxu0 %v5376
        %v5845 = vpop.f32.mrb[0].mxu0
        %v5846 = vadd.f32 %v5685, %v5845
        %v5847 = vpop.f32.mrb[0].mxu0
        %v5848 = vpop.f32.mrb[0].mxu0
        %v5849 = vadd.f32 %v5688, %v5848
        %v5850 = vpop.f32.mrb[0].mxu0
        %5851 = vmatprep.mubr.bf16.mxu0 0
        %5852 = vmatmul.mubr.bf16.gmra.mrb[0].mxu0 %v5379
        %v5853 = vpop.f32.mrb[0].mxu0
        %v5854 = vadd.f32 %v5693, %v5853
        %v5855 = vpop.f32.mrb[0].mxu0
        %v5856 = vpop.f32.mrb[0].mxu0
        %v5857 = vadd.f32 %v5696, %v5856
        %v5858 = vpop.f32.mrb[0].mxu0
        %5859 = vmatprep.mubr.bf16.mxu0 0
        %5860 = vmatmul.mubr.bf16.gmra.mrb[0].mxu0 %v5382
        %v5861 = vpop.f32.mrb[0].mxu0
        %v5862 = vadd.f32 %v5701, %v5861
        %v5863 = vpop.f32.mrb[0].mxu0
        %v5864 = vpop.f32.mrb[0].mxu0
        %v5865 = vadd.f32 %v5704, %v5864
        %v5866 = vpop.f32.mrb[0].mxu0
        %5867 = vmatprep.mubr.bf16.mxu0 0
        %5868 = vmatmul.mubr.bf16.gmra.mrb[0].mxu0 %v5385
        %v5869 = vpop.f32.mrb[0].mxu0
        %v5870 = vadd.f32 %v5709, %v5869
        %v5871 = vpop.f32.mrb[0].mxu0
        %v5872 = vpop.f32.mrb[0].mxu0
        %v5873 = vadd.f32 %v5712, %v5872
        %v5874 = vpop.f32.mrb[0].mxu0
        %5875 = vmatprep.mubr.bf16.mxu0 0
        %5876 = vmatmul.mubr.bf16.gmra.mrb[0].mxu0 %v5388
        %v5877 = vpop.f32.mrb[0].mxu0
        %v5878 = vadd.f32 %v5717, %v5877
        %v5879 = vpop.f32.mrb[0].mxu0
        %v5880 = vpop.f32.mrb[0].mxu0
        %v5881 = vadd.f32 %v5720, %v5880
        %v5882 = vpop.f32.mrb[0].mxu0
        %5883 = vmatprep.mubr.bf16.mxu0 0
        %5884 = vmatmul.mubr.bf16.gmra.mrb[0].mxu0 %v5391
        %v5885 = vpop.f32.mrb[0].mxu0
        %v5886 = vadd.f32 %v5725, %v5885
        %v5887 = vpop.f32.mrb[0].mxu0
        %v5888 = vpop.f32.mrb[0].mxu0
        %v5889 = vadd.f32 %v5728, %v5888
        %v5890 = vpop.f32.mrb[0].mxu0
        %5891 = vmatprep.mubr.bf16.mxu0 0
        %5892 = vmatmul.mubr.bf16.gmra.mrb[0].mxu0 %v5394
        %v5893 = vpop.f32.mrb[0].mxu0
        %v5894 = vadd.f32 %v5733, %v5893
        %v5895 = vpop.f32.mrb[0].mxu0
        %v5896 = vpop.f32.mrb[0].mxu0
        %v5897 = vadd.f32 %v5736, %v5896
        %v5898 = vpop.f32.mrb[0].mxu0
        %5899 = vmatprep.mubr.bf16.mxu0 0
        %5900 = vmatmul.mubr.bf16.gmra.mrb[0].mxu0 %v5397
        %v5901 = vpop.f32.mrb[0].mxu0
        %v5902 = vadd.f32 %v5741, %v5901
        %v5903 = vpop.f32.mrb[0].mxu0
        %v5904 = vpop.f32.mrb[0].mxu0
        %v5905 = vadd.f32 %v5744, %v5904
        %v5906 = vpop.f32.mrb[0].mxu0
        %5907 = vmatprep.mubr.bf16.mxu0 0
        %5908 = vmatmul.mubr.bf16.gmra.mrb[0].mxu0 %v5400
        %v5909 = vpop.f32.mrb[0].mxu0
        %v5910 = vadd.f32 %v5749, %v5909
        %v5911 = vpop.f32.mrb[0].mxu0
        %v5912 = vpop.f32.mrb[0].mxu0
        %v5913 = vadd.f32 %v5752, %v5912
        %v5914 = vpop.f32.mrb[0].mxu0
        %5915 = vdwg.mxu0
        %v5916 = vadd.f32 %v5321, %v5790
        %v5917 = vadd.f32 %v5322, %v5793
        %v5918 = vadd.f32 %v5323, %v5798
        %v5919 = vadd.f32 %v5324, %v5801
        %v5920 = vadd.f32 %v5325, %v5806
        %v5921 = vadd.f32 %v5326, %v5809
        %v5922 = vadd.f32 %v5327, %v5814
        %v5923 = vadd.f32 %v5328, %v5817
        %v5924 = vadd.f32 %v5329, %v5822
        %v5925 = vadd.f32 %v5330, %v5825
        %v5926 = vadd.f32 %v5331, %v5830
        %v5927 = vadd.f32 %v5332, %v5833
        %v5928 = vadd.f32 %v5333, %v5838
        %v5929 = vadd.f32 %v5334, %v5841
        %v5930 = vadd.f32 %v5335, %v5846
        %v5931 = vadd.f32 %v5336, %v5849
        %v5932 = vadd.f32 %v5337, %v5854
        %v5933 = vadd.f32 %v5338, %v5857
        %v5934 = vadd.f32 %v5339, %v5862
        %v5935 = vadd.f32 %v5340, %v5865
        %v5936 = vadd.f32 %v5341, %v5870
        %v5937 = vadd.f32 %v5342, %v5873
        %v5938 = vadd.f32 %v5343, %v5878
        %v5939 = vadd.f32 %v5344, %v5881
        %v5940 = vadd.f32 %v5345, %v5886
        %v5941 = vadd.f32 %v5346, %v5889
        %v5942 = vadd.f32 %v5347, %v5894
        %v5943 = vadd.f32 %v5348, %v5897
        %v5944 = vadd.f32 %v5349, %v5902
        %v5945 = vadd.f32 %v5350, %v5905
        %v5946 = vadd.f32 %v5351, %v5910
        %v5947 = vadd.f32 %v5352, %v5913
        %5948 = vst [vmem:[#allocation4] sm:$0xff] %v5916
        %5949 = vst [vmem:[#allocation4 + $0x8] sm:$0xff] %v5917
        %5950 = vst [vmem:[#allocation4 + $0x10] sm:$0xff] %v5918
        %5951 = vst [vmem:[#allocation4 + $0x18] sm:$0xff] %v5919
        %5952 = vst [vmem:[#allocation4 + $0x20] sm:$0xff] %v5920
        %5953 = vst [vmem:[#allocation4 + $0x28] sm:$0xff] %v5921
        %5954 = vst [vmem:[#allocation4 + $0x30] sm:$0xff] %v5922
        %5955 = vst [vmem:[#allocation4 + $0x38] sm:$0xff] %v5923
        %5956 = vst [vmem:[#allocation4 + $0x40] sm:$0xff] %v5924
        %5957 = vst [vmem:[#allocation4 + $0x48] sm:$0xff] %v5925
        %5958 = vst [vmem:[#allocation4 + $0x50] sm:$0xff] %v5926
        %5959 = vst [vmem:[#allocation4 + $0x58] sm:$0xff] %v5927
        %5960 = vst [vmem:[#allocation4 + $0x60] sm:$0xff] %v5928
        %5961 = vst [vmem:[#allocation4 + $0x68] sm:$0xff] %v5929
        %5962 = vst [vmem:[#allocation4 + $0x70] sm:$0xff] %v5930
        %5963 = vst [vmem:[#allocation4 + $0x78] sm:$0xff] %v5931
        %5964 = vst [vmem:[#allocation4 + $0x80] sm:$0xff] %v5932
        %5965 = vst [vmem:[#allocation4 + $0x88] sm:$0xff] %v5933
        %5966 = vst [vmem:[#allocation4 + $0x90] sm:$0xff] %v5934
        %5967 = vst [vmem:[#allocation4 + $0x98] sm:$0xff] %v5935
        %5968 = vst [vmem:[#allocation4 + $0xa0] sm:$0xff] %v5936
        %5969 = vst [vmem:[#allocation4 + $0xa8] sm:$0xff] %v5937
        %5970 = vst [vmem:[#allocation4 + $0xb0] sm:$0xff] %v5938
        %5971 = vst [vmem:[#allocation4 + $0xb8] sm:$0xff] %v5939
        %5972 = vst [vmem:[#allocation4 + $0xc0] sm:$0xff] %v5940
        %5973 = vst [vmem:[#allocation4 + $0xc8] sm:$0xff] %v5941
        %5974 = vst [vmem:[#allocation4 + $0xd0] sm:$0xff] %v5942
        %5975 = vst [vmem:[#allocation4 + $0xd8] sm:$0xff] %v5943
        %5976 = vst [vmem:[#allocation4 + $0xe0] sm:$0xff] %v5944
        %5977 = vst [vmem:[#allocation4 + $0xe8] sm:$0xff] %v5945
        %5978 = vst [vmem:[#allocation4 + $0xf0] sm:$0xff] %v5946
        %5979 = vst [vmem:[#allocation4 + $0xf8] sm:$0xff] %v5947
        %v5980 = vld [vmem:[#allocation4] sm:$0xff]
        %v5981 = vld [vmem:[#allocation4 + $0x8] sm:$0xff]
        %v5982 = vld [vmem:[#allocation4 + $0x10] sm:$0xff]
        %v5983 = vld [vmem:[#allocation4 + $0x18] sm:$0xff]
        %v5984 = vld [vmem:[#allocation4 + $0x20] sm:$0xff]
        %v5985 = vld [vmem:[#allocation4 + $0x28] sm:$0xff]
        %v5986 = vld [vmem:[#allocation4 + $0x30] sm:$0xff]
        %v5987 = vld [vmem:[#allocation4 + $0x38] sm:$0xff]
        %v5988 = vld [vmem:[#allocation4 + $0x40] sm:$0xff]
        %v5989 = vld [vmem:[#allocation4 + $0x48] sm:$0xff]
        %v5990 = vld [vmem:[#allocation4 + $0x50] sm:$0xff]
        %v5991 = vld [vmem:[#allocation4 + $0x58] sm:$0xff]
        %v5992 = vld [vmem:[#allocation4 + $0x60] sm:$0xff]
        %v5993 = vld [vmem:[#allocation4 + $0x68] sm:$0xff]
        %v5994 = vld [vmem:[#allocation4 + $0x70] sm:$0xff]
        %v5995 = vld [vmem:[#allocation4 + $0x78] sm:$0xff]
        %v5996 = vld [vmem:[#allocation4 + $0x80] sm:$0xff]
        %v5997 = vld [vmem:[#allocation4 + $0x88] sm:$0xff]
        %v5998 = vld [vmem:[#allocation4 + $0x90] sm:$0xff]
        %v5999 = vld [vmem:[#allocation4 + $0x98] sm:$0xff]
        %v6000 = vld [vmem:[#allocation4 + $0xa0] sm:$0xff]
        %v6001 = vld [vmem:[#allocation4 + $0xa8] sm:$0xff]
        %v6002 = vld [vmem:[#allocation4 + $0xb0] sm:$0xff]
        %v6003 = vld [vmem:[#allocation4 + $0xb8] sm:$0xff]
        %v6004 = vld [vmem:[#allocation4 + $0xc0] sm:$0xff]
        %v6005 = vld [vmem:[#allocation4 + $0xc8] sm:$0xff]
        %v6006 = vld [vmem:[#allocation4 + $0xd0] sm:$0xff]
        %v6007 = vld [vmem:[#allocation4 + $0xd8] sm:$0xff]
        %v6008 = vld [vmem:[#allocation4 + $0xe0] sm:$0xff]
        %v6009 = vld [vmem:[#allocation4 + $0xe8] sm:$0xff]
        %v6010 = vld [vmem:[#allocation4 + $0xf0] sm:$0xff]
        %v6011 = vld [vmem:[#allocation4 + $0xf8] sm:$0xff]
        %v6012 = vld [vmem:[#allocation2 + $0x30] sm:$0xff]
        %v6013 = vld [vmem:[#allocation2 + $0x38] sm:$0xff]
        %v6014 = vld [vmem:[#allocation2 + $0x40] sm:$0xff]
        %v6015 = vld [vmem:[#allocation2 + $0x48] sm:$0xff]
        %v6016 = vld [vmem:[#allocation2 + $0x50] sm:$0xff]
        %v6017 = vld [vmem:[#allocation2 + $0x58] sm:$0xff]
        %v6018 = vld [vmem:[#allocation2 + $0x60] sm:$0xff]
        %v6019 = vld [vmem:[#allocation2 + $0x68] sm:$0xff]
        %v6020 = vld [vmem:[#allocation2 + $0x70] sm:$0xff]
        %v6021 = vld [vmem:[#allocation2 + $0x78] sm:$0xff]
        %v6022 = vld [vmem:[#allocation2 + $0x80] sm:$0xff]
        %v6023 = vld [vmem:[#allocation2 + $0x88] sm:$0xff]
        %v6024 = vld [vmem:[#allocation2 + $0x90] sm:$0xff]
        %v6025 = vld [vmem:[#allocation2 + $0x98] sm:$0xff]
        %v6026 = vld [vmem:[#allocation2 + $0xa0] sm:$0xff]
        %v6027 = vld [vmem:[#allocation2 + $0xa8] sm:$0xff]
        %v6028 = vld [vmem:[#allocation2 + $0xb0] sm:$0xff]
        %v6029 = vld [vmem:[#allocation2 + $0xb8] sm:$0xff]
        %v6030 = vld [vmem:[#allocation2 + $0xc0] sm:$0xff]
        %v6031 = vld [vmem:[#allocation2 + $0xc8] sm:$0xff]
        %v6032 = vld [vmem:[#allocation2 + $0xd0] sm:$0xff]
        %v6033 = vld [vmem:[#allocation2 + $0xd8] sm:$0xff]
        %v6034 = vld [vmem:[#allocation2 + $0xe0] sm:$0xff]
        %v6035 = vld [vmem:[#allocation2 + $0xe8] sm:$0xff]
        %v6036 = vld [vmem:[#allocation2 + $0xf0] sm:$0xff]
        %v6037 = vld [vmem:[#allocation2 + $0xf8] sm:$0xff]
        %v6038 = vld [vmem:[#allocation2 + $0x100] sm:$0xff]
        %v6039 = vld [vmem:[#allocation2 + $0x108] sm:$0xff]
        %v6040 = vld [vmem:[#allocation2 + $0x110] sm:$0xff]
        %v6041 = vld [vmem:[#allocation2 + $0x118] sm:$0xff]
        %v6042 = vld [vmem:[#allocation2 + $0x120] sm:$0xff]
        %v6043 = vld [vmem:[#allocation2 + $0x128] sm:$0xff]
        %v6044 = vld [vmem:[#allocation2 + $0x130] sm:$0xff]
        %v6045 = vld [vmem:[#allocation2 + $0x138] sm:$0xff]
        %v6046 = vld [vmem:[#allocation2 + $0x140] sm:$0xff]
        %v6047 = vld [vmem:[#allocation2 + $0x148] sm:$0xff]
        %v6048 = vld [vmem:[#allocation2 + $0x150] sm:$0xff]
        %v6049 = vld [vmem:[#allocation2 + $0x158] sm:$0xff]
        %v6050 = vld [vmem:[#allocation2 + $0x160] sm:$0xff]
        %v6051 = vld [vmem:[#allocation2 + $0x168] sm:$0xff]
        %v6052 = vld [vmem:[#allocation2 + $0x170] sm:$0xff]
        %v6053 = vld [vmem:[#allocation2 + $0x178] sm:$0xff]
        %v6054 = vld [vmem:[#allocation2 + $0x180] sm:$0xff]
        %v6055 = vld [vmem:[#allocation2 + $0x188] sm:$0xff]
        %v6056 = vld [vmem:[#allocation2 + $0x190] sm:$0xff]
        %v6057 = vld [vmem:[#allocation2 + $0x198] sm:$0xff]
        %v6058 = vld [vmem:[#allocation2 + $0x1a0] sm:$0xff]
        %v6059 = vld [vmem:[#allocation2 + $0x1a8] sm:$0xff]
        %s6060 = scalar_lea.vmem %s2, 384
        %v6061 = vld [vmem:[%s6060] sm:$0xf]
        %v6062 = vld [vmem:[%s6060 + $0x4] sm:$0xf]
        %v6063 = vld [vmem:[%s6060 + $0x8] sm:$0xf]
        %v6064 = vld [vmem:[%s6060 + $0xc] sm:$0xf]
        %v6065 = vld [vmem:[%s6060 + $0x10] sm:$0xf]
        %v6066 = vld [vmem:[%s6060 + $0x14] sm:$0xf]
        %v6067 = vld [vmem:[%s6060 + $0x18] sm:$0xf]
        %v6068 = vld [vmem:[%s6060 + $0x1c] sm:$0xf]
        %v6069 = vld [vmem:[%s6060 + $0x20] sm:$0xf]
        %v6070 = vld [vmem:[%s6060 + $0x24] sm:$0xf]
        %v6071 = vld [vmem:[%s6060 + $0x28] sm:$0xf]
        %v6072 = vld [vmem:[%s6060 + $0x2c] sm:$0xf]
        %v6073 = vld [vmem:[%s6060 + $0x30] sm:$0xf]
        %v6074 = vld [vmem:[%s6060 + $0x34] sm:$0xf]
        %v6075 = vld [vmem:[%s6060 + $0x38] sm:$0xf]
        %v6076 = vld [vmem:[%s6060 + $0x3c] sm:$0xf]
        %v6077 = vld [vmem:[%s6060 + $0x40] sm:$0xf]
        %v6078 = vld [vmem:[%s6060 + $0x44] sm:$0xf]
        %v6079 = vld [vmem:[%s6060 + $0x48] sm:$0xf]
        %v6080 = vld [vmem:[%s6060 + $0x4c] sm:$0xf]
        %v6081 = vld [vmem:[%s6060 + $0x50] sm:$0xf]
        %v6082 = vld [vmem:[%s6060 + $0x54] sm:$0xf]
        %v6083 = vld [vmem:[%s6060 + $0x58] sm:$0xf]
        %v6084 = vld [vmem:[%s6060 + $0x5c] sm:$0xf]
        %v6085 = vld [vmem:[%s6060 + $0x60] sm:$0xf]
        %v6086 = vld [vmem:[%s6060 + $0x64] sm:$0xf]
        %v6087 = vld [vmem:[%s6060 + $0x68] sm:$0xf]
        %v6088 = vld [vmem:[%s6060 + $0x6c] sm:$0xf]
        %v6089 = vld [vmem:[%s6060 + $0x70] sm:$0xf]
        %v6090 = vld [vmem:[%s6060 + $0x74] sm:$0xf]
        %v6091 = vld [vmem:[%s6060 + $0x78] sm:$0xf]
        %v6092 = vld [vmem:[%s6060 + $0x7c] sm:$0xf]
        %v6093 = vld [vmem:[%s6060 + $0x80] sm:$0xf]
        %v6094 = vld [vmem:[%s6060 + $0x84] sm:$0xf]
        %v6095 = vld [vmem:[%s6060 + $0x88] sm:$0xf]
        %v6096 = vld [vmem:[%s6060 + $0x8c] sm:$0xf]
        %v6097 = vld [vmem:[%s6060 + $0x90] sm:$0xf]
        %v6098 = vld [vmem:[%s6060 + $0x94] sm:$0xf]
        %v6099 = vld [vmem:[%s6060 + $0x98] sm:$0xf]
        %v6100 = vld [vmem:[%s6060 + $0x9c] sm:$0xf]
        %v6101 = vld [vmem:[%s6060 + $0xa0] sm:$0xf]
        %v6102 = vld [vmem:[%s6060 + $0xa4] sm:$0xf]
        %v6103 = vld [vmem:[%s6060 + $0xa8] sm:$0xf]
        %v6104 = vld [vmem:[%s6060 + $0xac] sm:$0xf]
        %v6105 = vld [vmem:[%s6060 + $0xb0] sm:$0xf]
        %v6106 = vld [vmem:[%s6060 + $0xb4] sm:$0xf]
        %v6107 = vld [vmem:[%s6060 + $0xb8] sm:$0xf]
        %v6108 = vld [vmem:[%s6060 + $0xbc] sm:$0xf]
        %v6157 = vunpack.c.l.b16 %v6061
        %v6158 = vunpack.c.l.b16 %v6062
        %v6159 = vunpack.c.l.b16 %v6063
        %v6160 = vunpack.c.l.b16 %v6064
        %v6161 = vunpack.c.l.b16 %v6065
        %v6162 = vunpack.c.l.b16 %v6066
        %v6163 = vunpack.c.l.b16 %v6067
        %v6164 = vunpack.c.l.b16 %v6068
        %v6165 = vunpack.c.l.b16 %v6069
        %v6166 = vunpack.c.l.b16 %v6070
        %v6167 = vunpack.c.l.b16 %v6071
        %v6168 = vunpack.c.l.b16 %v6072
        %v6169 = vunpack.c.l.b16 %v6073
        %v6170 = vunpack.c.l.b16 %v6074
        %v6171 = vunpack.c.l.b16 %v6075
        %v6172 = vunpack.c.l.b16 %v6076
        %v6173 = vunpack.c.l.b16 %v6077
        %v6174 = vunpack.c.l.b16 %v6078
        %v6175 = vunpack.c.l.b16 %v6079
        %v6176 = vunpack.c.l.b16 %v6080
        %v6177 = vunpack.c.l.b16 %v6081
        %v6178 = vunpack.c.l.b16 %v6082
        %v6179 = vunpack.c.l.b16 %v6083
        %v6180 = vunpack.c.l.b16 %v6084
        %v6181 = vunpack.c.l.b16 %v6085
        %v6182 = vunpack.c.l.b16 %v6086
        %v6183 = vunpack.c.l.b16 %v6087
        %v6184 = vunpack.c.l.b16 %v6088
        %v6185 = vunpack.c.l.b16 %v6089
        %v6186 = vunpack.c.l.b16 %v6090
        %v6187 = vunpack.c.l.b16 %v6091
        %v6188 = vunpack.c.l.b16 %v6092
        %v6189 = vunpack.c.l.b16 %v6093
        %v6190 = vunpack.c.l.b16 %v6094
        %v6191 = vunpack.c.l.b16 %v6095
        %v6192 = vunpack.c.l.b16 %v6096
        %v6193 = vunpack.c.l.b16 %v6097
        %v6194 = vunpack.c.l.b16 %v6098
        %v6195 = vunpack.c.l.b16 %v6099
        %v6196 = vunpack.c.l.b16 %v6100
        %v6197 = vunpack.c.l.b16 %v6101
        %v6198 = vunpack.c.l.b16 %v6102
        %v6199 = vunpack.c.l.b16 %v6103
        %v6200 = vunpack.c.l.b16 %v6104
        %v6201 = vunpack.c.l.b16 %v6105
        %v6202 = vunpack.c.l.b16 %v6106
        %v6203 = vunpack.c.l.b16 %v6107
        %v6204 = vunpack.c.l.b16 %v6108
        %v6205 = vpack.c.b16 %v6158, %v6157
        %v6206 = vpack.c.b16 %v6160, %v6159
        %v6207 = vpack.c.b16 %v6162, %v6161
        %v6208 = vpack.c.b16 %v6164, %v6163
        %v6209 = vpack.c.b16 %v6166, %v6165
        %v6210 = vpack.c.b16 %v6168, %v6167
        %v6211 = vpack.c.b16 %v6170, %v6169
        %v6212 = vpack.c.b16 %v6172, %v6171
        %v6213 = vpack.c.b16 %v6174, %v6173
        %v6214 = vpack.c.b16 %v6176, %v6175
        %v6215 = vpack.c.b16 %v6178, %v6177
        %v6216 = vpack.c.b16 %v6180, %v6179
        %v6217 = vpack.c.b16 %v6182, %v6181
        %v6218 = vpack.c.b16 %v6184, %v6183
        %v6219 = vpack.c.b16 %v6186, %v6185
        %v6220 = vpack.c.b16 %v6188, %v6187
        %v6221 = vpack.c.b16 %v6190, %v6189
        %v6222 = vpack.c.b16 %v6192, %v6191
        %v6223 = vpack.c.b16 %v6194, %v6193
        %v6224 = vpack.c.b16 %v6196, %v6195
        %v6225 = vpack.c.b16 %v6198, %v6197
        %v6226 = vpack.c.b16 %v6200, %v6199
        %v6227 = vpack.c.b16 %v6202, %v6201
        %v6228 = vpack.c.b16 %v6204, %v6203
        %6253 = vmatprep.subr.bf16.mxu0 0
        %6254 = vmatpush1.bf16.msra.mxu0 %v6205
        %6255 = vmatprep.subr.bf16.mxu0 0
        %6256 = vmatpush1.bf16.msra.mxu0 %v6206
        %6257 = vmatprep.subr.bf16.mxu0 0
        %6258 = vmatpush1.bf16.msra.mxu0 %v6207
        %6259 = vmatprep.subr.bf16.mxu0 0
        %6260 = vmatpush1.bf16.msra.mxu0 %v6208
        %6261 = vmatprep.subr.bf16.mxu0 0
        %6262 = vmatpush1.bf16.msra.mxu0 %v6209
        %6263 = vmatprep.subr.bf16.mxu0 0
        %6264 = vmatpush1.bf16.msra.mxu0 %v6210
        %6265 = vmatprep.subr.bf16.mxu0 0
        %6266 = vmatpush1.bf16.msra.mxu0 %v6211
        %6267 = vmatprep.subr.bf16.mxu0 0
        %6268 = vmatpush1.bf16.msra.mxu0 %v6212
        %6269 = vmatprep.subr.bf16.mxu0 0
        %6270 = vmatpush1.bf16.msra.mxu0 %v6213
        %6271 = vmatprep.subr.bf16.mxu0 0
        %6272 = vmatpush1.bf16.msra.mxu0 %v6214
        %6273 = vmatprep.subr.bf16.mxu0 0
        %6274 = vmatpush1.bf16.msra.mxu0 %v6215
        %6275 = vmatprep.subr.bf16.mxu0 0
        %6276 = vmatpush1.bf16.msra.mxu0 %v6216
        %6277 = vmatprep.subr.bf16.mxu0 0
        %6278 = vmatpush1.bf16.msra.mxu0 %v6217
        %6279 = vmatprep.subr.bf16.mxu0 0
        %6280 = vmatpush1.bf16.msra.mxu0 %v6218
        %6281 = vmatprep.subr.bf16.mxu0 0
        %6282 = vmatpush1.bf16.msra.mxu0 %v6219
        %6283 = vmatprep.subr.bf16.mxu0 0
        %6284 = vmatpush1.bf16.msra.mxu0 %v6220
        %6285 = vmatprep.mubr.bf16.mxu0 %v6013
        %6286 = vmatmul.mubr.bf16.gmra.mrb[0].mxu0 %v6012
        %v6287 = vpop.f32.mrb[0].mxu0
        %v6288 = vadd.f32 0.0, %v6287
        %v6289 = vpop.f32.mrb[0].mxu0
        %v6290 = vpop.f32.mrb[0].mxu0
        %v6291 = vadd.f32 0.0, %v6290
        %v6292 = vpop.f32.mrb[0].mxu0
        %6293 = vmatprep.mubr.bf16.mxu0 %v6016
        %6294 = vmatmul.mubr.bf16.gmra.mrb[0].mxu0 %v6015
        %v6295 = vpop.f32.mrb[0].mxu0
        %v6296 = vadd.f32 0.0, %v6295
        %v6297 = vpop.f32.mrb[0].mxu0
        %v6298 = vpop.f32.mrb[0].mxu0
        %v6299 = vadd.f32 0.0, %v6298
        %v6300 = vpop.f32.mrb[0].mxu0
        %6301 = vmatprep.mubr.bf16.mxu0 %v6019
        %6302 = vmatmul.mubr.bf16.gmra.mrb[0].mxu0 %v6018
        %v6303 = vpop.f32.mrb[0].mxu0
        %v6304 = vadd.f32 0.0, %v6303
        %v6305 = vpop.f32.mrb[0].mxu0
        %v6306 = vpop.f32.mrb[0].mxu0
        %v6307 = vadd.f32 0.0, %v6306
        %v6308 = vpop.f32.mrb[0].mxu0
        %6309 = vmatprep.mubr.bf16.mxu0 %v6022
        %6310 = vmatmul.mubr.bf16.gmra.mrb[0].mxu0 %v6021
        %v6311 = vpop.f32.mrb[0].mxu0
        %v6312 = vadd.f32 0.0, %v6311
        %v6313 = vpop.f32.mrb[0].mxu0
        %v6314 = vpop.f32.mrb[0].mxu0
        %v6315 = vadd.f32 0.0, %v6314
        %v6316 = vpop.f32.mrb[0].mxu0
        %6317 = vmatprep.mubr.bf16.mxu0 %v6025
        %6318 = vmatmul.mubr.bf16.gmra.mrb[0].mxu0 %v6024
        %v6319 = vpop.f32.mrb[0].mxu0
        %v6320 = vadd.f32 0.0, %v6319
        %v6321 = vpop.f32.mrb[0].mxu0
        %v6322 = vpop.f32.mrb[0].mxu0
        %v6323 = vadd.f32 0.0, %v6322
        %v6324 = vpop.f32.mrb[0].mxu0
        %6325 = vmatprep.mubr.bf16.mxu0 %v6028
        %6326 = vmatmul.mubr.bf16.gmra.mrb[0].mxu0 %v6027
        %v6327 = vpop.f32.mrb[0].mxu0
        %v6328 = vadd.f32 0.0, %v6327
        %v6329 = vpop.f32.mrb[0].mxu0
        %v6330 = vpop.f32.mrb[0].mxu0
        %v6331 = vadd.f32 0.0, %v6330
        %v6332 = vpop.f32.mrb[0].mxu0
        %6333 = vmatprep.mubr.bf16.mxu0 %v6031
        %6334 = vmatmul.mubr.bf16.gmra.mrb[0].mxu0 %v6030
        %v6335 = vpop.f32.mrb[0].mxu0
        %v6336 = vadd.f32 0.0, %v6335
        %v6337 = vpop.f32.mrb[0].mxu0
        %v6338 = vpop.f32.mrb[0].mxu0
        %v6339 = vadd.f32 0.0, %v6338
        %v6340 = vpop.f32.mrb[0].mxu0
        %6341 = vmatprep.mubr.bf16.mxu0 %v6034
        %6342 = vmatmul.mubr.bf16.gmra.mrb[0].mxu0 %v6033
        %v6343 = vpop.f32.mrb[0].mxu0
        %v6344 = vadd.f32 0.0, %v6343
        %v6345 = vpop.f32.mrb[0].mxu0
        %v6346 = vpop.f32.mrb[0].mxu0
        %v6347 = vadd.f32 0.0, %v6346
        %v6348 = vpop.f32.mrb[0].mxu0
        %6349 = vmatprep.mubr.bf16.mxu0 %v6037
        %6350 = vmatmul.mubr.bf16.gmra.mrb[0].mxu0 %v6036
        %v6351 = vpop.f32.mrb[0].mxu0
        %v6352 = vadd.f32 0.0, %v6351
        %v6353 = vpop.f32.mrb[0].mxu0
        %v6354 = vpop.f32.mrb[0].mxu0
        %v6355 = vadd.f32 0.0, %v6354
        %v6356 = vpop.f32.mrb[0].mxu0
        %6357 = vmatprep.mubr.bf16.mxu0 %v6040
        %6358 = vmatmul.mubr.bf16.gmra.mrb[0].mxu0 %v6039
        %v6359 = vpop.f32.mrb[0].mxu0
        %v6360 = vadd.f32 0.0, %v6359
        %v6361 = vpop.f32.mrb[0].mxu0
        %v6362 = vpop.f32.mrb[0].mxu0
        %v6363 = vadd.f32 0.0, %v6362
        %v6364 = vpop.f32.mrb[0].mxu0
        %6365 = vmatprep.mubr.bf16.mxu0 %v6043
        %6366 = vmatmul.mubr.bf16.gmra.mrb[0].mxu0 %v6042
        %v6367 = vpop.f32.mrb[0].mxu0
        %v6368 = vadd.f32 0.0, %v6367
        %v6369 = vpop.f32.mrb[0].mxu0
        %v6370 = vpop.f32.mrb[0].mxu0
        %v6371 = vadd.f32 0.0, %v6370
        %v6372 = vpop.f32.mrb[0].mxu0
        %6373 = vmatprep.mubr.bf16.mxu0 %v6046
        %6374 = vmatmul.mubr.bf16.gmra.mrb[0].mxu0 %v6045
        %v6375 = vpop.f32.mrb[0].mxu0
        %v6376 = vadd.f32 0.0, %v6375
        %v6377 = vpop.f32.mrb[0].mxu0
        %v6378 = vpop.f32.mrb[0].mxu0
        %v6379 = vadd.f32 0.0, %v6378
        %v6380 = vpop.f32.mrb[0].mxu0
        %6381 = vmatprep.mubr.bf16.mxu0 %v6049
        %6382 = vmatmul.mubr.bf16.gmra.mrb[0].mxu0 %v6048
        %v6383 = vpop.f32.mrb[0].mxu0
        %v6384 = vadd.f32 0.0, %v6383
        %v6385 = vpop.f32.mrb[0].mxu0
        %v6386 = vpop.f32.mrb[0].mxu0
        %v6387 = vadd.f32 0.0, %v6386
        %v6388 = vpop.f32.mrb[0].mxu0
        %6389 = vmatprep.mubr.bf16.mxu0 %v6052
        %6390 = vmatmul.mubr.bf16.gmra.mrb[0].mxu0 %v6051
        %v6391 = vpop.f32.mrb[0].mxu0
        %v6392 = vadd.f32 0.0, %v6391
        %v6393 = vpop.f32.mrb[0].mxu0
        %v6394 = vpop.f32.mrb[0].mxu0
        %v6395 = vadd.f32 0.0, %v6394
        %v6396 = vpop.f32.mrb[0].mxu0
        %6397 = vmatprep.mubr.bf16.mxu0 %v6055
        %6398 = vmatmul.mubr.bf16.gmra.mrb[0].mxu0 %v6054
        %v6399 = vpop.f32.mrb[0].mxu0
        %v6400 = vadd.f32 0.0, %v6399
        %v6401 = vpop.f32.mrb[0].mxu0
        %v6402 = vpop.f32.mrb[0].mxu0
        %v6403 = vadd.f32 0.0, %v6402
        %v6404 = vpop.f32.mrb[0].mxu0
        %6405 = vmatprep.mubr.bf16.mxu0 %v6058
        %6406 = vmatmul.mubr.bf16.gmra.mrb[0].mxu0 %v6057
        %v6407 = vpop.f32.mrb[0].mxu0
        %v6408 = vadd.f32 0.0, %v6407
        %v6409 = vpop.f32.mrb[0].mxu0
        %v6410 = vpop.f32.mrb[0].mxu0
        %v6411 = vadd.f32 0.0, %v6410
        %v6412 = vpop.f32.mrb[0].mxu0
        %6413 = vdwg.mxu0
        %6414 = vmatprep.subr.bf16.mxu0 0
        %6415 = vmatpush1.bf16.msra.mxu0 %v6221
        %6416 = vmatprep.subr.bf16.mxu0 0
        %6417 = vmatpush1.bf16.msra.mxu0 %v6222
        %6418 = vmatprep.subr.bf16.mxu0 0
        %6419 = vmatpush1.bf16.msra.mxu0 %v6223
        %6420 = vmatprep.subr.bf16.mxu0 0
        %6421 = vmatpush1.bf16.msra.mxu0 %v6224
        %6422 = vmatprep.subr.bf16.mxu0 0
        %6423 = vmatpush1.bf16.msra.mxu0 %v6225
        %6424 = vmatprep.subr.bf16.mxu0 0
        %6425 = vmatpush1.bf16.msra.mxu0 %v6226
        %6426 = vmatprep.subr.bf16.mxu0 0
        %6427 = vmatpush1.bf16.msra.mxu0 %v6227
        %6428 = vmatprep.subr.bf16.mxu0 0
        %6429 = vmatpush1.bf16.msra.mxu0 %v6228
        %6430 = vmatprep.subr.bf16.mxu0 0
        %6431 = vmatpush1.bf16.msra.mxu0 0
        %6432 = vmatprep.subr.bf16.mxu0 0
        %6433 = vmatpush1.bf16.msra.mxu0 0
        %6434 = vmatprep.subr.bf16.mxu0 0
        %6435 = vmatpush1.bf16.msra.mxu0 0
        %6436 = vmatprep.subr.bf16.mxu0 0
        %6437 = vmatpush1.bf16.msra.mxu0 0
        %6438 = vmatprep.subr.bf16.mxu0 0
        %6439 = vmatpush1.bf16.msra.mxu0 0
        %6440 = vmatprep.subr.bf16.mxu0 0
        %6441 = vmatpush1.bf16.msra.mxu0 0
        %6442 = vmatprep.subr.bf16.mxu0 0
        %6443 = vmatpush1.bf16.msra.mxu0 0
        %6444 = vmatprep.subr.bf16.mxu0 0
        %6445 = vmatpush1.bf16.msra.mxu0 0
        %6446 = vmatprep.mubr.bf16.mxu0 0
        %6447 = vmatmul.mubr.bf16.gmra.mrb[0].mxu0 %v6014
        %v6448 = vpop.f32.mrb[0].mxu0
        %v6449 = vadd.f32 %v6288, %v6448
        %v6450 = vpop.f32.mrb[0].mxu0
        %v6451 = vpop.f32.mrb[0].mxu0
        %v6452 = vadd.f32 %v6291, %v6451
        %v6453 = vpop.f32.mrb[0].mxu0
        %6454 = vmatprep.mubr.bf16.mxu0 0
        %6455 = vmatmul.mubr.bf16.gmra.mrb[0].mxu0 %v6017
        %v6456 = vpop.f32.mrb[0].mxu0
        %v6457 = vadd.f32 %v6296, %v6456
        %v6458 = vpop.f32.mrb[0].mxu0
        %v6459 = vpop.f32.mrb[0].mxu0
        %v6460 = vadd.f32 %v6299, %v6459
        %v6461 = vpop.f32.mrb[0].mxu0
        %6462 = vmatprep.mubr.bf16.mxu0 0
        %6463 = vmatmul.mubr.bf16.gmra.mrb[0].mxu0 %v6020
        %v6464 = vpop.f32.mrb[0].mxu0
        %v6465 = vadd.f32 %v6304, %v6464
        %v6466 = vpop.f32.mrb[0].mxu0
        %v6467 = vpop.f32.mrb[0].mxu0
        %v6468 = vadd.f32 %v6307, %v6467
        %v6469 = vpop.f32.mrb[0].mxu0
        %6470 = vmatprep.mubr.bf16.mxu0 0
        %6471 = vmatmul.mubr.bf16.gmra.mrb[0].mxu0 %v6023
        %v6472 = vpop.f32.mrb[0].mxu0
        %v6473 = vadd.f32 %v6312, %v6472
        %v6474 = vpop.f32.mrb[0].mxu0
        %v6475 = vpop.f32.mrb[0].mxu0
        %v6476 = vadd.f32 %v6315, %v6475
        %v6477 = vpop.f32.mrb[0].mxu0
        %6478 = vmatprep.mubr.bf16.mxu0 0
        %6479 = vmatmul.mubr.bf16.gmra.mrb[0].mxu0 %v6026
        %v6480 = vpop.f32.mrb[0].mxu0
        %v6481 = vadd.f32 %v6320, %v6480
        %v6482 = vpop.f32.mrb[0].mxu0
        %v6483 = vpop.f32.mrb[0].mxu0
        %v6484 = vadd.f32 %v6323, %v6483
        %v6485 = vpop.f32.mrb[0].mxu0
        %6486 = vmatprep.mubr.bf16.mxu0 0
        %6487 = vmatmul.mubr.bf16.gmra.mrb[0].mxu0 %v6029
        %v6488 = vpop.f32.mrb[0].mxu0
        %v6489 = vadd.f32 %v6328, %v6488
        %v6490 = vpop.f32.mrb[0].mxu0
        %v6491 = vpop.f32.mrb[0].mxu0
        %v6492 = vadd.f32 %v6331, %v6491
        %v6493 = vpop.f32.mrb[0].mxu0
        %6494 = vmatprep.mubr.bf16.mxu0 0
        %6495 = vmatmul.mubr.bf16.gmra.mrb[0].mxu0 %v6032
        %v6496 = vpop.f32.mrb[0].mxu0
        %v6497 = vadd.f32 %v6336, %v6496
        %v6498 = vpop.f32.mrb[0].mxu0
        %v6499 = vpop.f32.mrb[0].mxu0
        %v6500 = vadd.f32 %v6339, %v6499
        %v6501 = vpop.f32.mrb[0].mxu0
        %6502 = vmatprep.mubr.bf16.mxu0 0
        %6503 = vmatmul.mubr.bf16.gmra.mrb[0].mxu0 %v6035
        %v6504 = vpop.f32.mrb[0].mxu0
        %v6505 = vadd.f32 %v6344, %v6504
        %v6506 = vpop.f32.mrb[0].mxu0
        %v6507 = vpop.f32.mrb[0].mxu0
        %v6508 = vadd.f32 %v6347, %v6507
        %v6509 = vpop.f32.mrb[0].mxu0
        %6510 = vmatprep.mubr.bf16.mxu0 0
        %6511 = vmatmul.mubr.bf16.gmra.mrb[0].mxu0 %v6038
        %v6512 = vpop.f32.mrb[0].mxu0
        %v6513 = vadd.f32 %v6352, %v6512
        %v6514 = vpop.f32.mrb[0].mxu0
        %v6515 = vpop.f32.mrb[0].mxu0
        %v6516 = vadd.f32 %v6355, %v6515
        %v6517 = vpop.f32.mrb[0].mxu0
        %6518 = vmatprep.mubr.bf16.mxu0 0
        %6519 = vmatmul.mubr.bf16.gmra.mrb[0].mxu0 %v6041
        %v6520 = vpop.f32.mrb[0].mxu0
        %v6521 = vadd.f32 %v6360, %v6520
        %v6522 = vpop.f32.mrb[0].mxu0
        %v6523 = vpop.f32.mrb[0].mxu0
        %v6524 = vadd.f32 %v6363, %v6523
        %v6525 = vpop.f32.mrb[0].mxu0
        %6526 = vmatprep.mubr.bf16.mxu0 0
        %6527 = vmatmul.mubr.bf16.gmra.mrb[0].mxu0 %v6044
        %v6528 = vpop.f32.mrb[0].mxu0
        %v6529 = vadd.f32 %v6368, %v6528
        %v6530 = vpop.f32.mrb[0].mxu0
        %v6531 = vpop.f32.mrb[0].mxu0
        %v6532 = vadd.f32 %v6371, %v6531
        %v6533 = vpop.f32.mrb[0].mxu0
        %6534 = vmatprep.mubr.bf16.mxu0 0
        %6535 = vmatmul.mubr.bf16.gmra.mrb[0].mxu0 %v6047
        %v6536 = vpop.f32.mrb[0].mxu0
        %v6537 = vadd.f32 %v6376, %v6536
        %v6538 = vpop.f32.mrb[0].mxu0
        %v6539 = vpop.f32.mrb[0].mxu0
        %v6540 = vadd.f32 %v6379, %v6539
        %v6541 = vpop.f32.mrb[0].mxu0
        %6542 = vmatprep.mubr.bf16.mxu0 0
        %6543 = vmatmul.mubr.bf16.gmra.mrb[0].mxu0 %v6050
        %v6544 = vpop.f32.mrb[0].mxu0
        %v6545 = vadd.f32 %v6384, %v6544
        %v6546 = vpop.f32.mrb[0].mxu0
        %v6547 = vpop.f32.mrb[0].mxu0
        %v6548 = vadd.f32 %v6387, %v6547
        %v6549 = vpop.f32.mrb[0].mxu0
        %6550 = vmatprep.mubr.bf16.mxu0 0
        %6551 = vmatmul.mubr.bf16.gmra.mrb[0].mxu0 %v6053
        %v6552 = vpop.f32.mrb[0].mxu0
        %v6553 = vadd.f32 %v6392, %v6552
        %v6554 = vpop.f32.mrb[0].mxu0
        %v6555 = vpop.f32.mrb[0].mxu0
        %v6556 = vadd.f32 %v6395, %v6555
        %v6557 = vpop.f32.mrb[0].mxu0
        %6558 = vmatprep.mubr.bf16.mxu0 0
        %6559 = vmatmul.mubr.bf16.gmra.mrb[0].mxu0 %v6056
        %v6560 = vpop.f32.mrb[0].mxu0
        %v6561 = vadd.f32 %v6400, %v6560
        %v6562 = vpop.f32.mrb[0].mxu0
        %v6563 = vpop.f32.mrb[0].mxu0
        %v6564 = vadd.f32 %v6403, %v6563
        %v6565 = vpop.f32.mrb[0].mxu0
        %6566 = vmatprep.mubr.bf16.mxu0 0
        %6567 = vmatmul.mubr.bf16.gmra.mrb[0].mxu0 %v6059
        %v6568 = vpop.f32.mrb[0].mxu0
        %v6569 = vadd.f32 %v6408, %v6568
        %v6570 = vpop.f32.mrb[0].mxu0
        %v6571 = vpop.f32.mrb[0].mxu0
        %v6572 = vadd.f32 %v6411, %v6571
        %v6573 = vpop.f32.mrb[0].mxu0
        %6574 = vdwg.mxu0
        %v6575 = vadd.f32 %v5980, %v6449
        %v6576 = vadd.f32 %v5981, %v6452
        %v6577 = vadd.f32 %v5982, %v6457
        %v6578 = vadd.f32 %v5983, %v6460
        %v6579 = vadd.f32 %v5984, %v6465
        %v6580 = vadd.f32 %v5985, %v6468
        %v6581 = vadd.f32 %v5986, %v6473
        %v6582 = vadd.f32 %v5987, %v6476
        %v6583 = vadd.f32 %v5988, %v6481
        %v6584 = vadd.f32 %v5989, %v6484
        %v6585 = vadd.f32 %v5990, %v6489
        %v6586 = vadd.f32 %v5991, %v6492
        %v6587 = vadd.f32 %v5992, %v6497
        %v6588 = vadd.f32 %v5993, %v6500
        %v6589 = vadd.f32 %v5994, %v6505
        %v6590 = vadd.f32 %v5995, %v6508
        %v6591 = vadd.f32 %v5996, %v6513
        %v6592 = vadd.f32 %v5997, %v6516
        %v6593 = vadd.f32 %v5998, %v6521
        %v6594 = vadd.f32 %v5999, %v6524
        %v6595 = vadd.f32 %v6000, %v6529
        %v6596 = vadd.f32 %v6001, %v6532
        %v6597 = vadd.f32 %v6002, %v6537
        %v6598 = vadd.f32 %v6003, %v6540
        %v6599 = vadd.f32 %v6004, %v6545
        %v6600 = vadd.f32 %v6005, %v6548
        %v6601 = vadd.f32 %v6006, %v6553
        %v6602 = vadd.f32 %v6007, %v6556
        %v6603 = vadd.f32 %v6008, %v6561
        %v6604 = vadd.f32 %v6009, %v6564
        %v6605 = vadd.f32 %v6010, %v6569
        %v6606 = vadd.f32 %v6011, %v6572
        %6607 = vst [vmem:[#allocation4] sm:$0xff] %v6575
        %6608 = vst [vmem:[#allocation4 + $0x8] sm:$0xff] %v6576
        %6609 = vst [vmem:[#allocation4 + $0x10] sm:$0xff] %v6577
        %6610 = vst [vmem:[#allocation4 + $0x18] sm:$0xff] %v6578
        %6611 = vst [vmem:[#allocation4 + $0x20] sm:$0xff] %v6579
        %6612 = vst [vmem:[#allocation4 + $0x28] sm:$0xff] %v6580
        %6613 = vst [vmem:[#allocation4 + $0x30] sm:$0xff] %v6581
        %6614 = vst [vmem:[#allocation4 + $0x38] sm:$0xff] %v6582
        %6615 = vst [vmem:[#allocation4 + $0x40] sm:$0xff] %v6583
        %6616 = vst [vmem:[#allocation4 + $0x48] sm:$0xff] %v6584
        %6617 = vst [vmem:[#allocation4 + $0x50] sm:$0xff] %v6585
        %6618 = vst [vmem:[#allocation4 + $0x58] sm:$0xff] %v6586
        %6619 = vst [vmem:[#allocation4 + $0x60] sm:$0xff] %v6587
        %6620 = vst [vmem:[#allocation4 + $0x68] sm:$0xff] %v6588
        %6621 = vst [vmem:[#allocation4 + $0x70] sm:$0xff] %v6589
        %6622 = vst [vmem:[#allocation4 + $0x78] sm:$0xff] %v6590
        %6623 = vst [vmem:[#allocation4 + $0x80] sm:$0xff] %v6591
        %6624 = vst [vmem:[#allocation4 + $0x88] sm:$0xff] %v6592
        %6625 = vst [vmem:[#allocation4 + $0x90] sm:$0xff] %v6593
        %6626 = vst [vmem:[#allocation4 + $0x98] sm:$0xff] %v6594
        %6627 = vst [vmem:[#allocation4 + $0xa0] sm:$0xff] %v6595
        %6628 = vst [vmem:[#allocation4 + $0xa8] sm:$0xff] %v6596
        %6629 = vst [vmem:[#allocation4 + $0xb0] sm:$0xff] %v6597
        %6630 = vst [vmem:[#allocation4 + $0xb8] sm:$0xff] %v6598
        %6631 = vst [vmem:[#allocation4 + $0xc0] sm:$0xff] %v6599
        %6632 = vst [vmem:[#allocation4 + $0xc8] sm:$0xff] %v6600
        %6633 = vst [vmem:[#allocation4 + $0xd0] sm:$0xff] %v6601
        %6634 = vst [vmem:[#allocation4 + $0xd8] sm:$0xff] %v6602
        %6635 = vst [vmem:[#allocation4 + $0xe0] sm:$0xff] %v6603
        %6636 = vst [vmem:[#allocation4 + $0xe8] sm:$0xff] %v6604
        %6637 = vst [vmem:[#allocation4 + $0xf0] sm:$0xff] %v6605
        %6638 = vst [vmem:[#allocation4 + $0xf8] sm:$0xff] %v6606
        %s6639 = scalar_lea.vmem %s168, 12
        %v6640 = vld [vmem:[%s6639] sm:$0xf]
        %v6641 = vld [vmem:[%s6639 + $0x4] sm:$0xf]
        %v6642 = vld [vmem:[%s6639 + $0x8] sm:$0x1]
        %v6643 = vld [vmem:[%s6639 + $0xc] sm:$0xf]
        %v6644 = vld [vmem:[%s6639 + $0x10] sm:$0xf]
        %v6645 = vld [vmem:[%s6639 + $0x14] sm:$0x1]
        %v6646 = vld [vmem:[%s6639 + $0x18] sm:$0xf]
        %v6647 = vld [vmem:[%s6639 + $0x1c] sm:$0xf]
        %v6648 = vld [vmem:[%s6639 + $0x20] sm:$0x1]
        %v6649 = vld [vmem:[%s6639 + $0x24] sm:$0xf]
        %v6650 = vld [vmem:[%s6639 + $0x28] sm:$0xf]
        %v6651 = vld [vmem:[%s6639 + $0x2c] sm:$0x1]
        %v6652 = vld [vmem:[%s6639 + $0x30] sm:$0xf]
        %v6653 = vld [vmem:[%s6639 + $0x34] sm:$0xf]
        %v6654 = vld [vmem:[%s6639 + $0x38] sm:$0x1]
        %v6655 = vld [vmem:[%s6639 + $0x3c] sm:$0xf]
        %v6656 = vld [vmem:[%s6639 + $0x40] sm:$0xf]
        %v6657 = vld [vmem:[%s6639 + $0x44] sm:$0x1]
        %v6658 = vld [vmem:[%s6639 + $0x48] sm:$0xf]
        %v6659 = vld [vmem:[%s6639 + $0x4c] sm:$0xf]
        %v6660 = vld [vmem:[%s6639 + $0x50] sm:$0x1]
        %v6661 = vld [vmem:[%s6639 + $0x54] sm:$0xf]
        %v6662 = vld [vmem:[%s6639 + $0x58] sm:$0xf]
        %v6663 = vld [vmem:[%s6639 + $0x5c] sm:$0x1]
        %v6664 = vld [vmem:[%s6639 + $0x60] sm:$0xf]
        %v6665 = vld [vmem:[%s6639 + $0x64] sm:$0xf]
        %v6666 = vld [vmem:[%s6639 + $0x68] sm:$0x1]
        %v6667 = vld [vmem:[%s6639 + $0x6c] sm:$0xf]
        %v6668 = vld [vmem:[%s6639 + $0x70] sm:$0xf]
        %v6669 = vld [vmem:[%s6639 + $0x74] sm:$0x1]
        %v6670 = vld [vmem:[%s6639 + $0x78] sm:$0xf]
        %v6671 = vld [vmem:[%s6639 + $0x7c] sm:$0xf]
        %v6672 = vld [vmem:[%s6639 + $0x80] sm:$0x1]
        %v6673 = vld [vmem:[%s6639 + $0x84] sm:$0xf]
        %v6674 = vld [vmem:[%s6639 + $0x88] sm:$0xf]
        %v6675 = vld [vmem:[%s6639 + $0x8c] sm:$0x1]
        %v6676 = vld [vmem:[%s6639 + $0x90] sm:$0xf]
        %v6677 = vld [vmem:[%s6639 + $0x94] sm:$0xf]
        %v6678 = vld [vmem:[%s6639 + $0x98] sm:$0x1]
        %v6679 = vld [vmem:[%s6639 + $0x9c] sm:$0xf]
        %v6680 = vld [vmem:[%s6639 + $0xa0] sm:$0xf]
        %v6681 = vld [vmem:[%s6639 + $0xa4] sm:$0x1]
        %v6682 = vld [vmem:[%s6639 + $0xa8] sm:$0xf]
        %v6683 = vld [vmem:[%s6639 + $0xac] sm:$0xf]
        %v6684 = vld [vmem:[%s6639 + $0xb0] sm:$0x1]
        %v6685 = vld [vmem:[%s6639 + $0xb4] sm:$0xf]
        %v6686 = vld [vmem:[%s6639 + $0xb8] sm:$0xf]
        %v6687 = vld [vmem:[%s6639 + $0xbc] sm:$0x1]
        %v6688 = vunpack.c.l.bf16 %v6640
        %v6689 = vunpack.c.l.bf16 %v6641
        %v6690 = vunpack.c.l.bf16 %v6642
        %v6691 = vunpack.c.l.bf16 %v6643
        %v6692 = vunpack.c.l.bf16 %v6644
        %v6693 = vunpack.c.l.bf16 %v6645
        %v6694 = vunpack.c.l.bf16 %v6646
        %v6695 = vunpack.c.l.bf16 %v6647
        %v6696 = vunpack.c.l.bf16 %v6648
        %v6697 = vunpack.c.l.bf16 %v6649
        %v6698 = vunpack.c.l.bf16 %v6650
        %v6699 = vunpack.c.l.bf16 %v6651
        %v6700 = vunpack.c.l.bf16 %v6652
        %v6701 = vunpack.c.l.bf16 %v6653
        %v6702 = vunpack.c.l.bf16 %v6654
        %v6703 = vunpack.c.l.bf16 %v6655
        %v6704 = vunpack.c.l.bf16 %v6656
        %v6705 = vunpack.c.l.bf16 %v6657
        %v6706 = vunpack.c.l.bf16 %v6658
        %v6707 = vunpack.c.l.bf16 %v6659
        %v6708 = vunpack.c.l.bf16 %v6660
        %v6709 = vunpack.c.l.bf16 %v6661
        %v6710 = vunpack.c.l.bf16 %v6662
        %v6711 = vunpack.c.l.bf16 %v6663
        %v6712 = vunpack.c.l.bf16 %v6664
        %v6713 = vunpack.c.l.bf16 %v6665
        %v6714 = vunpack.c.l.bf16 %v6666
        %v6715 = vunpack.c.l.bf16 %v6667
        %v6716 = vunpack.c.l.bf16 %v6668
        %v6717 = vunpack.c.l.bf16 %v6669
        %v6718 = vunpack.c.l.bf16 %v6670
        %v6719 = vunpack.c.l.bf16 %v6671
        %v6720 = vunpack.c.l.bf16 %v6672
        %v6721 = vunpack.c.l.bf16 %v6673
        %v6722 = vunpack.c.l.bf16 %v6674
        %v6723 = vunpack.c.l.bf16 %v6675
        %v6724 = vunpack.c.l.bf16 %v6676
        %v6725 = vunpack.c.l.bf16 %v6677
        %v6726 = vunpack.c.l.bf16 %v6678
        %v6727 = vunpack.c.l.bf16 %v6679
        %v6728 = vunpack.c.l.bf16 %v6680
        %v6729 = vunpack.c.l.bf16 %v6681
        %v6730 = vunpack.c.l.bf16 %v6682
        %v6731 = vunpack.c.l.bf16 %v6683
        %v6732 = vunpack.c.l.bf16 %v6684
        %v6733 = vunpack.c.l.bf16 %v6685
        %v6734 = vunpack.c.l.bf16 %v6686
        %v6735 = vunpack.c.l.bf16 %v6687
        %v6736 = vld [vmem:[#allocation4] sm:$0xff]
        %v6737 = vld [vmem:[#allocation4 + $0x8] sm:$0xff]
        %v6738 = vld [vmem:[#allocation4 + $0x10] sm:$0xff]
        %v6739 = vld [vmem:[#allocation4 + $0x18] sm:$0xff]
        %v6740 = vld [vmem:[#allocation4 + $0x20] sm:$0xff]
        %v6741 = vld [vmem:[#allocation4 + $0x28] sm:$0xff]
        %v6742 = vld [vmem:[#allocation4 + $0x30] sm:$0xff]
        %v6743 = vld [vmem:[#allocation4 + $0x38] sm:$0xff]
        %v6744 = vld [vmem:[#allocation4 + $0x40] sm:$0xff]
        %v6745 = vld [vmem:[#allocation4 + $0x48] sm:$0xff]
        %v6746 = vld [vmem:[#allocation4 + $0x50] sm:$0xff]
        %v6747 = vld [vmem:[#allocation4 + $0x58] sm:$0xff]
        %v6748 = vld [vmem:[#allocation4 + $0x60] sm:$0xff]
        %v6749 = vld [vmem:[#allocation4 + $0x68] sm:$0xff]
        %v6750 = vld [vmem:[#allocation4 + $0x70] sm:$0xff]
        %v6751 = vld [vmem:[#allocation4 + $0x78] sm:$0xff]
        %v6752 = vld [vmem:[#allocation4 + $0x80] sm:$0xff]
        %v6753 = vld [vmem:[#allocation4 + $0x88] sm:$0xff]
        %v6754 = vld [vmem:[#allocation4 + $0x90] sm:$0xff]
        %v6755 = vld [vmem:[#allocation4 + $0x98] sm:$0xff]
        %v6756 = vld [vmem:[#allocation4 + $0xa0] sm:$0xff]
        %v6757 = vld [vmem:[#allocation4 + $0xa8] sm:$0xff]
        %v6758 = vld [vmem:[#allocation4 + $0xb0] sm:$0xff]
        %v6759 = vld [vmem:[#allocation4 + $0xb8] sm:$0xff]
        %v6760 = vld [vmem:[#allocation4 + $0xc0] sm:$0xff]
        %v6761 = vld [vmem:[#allocation4 + $0xc8] sm:$0xff]
        %v6762 = vld [vmem:[#allocation4 + $0xd0] sm:$0xff]
        %v6763 = vld [vmem:[#allocation4 + $0xd8] sm:$0xff]
        %v6764 = vld [vmem:[#allocation4 + $0xe0] sm:$0xff]
        %v6765 = vld [vmem:[#allocation4 + $0xe8] sm:$0xff]
        %v6766 = vld [vmem:[#allocation4 + $0xf0] sm:$0xff]
        %v6767 = vld [vmem:[#allocation4 + $0xf8] sm:$0xff]
        %vm6816 = vcmask 1046528
        %v6817 = vrot.slane %v6688, 1
        %v6818 = vrot.slane %v6689, 1
        %v6819 = vsel %vm6816, %v6817, %v6818
        %v6820 = vrot.slane %v6690, 1
        %v6821 = vsel %vm6816, %v6818, %v6820
        %v6822 = vrot.slane %v6691, 1
        %v6823 = vrot.slane %v6692, 1
        %v6824 = vsel %vm6816, %v6822, %v6823
        %v6825 = vrot.slane %v6693, 1
        %v6826 = vsel %vm6816, %v6823, %v6825
        %v6827 = vrot.slane %v6694, 1
        %v6828 = vrot.slane %v6695, 1
        %v6829 = vsel %vm6816, %v6827, %v6828
        %v6830 = vrot.slane %v6696, 1
        %v6831 = vsel %vm6816, %v6828, %v6830
        %v6832 = vrot.slane %v6697, 1
        %v6833 = vrot.slane %v6698, 1
        %v6834 = vsel %vm6816, %v6832, %v6833
        %v6835 = vrot.slane %v6699, 1
        %v6836 = vsel %vm6816, %v6833, %v6835
        %v6837 = vrot.slane %v6700, 1
        %v6838 = vrot.slane %v6701, 1
        %v6839 = vsel %vm6816, %v6837, %v6838
        %v6840 = vrot.slane %v6702, 1
        %v6841 = vsel %vm6816, %v6838, %v6840
        %v6842 = vrot.slane %v6703, 1
        %v6843 = vrot.slane %v6704, 1
        %v6844 = vsel %vm6816, %v6842, %v6843
        %v6845 = vrot.slane %v6705, 1
        %v6846 = vsel %vm6816, %v6843, %v6845
        %v6847 = vrot.slane %v6706, 1
        %v6848 = vrot.slane %v6707, 1
        %v6849 = vsel %vm6816, %v6847, %v6848
        %v6850 = vrot.slane %v6708, 1
        %v6851 = vsel %vm6816, %v6848, %v6850
        %v6852 = vrot.slane %v6709, 1
        %v6853 = vrot.slane %v6710, 1
        %v6854 = vsel %vm6816, %v6852, %v6853
        %v6855 = vrot.slane %v6711, 1
        %v6856 = vsel %vm6816, %v6853, %v6855
        %v6857 = vrot.slane %v6712, 1
        %v6858 = vrot.slane %v6713, 1
        %v6859 = vsel %vm6816, %v6857, %v6858
        %v6860 = vrot.slane %v6714, 1
        %v6861 = vsel %vm6816, %v6858, %v6860
        %v6862 = vrot.slane %v6715, 1
        %v6863 = vrot.slane %v6716, 1
        %v6864 = vsel %vm6816, %v6862, %v6863
        %v6865 = vrot.slane %v6717, 1
        %v6866 = vsel %vm6816, %v6863, %v6865
        %v6867 = vrot.slane %v6718, 1
        %v6868 = vrot.slane %v6719, 1
        %v6869 = vsel %vm6816, %v6867, %v6868
        %v6870 = vrot.slane %v6720, 1
        %v6871 = vsel %vm6816, %v6868, %v6870
        %v6872 = vrot.slane %v6721, 1
        %v6873 = vrot.slane %v6722, 1
        %v6874 = vsel %vm6816, %v6872, %v6873
        %v6875 = vrot.slane %v6723, 1
        %v6876 = vsel %vm6816, %v6873, %v6875
        %v6877 = vrot.slane %v6724, 1
        %v6878 = vrot.slane %v6725, 1
        %v6879 = vsel %vm6816, %v6877, %v6878
        %v6880 = vrot.slane %v6726, 1
        %v6881 = vsel %vm6816, %v6878, %v6880
        %v6882 = vrot.slane %v6727, 1
        %v6883 = vrot.slane %v6728, 1
        %v6884 = vsel %vm6816, %v6882, %v6883
        %v6885 = vrot.slane %v6729, 1
        %v6886 = vsel %vm6816, %v6883, %v6885
        %v6887 = vrot.slane %v6730, 1
        %v6888 = vrot.slane %v6731, 1
        %v6889 = vsel %vm6816, %v6887, %v6888
        %v6890 = vrot.slane %v6732, 1
        %v6891 = vsel %vm6816, %v6888, %v6890
        %v6892 = vrot.slane %v6733, 1
        %v6893 = vrot.slane %v6734, 1
        %v6894 = vsel %vm6816, %v6892, %v6893
        %v6895 = vrot.slane %v6735, 1
        %v6896 = vsel %vm6816, %v6893, %v6895
        %v6929 = vadd.f32 %v6736, %v6819
        %v6930 = vadd.f32 %v6737, %v6821
        %v6931 = vadd.f32 %v6738, %v6824
        %v6932 = vadd.f32 %v6739, %v6826
        %v6933 = vadd.f32 %v6740, %v6829
        %v6934 = vadd.f32 %v6741, %v6831
        %v6935 = vadd.f32 %v6742, %v6834
        %v6936 = vadd.f32 %v6743, %v6836
        %v6937 = vadd.f32 %v6744, %v6839
        %v6938 = vadd.f32 %v6745, %v6841
        %v6939 = vadd.f32 %v6746, %v6844
        %v6940 = vadd.f32 %v6747, %v6846
        %v6941 = vadd.f32 %v6748, %v6849
        %v6942 = vadd.f32 %v6749, %v6851
        %v6943 = vadd.f32 %v6750, %v6854
        %v6944 = vadd.f32 %v6751, %v6856
        %v6945 = vadd.f32 %v6752, %v6859
        %v6946 = vadd.f32 %v6753, %v6861
        %v6947 = vadd.f32 %v6754, %v6864
        %v6948 = vadd.f32 %v6755, %v6866
        %v6949 = vadd.f32 %v6756, %v6869
        %v6950 = vadd.f32 %v6757, %v6871
        %v6951 = vadd.f32 %v6758, %v6874
        %v6952 = vadd.f32 %v6759, %v6876
        %v6953 = vadd.f32 %v6760, %v6879
        %v6954 = vadd.f32 %v6761, %v6881
        %v6955 = vadd.f32 %v6762, %v6884
        %v6956 = vadd.f32 %v6763, %v6886
        %v6957 = vadd.f32 %v6764, %v6889
        %v6958 = vadd.f32 %v6765, %v6891
        %v6959 = vadd.f32 %v6766, %v6894
        %v6960 = vadd.f32 %v6767, %v6896
        %6961 = vst [vmem:[%s163] sm:$0xff] %v6929
        %6962 = vst [vmem:[%s163 + $0x8] sm:$0xff] %v6930
        %6963 = vst [vmem:[%s163 + $0x10] sm:$0xff] %v6931
        %6964 = vst [vmem:[%s163 + $0x18] sm:$0xff] %v6932
        %6965 = vst [vmem:[%s163 + $0x20] sm:$0xff] %v6933
        %6966 = vst [vmem:[%s163 + $0x28] sm:$0xff] %v6934
        %6967 = vst [vmem:[%s163 + $0x30] sm:$0xff] %v6935
        %6968 = vst [vmem:[%s163 + $0x38] sm:$0xff] %v6936
        %6969 = vst [vmem:[%s163 + $0x40] sm:$0xff] %v6937
        %6970 = vst [vmem:[%s163 + $0x48] sm:$0xff] %v6938
        %6971 = vst [vmem:[%s163 + $0x50] sm:$0xff] %v6939
        %6972 = vst [vmem:[%s163 + $0x58] sm:$0xff] %v6940
        %6973 = vst [vmem:[%s163 + $0x60] sm:$0xff] %v6941
        %6974 = vst [vmem:[%s163 + $0x68] sm:$0xff] %v6942
        %6975 = vst [vmem:[%s163 + $0x70] sm:$0xff] %v6943
        %6976 = vst [vmem:[%s163 + $0x78] sm:$0xff] %v6944
        %6977 = vst [vmem:[%s163 + $0x80] sm:$0xff] %v6945
        %6978 = vst [vmem:[%s163 + $0x88] sm:$0xff] %v6946
        %6979 = vst [vmem:[%s163 + $0x90] sm:$0xff] %v6947
        %6980 = vst [vmem:[%s163 + $0x98] sm:$0xff] %v6948
        %6981 = vst [vmem:[%s163 + $0xa0] sm:$0xff] %v6949
        %6982 = vst [vmem:[%s163 + $0xa8] sm:$0xff] %v6950
        %6983 = vst [vmem:[%s163 + $0xb0] sm:$0xff] %v6951
        %6984 = vst [vmem:[%s163 + $0xb8] sm:$0xff] %v6952
        %6985 = vst [vmem:[%s163 + $0xc0] sm:$0xff] %v6953
        %6986 = vst [vmem:[%s163 + $0xc8] sm:$0xff] %v6954
        %6987 = vst [vmem:[%s163 + $0xd0] sm:$0xff] %v6955
        %6988 = vst [vmem:[%s163 + $0xd8] sm:$0xff] %v6956
        %6989 = vst [vmem:[%s163 + $0xe0] sm:$0xff] %v6957
        %6990 = vst [vmem:[%s163 + $0xe8] sm:$0xff] %v6958
        %6991 = vst [vmem:[%s163 + $0xf0] sm:$0xff] %v6959
        %6992 = vst [vmem:[%s163 + $0xf8] sm:$0xff] %v6960
        %s6993 = sand.u32 %s93, 1
        %s6994 = scalar_lea.sflag [#allocation6], %s6993
        %s6995 = sand.u32 %s93, 1
        %s6996 = smul.addr %s6995, 256
        %s6997 = scalar_lea.vmem [#allocation5], %s6996
        // Predicated region
        $region33: #{rres_block_forward.1} parent=31 // pred_check
          %p6998 = pneg %p103
        $region34: #{rres_block_forward.1} parent=31 // pred_check_branch
          %7000 = sbr.rel (%p6998) target = $region36
        $region35: #{rres_block_forward.1} parent=31 // pred_region
          %s7002 = ssub.s32 4096, 4096
          %7003 = vsyncadd %s6994, %s7002
          %s7004 = smul.addr %s17, 32
          %s7005 = smul.addr %s7004, 128
          %s7006 = scalar_lea.hbm %s3, %s7005
          %s7007 = sshll.u32 %s6997, 4
          %s7008 = int_to_ptr.vmem [resolvable:$true] %s7007
          %7013 = dma.vmem_to_hbm [thread:$0]  %s7008, 4096, %s7006, %s6994, 128, 128, 8
        $region36: #{rres_block_forward.1} parent=31 // pred_fallthru
          _
      $region32: #{rres_block_forward.1} parent=5 // pred_fallthru
        _
      %p7014 = scmp.le.s32.totalorder 2, %s12
      // Predicated region
      $region37: #{rres_block_forward.1} parent=5 // pred_check
        %p7015 = pneg %p7014
      $region38: #{rres_block_forward.1} parent=5 // pred_check_branch
        %7017 = sbr.rel (%p7015) target = $region40
      $region39: #{rres_block_forward.1} parent=5 // pred_region
        %s7018 = ssub.s32 %s12, 2
        // Predicated region
        $region41: #{rres_block_forward.1} parent=39 // pred_check
          %p7019 = pneg %p109
        $region42: #{rres_block_forward.1} parent=39 // pred_check_branch
          %7021 = sbr.rel (%p7019) target = $region44
        $region43: #{rres_block_forward.1} parent=39 // pred_region
          %s7022 = sand.u32 %s94, 1
          %s7023 = scalar_lea.sflag [#allocation6], %s7022
          %s7024 = sand.u32 %s94, 1
          %s7025 = smul.addr %s7024, 256
          %s7026 = scalar_lea.vmem [#allocation5], %s7025
          %7027 = dma.done %s7023, 4096
        $region44: #{rres_block_forward.1} parent=39 // pred_fallthru
          _
      $region40: #{rres_block_forward.1} parent=5 // pred_fallthru
        _
    $region6: #{rres_block_forward.1} parent=1 // loop_footer
      %s16 = sadd.s32 1, %s12
    $region7: #{rres_block_forward.1} parent=1 // loop_footer_branch
      %11 = sbr.rel target = $region3
    $region8: #{rres_block_forward.1} parent=1 // loop_exit
      _
    %7028 = vsyncpa [#allocation6], 1
    %s7029 = scalar_lea.sflag [#allocation6], 1
    %7030 = vsyncpa %s7029, 1

</llo_original>
